<compile_context>
chip_gen: v5e
topology: v5e:2x2
jax: 0.10.0
libtpu: 0.0.40
codegen_flags: <defaults>
</compile_context>

<pallas_src>
import math

import jax
import jax.numpy as jnp
from jax.experimental import pallas as pl
from jax.experimental.pallas import tpu as pltpu

# ----------------------------- hyper-parameters -----------------------------
D_MODEL = 32
N_HEADS = 4
D_K = D_MODEL // N_HEADS
D_FF = 64
N_LAYERS = 2
VOCAB = 16
EPS = 1e-6
MAX_LEN = 64
SEQ_PAD = 16          # padded in-kernel sequence length (multiple of 8)
NEG_INF = -1e9


# --------------------------- in-kernel math helpers ---------------------------
def _layer_norm(x, g, b):
    """Annotated-Transformer LayerNorm: g*(x-mean)/(std+eps)+b, unbiased std."""
    d = x.shape[-1]
    mean = jnp.mean(x, axis=-1, keepdims=True)
    xc = x - mean
    var = jnp.sum(xc * xc, axis=-1, keepdims=True) / (d - 1)   # torch .std(-1) is unbiased
    inv = 1.0 / (jnp.sqrt(var) + EPS)
    return xc * (g * inv) + b                                  # gamma folded into scale


def _attention(q, k, v, mask):
    """All heads for one batch element. q:(Sq,D) k,v:(Sk,D) mask:(Sq,Sk)."""
    scale = 1.0 / math.sqrt(D_K)
    outs = []
    for h in range(N_HEADS):                                   # static unroll, 4 heads
        sl = slice(h * D_K, (h + 1) * D_K)
        s = jnp.dot(q[:, sl], k[:, sl].T, preferred_element_type=jnp.float32) * scale
        s = jnp.where(mask == 0.0, NEG_INF, s)                 # masked_fill(mask==0, -1e9)
        s = s - jnp.max(s, axis=-1, keepdims=True)
        p = jnp.exp(s)
        p = p * pl.reciprocal(jnp.sum(p, axis=-1, keepdims=True), approx=True)
        outs.append(jnp.dot(p, v[:, sl], preferred_element_type=jnp.float32))
    return jnp.concatenate(outs, axis=-1)                      # (Sq, D_MODEL)


def _self_attn(x, mask, wqkv, bqkv, wo, bo):
    qkv = jnp.dot(x, wqkv, preferred_element_type=jnp.float32) + bqkv   # fused Q|K|V
    q = qkv[:, :D_MODEL]
    k = qkv[:, D_MODEL:2 * D_MODEL]
    v = qkv[:, 2 * D_MODEL:]
    a = _attention(q, k, v, mask)
    return jnp.dot(a, wo, preferred_element_type=jnp.float32) + bo


def _cross_attn(x, mem, mask, wq, bq, wkv, bkv, wo, bo):
    q = jnp.dot(x, wq, preferred_element_type=jnp.float32) + bq
    kv = jnp.dot(mem, wkv, preferred_element_type=jnp.float32) + bkv    # fused K|V
    k = kv[:, :D_MODEL]
    v = kv[:, D_MODEL:]
    a = _attention(q, k, v, mask)
    return jnp.dot(a, wo, preferred_element_type=jnp.float32) + bo


def _ffn(x, w1, b1, w2, b2):
    h = jnp.maximum(jnp.dot(x, w1, preferred_element_type=jnp.float32) + b1, 0.0)
    return jnp.dot(h, w2, preferred_element_type=jnp.float32) + b2


# ------------------------------ the fused kernel ------------------------------
def _encoder_decoder_kernel(
    # per-batch activations / masks
    src_x_ref, tgt_x_ref, src_mask_ref, tgt_mask_ref,
    # encoder params (stacked over layers)
    e_wqkv, e_bqkv, e_wo, e_bo, e_w1, e_b1, e_w2, e_b2,
    e_ln1g, e_ln1b, e_ln2g, e_ln2b, enc_ng, enc_nb,
    # decoder params (stacked over layers)
    d_swqkv, d_sbqkv, d_swo, d_sbo,
    d_xwq, d_xbq, d_xwkv, d_xbkv, d_xwo, d_xbo,
    d_w1, d_b1, d_w2, d_b2,
    d_ln1g, d_ln1b, d_ln2g, d_ln2b, d_ln3g, d_ln3b,
    dec_ng, dec_nb,
    # output
    out_ref,
):
    sp_src = src_x_ref.shape[1]
    sp_tgt = tgt_x_ref.shape[1]

    # ------------------------------- encoder -------------------------------
    x = src_x_ref[0]                                               # (Sp_src, D)
    src_m = jnp.broadcast_to(src_mask_ref[0], (sp_src, sp_src))    # (Sp_src, Sp_src)
    for l in range(N_LAYERS):                                      # static unroll
        nx = _layer_norm(x, e_ln1g[l], e_ln1b[l])
        x = x + _self_attn(nx, src_m, e_wqkv[l], e_bqkv[l], e_wo[l], e_bo[l])
        nx = _layer_norm(x, e_ln2g[l], e_ln2b[l])
        x = x + _ffn(nx, e_w1[l], e_b1[l], e_w2[l], e_b2[l])
    memory = _layer_norm(x, enc_ng[...], enc_nb[...])              # stays in VMEM/vregs

    # ------------------------------- decoder -------------------------------
    y = tgt_x_ref[0]                                               # (Sp_tgt, D)
    tgt_m = tgt_mask_ref[0]                                        # (Sp_tgt, Sp_tgt)
    xm = jnp.broadcast_to(src_mask_ref[0], (sp_tgt, sp_src))       # cross-attn mask
    for l in range(N_LAYERS):
        ny = _layer_norm(y, d_ln1g[l], d_ln1b[l])
        y = y + _self_attn(ny, tgt_m, d_swqkv[l], d_sbqkv[l], d_swo[l], d_sbo[l])
        ny = _layer_norm(y, d_ln2g[l], d_ln2b[l])
        y = y + _cross_attn(ny, memory, xm, d_xwq[l], d_xbq[l], d_xwkv[l], d_xbkv[l],
                            d_xwo[l], d_xbo[l])
        ny = _layer_norm(y, d_ln3g[l], d_ln3b[l])
        y = y + _ffn(ny, d_w1[l], d_b1[l], d_w2[l], d_b2[l])
    y = _layer_norm(y, dec_ng[...], dec_nb[...])

    # Drop padded query rows; only the real (S_tgt, D) block hits HBM.
    out_ref[0] = y[: out_ref.shape[1]]


# ------------------------------ call wrapper ------------------------------
def _full_spec(arr):
    """Whole-array block, same for every grid step (Pallas skips re-DMA)."""
    n = arr.ndim
    return pl.BlockSpec(arr.shape, lambda b: (0,) * n)


def encoder_decoder_forward(params, src, src_mask, tgt, tgt_mask):
    # TODO(synk): generator (final log-softmax projection) exists in __init__ but
    # is not applied in the reference forward(), so it is omitted here too.
    B, s_src = src.shape
    _, s_tgt = tgt.shape
    D, SP = D_MODEL, SEQ_PAD

    # Embedding gather + sinusoidal positional encoding (token gather stays in JAX).
    src_x = jnp.take(params["src_emb"], src, axis=0) * math.sqrt(D) + params["pe"][:s_src][None]
    tgt_x = jnp.take(params["tgt_emb"], tgt, axis=0) * math.sqrt(D) + params["pe"][:s_tgt][None]

    # Pad sequences to a multiple of 8 for (8,128)-friendly in-kernel tiles.
    # Padded key positions are masked out; padded query rows are discarded.
    src_x = jnp.pad(src_x, ((0, 0), (0, SP - s_src), (0, 0)))
    tgt_x = jnp.pad(tgt_x, ((0, 0), (0, SP - s_tgt), (0, 0)))
    src_mask_p = jnp.pad(src_mask.astype(jnp.float32), ((0, 0), (0, 0), (0, SP - s_src)))
    tgt_mask_p = jnp.pad(tgt_mask.astype(jnp.float32),
                         ((0, 0), (0, SP - s_tgt), (0, SP - s_tgt)))

    p = params
    inputs = [
        src_x, tgt_x, src_mask_p, tgt_mask_p,
        p["e_wqkv"], p["e_bqkv"], p["e_wo"], p["e_bo"],
        p["e_w1"], p["e_b1"], p["e_w2"], p["e_b2"],
        p["e_ln1g"], p["e_ln1b"], p["e_ln2g"], p["e_ln2b"],
        p["enc_ng"], p["enc_nb"],
        p["d_swqkv"], p["d_sbqkv"], p["d_swo"], p["d_sbo"],
        p["d_xwq"], p["d_xbq"], p["d_xwkv"], p["d_xbkv"], p["d_xwo"], p["d_xbo"],
        p["d_w1"], p["d_b1"], p["d_w2"], p["d_b2"],
        p["d_ln1g"], p["d_ln1b"], p["d_ln2g"], p["d_ln2b"], p["d_ln3g"], p["d_ln3b"],
        p["dec_ng"], p["dec_nb"],
    ]

    in_specs = [
        pl.BlockSpec((1, SP, D), lambda b: (b, 0, 0)),
        pl.BlockSpec((1, SP, D), lambda b: (b, 0, 0)),
        pl.BlockSpec((1, 1, SP), lambda b: (b, 0, 0)),
        pl.BlockSpec((1, SP, SP), lambda b: (b, 0, 0)),
    ] + [_full_spec(a) for a in inputs[4:]]

    return pl.pallas_call(
        _encoder_decoder_kernel,
        out_shape=jax.ShapeDtypeStruct((B, s_tgt, D), jnp.float32),
        grid=(B,),
        in_specs=in_specs,
        out_specs=pl.BlockSpec((1, s_tgt, D), lambda b: (b, 0, 0)),
        compiler_params=pltpu.CompilerParams(
            dimension_semantics=("parallel",),   # shard batches across v7x's 2 TCs
        ),
    )(*inputs)


# --------------------------------- parameters --------------------------------
def positional_encoding(max_len, d):
    pos = jnp.arange(max_len, dtype=jnp.float32)[:, None]
    div = jnp.exp(jnp.arange(0, d, 2, dtype=jnp.float32) * -(math.log(10000.0) / d))
    pe = jnp.zeros((max_len, d), jnp.float32)
    pe = pe.at[:, 0::2].set(jnp.sin(pos * div))
    pe = pe.at[:, 1::2].set(jnp.cos(pos * div))
    return pe


def init_params(key):
    keys = iter(jax.random.split(key, 256))
    D, F = D_MODEL, D_FF

    def w(din, dout):
        return jax.random.normal(next(keys), (din, dout), jnp.float32) * (1.0 / math.sqrt(din))

    def stack(fn):
        return jnp.stack([fn() for _ in range(N_LAYERS)], axis=0)

    zeros = lambda shape: jnp.zeros(shape, jnp.float32)
    ones = lambda shape: jnp.ones(shape, jnp.float32)

    return {
        # encoder (params stacked over layers; Q|K|V weights fused on the output dim)
        "e_wqkv": stack(lambda: jnp.concatenate([w(D, D), w(D, D), w(D, D)], axis=1)),
        "e_bqkv": zeros((N_LAYERS, 1, 3 * D)),
        "e_wo": stack(lambda: w(D, D)), "e_bo": zeros((N_LAYERS, 1, D)),
        "e_w1": stack(lambda: w(D, F)), "e_b1": zeros((N_LAYERS, 1, F)),
        "e_w2": stack(lambda: w(F, D)), "e_b2": zeros((N_LAYERS, 1, D)),
        "e_ln1g": ones((N_LAYERS, 1, D)), "e_ln1b": zeros((N_LAYERS, 1, D)),
        "e_ln2g": ones((N_LAYERS, 1, D)), "e_ln2b": zeros((N_LAYERS, 1, D)),
        "enc_ng": ones((1, D)), "enc_nb": zeros((1, D)),
        # decoder
        "d_swqkv": stack(lambda: jnp.concatenate([w(D, D), w(D, D), w(D, D)], axis=1)),
        "d_sbqkv": zeros((N_LAYERS, 1, 3 * D)),
        "d_swo": stack(lambda: w(D, D)), "d_sbo": zeros((N_LAYERS, 1, D)),
        "d_xwq": stack(lambda: w(D, D)), "d_xbq": zeros((N_LAYERS, 1, D)),
        "d_xwkv": stack(lambda: jnp.concatenate([w(D, D), w(D, D)], axis=1)),
        "d_xbkv": zeros((N_LAYERS, 1, 2 * D)),
        "d_xwo": stack(lambda: w(D, D)), "d_xbo": zeros((N_LAYERS, 1, D)),
        "d_w1": stack(lambda: w(D, F)), "d_b1": zeros((N_LAYERS, 1, F)),
        "d_w2": stack(lambda: w(F, D)), "d_b2": zeros((N_LAYERS, 1, D)),
        "d_ln1g": ones((N_LAYERS, 1, D)), "d_ln1b": zeros((N_LAYERS, 1, D)),
        "d_ln2g": ones((N_LAYERS, 1, D)), "d_ln2b": zeros((N_LAYERS, 1, D)),
        "d_ln3g": ones((N_LAYERS, 1, D)), "d_ln3b": zeros((N_LAYERS, 1, D)),
        "dec_ng": ones((1, D)), "dec_nb": zeros((1, D)),
        # embeddings + positional encoding
        "src_emb": jax.random.normal(next(keys), (VOCAB, D), jnp.float32) * 0.1,
        "tgt_emb": jax.random.normal(next(keys), (VOCAB, D), jnp.float32) * 0.1,
        "pe": positional_encoding(MAX_LEN, D),
    }


# ------------------------------------ main ------------------------------------
if __name__ == "__main__":
    B, S_SRC, S_TGT = 2, 10, 9  # mirrors the docstring's (batch, 10) src / (batch, 9) tgt

    root = jax.random.PRNGKey(0)
    pkey, skey, tkey = jax.random.split(root, 3)

    params = init_params(pkey)
    src = jax.random.randint(skey, (B, S_SRC), 0, VOCAB)
    tgt = jax.random.randint(tkey, (B, S_TGT), 0, VOCAB)
    src_mask = jnp.ones((B, 1, S_SRC), jnp.float32)                       # (B, 1, S_src)
    tgt_mask = jnp.broadcast_to(                                          # (B, S_tgt, S_tgt) causal
        jnp.tril(jnp.ones((S_TGT, S_TGT), jnp.float32))[None], (B, S_TGT, S_TGT))

    fwd = jax.jit(encoder_decoder_forward)
    out = jax.block_until_ready(fwd(params, src, src_mask, tgt, tgt_mask))

    assert out.shape == (B, S_TGT, D_MODEL), out.shape
    assert bool(jnp.all(jnp.isfinite(out)))
    print("KERNEL_OK")
</pallas_src>

<mosaic_0001>
module attributes {stable_mosaic.version = 11 : i64} {
  func.func @_encoder_decoder_kernel(%arg0: i32, %arg1: memref<1x16x32xf32, #tpu.memory_space<vmem>>, %arg2: memref<1x16x32xf32, #tpu.memory_space<vmem>>, %arg3: memref<1x1x16xf32, #tpu.memory_space<vmem>>, %arg4: memref<1x16x16xf32, #tpu.memory_space<vmem>>, %arg5: memref<2x32x96xf32, #tpu.memory_space<vmem>>, %arg6: memref<2x1x96xf32, #tpu.memory_space<vmem>>, %arg7: memref<2x32x32xf32, #tpu.memory_space<vmem>>, %arg8: memref<2x1x32xf32, #tpu.memory_space<vmem>>, %arg9: memref<2x32x64xf32, #tpu.memory_space<vmem>>, %arg10: memref<2x1x64xf32, #tpu.memory_space<vmem>>, %arg11: memref<2x64x32xf32, #tpu.memory_space<vmem>>, %arg12: memref<2x1x32xf32, #tpu.memory_space<vmem>>, %arg13: memref<2x1x32xf32, #tpu.memory_space<vmem>>, %arg14: memref<2x1x32xf32, #tpu.memory_space<vmem>>, %arg15: memref<2x1x32xf32, #tpu.memory_space<vmem>>, %arg16: memref<2x1x32xf32, #tpu.memory_space<vmem>>, %arg17: memref<1x32xf32, #tpu.memory_space<vmem>>, %arg18: memref<1x32xf32, #tpu.memory_space<vmem>>, %arg19: memref<2x32x96xf32, #tpu.memory_space<vmem>>, %arg20: memref<2x1x96xf32, #tpu.memory_space<vmem>>, %arg21: memref<2x32x32xf32, #tpu.memory_space<vmem>>, %arg22: memref<2x1x32xf32, #tpu.memory_space<vmem>>, %arg23: memref<2x32x32xf32, #tpu.memory_space<vmem>>, %arg24: memref<2x1x32xf32, #tpu.memory_space<vmem>>, %arg25: memref<2x32x64xf32, #tpu.memory_space<vmem>>, %arg26: memref<2x1x64xf32, #tpu.memory_space<vmem>>, %arg27: memref<2x32x32xf32, #tpu.memory_space<vmem>>, %arg28: memref<2x1x32xf32, #tpu.memory_space<vmem>>, %arg29: memref<2x32x64xf32, #tpu.memory_space<vmem>>, %arg30: memref<2x1x64xf32, #tpu.memory_space<vmem>>, %arg31: memref<2x64x32xf32, #tpu.memory_space<vmem>>, %arg32: memref<2x1x32xf32, #tpu.memory_space<vmem>>, %arg33: memref<2x1x32xf32, #tpu.memory_space<vmem>>, %arg34: memref<2x1x32xf32, #tpu.memory_space<vmem>>, %arg35: memref<2x1x32xf32, #tpu.memory_space<vmem>>, %arg36: memref<2x1x32xf32, #tpu.memory_space<vmem>>, %arg37: memref<2x1x32xf32, #tpu.memory_space<vmem>>, %arg38: memref<2x1x32xf32, #tpu.memory_space<vmem>>, %arg39: memref<1x32xf32, #tpu.memory_space<vmem>>, %arg40: memref<1x32xf32, #tpu.memory_space<vmem>>, %arg41: memref<1x9x32xf32, #tpu.memory_space<vmem>>) attributes {dimension_semantics = [#tpu.dimension_semantics<parallel>], iteration_bounds = array<i64: 2>, scalar_prefetch = 0 : i64, scratch_operands = 0 : i64, tpu.core_type = #tpu.core_type<tc>, window_params = [{transform_indices = @transform_0, window_bounds = array<i64: 1, 16, 32>}, {transform_indices = @transform_1, window_bounds = array<i64: 1, 16, 32>}, {transform_indices = @transform_2, window_bounds = array<i64: 1, 1, 16>}, {transform_indices = @transform_3, window_bounds = array<i64: 1, 16, 16>}, {pipeline_mode = #tpu.pipeline_mode<synchronous>, transform_indices = @transform_4, window_bounds = array<i64: 2, 32, 96>}, {pipeline_mode = #tpu.pipeline_mode<synchronous>, transform_indices = @transform_5, window_bounds = array<i64: 2, 1, 96>}, {pipeline_mode = #tpu.pipeline_mode<synchronous>, transform_indices = @transform_6, window_bounds = array<i64: 2, 32, 32>}, {pipeline_mode = #tpu.pipeline_mode<synchronous>, transform_indices = @transform_7, window_bounds = array<i64: 2, 1, 32>}, {pipeline_mode = #tpu.pipeline_mode<synchronous>, transform_indices = @transform_8, window_bounds = array<i64: 2, 32, 64>}, {pipeline_mode = #tpu.pipeline_mode<synchronous>, transform_indices = @transform_9, window_bounds = array<i64: 2, 1, 64>}, {pipeline_mode = #tpu.pipeline_mode<synchronous>, transform_indices = @transform_10, window_bounds = array<i64: 2, 64, 32>}, {pipeline_mode = #tpu.pipeline_mode<synchronous>, transform_indices = @transform_11, window_bounds = array<i64: 2, 1, 32>}, {pipeline_mode = #tpu.pipeline_mode<synchronous>, transform_indices = @transform_12, window_bounds = array<i64: 2, 1, 32>}, {pipeline_mode = #tpu.pipeline_mode<synchronous>, transform_indices = @transform_13, window_bounds = array<i64: 2, 1, 32>}, {pipeline_mode = #tpu.pipeline_mode<synchronous>, transform_indices = @transform_14, window_bounds = array<i64: 2, 1, 32>}, {pipeline_mode = #tpu.pipeline_mode<synchronous>, transform_indices = @transform_15, window_bounds = array<i64: 2, 1, 32>}, {pipeline_mode = #tpu.pipeline_mode<synchronous>, transform_indices = @transform_16, window_bounds = array<i64: 1, 32>}, {pipeline_mode = #tpu.pipeline_mode<synchronous>, transform_indices = @transform_17, window_bounds = array<i64: 1, 32>}, {pipeline_mode = #tpu.pipeline_mode<synchronous>, transform_indices = @transform_18, window_bounds = array<i64: 2, 32, 96>}, {pipeline_mode = #tpu.pipeline_mode<synchronous>, transform_indices = @transform_19, window_bounds = array<i64: 2, 1, 96>}, {pipeline_mode = #tpu.pipeline_mode<synchronous>, transform_indices = @transform_20, window_bounds = array<i64: 2, 32, 32>}, {pipeline_mode = #tpu.pipeline_mode<synchronous>, transform_indices = @transform_21, window_bounds = array<i64: 2, 1, 32>}, {pipeline_mode = #tpu.pipeline_mode<synchronous>, transform_indices = @transform_22, window_bounds = array<i64: 2, 32, 32>}, {pipeline_mode = #tpu.pipeline_mode<synchronous>, transform_indices = @transform_23, window_bounds = array<i64: 2, 1, 32>}, {pipeline_mode = #tpu.pipeline_mode<synchronous>, transform_indices = @transform_24, window_bounds = array<i64: 2, 32, 64>}, {pipeline_mode = #tpu.pipeline_mode<synchronous>, transform_indices = @transform_25, window_bounds = array<i64: 2, 1, 64>}, {pipeline_mode = #tpu.pipeline_mode<synchronous>, transform_indices = @transform_26, window_bounds = array<i64: 2, 32, 32>}, {pipeline_mode = #tpu.pipeline_mode<synchronous>, transform_indices = @transform_27, window_bounds = array<i64: 2, 1, 32>}, {pipeline_mode = #tpu.pipeline_mode<synchronous>, transform_indices = @transform_28, window_bounds = array<i64: 2, 32, 64>}, {pipeline_mode = #tpu.pipeline_mode<synchronous>, transform_indices = @transform_29, window_bounds = array<i64: 2, 1, 64>}, {pipeline_mode = #tpu.pipeline_mode<synchronous>, transform_indices = @transform_30, window_bounds = array<i64: 2, 64, 32>}, {pipeline_mode = #tpu.pipeline_mode<synchronous>, transform_indices = @transform_31, window_bounds = array<i64: 2, 1, 32>}, {pipeline_mode = #tpu.pipeline_mode<synchronous>, transform_indices = @transform_32, window_bounds = array<i64: 2, 1, 32>}, {pipeline_mode = #tpu.pipeline_mode<synchronous>, transform_indices = @transform_33, window_bounds = array<i64: 2, 1, 32>}, {pipeline_mode = #tpu.pipeline_mode<synchronous>, transform_indices = @transform_34, window_bounds = array<i64: 2, 1, 32>}, {pipeline_mode = #tpu.pipeline_mode<synchronous>, transform_indices = @transform_35, window_bounds = array<i64: 2, 1, 32>}, {pipeline_mode = #tpu.pipeline_mode<synchronous>, transform_indices = @transform_36, window_bounds = array<i64: 2, 1, 32>}, {pipeline_mode = #tpu.pipeline_mode<synchronous>, transform_indices = @transform_37, window_bounds = array<i64: 2, 1, 32>}, {pipeline_mode = #tpu.pipeline_mode<synchronous>, transform_indices = @transform_38, window_bounds = array<i64: 1, 32>}, {pipeline_mode = #tpu.pipeline_mode<synchronous>, transform_indices = @transform_39, window_bounds = array<i64: 1, 32>}, {transform_indices = @transform_40, window_bounds = array<i64: 1, 9, 32>}]} {
    %c0 = arith.constant 0 : index
    %c0_0 = arith.constant 0 : index
    %c0_1 = arith.constant 0 : index
    %0 = vector.load %arg1[%c0, %c0_0, %c0_1] : memref<1x16x32xf32, #tpu.memory_space<vmem>>, vector<1x16x32xf32>
    %1 = vector.shape_cast %0 : vector<1x16x32xf32> to vector<16x32xf32>
    %c0_2 = arith.constant 0 : index
    %c0_3 = arith.constant 0 : index
    %c0_4 = arith.constant 0 : index
    %2 = vector.load %arg3[%c0_2, %c0_3, %c0_4] : memref<1x1x16xf32, #tpu.memory_space<vmem>>, vector<1x1x16xf32>
    %3 = vector.shape_cast %2 : vector<1x1x16xf32> to vector<1x16xf32>
    %4 = vector.shape_cast %3 : vector<1x16xf32> to vector<1x16xf32>
    %5 = vector.broadcast %4 : vector<1x16xf32> to vector<16x16xf32>
    %c0_5 = arith.constant 0 : index
    %c0_6 = arith.constant 0 : index
    %c0_7 = arith.constant 0 : index
    %6 = vector.load %arg13[%c0_5, %c0_6, %c0_7] : memref<2x1x32xf32, #tpu.memory_space<vmem>>, vector<1x1x32xf32>
    %7 = vector.shape_cast %6 : vector<1x1x32xf32> to vector<1x32xf32>
    %c0_8 = arith.constant 0 : index
    %c0_9 = arith.constant 0 : index
    %c0_10 = arith.constant 0 : index
    %8 = vector.load %arg14[%c0_8, %c0_9, %c0_10] : memref<2x1x32xf32, #tpu.memory_space<vmem>>, vector<1x1x32xf32>
    %9 = vector.shape_cast %8 : vector<1x1x32xf32> to vector<1x32xf32>
    %cst = arith.constant dense<0.000000e+00> : vector<16xf32>
    %10 = vector.multi_reduction <add>, %1, %cst [1] : vector<16x32xf32> to vector<16xf32>
    %11 = vector.shape_cast %10 : vector<16xf32> to vector<16x1xf32>
    %cst_11 = arith.constant 3.200000e+01 : f32
    %12 = vector.broadcast %cst_11 : f32 to vector<16x1xf32>
    %13 = arith.divf %11, %12 : vector<16x1xf32>
    %14 = vector.broadcast %13 : vector<16x1xf32> to vector<16x32xf32>
    %15 = arith.subf %1, %14 : vector<16x32xf32>
    %16 = arith.mulf %15, %15 : vector<16x32xf32>
    %cst_12 = arith.constant dense<0.000000e+00> : vector<16xf32>
    %17 = vector.multi_reduction <add>, %16, %cst_12 [1] : vector<16x32xf32> to vector<16xf32>
    %18 = vector.shape_cast %17 : vector<16xf32> to vector<16x1xf32>
    %cst_13 = arith.constant 3.100000e+01 : f32
    %19 = vector.broadcast %cst_13 : f32 to vector<16x1xf32>
    %20 = arith.divf %18, %19 : vector<16x1xf32>
    %21 = math.sqrt %20 : vector<16x1xf32>
    %cst_14 = arith.constant 9.99999997E-7 : f32
    %22 = vector.broadcast %cst_14 : f32 to vector<16x1xf32>
    %23 = arith.addf %21, %22 : vector<16x1xf32>
    %cst_15 = arith.constant 1.000000e+00 : f32
    %24 = vector.broadcast %cst_15 : f32 to vector<16x1xf32>
    %25 = arith.divf %24, %23 : vector<16x1xf32>
    %26 = vector.broadcast %7 : vector<1x32xf32> to vector<16x32xf32>
    %27 = vector.broadcast %25 : vector<16x1xf32> to vector<16x32xf32>
    %28 = arith.mulf %26, %27 : vector<16x32xf32>
    %29 = arith.mulf %15, %28 : vector<16x32xf32>
    %30 = vector.broadcast %9 : vector<1x32xf32> to vector<16x32xf32>
    %31 = arith.addf %29, %30 : vector<16x32xf32>
    %c0_16 = arith.constant 0 : index
    %c0_17 = arith.constant 0 : index
    %c0_18 = arith.constant 0 : index
    %32 = vector.load %arg5[%c0_16, %c0_17, %c0_18] : memref<2x32x96xf32, #tpu.memory_space<vmem>>, vector<1x32x96xf32>
    %33 = vector.shape_cast %32 : vector<1x32x96xf32> to vector<32x96xf32>
    %c0_19 = arith.constant 0 : index
    %c0_20 = arith.constant 0 : index
    %c0_21 = arith.constant 0 : index
    %34 = vector.load %arg6[%c0_19, %c0_20, %c0_21] : memref<2x1x96xf32, #tpu.memory_space<vmem>>, vector<1x1x96xf32>
    %35 = vector.shape_cast %34 : vector<1x1x96xf32> to vector<1x96xf32>
    %c0_22 = arith.constant 0 : index
    %c0_23 = arith.constant 0 : index
    %c0_24 = arith.constant 0 : index
    %36 = vector.load %arg7[%c0_22, %c0_23, %c0_24] : memref<2x32x32xf32, #tpu.memory_space<vmem>>, vector<1x32x32xf32>
    %37 = vector.shape_cast %36 : vector<1x32x32xf32> to vector<32x32xf32>
    %c0_25 = arith.constant 0 : index
    %c0_26 = arith.constant 0 : index
    %c0_27 = arith.constant 0 : index
    %38 = vector.load %arg8[%c0_25, %c0_26, %c0_27] : memref<2x1x32xf32, #tpu.memory_space<vmem>>, vector<1x1x32xf32>
    %39 = vector.shape_cast %38 : vector<1x1x32xf32> to vector<1x32xf32>
    %cst_28 = arith.constant dense<0.000000e+00> : vector<16x96xf32>
    %40 = tpu.matmul %31, %33, %cst_28 {dimension_numbers = #tpu.dot_dimension_numbers<[1], [0], [0], [1], [0, 0, 1, 1], [], []>} : vector<16x32xf32>, vector<32x96xf32>, vector<16x96xf32> -> vector<16x96xf32>
    %41 = vector.broadcast %35 : vector<1x96xf32> to vector<16x96xf32>
    %42 = arith.addf %40, %41 : vector<16x96xf32>
    %43 = vector.extract_strided_slice %42 {offsets = [0, 0], sizes = [16, 32], strides = [1, 1]} : vector<16x96xf32> to vector<16x32xf32>
    %44 = vector.extract_strided_slice %42 {offsets = [0, 32], sizes = [16, 32], strides = [1, 1]} : vector<16x96xf32> to vector<16x32xf32>
    %45 = vector.extract_strided_slice %42 {offsets = [0, 64], sizes = [16, 32], strides = [1, 1]} : vector<16x96xf32> to vector<16x32xf32>
    %46 = vector.extract_strided_slice %43 {offsets = [0, 0], sizes = [16, 8], strides = [1, 1]} : vector<16x32xf32> to vector<16x8xf32>
    %47 = vector.extract_strided_slice %44 {offsets = [0, 0], sizes = [16, 8], strides = [1, 1]} : vector<16x32xf32> to vector<16x8xf32>
    %48 = tpu.transpose %47, [1, 0] : vector<16x8xf32> -> vector<8x16xf32>
    %cst_29 = arith.constant dense<0.000000e+00> : vector<16x16xf32>
    %49 = tpu.matmul %46, %48, %cst_29 {dimension_numbers = #tpu.dot_dimension_numbers<[1], [0], [0], [1], [0, 0, 1, 1], [], []>} : vector<16x8xf32>, vector<8x16xf32>, vector<16x16xf32> -> vector<16x16xf32>
    %cst_30 = arith.constant 0.353553385 : f32
    %50 = vector.broadcast %cst_30 : f32 to vector<16x16xf32>
    %51 = arith.mulf %49, %50 : vector<16x16xf32>
    %cst_31 = arith.constant 0.000000e+00 : f32
    %52 = vector.broadcast %cst_31 : f32 to vector<16x16xf32>
    %53 = arith.cmpf oeq, %5, %52 : vector<16x16xf32>
    %cst_32 = arith.constant -1.000000e+09 : f32
    %54 = vector.broadcast %cst_32 : f32 to vector<16x16xf32>
    %55 = arith.select %53, %54, %51 : vector<16x16xi1>, vector<16x16xf32>
    %cst_33 = arith.constant dense<0xFF800000> : vector<16xf32>
    %56 = vector.multi_reduction <maximumf>, %55, %cst_33 [1] : vector<16x16xf32> to vector<16xf32>
    %57 = vector.shape_cast %56 : vector<16xf32> to vector<16x1xf32>
    %58 = vector.broadcast %57 : vector<16x1xf32> to vector<16x16xf32>
    %59 = arith.subf %55, %58 : vector<16x16xf32>
    %60 = math.exp %59 : vector<16x16xf32>
    %cst_34 = arith.constant dense<0.000000e+00> : vector<16xf32>
    %61 = vector.multi_reduction <add>, %60, %cst_34 [1] : vector<16x16xf32> to vector<16xf32>
    %62 = vector.shape_cast %61 : vector<16xf32> to vector<16x1xf32>
    %63 = tpu.reciprocal %62 {approx = true} : vector<16x1xf32> -> vector<16x1xf32>
    %64 = vector.broadcast %63 : vector<16x1xf32> to vector<16x16xf32>
    %65 = arith.mulf %60, %64 : vector<16x16xf32>
    %66 = vector.extract_strided_slice %45 {offsets = [0, 0], sizes = [16, 8], strides = [1, 1]} : vector<16x32xf32> to vector<16x8xf32>
    %cst_35 = arith.constant dense<0.000000e+00> : vector<16x8xf32>
    %67 = tpu.matmul %65, %66, %cst_35 {dimension_numbers = #tpu.dot_dimension_numbers<[1], [0], [0], [1], [0, 0, 1, 1], [], []>} : vector<16x16xf32>, vector<16x8xf32>, vector<16x8xf32> -> vector<16x8xf32>
    %68 = vector.extract_strided_slice %43 {offsets = [0, 8], sizes = [16, 8], strides = [1, 1]} : vector<16x32xf32> to vector<16x8xf32>
    %69 = vector.extract_strided_slice %44 {offsets = [0, 8], sizes = [16, 8], strides = [1, 1]} : vector<16x32xf32> to vector<16x8xf32>
    %70 = tpu.transpose %69, [1, 0] : vector<16x8xf32> -> vector<8x16xf32>
    %cst_36 = arith.constant dense<0.000000e+00> : vector<16x16xf32>
    %71 = tpu.matmul %68, %70, %cst_36 {dimension_numbers = #tpu.dot_dimension_numbers<[1], [0], [0], [1], [0, 0, 1, 1], [], []>} : vector<16x8xf32>, vector<8x16xf32>, vector<16x16xf32> -> vector<16x16xf32>
    %cst_37 = arith.constant 0.353553385 : f32
    %72 = vector.broadcast %cst_37 : f32 to vector<16x16xf32>
    %73 = arith.mulf %71, %72 : vector<16x16xf32>
    %cst_38 = arith.constant 0.000000e+00 : f32
    %74 = vector.broadcast %cst_38 : f32 to vector<16x16xf32>
    %75 = arith.cmpf oeq, %5, %74 : vector<16x16xf32>
    %cst_39 = arith.constant -1.000000e+09 : f32
    %76 = vector.broadcast %cst_39 : f32 to vector<16x16xf32>
    %77 = arith.select %75, %76, %73 : vector<16x16xi1>, vector<16x16xf32>
    %cst_40 = arith.constant dense<0xFF800000> : vector<16xf32>
    %78 = vector.multi_reduction <maximumf>, %77, %cst_40 [1] : vector<16x16xf32> to vector<16xf32>
    %79 = vector.shape_cast %78 : vector<16xf32> to vector<16x1xf32>
    %80 = vector.broadcast %79 : vector<16x1xf32> to vector<16x16xf32>
    %81 = arith.subf %77, %80 : vector<16x16xf32>
    %82 = math.exp %81 : vector<16x16xf32>
    %cst_41 = arith.constant dense<0.000000e+00> : vector<16xf32>
    %83 = vector.multi_reduction <add>, %82, %cst_41 [1] : vector<16x16xf32> to vector<16xf32>
    %84 = vector.shape_cast %83 : vector<16xf32> to vector<16x1xf32>
    %85 = tpu.reciprocal %84 {approx = true} : vector<16x1xf32> -> vector<16x1xf32>
    %86 = vector.broadcast %85 : vector<16x1xf32> to vector<16x16xf32>
    %87 = arith.mulf %82, %86 : vector<16x16xf32>
    %88 = vector.extract_strided_slice %45 {offsets = [0, 8], sizes = [16, 8], strides = [1, 1]} : vector<16x32xf32> to vector<16x8xf32>
    %cst_42 = arith.constant dense<0.000000e+00> : vector<16x8xf32>
    %89 = tpu.matmul %87, %88, %cst_42 {dimension_numbers = #tpu.dot_dimension_numbers<[1], [0], [0], [1], [0, 0, 1, 1], [], []>} : vector<16x16xf32>, vector<16x8xf32>, vector<16x8xf32> -> vector<16x8xf32>
    %90 = vector.extract_strided_slice %43 {offsets = [0, 16], sizes = [16, 8], strides = [1, 1]} : vector<16x32xf32> to vector<16x8xf32>
    %91 = vector.extract_strided_slice %44 {offsets = [0, 16], sizes = [16, 8], strides = [1, 1]} : vector<16x32xf32> to vector<16x8xf32>
    %92 = tpu.transpose %91, [1, 0] : vector<16x8xf32> -> vector<8x16xf32>
    %cst_43 = arith.constant dense<0.000000e+00> : vector<16x16xf32>
    %93 = tpu.matmul %90, %92, %cst_43 {dimension_numbers = #tpu.dot_dimension_numbers<[1], [0], [0], [1], [0, 0, 1, 1], [], []>} : vector<16x8xf32>, vector<8x16xf32>, vector<16x16xf32> -> vector<16x16xf32>
    %cst_44 = arith.constant 0.353553385 : f32
    %94 = vector.broadcast %cst_44 : f32 to vector<16x16xf32>
    %95 = arith.mulf %93, %94 : vector<16x16xf32>
    %cst_45 = arith.constant 0.000000e+00 : f32
    %96 = vector.broadcast %cst_45 : f32 to vector<16x16xf32>
    %97 = arith.cmpf oeq, %5, %96 : vector<16x16xf32>
    %cst_46 = arith.constant -1.000000e+09 : f32
    %98 = vector.broadcast %cst_46 : f32 to vector<16x16xf32>
    %99 = arith.select %97, %98, %95 : vector<16x16xi1>, vector<16x16xf32>
    %cst_47 = arith.constant dense<0xFF800000> : vector<16xf32>
    %100 = vector.multi_reduction <maximumf>, %99, %cst_47 [1] : vector<16x16xf32> to vector<16xf32>
    %101 = vector.shape_cast %100 : vector<16xf32> to vector<16x1xf32>
    %102 = vector.broadcast %101 : vector<16x1xf32> to vector<16x16xf32>
    %103 = arith.subf %99, %102 : vector<16x16xf32>
    %104 = math.exp %103 : vector<16x16xf32>
    %cst_48 = arith.constant dense<0.000000e+00> : vector<16xf32>
    %105 = vector.multi_reduction <add>, %104, %cst_48 [1] : vector<16x16xf32> to vector<16xf32>
    %106 = vector.shape_cast %105 : vector<16xf32> to vector<16x1xf32>
    %107 = tpu.reciprocal %106 {approx = true} : vector<16x1xf32> -> vector<16x1xf32>
    %108 = vector.broadcast %107 : vector<16x1xf32> to vector<16x16xf32>
    %109 = arith.mulf %104, %108 : vector<16x16xf32>
    %110 = vector.extract_strided_slice %45 {offsets = [0, 16], sizes = [16, 8], strides = [1, 1]} : vector<16x32xf32> to vector<16x8xf32>
    %cst_49 = arith.constant dense<0.000000e+00> : vector<16x8xf32>
    %111 = tpu.matmul %109, %110, %cst_49 {dimension_numbers = #tpu.dot_dimension_numbers<[1], [0], [0], [1], [0, 0, 1, 1], [], []>} : vector<16x16xf32>, vector<16x8xf32>, vector<16x8xf32> -> vector<16x8xf32>
    %112 = vector.extract_strided_slice %43 {offsets = [0, 24], sizes = [16, 8], strides = [1, 1]} : vector<16x32xf32> to vector<16x8xf32>
    %113 = vector.extract_strided_slice %44 {offsets = [0, 24], sizes = [16, 8], strides = [1, 1]} : vector<16x32xf32> to vector<16x8xf32>
    %114 = tpu.transpose %113, [1, 0] : vector<16x8xf32> -> vector<8x16xf32>
    %cst_50 = arith.constant dense<0.000000e+00> : vector<16x16xf32>
    %115 = tpu.matmul %112, %114, %cst_50 {dimension_numbers = #tpu.dot_dimension_numbers<[1], [0], [0], [1], [0, 0, 1, 1], [], []>} : vector<16x8xf32>, vector<8x16xf32>, vector<16x16xf32> -> vector<16x16xf32>
    %cst_51 = arith.constant 0.353553385 : f32
    %116 = vector.broadcast %cst_51 : f32 to vector<16x16xf32>
    %117 = arith.mulf %115, %116 : vector<16x16xf32>
    %cst_52 = arith.constant 0.000000e+00 : f32
    %118 = vector.broadcast %cst_52 : f32 to vector<16x16xf32>
    %119 = arith.cmpf oeq, %5, %118 : vector<16x16xf32>
    %cst_53 = arith.constant -1.000000e+09 : f32
    %120 = vector.broadcast %cst_53 : f32 to vector<16x16xf32>
    %121 = arith.select %119, %120, %117 : vector<16x16xi1>, vector<16x16xf32>
    %cst_54 = arith.constant dense<0xFF800000> : vector<16xf32>
    %122 = vector.multi_reduction <maximumf>, %121, %cst_54 [1] : vector<16x16xf32> to vector<16xf32>
    %123 = vector.shape_cast %122 : vector<16xf32> to vector<16x1xf32>
    %124 = vector.broadcast %123 : vector<16x1xf32> to vector<16x16xf32>
    %125 = arith.subf %121, %124 : vector<16x16xf32>
    %126 = math.exp %125 : vector<16x16xf32>
    %cst_55 = arith.constant dense<0.000000e+00> : vector<16xf32>
    %127 = vector.multi_reduction <add>, %126, %cst_55 [1] : vector<16x16xf32> to vector<16xf32>
    %128 = vector.shape_cast %127 : vector<16xf32> to vector<16x1xf32>
    %129 = tpu.reciprocal %128 {approx = true} : vector<16x1xf32> -> vector<16x1xf32>
    %130 = vector.broadcast %129 : vector<16x1xf32> to vector<16x16xf32>
    %131 = arith.mulf %126, %130 : vector<16x16xf32>
    %132 = vector.extract_strided_slice %45 {offsets = [0, 24], sizes = [16, 8], strides = [1, 1]} : vector<16x32xf32> to vector<16x8xf32>
    %cst_56 = arith.constant dense<0.000000e+00> : vector<16x8xf32>
    %133 = tpu.matmul %131, %132, %cst_56 {dimension_numbers = #tpu.dot_dimension_numbers<[1], [0], [0], [1], [0, 0, 1, 1], [], []>} : vector<16x16xf32>, vector<16x8xf32>, vector<16x8xf32> -> vector<16x8xf32>
    %134 = tpu.concatenate %67, %89, %111, %133 in 1 : vector<16x8xf32>, vector<16x8xf32>, vector<16x8xf32>, vector<16x8xf32> -> vector<16x32xf32>
    %cst_57 = arith.constant dense<0.000000e+00> : vector<16x32xf32>
    %135 = tpu.matmul %134, %37, %cst_57 {dimension_numbers = #tpu.dot_dimension_numbers<[1], [0], [0], [1], [0, 0, 1, 1], [], []>} : vector<16x32xf32>, vector<32x32xf32>, vector<16x32xf32> -> vector<16x32xf32>
    %136 = vector.broadcast %39 : vector<1x32xf32> to vector<16x32xf32>
    %137 = arith.addf %135, %136 : vector<16x32xf32>
    %138 = arith.addf %1, %137 : vector<16x32xf32>
    %c0_58 = arith.constant 0 : index
    %c0_59 = arith.constant 0 : index
    %c0_60 = arith.constant 0 : index
    %139 = vector.load %arg15[%c0_58, %c0_59, %c0_60] : memref<2x1x32xf32, #tpu.memory_space<vmem>>, vector<1x1x32xf32>
    %140 = vector.shape_cast %139 : vector<1x1x32xf32> to vector<1x32xf32>
    %c0_61 = arith.constant 0 : index
    %c0_62 = arith.constant 0 : index
    %c0_63 = arith.constant 0 : index
    %141 = vector.load %arg16[%c0_61, %c0_62, %c0_63] : memref<2x1x32xf32, #tpu.memory_space<vmem>>, vector<1x1x32xf32>
    %142 = vector.shape_cast %141 : vector<1x1x32xf32> to vector<1x32xf32>
    %cst_64 = arith.constant dense<0.000000e+00> : vector<16xf32>
    %143 = vector.multi_reduction <add>, %138, %cst_64 [1] : vector<16x32xf32> to vector<16xf32>
    %144 = vector.shape_cast %143 : vector<16xf32> to vector<16x1xf32>
    %cst_65 = arith.constant 3.200000e+01 : f32
    %145 = vector.broadcast %cst_65 : f32 to vector<16x1xf32>
    %146 = arith.divf %144, %145 : vector<16x1xf32>
    %147 = vector.broadcast %146 : vector<16x1xf32> to vector<16x32xf32>
    %148 = arith.subf %138, %147 : vector<16x32xf32>
    %149 = arith.mulf %148, %148 : vector<16x32xf32>
    %cst_66 = arith.constant dense<0.000000e+00> : vector<16xf32>
    %150 = vector.multi_reduction <add>, %149, %cst_66 [1] : vector<16x32xf32> to vector<16xf32>
    %151 = vector.shape_cast %150 : vector<16xf32> to vector<16x1xf32>
    %cst_67 = arith.constant 3.100000e+01 : f32
    %152 = vector.broadcast %cst_67 : f32 to vector<16x1xf32>
    %153 = arith.divf %151, %152 : vector<16x1xf32>
    %154 = math.sqrt %153 : vector<16x1xf32>
    %cst_68 = arith.constant 9.99999997E-7 : f32
    %155 = vector.broadcast %cst_68 : f32 to vector<16x1xf32>
    %156 = arith.addf %154, %155 : vector<16x1xf32>
    %cst_69 = arith.constant 1.000000e+00 : f32
    %157 = vector.broadcast %cst_69 : f32 to vector<16x1xf32>
    %158 = arith.divf %157, %156 : vector<16x1xf32>
    %159 = vector.broadcast %140 : vector<1x32xf32> to vector<16x32xf32>
    %160 = vector.broadcast %158 : vector<16x1xf32> to vector<16x32xf32>
    %161 = arith.mulf %159, %160 : vector<16x32xf32>
    %162 = arith.mulf %148, %161 : vector<16x32xf32>
    %163 = vector.broadcast %142 : vector<1x32xf32> to vector<16x32xf32>
    %164 = arith.addf %162, %163 : vector<16x32xf32>
    %c0_70 = arith.constant 0 : index
    %c0_71 = arith.constant 0 : index
    %c0_72 = arith.constant 0 : index
    %165 = vector.load %arg9[%c0_70, %c0_71, %c0_72] : memref<2x32x64xf32, #tpu.memory_space<vmem>>, vector<1x32x64xf32>
    %166 = vector.shape_cast %165 : vector<1x32x64xf32> to vector<32x64xf32>
    %c0_73 = arith.constant 0 : index
    %c0_74 = arith.constant 0 : index
    %c0_75 = arith.constant 0 : index
    %167 = vector.load %arg10[%c0_73, %c0_74, %c0_75] : memref<2x1x64xf32, #tpu.memory_space<vmem>>, vector<1x1x64xf32>
    %168 = vector.shape_cast %167 : vector<1x1x64xf32> to vector<1x64xf32>
    %c0_76 = arith.constant 0 : index
    %c0_77 = arith.constant 0 : index
    %c0_78 = arith.constant 0 : index
    %169 = vector.load %arg11[%c0_76, %c0_77, %c0_78] : memref<2x64x32xf32, #tpu.memory_space<vmem>>, vector<1x64x32xf32>
    %170 = vector.shape_cast %169 : vector<1x64x32xf32> to vector<64x32xf32>
    %c0_79 = arith.constant 0 : index
    %c0_80 = arith.constant 0 : index
    %c0_81 = arith.constant 0 : index
    %171 = vector.load %arg12[%c0_79, %c0_80, %c0_81] : memref<2x1x32xf32, #tpu.memory_space<vmem>>, vector<1x1x32xf32>
    %172 = vector.shape_cast %171 : vector<1x1x32xf32> to vector<1x32xf32>
    %cst_82 = arith.constant dense<0.000000e+00> : vector<16x64xf32>
    %173 = tpu.matmul %164, %166, %cst_82 {dimension_numbers = #tpu.dot_dimension_numbers<[1], [0], [0], [1], [0, 0, 1, 1], [], []>} : vector<16x32xf32>, vector<32x64xf32>, vector<16x64xf32> -> vector<16x64xf32>
    %174 = vector.broadcast %168 : vector<1x64xf32> to vector<16x64xf32>
    %175 = arith.addf %173, %174 : vector<16x64xf32>
    %cst_83 = arith.constant 0.000000e+00 : f32
    %176 = vector.broadcast %cst_83 : f32 to vector<16x64xf32>
    %177 = arith.maximumf %175, %176 : vector<16x64xf32>
    %cst_84 = arith.constant dense<0.000000e+00> : vector<16x32xf32>
    %178 = tpu.matmul %177, %170, %cst_84 {dimension_numbers = #tpu.dot_dimension_numbers<[1], [0], [0], [1], [0, 0, 1, 1], [], []>} : vector<16x64xf32>, vector<64x32xf32>, vector<16x32xf32> -> vector<16x32xf32>
    %179 = vector.broadcast %172 : vector<1x32xf32> to vector<16x32xf32>
    %180 = arith.addf %178, %179 : vector<16x32xf32>
    %181 = arith.addf %138, %180 : vector<16x32xf32>
    %c1 = arith.constant 1 : index
    %c0_85 = arith.constant 0 : index
    %c0_86 = arith.constant 0 : index
    %182 = vector.load %arg13[%c1, %c0_85, %c0_86] : memref<2x1x32xf32, #tpu.memory_space<vmem>>, vector<1x1x32xf32>
    %183 = vector.shape_cast %182 : vector<1x1x32xf32> to vector<1x32xf32>
    %c1_87 = arith.constant 1 : index
    %c0_88 = arith.constant 0 : index
    %c0_89 = arith.constant 0 : index
    %184 = vector.load %arg14[%c1_87, %c0_88, %c0_89] : memref<2x1x32xf32, #tpu.memory_space<vmem>>, vector<1x1x32xf32>
    %185 = vector.shape_cast %184 : vector<1x1x32xf32> to vector<1x32xf32>
    %cst_90 = arith.constant dense<0.000000e+00> : vector<16xf32>
    %186 = vector.multi_reduction <add>, %181, %cst_90 [1] : vector<16x32xf32> to vector<16xf32>
    %187 = vector.shape_cast %186 : vector<16xf32> to vector<16x1xf32>
    %cst_91 = arith.constant 3.200000e+01 : f32
    %188 = vector.broadcast %cst_91 : f32 to vector<16x1xf32>
    %189 = arith.divf %187, %188 : vector<16x1xf32>
    %190 = vector.broadcast %189 : vector<16x1xf32> to vector<16x32xf32>
    %191 = arith.subf %181, %190 : vector<16x32xf32>
    %192 = arith.mulf %191, %191 : vector<16x32xf32>
    %cst_92 = arith.constant dense<0.000000e+00> : vector<16xf32>
    %193 = vector.multi_reduction <add>, %192, %cst_92 [1] : vector<16x32xf32> to vector<16xf32>
    %194 = vector.shape_cast %193 : vector<16xf32> to vector<16x1xf32>
    %cst_93 = arith.constant 3.100000e+01 : f32
    %195 = vector.broadcast %cst_93 : f32 to vector<16x1xf32>
    %196 = arith.divf %194, %195 : vector<16x1xf32>
    %197 = math.sqrt %196 : vector<16x1xf32>
    %cst_94 = arith.constant 9.99999997E-7 : f32
    %198 = vector.broadcast %cst_94 : f32 to vector<16x1xf32>
    %199 = arith.addf %197, %198 : vector<16x1xf32>
    %cst_95 = arith.constant 1.000000e+00 : f32
    %200 = vector.broadcast %cst_95 : f32 to vector<16x1xf32>
    %201 = arith.divf %200, %199 : vector<16x1xf32>
    %202 = vector.broadcast %183 : vector<1x32xf32> to vector<16x32xf32>
    %203 = vector.broadcast %201 : vector<16x1xf32> to vector<16x32xf32>
    %204 = arith.mulf %202, %203 : vector<16x32xf32>
    %205 = arith.mulf %191, %204 : vector<16x32xf32>
    %206 = vector.broadcast %185 : vector<1x32xf32> to vector<16x32xf32>
    %207 = arith.addf %205, %206 : vector<16x32xf32>
    %c1_96 = arith.constant 1 : index
    %c0_97 = arith.constant 0 : index
    %c0_98 = arith.constant 0 : index
    %208 = vector.load %arg5[%c1_96, %c0_97, %c0_98] : memref<2x32x96xf32, #tpu.memory_space<vmem>>, vector<1x32x96xf32>
    %209 = vector.shape_cast %208 : vector<1x32x96xf32> to vector<32x96xf32>
    %c1_99 = arith.constant 1 : index
    %c0_100 = arith.constant 0 : index
    %c0_101 = arith.constant 0 : index
    %210 = vector.load %arg6[%c1_99, %c0_100, %c0_101] : memref<2x1x96xf32, #tpu.memory_space<vmem>>, vector<1x1x96xf32>
    %211 = vector.shape_cast %210 : vector<1x1x96xf32> to vector<1x96xf32>
    %c1_102 = arith.constant 1 : index
    %c0_103 = arith.constant 0 : index
    %c0_104 = arith.constant 0 : index
    %212 = vector.load %arg7[%c1_102, %c0_103, %c0_104] : memref<2x32x32xf32, #tpu.memory_space<vmem>>, vector<1x32x32xf32>
    %213 = vector.shape_cast %212 : vector<1x32x32xf32> to vector<32x32xf32>
    %c1_105 = arith.constant 1 : index
    %c0_106 = arith.constant 0 : index
    %c0_107 = arith.constant 0 : index
    %214 = vector.load %arg8[%c1_105, %c0_106, %c0_107] : memref<2x1x32xf32, #tpu.memory_space<vmem>>, vector<1x1x32xf32>
    %215 = vector.shape_cast %214 : vector<1x1x32xf32> to vector<1x32xf32>
    %cst_108 = arith.constant dense<0.000000e+00> : vector<16x96xf32>
    %216 = tpu.matmul %207, %209, %cst_108 {dimension_numbers = #tpu.dot_dimension_numbers<[1], [0], [0], [1], [0, 0, 1, 1], [], []>} : vector<16x32xf32>, vector<32x96xf32>, vector<16x96xf32> -> vector<16x96xf32>
    %217 = vector.broadcast %211 : vector<1x96xf32> to vector<16x96xf32>
    %218 = arith.addf %216, %217 : vector<16x96xf32>
    %219 = vector.extract_strided_slice %218 {offsets = [0, 0], sizes = [16, 32], strides = [1, 1]} : vector<16x96xf32> to vector<16x32xf32>
    %220 = vector.extract_strided_slice %218 {offsets = [0, 32], sizes = [16, 32], strides = [1, 1]} : vector<16x96xf32> to vector<16x32xf32>
    %221 = vector.extract_strided_slice %218 {offsets = [0, 64], sizes = [16, 32], strides = [1, 1]} : vector<16x96xf32> to vector<16x32xf32>
    %222 = vector.extract_strided_slice %219 {offsets = [0, 0], sizes = [16, 8], strides = [1, 1]} : vector<16x32xf32> to vector<16x8xf32>
    %223 = vector.extract_strided_slice %220 {offsets = [0, 0], sizes = [16, 8], strides = [1, 1]} : vector<16x32xf32> to vector<16x8xf32>
    %224 = tpu.transpose %223, [1, 0] : vector<16x8xf32> -> vector<8x16xf32>
    %cst_109 = arith.constant dense<0.000000e+00> : vector<16x16xf32>
    %225 = tpu.matmul %222, %224, %cst_109 {dimension_numbers = #tpu.dot_dimension_numbers<[1], [0], [0], [1], [0, 0, 1, 1], [], []>} : vector<16x8xf32>, vector<8x16xf32>, vector<16x16xf32> -> vector<16x16xf32>
    %cst_110 = arith.constant 0.353553385 : f32
    %226 = vector.broadcast %cst_110 : f32 to vector<16x16xf32>
    %227 = arith.mulf %225, %226 : vector<16x16xf32>
    %cst_111 = arith.constant 0.000000e+00 : f32
    %228 = vector.broadcast %cst_111 : f32 to vector<16x16xf32>
    %229 = arith.cmpf oeq, %5, %228 : vector<16x16xf32>
    %cst_112 = arith.constant -1.000000e+09 : f32
    %230 = vector.broadcast %cst_112 : f32 to vector<16x16xf32>
    %231 = arith.select %229, %230, %227 : vector<16x16xi1>, vector<16x16xf32>
    %cst_113 = arith.constant dense<0xFF800000> : vector<16xf32>
    %232 = vector.multi_reduction <maximumf>, %231, %cst_113 [1] : vector<16x16xf32> to vector<16xf32>
    %233 = vector.shape_cast %232 : vector<16xf32> to vector<16x1xf32>
    %234 = vector.broadcast %233 : vector<16x1xf32> to vector<16x16xf32>
    %235 = arith.subf %231, %234 : vector<16x16xf32>
    %236 = math.exp %235 : vector<16x16xf32>
    %cst_114 = arith.constant dense<0.000000e+00> : vector<16xf32>
    %237 = vector.multi_reduction <add>, %236, %cst_114 [1] : vector<16x16xf32> to vector<16xf32>
    %238 = vector.shape_cast %237 : vector<16xf32> to vector<16x1xf32>
    %239 = tpu.reciprocal %238 {approx = true} : vector<16x1xf32> -> vector<16x1xf32>
    %240 = vector.broadcast %239 : vector<16x1xf32> to vector<16x16xf32>
    %241 = arith.mulf %236, %240 : vector<16x16xf32>
    %242 = vector.extract_strided_slice %221 {offsets = [0, 0], sizes = [16, 8], strides = [1, 1]} : vector<16x32xf32> to vector<16x8xf32>
    %cst_115 = arith.constant dense<0.000000e+00> : vector<16x8xf32>
    %243 = tpu.matmul %241, %242, %cst_115 {dimension_numbers = #tpu.dot_dimension_numbers<[1], [0], [0], [1], [0, 0, 1, 1], [], []>} : vector<16x16xf32>, vector<16x8xf32>, vector<16x8xf32> -> vector<16x8xf32>
    %244 = vector.extract_strided_slice %219 {offsets = [0, 8], sizes = [16, 8], strides = [1, 1]} : vector<16x32xf32> to vector<16x8xf32>
    %245 = vector.extract_strided_slice %220 {offsets = [0, 8], sizes = [16, 8], strides = [1, 1]} : vector<16x32xf32> to vector<16x8xf32>
    %246 = tpu.transpose %245, [1, 0] : vector<16x8xf32> -> vector<8x16xf32>
    %cst_116 = arith.constant dense<0.000000e+00> : vector<16x16xf32>
    %247 = tpu.matmul %244, %246, %cst_116 {dimension_numbers = #tpu.dot_dimension_numbers<[1], [0], [0], [1], [0, 0, 1, 1], [], []>} : vector<16x8xf32>, vector<8x16xf32>, vector<16x16xf32> -> vector<16x16xf32>
    %cst_117 = arith.constant 0.353553385 : f32
    %248 = vector.broadcast %cst_117 : f32 to vector<16x16xf32>
    %249 = arith.mulf %247, %248 : vector<16x16xf32>
    %cst_118 = arith.constant 0.000000e+00 : f32
    %250 = vector.broadcast %cst_118 : f32 to vector<16x16xf32>
    %251 = arith.cmpf oeq, %5, %250 : vector<16x16xf32>
    %cst_119 = arith.constant -1.000000e+09 : f32
    %252 = vector.broadcast %cst_119 : f32 to vector<16x16xf32>
    %253 = arith.select %251, %252, %249 : vector<16x16xi1>, vector<16x16xf32>
    %cst_120 = arith.constant dense<0xFF800000> : vector<16xf32>
    %254 = vector.multi_reduction <maximumf>, %253, %cst_120 [1] : vector<16x16xf32> to vector<16xf32>
    %255 = vector.shape_cast %254 : vector<16xf32> to vector<16x1xf32>
    %256 = vector.broadcast %255 : vector<16x1xf32> to vector<16x16xf32>
    %257 = arith.subf %253, %256 : vector<16x16xf32>
    %258 = math.exp %257 : vector<16x16xf32>
    %cst_121 = arith.constant dense<0.000000e+00> : vector<16xf32>
    %259 = vector.multi_reduction <add>, %258, %cst_121 [1] : vector<16x16xf32> to vector<16xf32>
    %260 = vector.shape_cast %259 : vector<16xf32> to vector<16x1xf32>
    %261 = tpu.reciprocal %260 {approx = true} : vector<16x1xf32> -> vector<16x1xf32>
    %262 = vector.broadcast %261 : vector<16x1xf32> to vector<16x16xf32>
    %263 = arith.mulf %258, %262 : vector<16x16xf32>
    %264 = vector.extract_strided_slice %221 {offsets = [0, 8], sizes = [16, 8], strides = [1, 1]} : vector<16x32xf32> to vector<16x8xf32>
    %cst_122 = arith.constant dense<0.000000e+00> : vector<16x8xf32>
    %265 = tpu.matmul %263, %264, %cst_122 {dimension_numbers = #tpu.dot_dimension_numbers<[1], [0], [0], [1], [0, 0, 1, 1], [], []>} : vector<16x16xf32>, vector<16x8xf32>, vector<16x8xf32> -> vector<16x8xf32>
    %266 = vector.extract_strided_slice %219 {offsets = [0, 16], sizes = [16, 8], strides = [1, 1]} : vector<16x32xf32> to vector<16x8xf32>
    %267 = vector.extract_strided_slice %220 {offsets = [0, 16], sizes = [16, 8], strides = [1, 1]} : vector<16x32xf32> to vector<16x8xf32>
    %268 = tpu.transpose %267, [1, 0] : vector<16x8xf32> -> vector<8x16xf32>
    %cst_123 = arith.constant dense<0.000000e+00> : vector<16x16xf32>
    %269 = tpu.matmul %266, %268, %cst_123 {dimension_numbers = #tpu.dot_dimension_numbers<[1], [0], [0], [1], [0, 0, 1, 1], [], []>} : vector<16x8xf32>, vector<8x16xf32>, vector<16x16xf32> -> vector<16x16xf32>
    %cst_124 = arith.constant 0.353553385 : f32
    %270 = vector.broadcast %cst_124 : f32 to vector<16x16xf32>
    %271 = arith.mulf %269, %270 : vector<16x16xf32>
    %cst_125 = arith.constant 0.000000e+00 : f32
    %272 = vector.broadcast %cst_125 : f32 to vector<16x16xf32>
    %273 = arith.cmpf oeq, %5, %272 : vector<16x16xf32>
    %cst_126 = arith.constant -1.000000e+09 : f32
    %274 = vector.broadcast %cst_126 : f32 to vector<16x16xf32>
    %275 = arith.select %273, %274, %271 : vector<16x16xi1>, vector<16x16xf32>
    %cst_127 = arith.constant dense<0xFF800000> : vector<16xf32>
    %276 = vector.multi_reduction <maximumf>, %275, %cst_127 [1] : vector<16x16xf32> to vector<16xf32>
    %277 = vector.shape_cast %276 : vector<16xf32> to vector<16x1xf32>
    %278 = vector.broadcast %277 : vector<16x1xf32> to vector<16x16xf32>
    %279 = arith.subf %275, %278 : vector<16x16xf32>
    %280 = math.exp %279 : vector<16x16xf32>
    %cst_128 = arith.constant dense<0.000000e+00> : vector<16xf32>
    %281 = vector.multi_reduction <add>, %280, %cst_128 [1] : vector<16x16xf32> to vector<16xf32>
    %282 = vector.shape_cast %281 : vector<16xf32> to vector<16x1xf32>
    %283 = tpu.reciprocal %282 {approx = true} : vector<16x1xf32> -> vector<16x1xf32>
    %284 = vector.broadcast %283 : vector<16x1xf32> to vector<16x16xf32>
    %285 = arith.mulf %280, %284 : vector<16x16xf32>
    %286 = vector.extract_strided_slice %221 {offsets = [0, 16], sizes = [16, 8], strides = [1, 1]} : vector<16x32xf32> to vector<16x8xf32>
    %cst_129 = arith.constant dense<0.000000e+00> : vector<16x8xf32>
    %287 = tpu.matmul %285, %286, %cst_129 {dimension_numbers = #tpu.dot_dimension_numbers<[1], [0], [0], [1], [0, 0, 1, 1], [], []>} : vector<16x16xf32>, vector<16x8xf32>, vector<16x8xf32> -> vector<16x8xf32>
    %288 = vector.extract_strided_slice %219 {offsets = [0, 24], sizes = [16, 8], strides = [1, 1]} : vector<16x32xf32> to vector<16x8xf32>
    %289 = vector.extract_strided_slice %220 {offsets = [0, 24], sizes = [16, 8], strides = [1, 1]} : vector<16x32xf32> to vector<16x8xf32>
    %290 = tpu.transpose %289, [1, 0] : vector<16x8xf32> -> vector<8x16xf32>
    %cst_130 = arith.constant dense<0.000000e+00> : vector<16x16xf32>
    %291 = tpu.matmul %288, %290, %cst_130 {dimension_numbers = #tpu.dot_dimension_numbers<[1], [0], [0], [1], [0, 0, 1, 1], [], []>} : vector<16x8xf32>, vector<8x16xf32>, vector<16x16xf32> -> vector<16x16xf32>
    %cst_131 = arith.constant 0.353553385 : f32
    %292 = vector.broadcast %cst_131 : f32 to vector<16x16xf32>
    %293 = arith.mulf %291, %292 : vector<16x16xf32>
    %cst_132 = arith.constant 0.000000e+00 : f32
    %294 = vector.broadcast %cst_132 : f32 to vector<16x16xf32>
    %295 = arith.cmpf oeq, %5, %294 : vector<16x16xf32>
    %cst_133 = arith.constant -1.000000e+09 : f32
    %296 = vector.broadcast %cst_133 : f32 to vector<16x16xf32>
    %297 = arith.select %295, %296, %293 : vector<16x16xi1>, vector<16x16xf32>
    %cst_134 = arith.constant dense<0xFF800000> : vector<16xf32>
    %298 = vector.multi_reduction <maximumf>, %297, %cst_134 [1] : vector<16x16xf32> to vector<16xf32>
    %299 = vector.shape_cast %298 : vector<16xf32> to vector<16x1xf32>
    %300 = vector.broadcast %299 : vector<16x1xf32> to vector<16x16xf32>
    %301 = arith.subf %297, %300 : vector<16x16xf32>
    %302 = math.exp %301 : vector<16x16xf32>
    %cst_135 = arith.constant dense<0.000000e+00> : vector<16xf32>
    %303 = vector.multi_reduction <add>, %302, %cst_135 [1] : vector<16x16xf32> to vector<16xf32>
    %304 = vector.shape_cast %303 : vector<16xf32> to vector<16x1xf32>
    %305 = tpu.reciprocal %304 {approx = true} : vector<16x1xf32> -> vector<16x1xf32>
    %306 = vector.broadcast %305 : vector<16x1xf32> to vector<16x16xf32>
    %307 = arith.mulf %302, %306 : vector<16x16xf32>
    %308 = vector.extract_strided_slice %221 {offsets = [0, 24], sizes = [16, 8], strides = [1, 1]} : vector<16x32xf32> to vector<16x8xf32>
    %cst_136 = arith.constant dense<0.000000e+00> : vector<16x8xf32>
    %309 = tpu.matmul %307, %308, %cst_136 {dimension_numbers = #tpu.dot_dimension_numbers<[1], [0], [0], [1], [0, 0, 1, 1], [], []>} : vector<16x16xf32>, vector<16x8xf32>, vector<16x8xf32> -> vector<16x8xf32>
    %310 = tpu.concatenate %243, %265, %287, %309 in 1 : vector<16x8xf32>, vector<16x8xf32>, vector<16x8xf32>, vector<16x8xf32> -> vector<16x32xf32>
    %cst_137 = arith.constant dense<0.000000e+00> : vector<16x32xf32>
    %311 = tpu.matmul %310, %213, %cst_137 {dimension_numbers = #tpu.dot_dimension_numbers<[1], [0], [0], [1], [0, 0, 1, 1], [], []>} : vector<16x32xf32>, vector<32x32xf32>, vector<16x32xf32> -> vector<16x32xf32>
    %312 = vector.broadcast %215 : vector<1x32xf32> to vector<16x32xf32>
    %313 = arith.addf %311, %312 : vector<16x32xf32>
    %314 = arith.addf %181, %313 : vector<16x32xf32>
    %c1_138 = arith.constant 1 : index
    %c0_139 = arith.constant 0 : index
    %c0_140 = arith.constant 0 : index
    %315 = vector.load %arg15[%c1_138, %c0_139, %c0_140] : memref<2x1x32xf32, #tpu.memory_space<vmem>>, vector<1x1x32xf32>
    %316 = vector.shape_cast %315 : vector<1x1x32xf32> to vector<1x32xf32>
    %c1_141 = arith.constant 1 : index
    %c0_142 = arith.constant 0 : index
    %c0_143 = arith.constant 0 : index
    %317 = vector.load %arg16[%c1_141, %c0_142, %c0_143] : memref<2x1x32xf32, #tpu.memory_space<vmem>>, vector<1x1x32xf32>
    %318 = vector.shape_cast %317 : vector<1x1x32xf32> to vector<1x32xf32>
    %cst_144 = arith.constant dense<0.000000e+00> : vector<16xf32>
    %319 = vector.multi_reduction <add>, %314, %cst_144 [1] : vector<16x32xf32> to vector<16xf32>
    %320 = vector.shape_cast %319 : vector<16xf32> to vector<16x1xf32>
    %cst_145 = arith.constant 3.200000e+01 : f32
    %321 = vector.broadcast %cst_145 : f32 to vector<16x1xf32>
    %322 = arith.divf %320, %321 : vector<16x1xf32>
    %323 = vector.broadcast %322 : vector<16x1xf32> to vector<16x32xf32>
    %324 = arith.subf %314, %323 : vector<16x32xf32>
    %325 = arith.mulf %324, %324 : vector<16x32xf32>
    %cst_146 = arith.constant dense<0.000000e+00> : vector<16xf32>
    %326 = vector.multi_reduction <add>, %325, %cst_146 [1] : vector<16x32xf32> to vector<16xf32>
    %327 = vector.shape_cast %326 : vector<16xf32> to vector<16x1xf32>
    %cst_147 = arith.constant 3.100000e+01 : f32
    %328 = vector.broadcast %cst_147 : f32 to vector<16x1xf32>
    %329 = arith.divf %327, %328 : vector<16x1xf32>
    %330 = math.sqrt %329 : vector<16x1xf32>
    %cst_148 = arith.constant 9.99999997E-7 : f32
    %331 = vector.broadcast %cst_148 : f32 to vector<16x1xf32>
    %332 = arith.addf %330, %331 : vector<16x1xf32>
    %cst_149 = arith.constant 1.000000e+00 : f32
    %333 = vector.broadcast %cst_149 : f32 to vector<16x1xf32>
    %334 = arith.divf %333, %332 : vector<16x1xf32>
    %335 = vector.broadcast %316 : vector<1x32xf32> to vector<16x32xf32>
    %336 = vector.broadcast %334 : vector<16x1xf32> to vector<16x32xf32>
    %337 = arith.mulf %335, %336 : vector<16x32xf32>
    %338 = arith.mulf %324, %337 : vector<16x32xf32>
    %339 = vector.broadcast %318 : vector<1x32xf32> to vector<16x32xf32>
    %340 = arith.addf %338, %339 : vector<16x32xf32>
    %c1_150 = arith.constant 1 : index
    %c0_151 = arith.constant 0 : index
    %c0_152 = arith.constant 0 : index
    %341 = vector.load %arg9[%c1_150, %c0_151, %c0_152] : memref<2x32x64xf32, #tpu.memory_space<vmem>>, vector<1x32x64xf32>
    %342 = vector.shape_cast %341 : vector<1x32x64xf32> to vector<32x64xf32>
    %c1_153 = arith.constant 1 : index
    %c0_154 = arith.constant 0 : index
    %c0_155 = arith.constant 0 : index
    %343 = vector.load %arg10[%c1_153, %c0_154, %c0_155] : memref<2x1x64xf32, #tpu.memory_space<vmem>>, vector<1x1x64xf32>
    %344 = vector.shape_cast %343 : vector<1x1x64xf32> to vector<1x64xf32>
    %c1_156 = arith.constant 1 : index
    %c0_157 = arith.constant 0 : index
    %c0_158 = arith.constant 0 : index
    %345 = vector.load %arg11[%c1_156, %c0_157, %c0_158] : memref<2x64x32xf32, #tpu.memory_space<vmem>>, vector<1x64x32xf32>
    %346 = vector.shape_cast %345 : vector<1x64x32xf32> to vector<64x32xf32>
    %c1_159 = arith.constant 1 : index
    %c0_160 = arith.constant 0 : index
    %c0_161 = arith.constant 0 : index
    %347 = vector.load %arg12[%c1_159, %c0_160, %c0_161] : memref<2x1x32xf32, #tpu.memory_space<vmem>>, vector<1x1x32xf32>
    %348 = vector.shape_cast %347 : vector<1x1x32xf32> to vector<1x32xf32>
    %cst_162 = arith.constant dense<0.000000e+00> : vector<16x64xf32>
    %349 = tpu.matmul %340, %342, %cst_162 {dimension_numbers = #tpu.dot_dimension_numbers<[1], [0], [0], [1], [0, 0, 1, 1], [], []>} : vector<16x32xf32>, vector<32x64xf32>, vector<16x64xf32> -> vector<16x64xf32>
    %350 = vector.broadcast %344 : vector<1x64xf32> to vector<16x64xf32>
    %351 = arith.addf %349, %350 : vector<16x64xf32>
    %cst_163 = arith.constant 0.000000e+00 : f32
    %352 = vector.broadcast %cst_163 : f32 to vector<16x64xf32>
    %353 = arith.maximumf %351, %352 : vector<16x64xf32>
    %cst_164 = arith.constant dense<0.000000e+00> : vector<16x32xf32>
    %354 = tpu.matmul %353, %346, %cst_164 {dimension_numbers = #tpu.dot_dimension_numbers<[1], [0], [0], [1], [0, 0, 1, 1], [], []>} : vector<16x64xf32>, vector<64x32xf32>, vector<16x32xf32> -> vector<16x32xf32>
    %355 = vector.broadcast %348 : vector<1x32xf32> to vector<16x32xf32>
    %356 = arith.addf %354, %355 : vector<16x32xf32>
    %357 = arith.addf %314, %356 : vector<16x32xf32>
    %c0_165 = arith.constant 0 : index
    %c0_166 = arith.constant 0 : index
    %358 = vector.load %arg17[%c0_165, %c0_166] : memref<1x32xf32, #tpu.memory_space<vmem>>, vector<1x32xf32>
    %c0_167 = arith.constant 0 : index
    %c0_168 = arith.constant 0 : index
    %359 = vector.load %arg18[%c0_167, %c0_168] : memref<1x32xf32, #tpu.memory_space<vmem>>, vector<1x32xf32>
    %cst_169 = arith.constant dense<0.000000e+00> : vector<16xf32>
    %360 = vector.multi_reduction <add>, %357, %cst_169 [1] : vector<16x32xf32> to vector<16xf32>
    %361 = vector.shape_cast %360 : vector<16xf32> to vector<16x1xf32>
    %cst_170 = arith.constant 3.200000e+01 : f32
    %362 = vector.broadcast %cst_170 : f32 to vector<16x1xf32>
    %363 = arith.divf %361, %362 : vector<16x1xf32>
    %364 = vector.broadcast %363 : vector<16x1xf32> to vector<16x32xf32>
    %365 = arith.subf %357, %364 : vector<16x32xf32>
    %366 = arith.mulf %365, %365 : vector<16x32xf32>
    %cst_171 = arith.constant dense<0.000000e+00> : vector<16xf32>
    %367 = vector.multi_reduction <add>, %366, %cst_171 [1] : vector<16x32xf32> to vector<16xf32>
    %368 = vector.shape_cast %367 : vector<16xf32> to vector<16x1xf32>
    %cst_172 = arith.constant 3.100000e+01 : f32
    %369 = vector.broadcast %cst_172 : f32 to vector<16x1xf32>
    %370 = arith.divf %368, %369 : vector<16x1xf32>
    %371 = math.sqrt %370 : vector<16x1xf32>
    %cst_173 = arith.constant 9.99999997E-7 : f32
    %372 = vector.broadcast %cst_173 : f32 to vector<16x1xf32>
    %373 = arith.addf %371, %372 : vector<16x1xf32>
    %cst_174 = arith.constant 1.000000e+00 : f32
    %374 = vector.broadcast %cst_174 : f32 to vector<16x1xf32>
    %375 = arith.divf %374, %373 : vector<16x1xf32>
    %376 = vector.broadcast %358 : vector<1x32xf32> to vector<16x32xf32>
    %377 = vector.broadcast %375 : vector<16x1xf32> to vector<16x32xf32>
    %378 = arith.mulf %376, %377 : vector<16x32xf32>
    %379 = arith.mulf %365, %378 : vector<16x32xf32>
    %380 = vector.broadcast %359 : vector<1x32xf32> to vector<16x32xf32>
    %381 = arith.addf %379, %380 : vector<16x32xf32>
    %c0_175 = arith.constant 0 : index
    %c0_176 = arith.constant 0 : index
    %c0_177 = arith.constant 0 : index
    %382 = vector.load %arg2[%c0_175, %c0_176, %c0_177] : memref<1x16x32xf32, #tpu.memory_space<vmem>>, vector<1x16x32xf32>
    %383 = vector.shape_cast %382 : vector<1x16x32xf32> to vector<16x32xf32>
    %c0_178 = arith.constant 0 : index
    %c0_179 = arith.constant 0 : index
    %c0_180 = arith.constant 0 : index
    %384 = vector.load %arg4[%c0_178, %c0_179, %c0_180] : memref<1x16x16xf32, #tpu.memory_space<vmem>>, vector<1x16x16xf32>
    %385 = vector.shape_cast %384 : vector<1x16x16xf32> to vector<16x16xf32>
    %c0_181 = arith.constant 0 : index
    %c0_182 = arith.constant 0 : index
    %c0_183 = arith.constant 0 : index
    %386 = vector.load %arg3[%c0_181, %c0_182, %c0_183] : memref<1x1x16xf32, #tpu.memory_space<vmem>>, vector<1x1x16xf32>
    %387 = vector.shape_cast %386 : vector<1x1x16xf32> to vector<1x16xf32>
    %388 = vector.shape_cast %387 : vector<1x16xf32> to vector<1x16xf32>
    %389 = vector.broadcast %388 : vector<1x16xf32> to vector<16x16xf32>
    %c0_184 = arith.constant 0 : index
    %c0_185 = arith.constant 0 : index
    %c0_186 = arith.constant 0 : index
    %390 = vector.load %arg33[%c0_184, %c0_185, %c0_186] : memref<2x1x32xf32, #tpu.memory_space<vmem>>, vector<1x1x32xf32>
    %391 = vector.shape_cast %390 : vector<1x1x32xf32> to vector<1x32xf32>
    %c0_187 = arith.constant 0 : index
    %c0_188 = arith.constant 0 : index
    %c0_189 = arith.constant 0 : index
    %392 = vector.load %arg34[%c0_187, %c0_188, %c0_189] : memref<2x1x32xf32, #tpu.memory_space<vmem>>, vector<1x1x32xf32>
    %393 = vector.shape_cast %392 : vector<1x1x32xf32> to vector<1x32xf32>
    %cst_190 = arith.constant dense<0.000000e+00> : vector<16xf32>
    %394 = vector.multi_reduction <add>, %383, %cst_190 [1] : vector<16x32xf32> to vector<16xf32>
    %395 = vector.shape_cast %394 : vector<16xf32> to vector<16x1xf32>
    %cst_191 = arith.constant 3.200000e+01 : f32
    %396 = vector.broadcast %cst_191 : f32 to vector<16x1xf32>
    %397 = arith.divf %395, %396 : vector<16x1xf32>
    %398 = vector.broadcast %397 : vector<16x1xf32> to vector<16x32xf32>
    %399 = arith.subf %383, %398 : vector<16x32xf32>
    %400 = arith.mulf %399, %399 : vector<16x32xf32>
    %cst_192 = arith.constant dense<0.000000e+00> : vector<16xf32>
    %401 = vector.multi_reduction <add>, %400, %cst_192 [1] : vector<16x32xf32> to vector<16xf32>
    %402 = vector.shape_cast %401 : vector<16xf32> to vector<16x1xf32>
    %cst_193 = arith.constant 3.100000e+01 : f32
    %403 = vector.broadcast %cst_193 : f32 to vector<16x1xf32>
    %404 = arith.divf %402, %403 : vector<16x1xf32>
    %405 = math.sqrt %404 : vector<16x1xf32>
    %cst_194 = arith.constant 9.99999997E-7 : f32
    %406 = vector.broadcast %cst_194 : f32 to vector<16x1xf32>
    %407 = arith.addf %405, %406 : vector<16x1xf32>
    %cst_195 = arith.constant 1.000000e+00 : f32
    %408 = vector.broadcast %cst_195 : f32 to vector<16x1xf32>
    %409 = arith.divf %408, %407 : vector<16x1xf32>
    %410 = vector.broadcast %391 : vector<1x32xf32> to vector<16x32xf32>
    %411 = vector.broadcast %409 : vector<16x1xf32> to vector<16x32xf32>
    %412 = arith.mulf %410, %411 : vector<16x32xf32>
    %413 = arith.mulf %399, %412 : vector<16x32xf32>
    %414 = vector.broadcast %393 : vector<1x32xf32> to vector<16x32xf32>
    %415 = arith.addf %413, %414 : vector<16x32xf32>
    %c0_196 = arith.constant 0 : index
    %c0_197 = arith.constant 0 : index
    %c0_198 = arith.constant 0 : index
    %416 = vector.load %arg19[%c0_196, %c0_197, %c0_198] : memref<2x32x96xf32, #tpu.memory_space<vmem>>, vector<1x32x96xf32>
    %417 = vector.shape_cast %416 : vector<1x32x96xf32> to vector<32x96xf32>
    %c0_199 = arith.constant 0 : index
    %c0_200 = arith.constant 0 : index
    %c0_201 = arith.constant 0 : index
    %418 = vector.load %arg20[%c0_199, %c0_200, %c0_201] : memref<2x1x96xf32, #tpu.memory_space<vmem>>, vector<1x1x96xf32>
    %419 = vector.shape_cast %418 : vector<1x1x96xf32> to vector<1x96xf32>
    %c0_202 = arith.constant 0 : index
    %c0_203 = arith.constant 0 : index
    %c0_204 = arith.constant 0 : index
    %420 = vector.load %arg21[%c0_202, %c0_203, %c0_204] : memref<2x32x32xf32, #tpu.memory_space<vmem>>, vector<1x32x32xf32>
    %421 = vector.shape_cast %420 : vector<1x32x32xf32> to vector<32x32xf32>
    %c0_205 = arith.constant 0 : index
    %c0_206 = arith.constant 0 : index
    %c0_207 = arith.constant 0 : index
    %422 = vector.load %arg22[%c0_205, %c0_206, %c0_207] : memref<2x1x32xf32, #tpu.memory_space<vmem>>, vector<1x1x32xf32>
    %423 = vector.shape_cast %422 : vector<1x1x32xf32> to vector<1x32xf32>
    %cst_208 = arith.constant dense<0.000000e+00> : vector<16x96xf32>
    %424 = tpu.matmul %415, %417, %cst_208 {dimension_numbers = #tpu.dot_dimension_numbers<[1], [0], [0], [1], [0, 0, 1, 1], [], []>} : vector<16x32xf32>, vector<32x96xf32>, vector<16x96xf32> -> vector<16x96xf32>
    %425 = vector.broadcast %419 : vector<1x96xf32> to vector<16x96xf32>
    %426 = arith.addf %424, %425 : vector<16x96xf32>
    %427 = vector.extract_strided_slice %426 {offsets = [0, 0], sizes = [16, 32], strides = [1, 1]} : vector<16x96xf32> to vector<16x32xf32>
    %428 = vector.extract_strided_slice %426 {offsets = [0, 32], sizes = [16, 32], strides = [1, 1]} : vector<16x96xf32> to vector<16x32xf32>
    %429 = vector.extract_strided_slice %426 {offsets = [0, 64], sizes = [16, 32], strides = [1, 1]} : vector<16x96xf32> to vector<16x32xf32>
    %430 = vector.extract_strided_slice %427 {offsets = [0, 0], sizes = [16, 8], strides = [1, 1]} : vector<16x32xf32> to vector<16x8xf32>
    %431 = vector.extract_strided_slice %428 {offsets = [0, 0], sizes = [16, 8], strides = [1, 1]} : vector<16x32xf32> to vector<16x8xf32>
    %432 = tpu.transpose %431, [1, 0] : vector<16x8xf32> -> vector<8x16xf32>
    %cst_209 = arith.constant dense<0.000000e+00> : vector<16x16xf32>
    %433 = tpu.matmul %430, %432, %cst_209 {dimension_numbers = #tpu.dot_dimension_numbers<[1], [0], [0], [1], [0, 0, 1, 1], [], []>} : vector<16x8xf32>, vector<8x16xf32>, vector<16x16xf32> -> vector<16x16xf32>
    %cst_210 = arith.constant 0.353553385 : f32
    %434 = vector.broadcast %cst_210 : f32 to vector<16x16xf32>
    %435 = arith.mulf %433, %434 : vector<16x16xf32>
    %cst_211 = arith.constant 0.000000e+00 : f32
    %436 = vector.broadcast %cst_211 : f32 to vector<16x16xf32>
    %437 = arith.cmpf oeq, %385, %436 : vector<16x16xf32>
    %cst_212 = arith.constant -1.000000e+09 : f32
    %438 = vector.broadcast %cst_212 : f32 to vector<16x16xf32>
    %439 = arith.select %437, %438, %435 : vector<16x16xi1>, vector<16x16xf32>
    %cst_213 = arith.constant dense<0xFF800000> : vector<16xf32>
    %440 = vector.multi_reduction <maximumf>, %439, %cst_213 [1] : vector<16x16xf32> to vector<16xf32>
    %441 = vector.shape_cast %440 : vector<16xf32> to vector<16x1xf32>
    %442 = vector.broadcast %441 : vector<16x1xf32> to vector<16x16xf32>
    %443 = arith.subf %439, %442 : vector<16x16xf32>
    %444 = math.exp %443 : vector<16x16xf32>
    %cst_214 = arith.constant dense<0.000000e+00> : vector<16xf32>
    %445 = vector.multi_reduction <add>, %444, %cst_214 [1] : vector<16x16xf32> to vector<16xf32>
    %446 = vector.shape_cast %445 : vector<16xf32> to vector<16x1xf32>
    %447 = tpu.reciprocal %446 {approx = true} : vector<16x1xf32> -> vector<16x1xf32>
    %448 = vector.broadcast %447 : vector<16x1xf32> to vector<16x16xf32>
    %449 = arith.mulf %444, %448 : vector<16x16xf32>
    %450 = vector.extract_strided_slice %429 {offsets = [0, 0], sizes = [16, 8], strides = [1, 1]} : vector<16x32xf32> to vector<16x8xf32>
    %cst_215 = arith.constant dense<0.000000e+00> : vector<16x8xf32>
    %451 = tpu.matmul %449, %450, %cst_215 {dimension_numbers = #tpu.dot_dimension_numbers<[1], [0], [0], [1], [0, 0, 1, 1], [], []>} : vector<16x16xf32>, vector<16x8xf32>, vector<16x8xf32> -> vector<16x8xf32>
    %452 = vector.extract_strided_slice %427 {offsets = [0, 8], sizes = [16, 8], strides = [1, 1]} : vector<16x32xf32> to vector<16x8xf32>
    %453 = vector.extract_strided_slice %428 {offsets = [0, 8], sizes = [16, 8], strides = [1, 1]} : vector<16x32xf32> to vector<16x8xf32>
    %454 = tpu.transpose %453, [1, 0] : vector<16x8xf32> -> vector<8x16xf32>
    %cst_216 = arith.constant dense<0.000000e+00> : vector<16x16xf32>
    %455 = tpu.matmul %452, %454, %cst_216 {dimension_numbers = #tpu.dot_dimension_numbers<[1], [0], [0], [1], [0, 0, 1, 1], [], []>} : vector<16x8xf32>, vector<8x16xf32>, vector<16x16xf32> -> vector<16x16xf32>
    %cst_217 = arith.constant 0.353553385 : f32
    %456 = vector.broadcast %cst_217 : f32 to vector<16x16xf32>
    %457 = arith.mulf %455, %456 : vector<16x16xf32>
    %cst_218 = arith.constant 0.000000e+00 : f32
    %458 = vector.broadcast %cst_218 : f32 to vector<16x16xf32>
    %459 = arith.cmpf oeq, %385, %458 : vector<16x16xf32>
    %cst_219 = arith.constant -1.000000e+09 : f32
    %460 = vector.broadcast %cst_219 : f32 to vector<16x16xf32>
    %461 = arith.select %459, %460, %457 : vector<16x16xi1>, vector<16x16xf32>
    %cst_220 = arith.constant dense<0xFF800000> : vector<16xf32>
    %462 = vector.multi_reduction <maximumf>, %461, %cst_220 [1] : vector<16x16xf32> to vector<16xf32>
    %463 = vector.shape_cast %462 : vector<16xf32> to vector<16x1xf32>
    %464 = vector.broadcast %463 : vector<16x1xf32> to vector<16x16xf32>
    %465 = arith.subf %461, %464 : vector<16x16xf32>
    %466 = math.exp %465 : vector<16x16xf32>
    %cst_221 = arith.constant dense<0.000000e+00> : vector<16xf32>
    %467 = vector.multi_reduction <add>, %466, %cst_221 [1] : vector<16x16xf32> to vector<16xf32>
    %468 = vector.shape_cast %467 : vector<16xf32> to vector<16x1xf32>
    %469 = tpu.reciprocal %468 {approx = true} : vector<16x1xf32> -> vector<16x1xf32>
    %470 = vector.broadcast %469 : vector<16x1xf32> to vector<16x16xf32>
    %471 = arith.mulf %466, %470 : vector<16x16xf32>
    %472 = vector.extract_strided_slice %429 {offsets = [0, 8], sizes = [16, 8], strides = [1, 1]} : vector<16x32xf32> to vector<16x8xf32>
    %cst_222 = arith.constant dense<0.000000e+00> : vector<16x8xf32>
    %473 = tpu.matmul %471, %472, %cst_222 {dimension_numbers = #tpu.dot_dimension_numbers<[1], [0], [0], [1], [0, 0, 1, 1], [], []>} : vector<16x16xf32>, vector<16x8xf32>, vector<16x8xf32> -> vector<16x8xf32>
    %474 = vector.extract_strided_slice %427 {offsets = [0, 16], sizes = [16, 8], strides = [1, 1]} : vector<16x32xf32> to vector<16x8xf32>
    %475 = vector.extract_strided_slice %428 {offsets = [0, 16], sizes = [16, 8], strides = [1, 1]} : vector<16x32xf32> to vector<16x8xf32>
    %476 = tpu.transpose %475, [1, 0] : vector<16x8xf32> -> vector<8x16xf32>
    %cst_223 = arith.constant dense<0.000000e+00> : vector<16x16xf32>
    %477 = tpu.matmul %474, %476, %cst_223 {dimension_numbers = #tpu.dot_dimension_numbers<[1], [0], [0], [1], [0, 0, 1, 1], [], []>} : vector<16x8xf32>, vector<8x16xf32>, vector<16x16xf32> -> vector<16x16xf32>
    %cst_224 = arith.constant 0.353553385 : f32
    %478 = vector.broadcast %cst_224 : f32 to vector<16x16xf32>
    %479 = arith.mulf %477, %478 : vector<16x16xf32>
    %cst_225 = arith.constant 0.000000e+00 : f32
    %480 = vector.broadcast %cst_225 : f32 to vector<16x16xf32>
    %481 = arith.cmpf oeq, %385, %480 : vector<16x16xf32>
    %cst_226 = arith.constant -1.000000e+09 : f32
    %482 = vector.broadcast %cst_226 : f32 to vector<16x16xf32>
    %483 = arith.select %481, %482, %479 : vector<16x16xi1>, vector<16x16xf32>
    %cst_227 = arith.constant dense<0xFF800000> : vector<16xf32>
    %484 = vector.multi_reduction <maximumf>, %483, %cst_227 [1] : vector<16x16xf32> to vector<16xf32>
    %485 = vector.shape_cast %484 : vector<16xf32> to vector<16x1xf32>
    %486 = vector.broadcast %485 : vector<16x1xf32> to vector<16x16xf32>
    %487 = arith.subf %483, %486 : vector<16x16xf32>
    %488 = math.exp %487 : vector<16x16xf32>
    %cst_228 = arith.constant dense<0.000000e+00> : vector<16xf32>
    %489 = vector.multi_reduction <add>, %488, %cst_228 [1] : vector<16x16xf32> to vector<16xf32>
    %490 = vector.shape_cast %489 : vector<16xf32> to vector<16x1xf32>
    %491 = tpu.reciprocal %490 {approx = true} : vector<16x1xf32> -> vector<16x1xf32>
    %492 = vector.broadcast %491 : vector<16x1xf32> to vector<16x16xf32>
    %493 = arith.mulf %488, %492 : vector<16x16xf32>
    %494 = vector.extract_strided_slice %429 {offsets = [0, 16], sizes = [16, 8], strides = [1, 1]} : vector<16x32xf32> to vector<16x8xf32>
    %cst_229 = arith.constant dense<0.000000e+00> : vector<16x8xf32>
    %495 = tpu.matmul %493, %494, %cst_229 {dimension_numbers = #tpu.dot_dimension_numbers<[1], [0], [0], [1], [0, 0, 1, 1], [], []>} : vector<16x16xf32>, vector<16x8xf32>, vector<16x8xf32> -> vector<16x8xf32>
    %496 = vector.extract_strided_slice %427 {offsets = [0, 24], sizes = [16, 8], strides = [1, 1]} : vector<16x32xf32> to vector<16x8xf32>
    %497 = vector.extract_strided_slice %428 {offsets = [0, 24], sizes = [16, 8], strides = [1, 1]} : vector<16x32xf32> to vector<16x8xf32>
    %498 = tpu.transpose %497, [1, 0] : vector<16x8xf32> -> vector<8x16xf32>
    %cst_230 = arith.constant dense<0.000000e+00> : vector<16x16xf32>
    %499 = tpu.matmul %496, %498, %cst_230 {dimension_numbers = #tpu.dot_dimension_numbers<[1], [0], [0], [1], [0, 0, 1, 1], [], []>} : vector<16x8xf32>, vector<8x16xf32>, vector<16x16xf32> -> vector<16x16xf32>
    %cst_231 = arith.constant 0.353553385 : f32
    %500 = vector.broadcast %cst_231 : f32 to vector<16x16xf32>
    %501 = arith.mulf %499, %500 : vector<16x16xf32>
    %cst_232 = arith.constant 0.000000e+00 : f32
    %502 = vector.broadcast %cst_232 : f32 to vector<16x16xf32>
    %503 = arith.cmpf oeq, %385, %502 : vector<16x16xf32>
    %cst_233 = arith.constant -1.000000e+09 : f32
    %504 = vector.broadcast %cst_233 : f32 to vector<16x16xf32>
    %505 = arith.select %503, %504, %501 : vector<16x16xi1>, vector<16x16xf32>
    %cst_234 = arith.constant dense<0xFF800000> : vector<16xf32>
    %506 = vector.multi_reduction <maximumf>, %505, %cst_234 [1] : vector<16x16xf32> to vector<16xf32>
    %507 = vector.shape_cast %506 : vector<16xf32> to vector<16x1xf32>
    %508 = vector.broadcast %507 : vector<16x1xf32> to vector<16x16xf32>
    %509 = arith.subf %505, %508 : vector<16x16xf32>
    %510 = math.exp %509 : vector<16x16xf32>
    %cst_235 = arith.constant dense<0.000000e+00> : vector<16xf32>
    %511 = vector.multi_reduction <add>, %510, %cst_235 [1] : vector<16x16xf32> to vector<16xf32>
    %512 = vector.shape_cast %511 : vector<16xf32> to vector<16x1xf32>
    %513 = tpu.reciprocal %512 {approx = true} : vector<16x1xf32> -> vector<16x1xf32>
    %514 = vector.broadcast %513 : vector<16x1xf32> to vector<16x16xf32>
    %515 = arith.mulf %510, %514 : vector<16x16xf32>
    %516 = vector.extract_strided_slice %429 {offsets = [0, 24], sizes = [16, 8], strides = [1, 1]} : vector<16x32xf32> to vector<16x8xf32>
    %cst_236 = arith.constant dense<0.000000e+00> : vector<16x8xf32>
    %517 = tpu.matmul %515, %516, %cst_236 {dimension_numbers = #tpu.dot_dimension_numbers<[1], [0], [0], [1], [0, 0, 1, 1], [], []>} : vector<16x16xf32>, vector<16x8xf32>, vector<16x8xf32> -> vector<16x8xf32>
    %518 = tpu.concatenate %451, %473, %495, %517 in 1 : vector<16x8xf32>, vector<16x8xf32>, vector<16x8xf32>, vector<16x8xf32> -> vector<16x32xf32>
    %cst_237 = arith.constant dense<0.000000e+00> : vector<16x32xf32>
    %519 = tpu.matmul %518, %421, %cst_237 {dimension_numbers = #tpu.dot_dimension_numbers<[1], [0], [0], [1], [0, 0, 1, 1], [], []>} : vector<16x32xf32>, vector<32x32xf32>, vector<16x32xf32> -> vector<16x32xf32>
    %520 = vector.broadcast %423 : vector<1x32xf32> to vector<16x32xf32>
    %521 = arith.addf %519, %520 : vector<16x32xf32>
    %522 = arith.addf %383, %521 : vector<16x32xf32>
    %c0_238 = arith.constant 0 : index
    %c0_239 = arith.constant 0 : index
    %c0_240 = arith.constant 0 : index
    %523 = vector.load %arg35[%c0_238, %c0_239, %c0_240] : memref<2x1x32xf32, #tpu.memory_space<vmem>>, vector<1x1x32xf32>
    %524 = vector.shape_cast %523 : vector<1x1x32xf32> to vector<1x32xf32>
    %c0_241 = arith.constant 0 : index
    %c0_242 = arith.constant 0 : index
    %c0_243 = arith.constant 0 : index
    %525 = vector.load %arg36[%c0_241, %c0_242, %c0_243] : memref<2x1x32xf32, #tpu.memory_space<vmem>>, vector<1x1x32xf32>
    %526 = vector.shape_cast %525 : vector<1x1x32xf32> to vector<1x32xf32>
    %cst_244 = arith.constant dense<0.000000e+00> : vector<16xf32>
    %527 = vector.multi_reduction <add>, %522, %cst_244 [1] : vector<16x32xf32> to vector<16xf32>
    %528 = vector.shape_cast %527 : vector<16xf32> to vector<16x1xf32>
    %cst_245 = arith.constant 3.200000e+01 : f32
    %529 = vector.broadcast %cst_245 : f32 to vector<16x1xf32>
    %530 = arith.divf %528, %529 : vector<16x1xf32>
    %531 = vector.broadcast %530 : vector<16x1xf32> to vector<16x32xf32>
    %532 = arith.subf %522, %531 : vector<16x32xf32>
    %533 = arith.mulf %532, %532 : vector<16x32xf32>
    %cst_246 = arith.constant dense<0.000000e+00> : vector<16xf32>
    %534 = vector.multi_reduction <add>, %533, %cst_246 [1] : vector<16x32xf32> to vector<16xf32>
    %535 = vector.shape_cast %534 : vector<16xf32> to vector<16x1xf32>
    %cst_247 = arith.constant 3.100000e+01 : f32
    %536 = vector.broadcast %cst_247 : f32 to vector<16x1xf32>
    %537 = arith.divf %535, %536 : vector<16x1xf32>
    %538 = math.sqrt %537 : vector<16x1xf32>
    %cst_248 = arith.constant 9.99999997E-7 : f32
    %539 = vector.broadcast %cst_248 : f32 to vector<16x1xf32>
    %540 = arith.addf %538, %539 : vector<16x1xf32>
    %cst_249 = arith.constant 1.000000e+00 : f32
    %541 = vector.broadcast %cst_249 : f32 to vector<16x1xf32>
    %542 = arith.divf %541, %540 : vector<16x1xf32>
    %543 = vector.broadcast %524 : vector<1x32xf32> to vector<16x32xf32>
    %544 = vector.broadcast %542 : vector<16x1xf32> to vector<16x32xf32>
    %545 = arith.mulf %543, %544 : vector<16x32xf32>
    %546 = arith.mulf %532, %545 : vector<16x32xf32>
    %547 = vector.broadcast %526 : vector<1x32xf32> to vector<16x32xf32>
    %548 = arith.addf %546, %547 : vector<16x32xf32>
    %c0_250 = arith.constant 0 : index
    %c0_251 = arith.constant 0 : index
    %c0_252 = arith.constant 0 : index
    %549 = vector.load %arg23[%c0_250, %c0_251, %c0_252] : memref<2x32x32xf32, #tpu.memory_space<vmem>>, vector<1x32x32xf32>
    %550 = vector.shape_cast %549 : vector<1x32x32xf32> to vector<32x32xf32>
    %c0_253 = arith.constant 0 : index
    %c0_254 = arith.constant 0 : index
    %c0_255 = arith.constant 0 : index
    %551 = vector.load %arg24[%c0_253, %c0_254, %c0_255] : memref<2x1x32xf32, #tpu.memory_space<vmem>>, vector<1x1x32xf32>
    %552 = vector.shape_cast %551 : vector<1x1x32xf32> to vector<1x32xf32>
    %c0_256 = arith.constant 0 : index
    %c0_257 = arith.constant 0 : index
    %c0_258 = arith.constant 0 : index
    %553 = vector.load %arg25[%c0_256, %c0_257, %c0_258] : memref<2x32x64xf32, #tpu.memory_space<vmem>>, vector<1x32x64xf32>
    %554 = vector.shape_cast %553 : vector<1x32x64xf32> to vector<32x64xf32>
    %c0_259 = arith.constant 0 : index
    %c0_260 = arith.constant 0 : index
    %c0_261 = arith.constant 0 : index
    %555 = vector.load %arg26[%c0_259, %c0_260, %c0_261] : memref<2x1x64xf32, #tpu.memory_space<vmem>>, vector<1x1x64xf32>
    %556 = vector.shape_cast %555 : vector<1x1x64xf32> to vector<1x64xf32>
    %c0_262 = arith.constant 0 : index
    %c0_263 = arith.constant 0 : index
    %c0_264 = arith.constant 0 : index
    %557 = vector.load %arg27[%c0_262, %c0_263, %c0_264] : memref<2x32x32xf32, #tpu.memory_space<vmem>>, vector<1x32x32xf32>
    %558 = vector.shape_cast %557 : vector<1x32x32xf32> to vector<32x32xf32>
    %c0_265 = arith.constant 0 : index
    %c0_266 = arith.constant 0 : index
    %c0_267 = arith.constant 0 : index
    %559 = vector.load %arg28[%c0_265, %c0_266, %c0_267] : memref<2x1x32xf32, #tpu.memory_space<vmem>>, vector<1x1x32xf32>
    %560 = vector.shape_cast %559 : vector<1x1x32xf32> to vector<1x32xf32>
    %cst_268 = arith.constant dense<0.000000e+00> : vector<16x32xf32>
    %561 = tpu.matmul %548, %550, %cst_268 {dimension_numbers = #tpu.dot_dimension_numbers<[1], [0], [0], [1], [0, 0, 1, 1], [], []>} : vector<16x32xf32>, vector<32x32xf32>, vector<16x32xf32> -> vector<16x32xf32>
    %562 = vector.broadcast %552 : vector<1x32xf32> to vector<16x32xf32>
    %563 = arith.addf %561, %562 : vector<16x32xf32>
    %cst_269 = arith.constant dense<0.000000e+00> : vector<16x64xf32>
    %564 = tpu.matmul %381, %554, %cst_269 {dimension_numbers = #tpu.dot_dimension_numbers<[1], [0], [0], [1], [0, 0, 1, 1], [], []>} : vector<16x32xf32>, vector<32x64xf32>, vector<16x64xf32> -> vector<16x64xf32>
    %565 = vector.broadcast %556 : vector<1x64xf32> to vector<16x64xf32>
    %566 = arith.addf %564, %565 : vector<16x64xf32>
    %567 = vector.extract_strided_slice %566 {offsets = [0, 0], sizes = [16, 32], strides = [1, 1]} : vector<16x64xf32> to vector<16x32xf32>
    %568 = vector.extract_strided_slice %566 {offsets = [0, 32], sizes = [16, 32], strides = [1, 1]} : vector<16x64xf32> to vector<16x32xf32>
    %569 = vector.extract_strided_slice %563 {offsets = [0, 0], sizes = [16, 8], strides = [1, 1]} : vector<16x32xf32> to vector<16x8xf32>
    %570 = vector.extract_strided_slice %567 {offsets = [0, 0], sizes = [16, 8], strides = [1, 1]} : vector<16x32xf32> to vector<16x8xf32>
    %571 = tpu.transpose %570, [1, 0] : vector<16x8xf32> -> vector<8x16xf32>
    %cst_270 = arith.constant dense<0.000000e+00> : vector<16x16xf32>
    %572 = tpu.matmul %569, %571, %cst_270 {dimension_numbers = #tpu.dot_dimension_numbers<[1], [0], [0], [1], [0, 0, 1, 1], [], []>} : vector<16x8xf32>, vector<8x16xf32>, vector<16x16xf32> -> vector<16x16xf32>
    %cst_271 = arith.constant 0.353553385 : f32
    %573 = vector.broadcast %cst_271 : f32 to vector<16x16xf32>
    %574 = arith.mulf %572, %573 : vector<16x16xf32>
    %cst_272 = arith.constant 0.000000e+00 : f32
    %575 = vector.broadcast %cst_272 : f32 to vector<16x16xf32>
    %576 = arith.cmpf oeq, %389, %575 : vector<16x16xf32>
    %cst_273 = arith.constant -1.000000e+09 : f32
    %577 = vector.broadcast %cst_273 : f32 to vector<16x16xf32>
    %578 = arith.select %576, %577, %574 : vector<16x16xi1>, vector<16x16xf32>
    %cst_274 = arith.constant dense<0xFF800000> : vector<16xf32>
    %579 = vector.multi_reduction <maximumf>, %578, %cst_274 [1] : vector<16x16xf32> to vector<16xf32>
    %580 = vector.shape_cast %579 : vector<16xf32> to vector<16x1xf32>
    %581 = vector.broadcast %580 : vector<16x1xf32> to vector<16x16xf32>
    %582 = arith.subf %578, %581 : vector<16x16xf32>
    %583 = math.exp %582 : vector<16x16xf32>
    %cst_275 = arith.constant dense<0.000000e+00> : vector<16xf32>
    %584 = vector.multi_reduction <add>, %583, %cst_275 [1] : vector<16x16xf32> to vector<16xf32>
    %585 = vector.shape_cast %584 : vector<16xf32> to vector<16x1xf32>
    %586 = tpu.reciprocal %585 {approx = true} : vector<16x1xf32> -> vector<16x1xf32>
    %587 = vector.broadcast %586 : vector<16x1xf32> to vector<16x16xf32>
    %588 = arith.mulf %583, %587 : vector<16x16xf32>
    %589 = vector.extract_strided_slice %568 {offsets = [0, 0], sizes = [16, 8], strides = [1, 1]} : vector<16x32xf32> to vector<16x8xf32>
    %cst_276 = arith.constant dense<0.000000e+00> : vector<16x8xf32>
    %590 = tpu.matmul %588, %589, %cst_276 {dimension_numbers = #tpu.dot_dimension_numbers<[1], [0], [0], [1], [0, 0, 1, 1], [], []>} : vector<16x16xf32>, vector<16x8xf32>, vector<16x8xf32> -> vector<16x8xf32>
    %591 = vector.extract_strided_slice %563 {offsets = [0, 8], sizes = [16, 8], strides = [1, 1]} : vector<16x32xf32> to vector<16x8xf32>
    %592 = vector.extract_strided_slice %567 {offsets = [0, 8], sizes = [16, 8], strides = [1, 1]} : vector<16x32xf32> to vector<16x8xf32>
    %593 = tpu.transpose %592, [1, 0] : vector<16x8xf32> -> vector<8x16xf32>
    %cst_277 = arith.constant dense<0.000000e+00> : vector<16x16xf32>
    %594 = tpu.matmul %591, %593, %cst_277 {dimension_numbers = #tpu.dot_dimension_numbers<[1], [0], [0], [1], [0, 0, 1, 1], [], []>} : vector<16x8xf32>, vector<8x16xf32>, vector<16x16xf32> -> vector<16x16xf32>
    %cst_278 = arith.constant 0.353553385 : f32
    %595 = vector.broadcast %cst_278 : f32 to vector<16x16xf32>
    %596 = arith.mulf %594, %595 : vector<16x16xf32>
    %cst_279 = arith.constant 0.000000e+00 : f32
    %597 = vector.broadcast %cst_279 : f32 to vector<16x16xf32>
    %598 = arith.cmpf oeq, %389, %597 : vector<16x16xf32>
    %cst_280 = arith.constant -1.000000e+09 : f32
    %599 = vector.broadcast %cst_280 : f32 to vector<16x16xf32>
    %600 = arith.select %598, %599, %596 : vector<16x16xi1>, vector<16x16xf32>
    %cst_281 = arith.constant dense<0xFF800000> : vector<16xf32>
    %601 = vector.multi_reduction <maximumf>, %600, %cst_281 [1] : vector<16x16xf32> to vector<16xf32>
    %602 = vector.shape_cast %601 : vector<16xf32> to vector<16x1xf32>
    %603 = vector.broadcast %602 : vector<16x1xf32> to vector<16x16xf32>
    %604 = arith.subf %600, %603 : vector<16x16xf32>
    %605 = math.exp %604 : vector<16x16xf32>
    %cst_282 = arith.constant dense<0.000000e+00> : vector<16xf32>
    %606 = vector.multi_reduction <add>, %605, %cst_282 [1] : vector<16x16xf32> to vector<16xf32>
    %607 = vector.shape_cast %606 : vector<16xf32> to vector<16x1xf32>
    %608 = tpu.reciprocal %607 {approx = true} : vector<16x1xf32> -> vector<16x1xf32>
    %609 = vector.broadcast %608 : vector<16x1xf32> to vector<16x16xf32>
    %610 = arith.mulf %605, %609 : vector<16x16xf32>
    %611 = vector.extract_strided_slice %568 {offsets = [0, 8], sizes = [16, 8], strides = [1, 1]} : vector<16x32xf32> to vector<16x8xf32>
    %cst_283 = arith.constant dense<0.000000e+00> : vector<16x8xf32>
    %612 = tpu.matmul %610, %611, %cst_283 {dimension_numbers = #tpu.dot_dimension_numbers<[1], [0], [0], [1], [0, 0, 1, 1], [], []>} : vector<16x16xf32>, vector<16x8xf32>, vector<16x8xf32> -> vector<16x8xf32>
    %613 = vector.extract_strided_slice %563 {offsets = [0, 16], sizes = [16, 8], strides = [1, 1]} : vector<16x32xf32> to vector<16x8xf32>
    %614 = vector.extract_strided_slice %567 {offsets = [0, 16], sizes = [16, 8], strides = [1, 1]} : vector<16x32xf32> to vector<16x8xf32>
    %615 = tpu.transpose %614, [1, 0] : vector<16x8xf32> -> vector<8x16xf32>
    %cst_284 = arith.constant dense<0.000000e+00> : vector<16x16xf32>
    %616 = tpu.matmul %613, %615, %cst_284 {dimension_numbers = #tpu.dot_dimension_numbers<[1], [0], [0], [1], [0, 0, 1, 1], [], []>} : vector<16x8xf32>, vector<8x16xf32>, vector<16x16xf32> -> vector<16x16xf32>
    %cst_285 = arith.constant 0.353553385 : f32
    %617 = vector.broadcast %cst_285 : f32 to vector<16x16xf32>
    %618 = arith.mulf %616, %617 : vector<16x16xf32>
    %cst_286 = arith.constant 0.000000e+00 : f32
    %619 = vector.broadcast %cst_286 : f32 to vector<16x16xf32>
    %620 = arith.cmpf oeq, %389, %619 : vector<16x16xf32>
    %cst_287 = arith.constant -1.000000e+09 : f32
    %621 = vector.broadcast %cst_287 : f32 to vector<16x16xf32>
    %622 = arith.select %620, %621, %618 : vector<16x16xi1>, vector<16x16xf32>
    %cst_288 = arith.constant dense<0xFF800000> : vector<16xf32>
    %623 = vector.multi_reduction <maximumf>, %622, %cst_288 [1] : vector<16x16xf32> to vector<16xf32>
    %624 = vector.shape_cast %623 : vector<16xf32> to vector<16x1xf32>
    %625 = vector.broadcast %624 : vector<16x1xf32> to vector<16x16xf32>
    %626 = arith.subf %622, %625 : vector<16x16xf32>
    %627 = math.exp %626 : vector<16x16xf32>
    %cst_289 = arith.constant dense<0.000000e+00> : vector<16xf32>
    %628 = vector.multi_reduction <add>, %627, %cst_289 [1] : vector<16x16xf32> to vector<16xf32>
    %629 = vector.shape_cast %628 : vector<16xf32> to vector<16x1xf32>
    %630 = tpu.reciprocal %629 {approx = true} : vector<16x1xf32> -> vector<16x1xf32>
    %631 = vector.broadcast %630 : vector<16x1xf32> to vector<16x16xf32>
    %632 = arith.mulf %627, %631 : vector<16x16xf32>
    %633 = vector.extract_strided_slice %568 {offsets = [0, 16], sizes = [16, 8], strides = [1, 1]} : vector<16x32xf32> to vector<16x8xf32>
    %cst_290 = arith.constant dense<0.000000e+00> : vector<16x8xf32>
    %634 = tpu.matmul %632, %633, %cst_290 {dimension_numbers = #tpu.dot_dimension_numbers<[1], [0], [0], [1], [0, 0, 1, 1], [], []>} : vector<16x16xf32>, vector<16x8xf32>, vector<16x8xf32> -> vector<16x8xf32>
    %635 = vector.extract_strided_slice %563 {offsets = [0, 24], sizes = [16, 8], strides = [1, 1]} : vector<16x32xf32> to vector<16x8xf32>
    %636 = vector.extract_strided_slice %567 {offsets = [0, 24], sizes = [16, 8], strides = [1, 1]} : vector<16x32xf32> to vector<16x8xf32>
    %637 = tpu.transpose %636, [1, 0] : vector<16x8xf32> -> vector<8x16xf32>
    %cst_291 = arith.constant dense<0.000000e+00> : vector<16x16xf32>
    %638 = tpu.matmul %635, %637, %cst_291 {dimension_numbers = #tpu.dot_dimension_numbers<[1], [0], [0], [1], [0, 0, 1, 1], [], []>} : vector<16x8xf32>, vector<8x16xf32>, vector<16x16xf32> -> vector<16x16xf32>
    %cst_292 = arith.constant 0.353553385 : f32
    %639 = vector.broadcast %cst_292 : f32 to vector<16x16xf32>
    %640 = arith.mulf %638, %639 : vector<16x16xf32>
    %cst_293 = arith.constant 0.000000e+00 : f32
    %641 = vector.broadcast %cst_293 : f32 to vector<16x16xf32>
    %642 = arith.cmpf oeq, %389, %641 : vector<16x16xf32>
    %cst_294 = arith.constant -1.000000e+09 : f32
    %643 = vector.broadcast %cst_294 : f32 to vector<16x16xf32>
    %644 = arith.select %642, %643, %640 : vector<16x16xi1>, vector<16x16xf32>
    %cst_295 = arith.constant dense<0xFF800000> : vector<16xf32>
    %645 = vector.multi_reduction <maximumf>, %644, %cst_295 [1] : vector<16x16xf32> to vector<16xf32>
    %646 = vector.shape_cast %645 : vector<16xf32> to vector<16x1xf32>
    %647 = vector.broadcast %646 : vector<16x1xf32> to vector<16x16xf32>
    %648 = arith.subf %644, %647 : vector<16x16xf32>
    %649 = math.exp %648 : vector<16x16xf32>
    %cst_296 = arith.constant dense<0.000000e+00> : vector<16xf32>
    %650 = vector.multi_reduction <add>, %649, %cst_296 [1] : vector<16x16xf32> to vector<16xf32>
    %651 = vector.shape_cast %650 : vector<16xf32> to vector<16x1xf32>
    %652 = tpu.reciprocal %651 {approx = true} : vector<16x1xf32> -> vector<16x1xf32>
    %653 = vector.broadcast %652 : vector<16x1xf32> to vector<16x16xf32>
    %654 = arith.mulf %649, %653 : vector<16x16xf32>
    %655 = vector.extract_strided_slice %568 {offsets = [0, 24], sizes = [16, 8], strides = [1, 1]} : vector<16x32xf32> to vector<16x8xf32>
    %cst_297 = arith.constant dense<0.000000e+00> : vector<16x8xf32>
    %656 = tpu.matmul %654, %655, %cst_297 {dimension_numbers = #tpu.dot_dimension_numbers<[1], [0], [0], [1], [0, 0, 1, 1], [], []>} : vector<16x16xf32>, vector<16x8xf32>, vector<16x8xf32> -> vector<16x8xf32>
    %657 = tpu.concatenate %590, %612, %634, %656 in 1 : vector<16x8xf32>, vector<16x8xf32>, vector<16x8xf32>, vector<16x8xf32> -> vector<16x32xf32>
    %cst_298 = arith.constant dense<0.000000e+00> : vector<16x32xf32>
    %658 = tpu.matmul %657, %558, %cst_298 {dimension_numbers = #tpu.dot_dimension_numbers<[1], [0], [0], [1], [0, 0, 1, 1], [], []>} : vector<16x32xf32>, vector<32x32xf32>, vector<16x32xf32> -> vector<16x32xf32>
    %659 = vector.broadcast %560 : vector<1x32xf32> to vector<16x32xf32>
    %660 = arith.addf %658, %659 : vector<16x32xf32>
    %661 = arith.addf %522, %660 : vector<16x32xf32>
    %c0_299 = arith.constant 0 : index
    %c0_300 = arith.constant 0 : index
    %c0_301 = arith.constant 0 : index
    %662 = vector.load %arg37[%c0_299, %c0_300, %c0_301] : memref<2x1x32xf32, #tpu.memory_space<vmem>>, vector<1x1x32xf32>
    %663 = vector.shape_cast %662 : vector<1x1x32xf32> to vector<1x32xf32>
    %c0_302 = arith.constant 0 : index
    %c0_303 = arith.constant 0 : index
    %c0_304 = arith.constant 0 : index
    %664 = vector.load %arg38[%c0_302, %c0_303, %c0_304] : memref<2x1x32xf32, #tpu.memory_space<vmem>>, vector<1x1x32xf32>
    %665 = vector.shape_cast %664 : vector<1x1x32xf32> to vector<1x32xf32>
    %cst_305 = arith.constant dense<0.000000e+00> : vector<16xf32>
    %666 = vector.multi_reduction <add>, %661, %cst_305 [1] : vector<16x32xf32> to vector<16xf32>
    %667 = vector.shape_cast %666 : vector<16xf32> to vector<16x1xf32>
    %cst_306 = arith.constant 3.200000e+01 : f32
    %668 = vector.broadcast %cst_306 : f32 to vector<16x1xf32>
    %669 = arith.divf %667, %668 : vector<16x1xf32>
    %670 = vector.broadcast %669 : vector<16x1xf32> to vector<16x32xf32>
    %671 = arith.subf %661, %670 : vector<16x32xf32>
    %672 = arith.mulf %671, %671 : vector<16x32xf32>
    %cst_307 = arith.constant dense<0.000000e+00> : vector<16xf32>
    %673 = vector.multi_reduction <add>, %672, %cst_307 [1] : vector<16x32xf32> to vector<16xf32>
    %674 = vector.shape_cast %673 : vector<16xf32> to vector<16x1xf32>
    %cst_308 = arith.constant 3.100000e+01 : f32
    %675 = vector.broadcast %cst_308 : f32 to vector<16x1xf32>
    %676 = arith.divf %674, %675 : vector<16x1xf32>
    %677 = math.sqrt %676 : vector<16x1xf32>
    %cst_309 = arith.constant 9.99999997E-7 : f32
    %678 = vector.broadcast %cst_309 : f32 to vector<16x1xf32>
    %679 = arith.addf %677, %678 : vector<16x1xf32>
    %cst_310 = arith.constant 1.000000e+00 : f32
    %680 = vector.broadcast %cst_310 : f32 to vector<16x1xf32>
    %681 = arith.divf %680, %679 : vector<16x1xf32>
    %682 = vector.broadcast %663 : vector<1x32xf32> to vector<16x32xf32>
    %683 = vector.broadcast %681 : vector<16x1xf32> to vector<16x32xf32>
    %684 = arith.mulf %682, %683 : vector<16x32xf32>
    %685 = arith.mulf %671, %684 : vector<16x32xf32>
    %686 = vector.broadcast %665 : vector<1x32xf32> to vector<16x32xf32>
    %687 = arith.addf %685, %686 : vector<16x32xf32>
    %c0_311 = arith.constant 0 : index
    %c0_312 = arith.constant 0 : index
    %c0_313 = arith.constant 0 : index
    %688 = vector.load %arg29[%c0_311, %c0_312, %c0_313] : memref<2x32x64xf32, #tpu.memory_space<vmem>>, vector<1x32x64xf32>
    %689 = vector.shape_cast %688 : vector<1x32x64xf32> to vector<32x64xf32>
    %c0_314 = arith.constant 0 : index
    %c0_315 = arith.constant 0 : index
    %c0_316 = arith.constant 0 : index
    %690 = vector.load %arg30[%c0_314, %c0_315, %c0_316] : memref<2x1x64xf32, #tpu.memory_space<vmem>>, vector<1x1x64xf32>
    %691 = vector.shape_cast %690 : vector<1x1x64xf32> to vector<1x64xf32>
    %c0_317 = arith.constant 0 : index
    %c0_318 = arith.constant 0 : index
    %c0_319 = arith.constant 0 : index
    %692 = vector.load %arg31[%c0_317, %c0_318, %c0_319] : memref<2x64x32xf32, #tpu.memory_space<vmem>>, vector<1x64x32xf32>
    %693 = vector.shape_cast %692 : vector<1x64x32xf32> to vector<64x32xf32>
    %c0_320 = arith.constant 0 : index
    %c0_321 = arith.constant 0 : index
    %c0_322 = arith.constant 0 : index
    %694 = vector.load %arg32[%c0_320, %c0_321, %c0_322] : memref<2x1x32xf32, #tpu.memory_space<vmem>>, vector<1x1x32xf32>
    %695 = vector.shape_cast %694 : vector<1x1x32xf32> to vector<1x32xf32>
    %cst_323 = arith.constant dense<0.000000e+00> : vector<16x64xf32>
    %696 = tpu.matmul %687, %689, %cst_323 {dimension_numbers = #tpu.dot_dimension_numbers<[1], [0], [0], [1], [0, 0, 1, 1], [], []>} : vector<16x32xf32>, vector<32x64xf32>, vector<16x64xf32> -> vector<16x64xf32>
    %697 = vector.broadcast %691 : vector<1x64xf32> to vector<16x64xf32>
    %698 = arith.addf %696, %697 : vector<16x64xf32>
    %cst_324 = arith.constant 0.000000e+00 : f32
    %699 = vector.broadcast %cst_324 : f32 to vector<16x64xf32>
    %700 = arith.maximumf %698, %699 : vector<16x64xf32>
    %cst_325 = arith.constant dense<0.000000e+00> : vector<16x32xf32>
    %701 = tpu.matmul %700, %693, %cst_325 {dimension_numbers = #tpu.dot_dimension_numbers<[1], [0], [0], [1], [0, 0, 1, 1], [], []>} : vector<16x64xf32>, vector<64x32xf32>, vector<16x32xf32> -> vector<16x32xf32>
    %702 = vector.broadcast %695 : vector<1x32xf32> to vector<16x32xf32>
    %703 = arith.addf %701, %702 : vector<16x32xf32>
    %704 = arith.addf %661, %703 : vector<16x32xf32>
    %c1_326 = arith.constant 1 : index
    %c0_327 = arith.constant 0 : index
    %c0_328 = arith.constant 0 : index
    %705 = vector.load %arg33[%c1_326, %c0_327, %c0_328] : memref<2x1x32xf32, #tpu.memory_space<vmem>>, vector<1x1x32xf32>
    %706 = vector.shape_cast %705 : vector<1x1x32xf32> to vector<1x32xf32>
    %c1_329 = arith.constant 1 : index
    %c0_330 = arith.constant 0 : index
    %c0_331 = arith.constant 0 : index
    %707 = vector.load %arg34[%c1_329, %c0_330, %c0_331] : memref<2x1x32xf32, #tpu.memory_space<vmem>>, vector<1x1x32xf32>
    %708 = vector.shape_cast %707 : vector<1x1x32xf32> to vector<1x32xf32>
    %cst_332 = arith.constant dense<0.000000e+00> : vector<16xf32>
    %709 = vector.multi_reduction <add>, %704, %cst_332 [1] : vector<16x32xf32> to vector<16xf32>
    %710 = vector.shape_cast %709 : vector<16xf32> to vector<16x1xf32>
    %cst_333 = arith.constant 3.200000e+01 : f32
    %711 = vector.broadcast %cst_333 : f32 to vector<16x1xf32>
    %712 = arith.divf %710, %711 : vector<16x1xf32>
    %713 = vector.broadcast %712 : vector<16x1xf32> to vector<16x32xf32>
    %714 = arith.subf %704, %713 : vector<16x32xf32>
    %715 = arith.mulf %714, %714 : vector<16x32xf32>
    %cst_334 = arith.constant dense<0.000000e+00> : vector<16xf32>
    %716 = vector.multi_reduction <add>, %715, %cst_334 [1] : vector<16x32xf32> to vector<16xf32>
    %717 = vector.shape_cast %716 : vector<16xf32> to vector<16x1xf32>
    %cst_335 = arith.constant 3.100000e+01 : f32
    %718 = vector.broadcast %cst_335 : f32 to vector<16x1xf32>
    %719 = arith.divf %717, %718 : vector<16x1xf32>
    %720 = math.sqrt %719 : vector<16x1xf32>
    %cst_336 = arith.constant 9.99999997E-7 : f32
    %721 = vector.broadcast %cst_336 : f32 to vector<16x1xf32>
    %722 = arith.addf %720, %721 : vector<16x1xf32>
    %cst_337 = arith.constant 1.000000e+00 : f32
    %723 = vector.broadcast %cst_337 : f32 to vector<16x1xf32>
    %724 = arith.divf %723, %722 : vector<16x1xf32>
    %725 = vector.broadcast %706 : vector<1x32xf32> to vector<16x32xf32>
    %726 = vector.broadcast %724 : vector<16x1xf32> to vector<16x32xf32>
    %727 = arith.mulf %725, %726 : vector<16x32xf32>
    %728 = arith.mulf %714, %727 : vector<16x32xf32>
    %729 = vector.broadcast %708 : vector<1x32xf32> to vector<16x32xf32>
    %730 = arith.addf %728, %729 : vector<16x32xf32>
    %c1_338 = arith.constant 1 : index
    %c0_339 = arith.constant 0 : index
    %c0_340 = arith.constant 0 : index
    %731 = vector.load %arg19[%c1_338, %c0_339, %c0_340] : memref<2x32x96xf32, #tpu.memory_space<vmem>>, vector<1x32x96xf32>
    %732 = vector.shape_cast %731 : vector<1x32x96xf32> to vector<32x96xf32>
    %c1_341 = arith.constant 1 : index
    %c0_342 = arith.constant 0 : index
    %c0_343 = arith.constant 0 : index
    %733 = vector.load %arg20[%c1_341, %c0_342, %c0_343] : memref<2x1x96xf32, #tpu.memory_space<vmem>>, vector<1x1x96xf32>
    %734 = vector.shape_cast %733 : vector<1x1x96xf32> to vector<1x96xf32>
    %c1_344 = arith.constant 1 : index
    %c0_345 = arith.constant 0 : index
    %c0_346 = arith.constant 0 : index
    %735 = vector.load %arg21[%c1_344, %c0_345, %c0_346] : memref<2x32x32xf32, #tpu.memory_space<vmem>>, vector<1x32x32xf32>
    %736 = vector.shape_cast %735 : vector<1x32x32xf32> to vector<32x32xf32>
    %c1_347 = arith.constant 1 : index
    %c0_348 = arith.constant 0 : index
    %c0_349 = arith.constant 0 : index
    %737 = vector.load %arg22[%c1_347, %c0_348, %c0_349] : memref<2x1x32xf32, #tpu.memory_space<vmem>>, vector<1x1x32xf32>
    %738 = vector.shape_cast %737 : vector<1x1x32xf32> to vector<1x32xf32>
    %cst_350 = arith.constant dense<0.000000e+00> : vector<16x96xf32>
    %739 = tpu.matmul %730, %732, %cst_350 {dimension_numbers = #tpu.dot_dimension_numbers<[1], [0], [0], [1], [0, 0, 1, 1], [], []>} : vector<16x32xf32>, vector<32x96xf32>, vector<16x96xf32> -> vector<16x96xf32>
    %740 = vector.broadcast %734 : vector<1x96xf32> to vector<16x96xf32>
    %741 = arith.addf %739, %740 : vector<16x96xf32>
    %742 = vector.extract_strided_slice %741 {offsets = [0, 0], sizes = [16, 32], strides = [1, 1]} : vector<16x96xf32> to vector<16x32xf32>
    %743 = vector.extract_strided_slice %741 {offsets = [0, 32], sizes = [16, 32], strides = [1, 1]} : vector<16x96xf32> to vector<16x32xf32>
    %744 = vector.extract_strided_slice %741 {offsets = [0, 64], sizes = [16, 32], strides = [1, 1]} : vector<16x96xf32> to vector<16x32xf32>
    %745 = vector.extract_strided_slice %742 {offsets = [0, 0], sizes = [16, 8], strides = [1, 1]} : vector<16x32xf32> to vector<16x8xf32>
    %746 = vector.extract_strided_slice %743 {offsets = [0, 0], sizes = [16, 8], strides = [1, 1]} : vector<16x32xf32> to vector<16x8xf32>
    %747 = tpu.transpose %746, [1, 0] : vector<16x8xf32> -> vector<8x16xf32>
    %cst_351 = arith.constant dense<0.000000e+00> : vector<16x16xf32>
    %748 = tpu.matmul %745, %747, %cst_351 {dimension_numbers = #tpu.dot_dimension_numbers<[1], [0], [0], [1], [0, 0, 1, 1], [], []>} : vector<16x8xf32>, vector<8x16xf32>, vector<16x16xf32> -> vector<16x16xf32>
    %cst_352 = arith.constant 0.353553385 : f32
    %749 = vector.broadcast %cst_352 : f32 to vector<16x16xf32>
    %750 = arith.mulf %748, %749 : vector<16x16xf32>
    %cst_353 = arith.constant 0.000000e+00 : f32
    %751 = vector.broadcast %cst_353 : f32 to vector<16x16xf32>
    %752 = arith.cmpf oeq, %385, %751 : vector<16x16xf32>
    %cst_354 = arith.constant -1.000000e+09 : f32
    %753 = vector.broadcast %cst_354 : f32 to vector<16x16xf32>
    %754 = arith.select %752, %753, %750 : vector<16x16xi1>, vector<16x16xf32>
    %cst_355 = arith.constant dense<0xFF800000> : vector<16xf32>
    %755 = vector.multi_reduction <maximumf>, %754, %cst_355 [1] : vector<16x16xf32> to vector<16xf32>
    %756 = vector.shape_cast %755 : vector<16xf32> to vector<16x1xf32>
    %757 = vector.broadcast %756 : vector<16x1xf32> to vector<16x16xf32>
    %758 = arith.subf %754, %757 : vector<16x16xf32>
    %759 = math.exp %758 : vector<16x16xf32>
    %cst_356 = arith.constant dense<0.000000e+00> : vector<16xf32>
    %760 = vector.multi_reduction <add>, %759, %cst_356 [1] : vector<16x16xf32> to vector<16xf32>
    %761 = vector.shape_cast %760 : vector<16xf32> to vector<16x1xf32>
    %762 = tpu.reciprocal %761 {approx = true} : vector<16x1xf32> -> vector<16x1xf32>
    %763 = vector.broadcast %762 : vector<16x1xf32> to vector<16x16xf32>
    %764 = arith.mulf %759, %763 : vector<16x16xf32>
    %765 = vector.extract_strided_slice %744 {offsets = [0, 0], sizes = [16, 8], strides = [1, 1]} : vector<16x32xf32> to vector<16x8xf32>
    %cst_357 = arith.constant dense<0.000000e+00> : vector<16x8xf32>
    %766 = tpu.matmul %764, %765, %cst_357 {dimension_numbers = #tpu.dot_dimension_numbers<[1], [0], [0], [1], [0, 0, 1, 1], [], []>} : vector<16x16xf32>, vector<16x8xf32>, vector<16x8xf32> -> vector<16x8xf32>
    %767 = vector.extract_strided_slice %742 {offsets = [0, 8], sizes = [16, 8], strides = [1, 1]} : vector<16x32xf32> to vector<16x8xf32>
    %768 = vector.extract_strided_slice %743 {offsets = [0, 8], sizes = [16, 8], strides = [1, 1]} : vector<16x32xf32> to vector<16x8xf32>
    %769 = tpu.transpose %768, [1, 0] : vector<16x8xf32> -> vector<8x16xf32>
    %cst_358 = arith.constant dense<0.000000e+00> : vector<16x16xf32>
    %770 = tpu.matmul %767, %769, %cst_358 {dimension_numbers = #tpu.dot_dimension_numbers<[1], [0], [0], [1], [0, 0, 1, 1], [], []>} : vector<16x8xf32>, vector<8x16xf32>, vector<16x16xf32> -> vector<16x16xf32>
    %cst_359 = arith.constant 0.353553385 : f32
    %771 = vector.broadcast %cst_359 : f32 to vector<16x16xf32>
    %772 = arith.mulf %770, %771 : vector<16x16xf32>
    %cst_360 = arith.constant 0.000000e+00 : f32
    %773 = vector.broadcast %cst_360 : f32 to vector<16x16xf32>
    %774 = arith.cmpf oeq, %385, %773 : vector<16x16xf32>
    %cst_361 = arith.constant -1.000000e+09 : f32
    %775 = vector.broadcast %cst_361 : f32 to vector<16x16xf32>
    %776 = arith.select %774, %775, %772 : vector<16x16xi1>, vector<16x16xf32>
    %cst_362 = arith.constant dense<0xFF800000> : vector<16xf32>
    %777 = vector.multi_reduction <maximumf>, %776, %cst_362 [1] : vector<16x16xf32> to vector<16xf32>
    %778 = vector.shape_cast %777 : vector<16xf32> to vector<16x1xf32>
    %779 = vector.broadcast %778 : vector<16x1xf32> to vector<16x16xf32>
    %780 = arith.subf %776, %779 : vector<16x16xf32>
    %781 = math.exp %780 : vector<16x16xf32>
    %cst_363 = arith.constant dense<0.000000e+00> : vector<16xf32>
    %782 = vector.multi_reduction <add>, %781, %cst_363 [1] : vector<16x16xf32> to vector<16xf32>
    %783 = vector.shape_cast %782 : vector<16xf32> to vector<16x1xf32>
    %784 = tpu.reciprocal %783 {approx = true} : vector<16x1xf32> -> vector<16x1xf32>
    %785 = vector.broadcast %784 : vector<16x1xf32> to vector<16x16xf32>
    %786 = arith.mulf %781, %785 : vector<16x16xf32>
    %787 = vector.extract_strided_slice %744 {offsets = [0, 8], sizes = [16, 8], strides = [1, 1]} : vector<16x32xf32> to vector<16x8xf32>
    %cst_364 = arith.constant dense<0.000000e+00> : vector<16x8xf32>
    %788 = tpu.matmul %786, %787, %cst_364 {dimension_numbers = #tpu.dot_dimension_numbers<[1], [0], [0], [1], [0, 0, 1, 1], [], []>} : vector<16x16xf32>, vector<16x8xf32>, vector<16x8xf32> -> vector<16x8xf32>
    %789 = vector.extract_strided_slice %742 {offsets = [0, 16], sizes = [16, 8], strides = [1, 1]} : vector<16x32xf32> to vector<16x8xf32>
    %790 = vector.extract_strided_slice %743 {offsets = [0, 16], sizes = [16, 8], strides = [1, 1]} : vector<16x32xf32> to vector<16x8xf32>
    %791 = tpu.transpose %790, [1, 0] : vector<16x8xf32> -> vector<8x16xf32>
    %cst_365 = arith.constant dense<0.000000e+00> : vector<16x16xf32>
    %792 = tpu.matmul %789, %791, %cst_365 {dimension_numbers = #tpu.dot_dimension_numbers<[1], [0], [0], [1], [0, 0, 1, 1], [], []>} : vector<16x8xf32>, vector<8x16xf32>, vector<16x16xf32> -> vector<16x16xf32>
    %cst_366 = arith.constant 0.353553385 : f32
    %793 = vector.broadcast %cst_366 : f32 to vector<16x16xf32>
    %794 = arith.mulf %792, %793 : vector<16x16xf32>
    %cst_367 = arith.constant 0.000000e+00 : f32
    %795 = vector.broadcast %cst_367 : f32 to vector<16x16xf32>
    %796 = arith.cmpf oeq, %385, %795 : vector<16x16xf32>
    %cst_368 = arith.constant -1.000000e+09 : f32
    %797 = vector.broadcast %cst_368 : f32 to vector<16x16xf32>
    %798 = arith.select %796, %797, %794 : vector<16x16xi1>, vector<16x16xf32>
    %cst_369 = arith.constant dense<0xFF800000> : vector<16xf32>
    %799 = vector.multi_reduction <maximumf>, %798, %cst_369 [1] : vector<16x16xf32> to vector<16xf32>
    %800 = vector.shape_cast %799 : vector<16xf32> to vector<16x1xf32>
    %801 = vector.broadcast %800 : vector<16x1xf32> to vector<16x16xf32>
    %802 = arith.subf %798, %801 : vector<16x16xf32>
    %803 = math.exp %802 : vector<16x16xf32>
    %cst_370 = arith.constant dense<0.000000e+00> : vector<16xf32>
    %804 = vector.multi_reduction <add>, %803, %cst_370 [1] : vector<16x16xf32> to vector<16xf32>
    %805 = vector.shape_cast %804 : vector<16xf32> to vector<16x1xf32>
    %806 = tpu.reciprocal %805 {approx = true} : vector<16x1xf32> -> vector<16x1xf32>
    %807 = vector.broadcast %806 : vector<16x1xf32> to vector<16x16xf32>
    %808 = arith.mulf %803, %807 : vector<16x16xf32>
    %809 = vector.extract_strided_slice %744 {offsets = [0, 16], sizes = [16, 8], strides = [1, 1]} : vector<16x32xf32> to vector<16x8xf32>
    %cst_371 = arith.constant dense<0.000000e+00> : vector<16x8xf32>
    %810 = tpu.matmul %808, %809, %cst_371 {dimension_numbers = #tpu.dot_dimension_numbers<[1], [0], [0], [1], [0, 0, 1, 1], [], []>} : vector<16x16xf32>, vector<16x8xf32>, vector<16x8xf32> -> vector<16x8xf32>
    %811 = vector.extract_strided_slice %742 {offsets = [0, 24], sizes = [16, 8], strides = [1, 1]} : vector<16x32xf32> to vector<16x8xf32>
    %812 = vector.extract_strided_slice %743 {offsets = [0, 24], sizes = [16, 8], strides = [1, 1]} : vector<16x32xf32> to vector<16x8xf32>
    %813 = tpu.transpose %812, [1, 0] : vector<16x8xf32> -> vector<8x16xf32>
    %cst_372 = arith.constant dense<0.000000e+00> : vector<16x16xf32>
    %814 = tpu.matmul %811, %813, %cst_372 {dimension_numbers = #tpu.dot_dimension_numbers<[1], [0], [0], [1], [0, 0, 1, 1], [], []>} : vector<16x8xf32>, vector<8x16xf32>, vector<16x16xf32> -> vector<16x16xf32>
    %cst_373 = arith.constant 0.353553385 : f32
    %815 = vector.broadcast %cst_373 : f32 to vector<16x16xf32>
    %816 = arith.mulf %814, %815 : vector<16x16xf32>
    %cst_374 = arith.constant 0.000000e+00 : f32
    %817 = vector.broadcast %cst_374 : f32 to vector<16x16xf32>
    %818 = arith.cmpf oeq, %385, %817 : vector<16x16xf32>
    %cst_375 = arith.constant -1.000000e+09 : f32
    %819 = vector.broadcast %cst_375 : f32 to vector<16x16xf32>
    %820 = arith.select %818, %819, %816 : vector<16x16xi1>, vector<16x16xf32>
    %cst_376 = arith.constant dense<0xFF800000> : vector<16xf32>
    %821 = vector.multi_reduction <maximumf>, %820, %cst_376 [1] : vector<16x16xf32> to vector<16xf32>
    %822 = vector.shape_cast %821 : vector<16xf32> to vector<16x1xf32>
    %823 = vector.broadcast %822 : vector<16x1xf32> to vector<16x16xf32>
    %824 = arith.subf %820, %823 : vector<16x16xf32>
    %825 = math.exp %824 : vector<16x16xf32>
    %cst_377 = arith.constant dense<0.000000e+00> : vector<16xf32>
    %826 = vector.multi_reduction <add>, %825, %cst_377 [1] : vector<16x16xf32> to vector<16xf32>
    %827 = vector.shape_cast %826 : vector<16xf32> to vector<16x1xf32>
    %828 = tpu.reciprocal %827 {approx = true} : vector<16x1xf32> -> vector<16x1xf32>
    %829 = vector.broadcast %828 : vector<16x1xf32> to vector<16x16xf32>
    %830 = arith.mulf %825, %829 : vector<16x16xf32>
    %831 = vector.extract_strided_slice %744 {offsets = [0, 24], sizes = [16, 8], strides = [1, 1]} : vector<16x32xf32> to vector<16x8xf32>
    %cst_378 = arith.constant dense<0.000000e+00> : vector<16x8xf32>
    %832 = tpu.matmul %830, %831, %cst_378 {dimension_numbers = #tpu.dot_dimension_numbers<[1], [0], [0], [1], [0, 0, 1, 1], [], []>} : vector<16x16xf32>, vector<16x8xf32>, vector<16x8xf32> -> vector<16x8xf32>
    %833 = tpu.concatenate %766, %788, %810, %832 in 1 : vector<16x8xf32>, vector<16x8xf32>, vector<16x8xf32>, vector<16x8xf32> -> vector<16x32xf32>
    %cst_379 = arith.constant dense<0.000000e+00> : vector<16x32xf32>
    %834 = tpu.matmul %833, %736, %cst_379 {dimension_numbers = #tpu.dot_dimension_numbers<[1], [0], [0], [1], [0, 0, 1, 1], [], []>} : vector<16x32xf32>, vector<32x32xf32>, vector<16x32xf32> -> vector<16x32xf32>
    %835 = vector.broadcast %738 : vector<1x32xf32> to vector<16x32xf32>
    %836 = arith.addf %834, %835 : vector<16x32xf32>
    %837 = arith.addf %704, %836 : vector<16x32xf32>
    %c1_380 = arith.constant 1 : index
    %c0_381 = arith.constant 0 : index
    %c0_382 = arith.constant 0 : index
    %838 = vector.load %arg35[%c1_380, %c0_381, %c0_382] : memref<2x1x32xf32, #tpu.memory_space<vmem>>, vector<1x1x32xf32>
    %839 = vector.shape_cast %838 : vector<1x1x32xf32> to vector<1x32xf32>
    %c1_383 = arith.constant 1 : index
    %c0_384 = arith.constant 0 : index
    %c0_385 = arith.constant 0 : index
    %840 = vector.load %arg36[%c1_383, %c0_384, %c0_385] : memref<2x1x32xf32, #tpu.memory_space<vmem>>, vector<1x1x32xf32>
    %841 = vector.shape_cast %840 : vector<1x1x32xf32> to vector<1x32xf32>
    %cst_386 = arith.constant dense<0.000000e+00> : vector<16xf32>
    %842 = vector.multi_reduction <add>, %837, %cst_386 [1] : vector<16x32xf32> to vector<16xf32>
    %843 = vector.shape_cast %842 : vector<16xf32> to vector<16x1xf32>
    %cst_387 = arith.constant 3.200000e+01 : f32
    %844 = vector.broadcast %cst_387 : f32 to vector<16x1xf32>
    %845 = arith.divf %843, %844 : vector<16x1xf32>
    %846 = vector.broadcast %845 : vector<16x1xf32> to vector<16x32xf32>
    %847 = arith.subf %837, %846 : vector<16x32xf32>
    %848 = arith.mulf %847, %847 : vector<16x32xf32>
    %cst_388 = arith.constant dense<0.000000e+00> : vector<16xf32>
    %849 = vector.multi_reduction <add>, %848, %cst_388 [1] : vector<16x32xf32> to vector<16xf32>
    %850 = vector.shape_cast %849 : vector<16xf32> to vector<16x1xf32>
    %cst_389 = arith.constant 3.100000e+01 : f32
    %851 = vector.broadcast %cst_389 : f32 to vector<16x1xf32>
    %852 = arith.divf %850, %851 : vector<16x1xf32>
    %853 = math.sqrt %852 : vector<16x1xf32>
    %cst_390 = arith.constant 9.99999997E-7 : f32
    %854 = vector.broadcast %cst_390 : f32 to vector<16x1xf32>
    %855 = arith.addf %853, %854 : vector<16x1xf32>
    %cst_391 = arith.constant 1.000000e+00 : f32
    %856 = vector.broadcast %cst_391 : f32 to vector<16x1xf32>
    %857 = arith.divf %856, %855 : vector<16x1xf32>
    %858 = vector.broadcast %839 : vector<1x32xf32> to vector<16x32xf32>
    %859 = vector.broadcast %857 : vector<16x1xf32> to vector<16x32xf32>
    %860 = arith.mulf %858, %859 : vector<16x32xf32>
    %861 = arith.mulf %847, %860 : vector<16x32xf32>
    %862 = vector.broadcast %841 : vector<1x32xf32> to vector<16x32xf32>
    %863 = arith.addf %861, %862 : vector<16x32xf32>
    %c1_392 = arith.constant 1 : index
    %c0_393 = arith.constant 0 : index
    %c0_394 = arith.constant 0 : index
    %864 = vector.load %arg23[%c1_392, %c0_393, %c0_394] : memref<2x32x32xf32, #tpu.memory_space<vmem>>, vector<1x32x32xf32>
    %865 = vector.shape_cast %864 : vector<1x32x32xf32> to vector<32x32xf32>
    %c1_395 = arith.constant 1 : index
    %c0_396 = arith.constant 0 : index
    %c0_397 = arith.constant 0 : index
    %866 = vector.load %arg24[%c1_395, %c0_396, %c0_397] : memref<2x1x32xf32, #tpu.memory_space<vmem>>, vector<1x1x32xf32>
    %867 = vector.shape_cast %866 : vector<1x1x32xf32> to vector<1x32xf32>
    %c1_398 = arith.constant 1 : index
    %c0_399 = arith.constant 0 : index
    %c0_400 = arith.constant 0 : index
    %868 = vector.load %arg25[%c1_398, %c0_399, %c0_400] : memref<2x32x64xf32, #tpu.memory_space<vmem>>, vector<1x32x64xf32>
    %869 = vector.shape_cast %868 : vector<1x32x64xf32> to vector<32x64xf32>
    %c1_401 = arith.constant 1 : index
    %c0_402 = arith.constant 0 : index
    %c0_403 = arith.constant 0 : index
    %870 = vector.load %arg26[%c1_401, %c0_402, %c0_403] : memref<2x1x64xf32, #tpu.memory_space<vmem>>, vector<1x1x64xf32>
    %871 = vector.shape_cast %870 : vector<1x1x64xf32> to vector<1x64xf32>
    %c1_404 = arith.constant 1 : index
    %c0_405 = arith.constant 0 : index
    %c0_406 = arith.constant 0 : index
    %872 = vector.load %arg27[%c1_404, %c0_405, %c0_406] : memref<2x32x32xf32, #tpu.memory_space<vmem>>, vector<1x32x32xf32>
    %873 = vector.shape_cast %872 : vector<1x32x32xf32> to vector<32x32xf32>
    %c1_407 = arith.constant 1 : index
    %c0_408 = arith.constant 0 : index
    %c0_409 = arith.constant 0 : index
    %874 = vector.load %arg28[%c1_407, %c0_408, %c0_409] : memref<2x1x32xf32, #tpu.memory_space<vmem>>, vector<1x1x32xf32>
    %875 = vector.shape_cast %874 : vector<1x1x32xf32> to vector<1x32xf32>
    %cst_410 = arith.constant dense<0.000000e+00> : vector<16x32xf32>
    %876 = tpu.matmul %863, %865, %cst_410 {dimension_numbers = #tpu.dot_dimension_numbers<[1], [0], [0], [1], [0, 0, 1, 1], [], []>} : vector<16x32xf32>, vector<32x32xf32>, vector<16x32xf32> -> vector<16x32xf32>
    %877 = vector.broadcast %867 : vector<1x32xf32> to vector<16x32xf32>
    %878 = arith.addf %876, %877 : vector<16x32xf32>
    %cst_411 = arith.constant dense<0.000000e+00> : vector<16x64xf32>
    %879 = tpu.matmul %381, %869, %cst_411 {dimension_numbers = #tpu.dot_dimension_numbers<[1], [0], [0], [1], [0, 0, 1, 1], [], []>} : vector<16x32xf32>, vector<32x64xf32>, vector<16x64xf32> -> vector<16x64xf32>
    %880 = vector.broadcast %871 : vector<1x64xf32> to vector<16x64xf32>
    %881 = arith.addf %879, %880 : vector<16x64xf32>
    %882 = vector.extract_strided_slice %881 {offsets = [0, 0], sizes = [16, 32], strides = [1, 1]} : vector<16x64xf32> to vector<16x32xf32>
    %883 = vector.extract_strided_slice %881 {offsets = [0, 32], sizes = [16, 32], strides = [1, 1]} : vector<16x64xf32> to vector<16x32xf32>
    %884 = vector.extract_strided_slice %878 {offsets = [0, 0], sizes = [16, 8], strides = [1, 1]} : vector<16x32xf32> to vector<16x8xf32>
    %885 = vector.extract_strided_slice %882 {offsets = [0, 0], sizes = [16, 8], strides = [1, 1]} : vector<16x32xf32> to vector<16x8xf32>
    %886 = tpu.transpose %885, [1, 0] : vector<16x8xf32> -> vector<8x16xf32>
    %cst_412 = arith.constant dense<0.000000e+00> : vector<16x16xf32>
    %887 = tpu.matmul %884, %886, %cst_412 {dimension_numbers = #tpu.dot_dimension_numbers<[1], [0], [0], [1], [0, 0, 1, 1], [], []>} : vector<16x8xf32>, vector<8x16xf32>, vector<16x16xf32> -> vector<16x16xf32>
    %cst_413 = arith.constant 0.353553385 : f32
    %888 = vector.broadcast %cst_413 : f32 to vector<16x16xf32>
    %889 = arith.mulf %887, %888 : vector<16x16xf32>
    %cst_414 = arith.constant 0.000000e+00 : f32
    %890 = vector.broadcast %cst_414 : f32 to vector<16x16xf32>
    %891 = arith.cmpf oeq, %389, %890 : vector<16x16xf32>
    %cst_415 = arith.constant -1.000000e+09 : f32
    %892 = vector.broadcast %cst_415 : f32 to vector<16x16xf32>
    %893 = arith.select %891, %892, %889 : vector<16x16xi1>, vector<16x16xf32>
    %cst_416 = arith.constant dense<0xFF800000> : vector<16xf32>
    %894 = vector.multi_reduction <maximumf>, %893, %cst_416 [1] : vector<16x16xf32> to vector<16xf32>
    %895 = vector.shape_cast %894 : vector<16xf32> to vector<16x1xf32>
    %896 = vector.broadcast %895 : vector<16x1xf32> to vector<16x16xf32>
    %897 = arith.subf %893, %896 : vector<16x16xf32>
    %898 = math.exp %897 : vector<16x16xf32>
    %cst_417 = arith.constant dense<0.000000e+00> : vector<16xf32>
    %899 = vector.multi_reduction <add>, %898, %cst_417 [1] : vector<16x16xf32> to vector<16xf32>
    %900 = vector.shape_cast %899 : vector<16xf32> to vector<16x1xf32>
    %901 = tpu.reciprocal %900 {approx = true} : vector<16x1xf32> -> vector<16x1xf32>
    %902 = vector.broadcast %901 : vector<16x1xf32> to vector<16x16xf32>
    %903 = arith.mulf %898, %902 : vector<16x16xf32>
    %904 = vector.extract_strided_slice %883 {offsets = [0, 0], sizes = [16, 8], strides = [1, 1]} : vector<16x32xf32> to vector<16x8xf32>
    %cst_418 = arith.constant dense<0.000000e+00> : vector<16x8xf32>
    %905 = tpu.matmul %903, %904, %cst_418 {dimension_numbers = #tpu.dot_dimension_numbers<[1], [0], [0], [1], [0, 0, 1, 1], [], []>} : vector<16x16xf32>, vector<16x8xf32>, vector<16x8xf32> -> vector<16x8xf32>
    %906 = vector.extract_strided_slice %878 {offsets = [0, 8], sizes = [16, 8], strides = [1, 1]} : vector<16x32xf32> to vector<16x8xf32>
    %907 = vector.extract_strided_slice %882 {offsets = [0, 8], sizes = [16, 8], strides = [1, 1]} : vector<16x32xf32> to vector<16x8xf32>
    %908 = tpu.transpose %907, [1, 0] : vector<16x8xf32> -> vector<8x16xf32>
    %cst_419 = arith.constant dense<0.000000e+00> : vector<16x16xf32>
    %909 = tpu.matmul %906, %908, %cst_419 {dimension_numbers = #tpu.dot_dimension_numbers<[1], [0], [0], [1], [0, 0, 1, 1], [], []>} : vector<16x8xf32>, vector<8x16xf32>, vector<16x16xf32> -> vector<16x16xf32>
    %cst_420 = arith.constant 0.353553385 : f32
    %910 = vector.broadcast %cst_420 : f32 to vector<16x16xf32>
    %911 = arith.mulf %909, %910 : vector<16x16xf32>
    %cst_421 = arith.constant 0.000000e+00 : f32
    %912 = vector.broadcast %cst_421 : f32 to vector<16x16xf32>
    %913 = arith.cmpf oeq, %389, %912 : vector<16x16xf32>
    %cst_422 = arith.constant -1.000000e+09 : f32
    %914 = vector.broadcast %cst_422 : f32 to vector<16x16xf32>
    %915 = arith.select %913, %914, %911 : vector<16x16xi1>, vector<16x16xf32>
    %cst_423 = arith.constant dense<0xFF800000> : vector<16xf32>
    %916 = vector.multi_reduction <maximumf>, %915, %cst_423 [1] : vector<16x16xf32> to vector<16xf32>
    %917 = vector.shape_cast %916 : vector<16xf32> to vector<16x1xf32>
    %918 = vector.broadcast %917 : vector<16x1xf32> to vector<16x16xf32>
    %919 = arith.subf %915, %918 : vector<16x16xf32>
    %920 = math.exp %919 : vector<16x16xf32>
    %cst_424 = arith.constant dense<0.000000e+00> : vector<16xf32>
    %921 = vector.multi_reduction <add>, %920, %cst_424 [1] : vector<16x16xf32> to vector<16xf32>
    %922 = vector.shape_cast %921 : vector<16xf32> to vector<16x1xf32>
    %923 = tpu.reciprocal %922 {approx = true} : vector<16x1xf32> -> vector<16x1xf32>
    %924 = vector.broadcast %923 : vector<16x1xf32> to vector<16x16xf32>
    %925 = arith.mulf %920, %924 : vector<16x16xf32>
    %926 = vector.extract_strided_slice %883 {offsets = [0, 8], sizes = [16, 8], strides = [1, 1]} : vector<16x32xf32> to vector<16x8xf32>
    %cst_425 = arith.constant dense<0.000000e+00> : vector<16x8xf32>
    %927 = tpu.matmul %925, %926, %cst_425 {dimension_numbers = #tpu.dot_dimension_numbers<[1], [0], [0], [1], [0, 0, 1, 1], [], []>} : vector<16x16xf32>, vector<16x8xf32>, vector<16x8xf32> -> vector<16x8xf32>
    %928 = vector.extract_strided_slice %878 {offsets = [0, 16], sizes = [16, 8], strides = [1, 1]} : vector<16x32xf32> to vector<16x8xf32>
    %929 = vector.extract_strided_slice %882 {offsets = [0, 16], sizes = [16, 8], strides = [1, 1]} : vector<16x32xf32> to vector<16x8xf32>
    %930 = tpu.transpose %929, [1, 0] : vector<16x8xf32> -> vector<8x16xf32>
    %cst_426 = arith.constant dense<0.000000e+00> : vector<16x16xf32>
    %931 = tpu.matmul %928, %930, %cst_426 {dimension_numbers = #tpu.dot_dimension_numbers<[1], [0], [0], [1], [0, 0, 1, 1], [], []>} : vector<16x8xf32>, vector<8x16xf32>, vector<16x16xf32> -> vector<16x16xf32>
    %cst_427 = arith.constant 0.353553385 : f32
    %932 = vector.broadcast %cst_427 : f32 to vector<16x16xf32>
    %933 = arith.mulf %931, %932 : vector<16x16xf32>
    %cst_428 = arith.constant 0.000000e+00 : f32
    %934 = vector.broadcast %cst_428 : f32 to vector<16x16xf32>
    %935 = arith.cmpf oeq, %389, %934 : vector<16x16xf32>
    %cst_429 = arith.constant -1.000000e+09 : f32
    %936 = vector.broadcast %cst_429 : f32 to vector<16x16xf32>
    %937 = arith.select %935, %936, %933 : vector<16x16xi1>, vector<16x16xf32>
    %cst_430 = arith.constant dense<0xFF800000> : vector<16xf32>
    %938 = vector.multi_reduction <maximumf>, %937, %cst_430 [1] : vector<16x16xf32> to vector<16xf32>
    %939 = vector.shape_cast %938 : vector<16xf32> to vector<16x1xf32>
    %940 = vector.broadcast %939 : vector<16x1xf32> to vector<16x16xf32>
    %941 = arith.subf %937, %940 : vector<16x16xf32>
    %942 = math.exp %941 : vector<16x16xf32>
    %cst_431 = arith.constant dense<0.000000e+00> : vector<16xf32>
    %943 = vector.multi_reduction <add>, %942, %cst_431 [1] : vector<16x16xf32> to vector<16xf32>
    %944 = vector.shape_cast %943 : vector<16xf32> to vector<16x1xf32>
    %945 = tpu.reciprocal %944 {approx = true} : vector<16x1xf32> -> vector<16x1xf32>
    %946 = vector.broadcast %945 : vector<16x1xf32> to vector<16x16xf32>
    %947 = arith.mulf %942, %946 : vector<16x16xf32>
    %948 = vector.extract_strided_slice %883 {offsets = [0, 16], sizes = [16, 8], strides = [1, 1]} : vector<16x32xf32> to vector<16x8xf32>
    %cst_432 = arith.constant dense<0.000000e+00> : vector<16x8xf32>
    %949 = tpu.matmul %947, %948, %cst_432 {dimension_numbers = #tpu.dot_dimension_numbers<[1], [0], [0], [1], [0, 0, 1, 1], [], []>} : vector<16x16xf32>, vector<16x8xf32>, vector<16x8xf32> -> vector<16x8xf32>
    %950 = vector.extract_strided_slice %878 {offsets = [0, 24], sizes = [16, 8], strides = [1, 1]} : vector<16x32xf32> to vector<16x8xf32>
    %951 = vector.extract_strided_slice %882 {offsets = [0, 24], sizes = [16, 8], strides = [1, 1]} : vector<16x32xf32> to vector<16x8xf32>
    %952 = tpu.transpose %951, [1, 0] : vector<16x8xf32> -> vector<8x16xf32>
    %cst_433 = arith.constant dense<0.000000e+00> : vector<16x16xf32>
    %953 = tpu.matmul %950, %952, %cst_433 {dimension_numbers = #tpu.dot_dimension_numbers<[1], [0], [0], [1], [0, 0, 1, 1], [], []>} : vector<16x8xf32>, vector<8x16xf32>, vector<16x16xf32> -> vector<16x16xf32>
    %cst_434 = arith.constant 0.353553385 : f32
    %954 = vector.broadcast %cst_434 : f32 to vector<16x16xf32>
    %955 = arith.mulf %953, %954 : vector<16x16xf32>
    %cst_435 = arith.constant 0.000000e+00 : f32
    %956 = vector.broadcast %cst_435 : f32 to vector<16x16xf32>
    %957 = arith.cmpf oeq, %389, %956 : vector<16x16xf32>
    %cst_436 = arith.constant -1.000000e+09 : f32
    %958 = vector.broadcast %cst_436 : f32 to vector<16x16xf32>
    %959 = arith.select %957, %958, %955 : vector<16x16xi1>, vector<16x16xf32>
    %cst_437 = arith.constant dense<0xFF800000> : vector<16xf32>
    %960 = vector.multi_reduction <maximumf>, %959, %cst_437 [1] : vector<16x16xf32> to vector<16xf32>
    %961 = vector.shape_cast %960 : vector<16xf32> to vector<16x1xf32>
    %962 = vector.broadcast %961 : vector<16x1xf32> to vector<16x16xf32>
    %963 = arith.subf %959, %962 : vector<16x16xf32>
    %964 = math.exp %963 : vector<16x16xf32>
    %cst_438 = arith.constant dense<0.000000e+00> : vector<16xf32>
    %965 = vector.multi_reduction <add>, %964, %cst_438 [1] : vector<16x16xf32> to vector<16xf32>
    %966 = vector.shape_cast %965 : vector<16xf32> to vector<16x1xf32>
    %967 = tpu.reciprocal %966 {approx = true} : vector<16x1xf32> -> vector<16x1xf32>
    %968 = vector.broadcast %967 : vector<16x1xf32> to vector<16x16xf32>
    %969 = arith.mulf %964, %968 : vector<16x16xf32>
    %970 = vector.extract_strided_slice %883 {offsets = [0, 24], sizes = [16, 8], strides = [1, 1]} : vector<16x32xf32> to vector<16x8xf32>
    %cst_439 = arith.constant dense<0.000000e+00> : vector<16x8xf32>
    %971 = tpu.matmul %969, %970, %cst_439 {dimension_numbers = #tpu.dot_dimension_numbers<[1], [0], [0], [1], [0, 0, 1, 1], [], []>} : vector<16x16xf32>, vector<16x8xf32>, vector<16x8xf32> -> vector<16x8xf32>
    %972 = tpu.concatenate %905, %927, %949, %971 in 1 : vector<16x8xf32>, vector<16x8xf32>, vector<16x8xf32>, vector<16x8xf32> -> vector<16x32xf32>
    %cst_440 = arith.constant dense<0.000000e+00> : vector<16x32xf32>
    %973 = tpu.matmul %972, %873, %cst_440 {dimension_numbers = #tpu.dot_dimension_numbers<[1], [0], [0], [1], [0, 0, 1, 1], [], []>} : vector<16x32xf32>, vector<32x32xf32>, vector<16x32xf32> -> vector<16x32xf32>
    %974 = vector.broadcast %875 : vector<1x32xf32> to vector<16x32xf32>
    %975 = arith.addf %973, %974 : vector<16x32xf32>
    %976 = arith.addf %837, %975 : vector<16x32xf32>
    %c1_441 = arith.constant 1 : index
    %c0_442 = arith.constant 0 : index
    %c0_443 = arith.constant 0 : index
    %977 = vector.load %arg37[%c1_441, %c0_442, %c0_443] : memref<2x1x32xf32, #tpu.memory_space<vmem>>, vector<1x1x32xf32>
    %978 = vector.shape_cast %977 : vector<1x1x32xf32> to vector<1x32xf32>
    %c1_444 = arith.constant 1 : index
    %c0_445 = arith.constant 0 : index
    %c0_446 = arith.constant 0 : index
    %979 = vector.load %arg38[%c1_444, %c0_445, %c0_446] : memref<2x1x32xf32, #tpu.memory_space<vmem>>, vector<1x1x32xf32>
    %980 = vector.shape_cast %979 : vector<1x1x32xf32> to vector<1x32xf32>
    %cst_447 = arith.constant dense<0.000000e+00> : vector<16xf32>
    %981 = vector.multi_reduction <add>, %976, %cst_447 [1] : vector<16x32xf32> to vector<16xf32>
    %982 = vector.shape_cast %981 : vector<16xf32> to vector<16x1xf32>
    %cst_448 = arith.constant 3.200000e+01 : f32
    %983 = vector.broadcast %cst_448 : f32 to vector<16x1xf32>
    %984 = arith.divf %982, %983 : vector<16x1xf32>
    %985 = vector.broadcast %984 : vector<16x1xf32> to vector<16x32xf32>
    %986 = arith.subf %976, %985 : vector<16x32xf32>
    %987 = arith.mulf %986, %986 : vector<16x32xf32>
    %cst_449 = arith.constant dense<0.000000e+00> : vector<16xf32>
    %988 = vector.multi_reduction <add>, %987, %cst_449 [1] : vector<16x32xf32> to vector<16xf32>
    %989 = vector.shape_cast %988 : vector<16xf32> to vector<16x1xf32>
    %cst_450 = arith.constant 3.100000e+01 : f32
    %990 = vector.broadcast %cst_450 : f32 to vector<16x1xf32>
    %991 = arith.divf %989, %990 : vector<16x1xf32>
    %992 = math.sqrt %991 : vector<16x1xf32>
    %cst_451 = arith.constant 9.99999997E-7 : f32
    %993 = vector.broadcast %cst_451 : f32 to vector<16x1xf32>
    %994 = arith.addf %992, %993 : vector<16x1xf32>
    %cst_452 = arith.constant 1.000000e+00 : f32
    %995 = vector.broadcast %cst_452 : f32 to vector<16x1xf32>
    %996 = arith.divf %995, %994 : vector<16x1xf32>
    %997 = vector.broadcast %978 : vector<1x32xf32> to vector<16x32xf32>
    %998 = vector.broadcast %996 : vector<16x1xf32> to vector<16x32xf32>
    %999 = arith.mulf %997, %998 : vector<16x32xf32>
    %1000 = arith.mulf %986, %999 : vector<16x32xf32>
    %1001 = vector.broadcast %980 : vector<1x32xf32> to vector<16x32xf32>
    %1002 = arith.addf %1000, %1001 : vector<16x32xf32>
    %c1_453 = arith.constant 1 : index
    %c0_454 = arith.constant 0 : index
    %c0_455 = arith.constant 0 : index
    %1003 = vector.load %arg29[%c1_453, %c0_454, %c0_455] : memref<2x32x64xf32, #tpu.memory_space<vmem>>, vector<1x32x64xf32>
    %1004 = vector.shape_cast %1003 : vector<1x32x64xf32> to vector<32x64xf32>
    %c1_456 = arith.constant 1 : index
    %c0_457 = arith.constant 0 : index
    %c0_458 = arith.constant 0 : index
    %1005 = vector.load %arg30[%c1_456, %c0_457, %c0_458] : memref<2x1x64xf32, #tpu.memory_space<vmem>>, vector<1x1x64xf32>
    %1006 = vector.shape_cast %1005 : vector<1x1x64xf32> to vector<1x64xf32>
    %c1_459 = arith.constant 1 : index
    %c0_460 = arith.constant 0 : index
    %c0_461 = arith.constant 0 : index
    %1007 = vector.load %arg31[%c1_459, %c0_460, %c0_461] : memref<2x64x32xf32, #tpu.memory_space<vmem>>, vector<1x64x32xf32>
    %1008 = vector.shape_cast %1007 : vector<1x64x32xf32> to vector<64x32xf32>
    %c1_462 = arith.constant 1 : index
    %c0_463 = arith.constant 0 : index
    %c0_464 = arith.constant 0 : index
    %1009 = vector.load %arg32[%c1_462, %c0_463, %c0_464] : memref<2x1x32xf32, #tpu.memory_space<vmem>>, vector<1x1x32xf32>
    %1010 = vector.shape_cast %1009 : vector<1x1x32xf32> to vector<1x32xf32>
    %cst_465 = arith.constant dense<0.000000e+00> : vector<16x64xf32>
    %1011 = tpu.matmul %1002, %1004, %cst_465 {dimension_numbers = #tpu.dot_dimension_numbers<[1], [0], [0], [1], [0, 0, 1, 1], [], []>} : vector<16x32xf32>, vector<32x64xf32>, vector<16x64xf32> -> vector<16x64xf32>
    %1012 = vector.broadcast %1006 : vector<1x64xf32> to vector<16x64xf32>
    %1013 = arith.addf %1011, %1012 : vector<16x64xf32>
    %cst_466 = arith.constant 0.000000e+00 : f32
    %1014 = vector.broadcast %cst_466 : f32 to vector<16x64xf32>
    %1015 = arith.maximumf %1013, %1014 : vector<16x64xf32>
    %cst_467 = arith.constant dense<0.000000e+00> : vector<16x32xf32>
    %1016 = tpu.matmul %1015, %1008, %cst_467 {dimension_numbers = #tpu.dot_dimension_numbers<[1], [0], [0], [1], [0, 0, 1, 1], [], []>} : vector<16x64xf32>, vector<64x32xf32>, vector<16x32xf32> -> vector<16x32xf32>
    %1017 = vector.broadcast %1010 : vector<1x32xf32> to vector<16x32xf32>
    %1018 = arith.addf %1016, %1017 : vector<16x32xf32>
    %1019 = arith.addf %976, %1018 : vector<16x32xf32>
    %c0_468 = arith.constant 0 : index
    %c0_469 = arith.constant 0 : index
    %1020 = vector.load %arg39[%c0_468, %c0_469] : memref<1x32xf32, #tpu.memory_space<vmem>>, vector<1x32xf32>
    %c0_470 = arith.constant 0 : index
    %c0_471 = arith.constant 0 : index
    %1021 = vector.load %arg40[%c0_470, %c0_471] : memref<1x32xf32, #tpu.memory_space<vmem>>, vector<1x32xf32>
    %cst_472 = arith.constant dense<0.000000e+00> : vector<16xf32>
    %1022 = vector.multi_reduction <add>, %1019, %cst_472 [1] : vector<16x32xf32> to vector<16xf32>
    %1023 = vector.shape_cast %1022 : vector<16xf32> to vector<16x1xf32>
    %cst_473 = arith.constant 3.200000e+01 : f32
    %1024 = vector.broadcast %cst_473 : f32 to vector<16x1xf32>
    %1025 = arith.divf %1023, %1024 : vector<16x1xf32>
    %1026 = vector.broadcast %1025 : vector<16x1xf32> to vector<16x32xf32>
    %1027 = arith.subf %1019, %1026 : vector<16x32xf32>
    %1028 = arith.mulf %1027, %1027 : vector<16x32xf32>
    %cst_474 = arith.constant dense<0.000000e+00> : vector<16xf32>
    %1029 = vector.multi_reduction <add>, %1028, %cst_474 [1] : vector<16x32xf32> to vector<16xf32>
    %1030 = vector.shape_cast %1029 : vector<16xf32> to vector<16x1xf32>
    %cst_475 = arith.constant 3.100000e+01 : f32
    %1031 = vector.broadcast %cst_475 : f32 to vector<16x1xf32>
    %1032 = arith.divf %1030, %1031 : vector<16x1xf32>
    %1033 = math.sqrt %1032 : vector<16x1xf32>
    %cst_476 = arith.constant 9.99999997E-7 : f32
    %1034 = vector.broadcast %cst_476 : f32 to vector<16x1xf32>
    %1035 = arith.addf %1033, %1034 : vector<16x1xf32>
    %cst_477 = arith.constant 1.000000e+00 : f32
    %1036 = vector.broadcast %cst_477 : f32 to vector<16x1xf32>
    %1037 = arith.divf %1036, %1035 : vector<16x1xf32>
    %1038 = vector.broadcast %1020 : vector<1x32xf32> to vector<16x32xf32>
    %1039 = vector.broadcast %1037 : vector<16x1xf32> to vector<16x32xf32>
    %1040 = arith.mulf %1038, %1039 : vector<16x32xf32>
    %1041 = arith.mulf %1027, %1040 : vector<16x32xf32>
    %1042 = vector.broadcast %1021 : vector<1x32xf32> to vector<16x32xf32>
    %1043 = arith.addf %1041, %1042 : vector<16x32xf32>
    %1044 = vector.extract_strided_slice %1043 {offsets = [0, 0], sizes = [9, 32], strides = [1, 1]} : vector<16x32xf32> to vector<9x32xf32>
    %c0_478 = arith.constant 0 : index
    %c0_479 = arith.constant 0 : index
    %c0_480 = arith.constant 0 : index
    %1045 = vector.load %arg41[%c0_478, %c0_479, %c0_480] : memref<1x9x32xf32, #tpu.memory_space<vmem>>, vector<1x9x32xf32>
    %1046 = vector.shape_cast %1045 : vector<1x9x32xf32> to vector<9x32xf32>
    %1047 = vector.shape_cast %1044 : vector<9x32xf32> to vector<1x9x32xf32>
    tpu.vector_store %arg41[%c0_478, %c0_479, %c0_480], %1047 {strides = array<i32>} : memref<1x9x32xf32, #tpu.memory_space<vmem>>, vector<1x9x32xf32>,
    return
  }
  func.func @transform_0(%arg0: i32) -> (i32, i32, i32) {
    %c0_i32 = arith.constant 0 : i32
    %c0_i32_0 = arith.constant 0 : i32
    %c0_i32_1 = arith.constant 0 : i32
    return %arg0, %c0_i32, %c0_i32_0 : i32, i32, i32
  }
  func.func @transform_1(%arg0: i32) -> (i32, i32, i32) {
    %c0_i32 = arith.constant 0 : i32
    %c0_i32_0 = arith.constant 0 : i32
    %c0_i32_1 = arith.constant 0 : i32
    return %arg0, %c0_i32, %c0_i32_0 : i32, i32, i32
  }
  func.func @transform_2(%arg0: i32) -> (i32, i32, i32) {
    %c0_i32 = arith.constant 0 : i32
    %c0_i32_0 = arith.constant 0 : i32
    %c0_i32_1 = arith.constant 0 : i32
    return %arg0, %c0_i32, %c0_i32_0 : i32, i32, i32
  }
  func.func @transform_3(%arg0: i32) -> (i32, i32, i32) {
    %c0_i32 = arith.constant 0 : i32
    %c0_i32_0 = arith.constant 0 : i32
    %c0_i32_1 = arith.constant 0 : i32
    return %arg0, %c0_i32, %c0_i32_0 : i32, i32, i32
  }
  func.func @transform_4(%arg0: i32) -> (i32, i32, i32) {
    %c0_i32 = arith.constant 0 : i32
    %c0_i32_0 = arith.constant 0 : i32
    %c0_i32_1 = arith.constant 0 : i32
    %c0_i32_2 = arith.constant 0 : i32
    return %c0_i32, %c0_i32_0, %c0_i32_1 : i32, i32, i32
  }
  func.func @transform_5(%arg0: i32) -> (i32, i32, i32) {
    %c0_i32 = arith.constant 0 : i32
    %c0_i32_0 = arith.constant 0 : i32
    %c0_i32_1 = arith.constant 0 : i32
    %c0_i32_2 = arith.constant 0 : i32
    return %c0_i32, %c0_i32_0, %c0_i32_1 : i32, i32, i32
  }
  func.func @transform_6(%arg0: i32) -> (i32, i32, i32) {
    %c0_i32 = arith.constant 0 : i32
    %c0_i32_0 = arith.constant 0 : i32
    %c0_i32_1 = arith.constant 0 : i32
    %c0_i32_2 = arith.constant 0 : i32
    return %c0_i32, %c0_i32_0, %c0_i32_1 : i32, i32, i32
  }
  func.func @transform_7(%arg0: i32) -> (i32, i32, i32) {
    %c0_i32 = arith.constant 0 : i32
    %c0_i32_0 = arith.constant 0 : i32
    %c0_i32_1 = arith.constant 0 : i32
    %c0_i32_2 = arith.constant 0 : i32
    return %c0_i32, %c0_i32_0, %c0_i32_1 : i32, i32, i32
  }
  func.func @transform_8(%arg0: i32) -> (i32, i32, i32) {
    %c0_i32 = arith.constant 0 : i32
    %c0_i32_0 = arith.constant 0 : i32
    %c0_i32_1 = arith.constant 0 : i32
    %c0_i32_2 = arith.constant 0 : i32
    return %c0_i32, %c0_i32_0, %c0_i32_1 : i32, i32, i32
  }
  func.func @transform_9(%arg0: i32) -> (i32, i32, i32) {
    %c0_i32 = arith.constant 0 : i32
    %c0_i32_0 = arith.constant 0 : i32
    %c0_i32_1 = arith.constant 0 : i32
    %c0_i32_2 = arith.constant 0 : i32
    return %c0_i32, %c0_i32_0, %c0_i32_1 : i32, i32, i32
  }
  func.func @transform_10(%arg0: i32) -> (i32, i32, i32) {
    %c0_i32 = arith.constant 0 : i32
    %c0_i32_0 = arith.constant 0 : i32
    %c0_i32_1 = arith.constant 0 : i32
    %c0_i32_2 = arith.constant 0 : i32
    return %c0_i32, %c0_i32_0, %c0_i32_1 : i32, i32, i32
  }
  func.func @transform_11(%arg0: i32) -> (i32, i32, i32) {
    %c0_i32 = arith.constant 0 : i32
    %c0_i32_0 = arith.constant 0 : i32
    %c0_i32_1 = arith.constant 0 : i32
    %c0_i32_2 = arith.constant 0 : i32
    return %c0_i32, %c0_i32_0, %c0_i32_1 : i32, i32, i32
  }
  func.func @transform_12(%arg0: i32) -> (i32, i32, i32) {
    %c0_i32 = arith.constant 0 : i32
    %c0_i32_0 = arith.constant 0 : i32
    %c0_i32_1 = arith.constant 0 : i32
    %c0_i32_2 = arith.constant 0 : i32
    return %c0_i32, %c0_i32_0, %c0_i32_1 : i32, i32, i32
  }
  func.func @transform_13(%arg0: i32) -> (i32, i32, i32) {
    %c0_i32 = arith.constant 0 : i32
    %c0_i32_0 = arith.constant 0 : i32
    %c0_i32_1 = arith.constant 0 : i32
    %c0_i32_2 = arith.constant 0 : i32
    return %c0_i32, %c0_i32_0, %c0_i32_1 : i32, i32, i32
  }
  func.func @transform_14(%arg0: i32) -> (i32, i32, i32) {
    %c0_i32 = arith.constant 0 : i32
    %c0_i32_0 = arith.constant 0 : i32
    %c0_i32_1 = arith.constant 0 : i32
    %c0_i32_2 = arith.constant 0 : i32
    return %c0_i32, %c0_i32_0, %c0_i32_1 : i32, i32, i32
  }
  func.func @transform_15(%arg0: i32) -> (i32, i32, i32) {
    %c0_i32 = arith.constant 0 : i32
    %c0_i32_0 = arith.constant 0 : i32
    %c0_i32_1 = arith.constant 0 : i32
    %c0_i32_2 = arith.constant 0 : i32
    return %c0_i32, %c0_i32_0, %c0_i32_1 : i32, i32, i32
  }
  func.func @transform_16(%arg0: i32) -> (i32, i32) {
    %c0_i32 = arith.constant 0 : i32
    %c0_i32_0 = arith.constant 0 : i32
    %c0_i32_1 = arith.constant 0 : i32
    return %c0_i32, %c0_i32_0 : i32, i32
  }
  func.func @transform_17(%arg0: i32) -> (i32, i32) {
    %c0_i32 = arith.constant 0 : i32
    %c0_i32_0 = arith.constant 0 : i32
    %c0_i32_1 = arith.constant 0 : i32
    return %c0_i32, %c0_i32_0 : i32, i32
  }
  func.func @transform_18(%arg0: i32) -> (i32, i32, i32) {
    %c0_i32 = arith.constant 0 : i32
    %c0_i32_0 = arith.constant 0 : i32
    %c0_i32_1 = arith.constant 0 : i32
    %c0_i32_2 = arith.constant 0 : i32
    return %c0_i32, %c0_i32_0, %c0_i32_1 : i32, i32, i32
  }
  func.func @transform_19(%arg0: i32) -> (i32, i32, i32) {
    %c0_i32 = arith.constant 0 : i32
    %c0_i32_0 = arith.constant 0 : i32
    %c0_i32_1 = arith.constant 0 : i32
    %c0_i32_2 = arith.constant 0 : i32
    return %c0_i32, %c0_i32_0, %c0_i32_1 : i32, i32, i32
  }
  func.func @transform_20(%arg0: i32) -> (i32, i32, i32) {
    %c0_i32 = arith.constant 0 : i32
    %c0_i32_0 = arith.constant 0 : i32
    %c0_i32_1 = arith.constant 0 : i32
    %c0_i32_2 = arith.constant 0 : i32
    return %c0_i32, %c0_i32_0, %c0_i32_1 : i32, i32, i32
  }
  func.func @transform_21(%arg0: i32) -> (i32, i32, i32) {
    %c0_i32 = arith.constant 0 : i32
    %c0_i32_0 = arith.constant 0 : i32
    %c0_i32_1 = arith.constant 0 : i32
    %c0_i32_2 = arith.constant 0 : i32
    return %c0_i32, %c0_i32_0, %c0_i32_1 : i32, i32, i32
  }
  func.func @transform_22(%arg0: i32) -> (i32, i32, i32) {
    %c0_i32 = arith.constant 0 : i32
    %c0_i32_0 = arith.constant 0 : i32
    %c0_i32_1 = arith.constant 0 : i32
    %c0_i32_2 = arith.constant 0 : i32
    return %c0_i32, %c0_i32_0, %c0_i32_1 : i32, i32, i32
  }
  func.func @transform_23(%arg0: i32) -> (i32, i32, i32) {
    %c0_i32 = arith.constant 0 : i32
    %c0_i32_0 = arith.constant 0 : i32
    %c0_i32_1 = arith.constant 0 : i32
    %c0_i32_2 = arith.constant 0 : i32
    return %c0_i32, %c0_i32_0, %c0_i32_1 : i32, i32, i32
  }
  func.func @transform_24(%arg0: i32) -> (i32, i32, i32) {
    %c0_i32 = arith.constant 0 : i32
    %c0_i32_0 = arith.constant 0 : i32
    %c0_i32_1 = arith.constant 0 : i32
    %c0_i32_2 = arith.constant 0 : i32
    return %c0_i32, %c0_i32_0, %c0_i32_1 : i32, i32, i32
  }
  func.func @transform_25(%arg0: i32) -> (i32, i32, i32) {
    %c0_i32 = arith.constant 0 : i32
    %c0_i32_0 = arith.constant 0 : i32
    %c0_i32_1 = arith.constant 0 : i32
    %c0_i32_2 = arith.constant 0 : i32
    return %c0_i32, %c0_i32_0, %c0_i32_1 : i32, i32, i32
  }
  func.func @transform_26(%arg0: i32) -> (i32, i32, i32) {
    %c0_i32 = arith.constant 0 : i32
    %c0_i32_0 = arith.constant 0 : i32
    %c0_i32_1 = arith.constant 0 : i32
    %c0_i32_2 = arith.constant 0 : i32
    return %c0_i32, %c0_i32_0, %c0_i32_1 : i32, i32, i32
  }
  func.func @transform_27(%arg0: i32) -> (i32, i32, i32) {
    %c0_i32 = arith.constant 0 : i32
    %c0_i32_0 = arith.constant 0 : i32
    %c0_i32_1 = arith.constant 0 : i32
    %c0_i32_2 = arith.constant 0 : i32
    return %c0_i32, %c0_i32_0, %c0_i32_1 : i32, i32, i32
  }
  func.func @transform_28(%arg0: i32) -> (i32, i32, i32) {
    %c0_i32 = arith.constant 0 : i32
    %c0_i32_0 = arith.constant 0 : i32
    %c0_i32_1 = arith.constant 0 : i32
    %c0_i32_2 = arith.constant 0 : i32
    return %c0_i32, %c0_i32_0, %c0_i32_1 : i32, i32, i32
  }
  func.func @transform_29(%arg0: i32) -> (i32, i32, i32) {
    %c0_i32 = arith.constant 0 : i32
    %c0_i32_0 = arith.constant 0 : i32
    %c0_i32_1 = arith.constant 0 : i32
    %c0_i32_2 = arith.constant 0 : i32
    return %c0_i32, %c0_i32_0, %c0_i32_1 : i32, i32, i32
  }
  func.func @transform_30(%arg0: i32) -> (i32, i32, i32) {
    %c0_i32 = arith.constant 0 : i32
    %c0_i32_0 = arith.constant 0 : i32
    %c0_i32_1 = arith.constant 0 : i32
    %c0_i32_2 = arith.constant 0 : i32
    return %c0_i32, %c0_i32_0, %c0_i32_1 : i32, i32, i32
  }
  func.func @transform_31(%arg0: i32) -> (i32, i32, i32) {
    %c0_i32 = arith.constant 0 : i32
    %c0_i32_0 = arith.constant 0 : i32
    %c0_i32_1 = arith.constant 0 : i32
    %c0_i32_2 = arith.constant 0 : i32
    return %c0_i32, %c0_i32_0, %c0_i32_1 : i32, i32, i32
  }
  func.func @transform_32(%arg0: i32) -> (i32, i32, i32) {
    %c0_i32 = arith.constant 0 : i32
    %c0_i32_0 = arith.constant 0 : i32
    %c0_i32_1 = arith.constant 0 : i32
    %c0_i32_2 = arith.constant 0 : i32
    return %c0_i32, %c0_i32_0, %c0_i32_1 : i32, i32, i32
  }
  func.func @transform_33(%arg0: i32) -> (i32, i32, i32) {
    %c0_i32 = arith.constant 0 : i32
    %c0_i32_0 = arith.constant 0 : i32
    %c0_i32_1 = arith.constant 0 : i32
    %c0_i32_2 = arith.constant 0 : i32
    return %c0_i32, %c0_i32_0, %c0_i32_1 : i32, i32, i32
  }
  func.func @transform_34(%arg0: i32) -> (i32, i32, i32) {
    %c0_i32 = arith.constant 0 : i32
    %c0_i32_0 = arith.constant 0 : i32
    %c0_i32_1 = arith.constant 0 : i32
    %c0_i32_2 = arith.constant 0 : i32
    return %c0_i32, %c0_i32_0, %c0_i32_1 : i32, i32, i32
  }
  func.func @transform_35(%arg0: i32) -> (i32, i32, i32) {
    %c0_i32 = arith.constant 0 : i32
    %c0_i32_0 = arith.constant 0 : i32
    %c0_i32_1 = arith.constant 0 : i32
    %c0_i32_2 = arith.constant 0 : i32
    return %c0_i32, %c0_i32_0, %c0_i32_1 : i32, i32, i32
  }
  func.func @transform_36(%arg0: i32) -> (i32, i32, i32) {
    %c0_i32 = arith.constant 0 : i32
    %c0_i32_0 = arith.constant 0 : i32
    %c0_i32_1 = arith.constant 0 : i32
    %c0_i32_2 = arith.constant 0 : i32
    return %c0_i32, %c0_i32_0, %c0_i32_1 : i32, i32, i32
  }
  func.func @transform_37(%arg0: i32) -> (i32, i32, i32) {
    %c0_i32 = arith.constant 0 : i32
    %c0_i32_0 = arith.constant 0 : i32
    %c0_i32_1 = arith.constant 0 : i32
    %c0_i32_2 = arith.constant 0 : i32
    return %c0_i32, %c0_i32_0, %c0_i32_1 : i32, i32, i32
  }
  func.func @transform_38(%arg0: i32) -> (i32, i32) {
    %c0_i32 = arith.constant 0 : i32
    %c0_i32_0 = arith.constant 0 : i32
    %c0_i32_1 = arith.constant 0 : i32
    return %c0_i32, %c0_i32_0 : i32, i32
  }
  func.func @transform_39(%arg0: i32) -> (i32, i32) {
    %c0_i32 = arith.constant 0 : i32
    %c0_i32_0 = arith.constant 0 : i32
    %c0_i32_1 = arith.constant 0 : i32
    return %c0_i32, %c0_i32_0 : i32, i32
  }
  func.func @transform_40(%arg0: i32) -> (i32, i32, i32) {
    %c0_i32 = arith.constant 0 : i32
    %c0_i32_0 = arith.constant 0 : i32
    %c0_i32_1 = arith.constant 0 : i32
    return %arg0, %c0_i32, %c0_i32_0 : i32, i32, i32
  }
}

</mosaic_0001>

<llo_original>
// kernel: encoder_decoder_forward.1
$region0: #{encoder_decoder_forward.1}
  #allocation0 [shape = 'u32[]', space=smem, size = 0x4, offset = 0x4, fixed_abs, tag = 'smem constant byte address 0x4 - core index']
  #allocation1 [shape = 'u32[72,128]{1,0:T(1,128)}', space=vmem, size = 0x9000, scoped, tag = 'internal scratch']
  %s0 = inlined_call_operand.smem [shape: u32[41], index: -1, kind: input, shape index: {}]
  %s1 = sld [smem:[%s0]]
  %s2 = scalar_lea.smem %s0, 1
  %s3 = sld [smem:[%s2]]
  %s4 = scalar_lea.smem %s0, 2
  %s5 = sld [smem:[%s4]]
  %s6 = scalar_lea.smem %s0, 3
  %s7 = sld [smem:[%s6]]
  %s8 = scalar_lea.smem %s0, 4
  %s9 = sld [smem:[%s8]]
  %s10 = scalar_lea.smem %s0, 5
  %s11 = sld [smem:[%s10]]
  %s12 = scalar_lea.smem %s0, 6
  %s13 = sld [smem:[%s12]]
  %s14 = scalar_lea.smem %s0, 7
  %s15 = sld [smem:[%s14]]
  %s16 = scalar_lea.smem %s0, 8
  %s17 = sld [smem:[%s16]]
  %s18 = scalar_lea.smem %s0, 9
  %s19 = sld [smem:[%s18]]
  %s20 = scalar_lea.smem %s0, 10
  %s21 = sld [smem:[%s20]]
  %s22 = scalar_lea.smem %s0, 11
  %s23 = sld [smem:[%s22]]
  %s24 = scalar_lea.smem %s0, 12
  %s25 = sld [smem:[%s24]]
  %s26 = scalar_lea.smem %s0, 13
  %s27 = sld [smem:[%s26]]
  %s28 = scalar_lea.smem %s0, 14
  %s29 = sld [smem:[%s28]]
  %s30 = scalar_lea.smem %s0, 15
  %s31 = sld [smem:[%s30]]
  %s32 = scalar_lea.smem %s0, 16
  %s33 = sld [smem:[%s32]]
  %s34 = scalar_lea.smem %s0, 17
  %s35 = sld [smem:[%s34]]
  %s36 = scalar_lea.smem %s0, 18
  %s37 = sld [smem:[%s36]]
  %s38 = scalar_lea.smem %s0, 19
  %s39 = sld [smem:[%s38]]
  %s40 = scalar_lea.smem %s0, 20
  %s41 = sld [smem:[%s40]]
  %s42 = scalar_lea.smem %s0, 21
  %s43 = sld [smem:[%s42]]
  %s44 = scalar_lea.smem %s0, 22
  %s45 = sld [smem:[%s44]]
  %s46 = scalar_lea.smem %s0, 23
  %s47 = sld [smem:[%s46]]
  %s48 = scalar_lea.smem %s0, 24
  %s49 = sld [smem:[%s48]]
  %s50 = scalar_lea.smem %s0, 25
  %s51 = sld [smem:[%s50]]
  %s52 = scalar_lea.smem %s0, 26
  %s53 = sld [smem:[%s52]]
  %s54 = scalar_lea.smem %s0, 27
  %s55 = sld [smem:[%s54]]
  %s56 = scalar_lea.smem %s0, 28
  %s57 = sld [smem:[%s56]]
  %s58 = scalar_lea.smem %s0, 29
  %s59 = sld [smem:[%s58]]
  %s60 = scalar_lea.smem %s0, 30
  %s61 = sld [smem:[%s60]]
  %s62 = scalar_lea.smem %s0, 31
  %s63 = sld [smem:[%s62]]
  %s64 = scalar_lea.smem %s0, 32
  %s65 = sld [smem:[%s64]]
  %s66 = scalar_lea.smem %s0, 33
  %s67 = sld [smem:[%s66]]
  %s68 = scalar_lea.smem %s0, 34
  %s69 = sld [smem:[%s68]]
  %s70 = scalar_lea.smem %s0, 35
  %s71 = sld [smem:[%s70]]
  %s72 = scalar_lea.smem %s0, 36
  %s73 = sld [smem:[%s72]]
  %s74 = scalar_lea.smem %s0, 37
  %s75 = sld [smem:[%s74]]
  %s76 = scalar_lea.smem %s0, 38
  %s77 = sld [smem:[%s76]]
  %s78 = scalar_lea.smem %s0, 39
  %s79 = sld [smem:[%s78]]
  %s80 = scalar_lea.smem %s0, 40
  %s81 = sld [smem:[%s80]]
  %s82 = sld [smem:[#allocation0]]
  $region193: #{encoder_decoder_forward.1} parent=0
    _
  %s84 = ssub.s32 1, %s82
  %s85 = scalar_select 0, %s84, %s82
  loop: start=0, step=1, limit=4
  $region2: #{encoder_decoder_forward.1} parent=0 // loop_pre_header
    _
  $region3: #{encoder_decoder_forward.1} parent=0 // loop_header
    %s87 = sphi 0, %s91
    %p88 = scmp.ge.s32.totalorder %s87, 4
    %s97 = sphi 0, %s99
    %s100 = sphi 0, %s97
    %s101 = sphi 0, %s100
    %s117 = sphi 0, %s101
    %s123 = sphi 0, %s125
    %s126 = sphi 0, %s123
    %s127 = sphi 0, %s126
    %s143 = sphi 0, %s127
    %s149 = sphi 0, %s151
    %s152 = sphi 0, %s149
    %s153 = sphi 0, %s152
    %s169 = sphi 0, %s153
    %s175 = sphi 0, %s177
    %s178 = sphi 0, %s175
    %s179 = sphi 0, %s178
    %s195 = sphi 0, %s179
    %s199 = sphi 0, %s199
    %s201 = sphi 0, %s199
    %s202 = sphi 0, %s201
    %s216 = sphi 0, %s202
    %s220 = sphi 0, %s220
    %s222 = sphi 0, %s220
    %s223 = sphi 0, %s222
    %s237 = sphi 0, %s223
    %s241 = sphi 0, %s241
    %s243 = sphi 0, %s241
    %s244 = sphi 0, %s243
    %s258 = sphi 0, %s244
    %s262 = sphi 0, %s262
    %s264 = sphi 0, %s262
    %s265 = sphi 0, %s264
    %s279 = sphi 0, %s265
    %s283 = sphi 0, %s283
    %s285 = sphi 0, %s283
    %s286 = sphi 0, %s285
    %s300 = sphi 0, %s286
    %s304 = sphi 0, %s304
    %s306 = sphi 0, %s304
    %s307 = sphi 0, %s306
    %s321 = sphi 0, %s307
    %s325 = sphi 0, %s325
    %s327 = sphi 0, %s325
    %s328 = sphi 0, %s327
    %s342 = sphi 0, %s328
    %s346 = sphi 0, %s346
    %s348 = sphi 0, %s346
    %s349 = sphi 0, %s348
    %s363 = sphi 0, %s349
    %s367 = sphi 0, %s367
    %s369 = sphi 0, %s367
    %s370 = sphi 0, %s369
    %s384 = sphi 0, %s370
    %s388 = sphi 0, %s388
    %s390 = sphi 0, %s388
    %s391 = sphi 0, %s390
    %s405 = sphi 0, %s391
    %s409 = sphi 0, %s409
    %s411 = sphi 0, %s409
    %s412 = sphi 0, %s411
    %s426 = sphi 0, %s412
    %s430 = sphi 0, %s430
    %s432 = sphi 0, %s430
    %s433 = sphi 0, %s432
    %s447 = sphi 0, %s433
    %s451 = sphi 0, %s451
    %s453 = sphi 0, %s451
    %s454 = sphi 0, %s453
    %s468 = sphi 0, %s454
    %s472 = sphi 0, %s472
    %s474 = sphi 0, %s472
    %s475 = sphi 0, %s474
    %s489 = sphi 0, %s475
    %s493 = sphi 0, %s493
    %s495 = sphi 0, %s493
    %s496 = sphi 0, %s495
    %s510 = sphi 0, %s496
    %s514 = sphi 0, %s514
    %s516 = sphi 0, %s514
    %s517 = sphi 0, %s516
    %s531 = sphi 0, %s517
    %s535 = sphi 0, %s535
    %s537 = sphi 0, %s535
    %s538 = sphi 0, %s537
    %s552 = sphi 0, %s538
    %s556 = sphi 0, %s556
    %s558 = sphi 0, %s556
    %s559 = sphi 0, %s558
    %s573 = sphi 0, %s559
    %s577 = sphi 0, %s577
    %s579 = sphi 0, %s577
    %s580 = sphi 0, %s579
    %s594 = sphi 0, %s580
    %s598 = sphi 0, %s598
    %s600 = sphi 0, %s598
    %s601 = sphi 0, %s600
    %s615 = sphi 0, %s601
    %s619 = sphi 0, %s619
    %s621 = sphi 0, %s619
    %s622 = sphi 0, %s621
    %s636 = sphi 0, %s622
    %s640 = sphi 0, %s640
    %s642 = sphi 0, %s640
    %s643 = sphi 0, %s642
    %s657 = sphi 0, %s643
    %s661 = sphi 0, %s661
    %s663 = sphi 0, %s661
    %s664 = sphi 0, %s663
    %s678 = sphi 0, %s664
    %s682 = sphi 0, %s682
    %s684 = sphi 0, %s682
    %s685 = sphi 0, %s684
    %s699 = sphi 0, %s685
    %s703 = sphi 0, %s703
    %s705 = sphi 0, %s703
    %s706 = sphi 0, %s705
    %s720 = sphi 0, %s706
    %s724 = sphi 0, %s724
    %s726 = sphi 0, %s724
    %s727 = sphi 0, %s726
    %s741 = sphi 0, %s727
    %s745 = sphi 0, %s745
    %s747 = sphi 0, %s745
    %s748 = sphi 0, %s747
    %s762 = sphi 0, %s748
    %s766 = sphi 0, %s766
    %s768 = sphi 0, %s766
    %s769 = sphi 0, %s768
    %s783 = sphi 0, %s769
    %s787 = sphi 0, %s787
    %s789 = sphi 0, %s787
    %s790 = sphi 0, %s789
    %s804 = sphi 0, %s790
    %s808 = sphi 0, %s808
    %s810 = sphi 0, %s808
    %s811 = sphi 0, %s810
    %s825 = sphi 0, %s811
    %s829 = sphi 0, %s829
    %s831 = sphi 0, %s829
    %s832 = sphi 0, %s831
    %s846 = sphi 0, %s832
    %s850 = sphi 0, %s850
    %s852 = sphi 0, %s850
    %s853 = sphi 0, %s852
    %s867 = sphi 0, %s853
    %s871 = sphi 0, %s871
    %s873 = sphi 0, %s871
    %s874 = sphi 0, %s873
    %s888 = sphi 0, %s874
    %s892 = sphi 0, %s892
    %s894 = sphi 0, %s892
    %s895 = sphi 0, %s894
    %s909 = sphi 0, %s895
    %s913 = sphi 0, %s913
    %s915 = sphi 0, %s913
    %s916 = sphi 0, %s915
    %s930 = sphi 0, %s916
    %s934 = sphi 0, %s934
    %s936 = sphi 0, %s934
    %s937 = sphi 0, %s936
    %s951 = sphi 0, %s937
    %s957 = sphi 0, %s959
    %s960 = sphi 0, %s957
    %s961 = sphi 0, %s960
    %s977 = sphi 0, %s961
  $region4: #{encoder_decoder_forward.1} parent=0 // loop_header_branch
    %90 = sbr.rel (%p88) target = $region8
  $region5: #{encoder_decoder_forward.1} parent=0 // loop_body
    %s92 = ssub.s32 %s87, 1
    %s93 = ssub.s32 %s87, 2
    %s94 = sadd.s32 %s87, 1
    %s95 = ssub.s32 %s87, %s94
    %p96 = scmp.eq.s32.totalorder %s95, 0
    %s98 = sadd.s32 %s97, 1
    %s99 = scalar_select %p96, %s97, %s98
    %p102 = pneg %p96
    %p103 = scmp.eq.s32.totalorder %s87, 1
    %p104 = por %p102, %p103
    %p105 = scmp.ne.s32.totalorder %s97, %s100
    %p106 = scmp.eq.s32.totalorder %s87, 0
    %p107 = por %p105, %p106
    %p108 = scmp.ne.s32.totalorder %s97, %s100
    %p109 = scmp.eq.s32.totalorder %s92, 1
    %p110 = por %p108, %p109
    %p111 = scmp.ne.s32.totalorder %s100, %s101
    %p112 = scmp.eq.s32.totalorder %s92, 0
    %p113 = por %p111, %p112
    %p114 = scmp.ne.s32.totalorder %s100, %s101
    %p115 = scmp.eq.s32.totalorder %s93, 1
    %p116 = por %p114, %p115
    %p118 = scmp.ne.s32.totalorder %s101, %s117
    %p119 = scmp.eq.s32.totalorder %s93, 0
    %p120 = por %p118, %p119
    %s121 = ssub.s32 %s87, %s94
    %p122 = scmp.eq.s32.totalorder %s121, 0
    %s124 = sadd.s32 %s123, 1
    %s125 = scalar_select %p122, %s123, %s124
    %p128 = pneg %p122
    %p129 = scmp.eq.s32.totalorder %s87, 1
    %p130 = por %p128, %p129
    %p131 = scmp.ne.s32.totalorder %s123, %s126
    %p132 = scmp.eq.s32.totalorder %s87, 0
    %p133 = por %p131, %p132
    %p134 = scmp.ne.s32.totalorder %s123, %s126
    %p135 = scmp.eq.s32.totalorder %s92, 1
    %p136 = por %p134, %p135
    %p137 = scmp.ne.s32.totalorder %s126, %s127
    %p138 = scmp.eq.s32.totalorder %s92, 0
    %p139 = por %p137, %p138
    %p140 = scmp.ne.s32.totalorder %s126, %s127
    %p141 = scmp.eq.s32.totalorder %s93, 1
    %p142 = por %p140, %p141
    %p144 = scmp.ne.s32.totalorder %s127, %s143
    %p145 = scmp.eq.s32.totalorder %s93, 0
    %p146 = por %p144, %p145
    %s147 = ssub.s32 %s87, %s94
    %p148 = scmp.eq.s32.totalorder %s147, 0
    %s150 = sadd.s32 %s149, 1
    %s151 = scalar_select %p148, %s149, %s150
    %p154 = pneg %p148
    %p155 = scmp.eq.s32.totalorder %s87, 1
    %p156 = por %p154, %p155
    %p157 = scmp.ne.s32.totalorder %s149, %s152
    %p158 = scmp.eq.s32.totalorder %s87, 0
    %p159 = por %p157, %p158
    %p160 = scmp.ne.s32.totalorder %s149, %s152
    %p161 = scmp.eq.s32.totalorder %s92, 1
    %p162 = por %p160, %p161
    %p163 = scmp.ne.s32.totalorder %s152, %s153
    %p164 = scmp.eq.s32.totalorder %s92, 0
    %p165 = por %p163, %p164
    %p166 = scmp.ne.s32.totalorder %s152, %s153
    %p167 = scmp.eq.s32.totalorder %s93, 1
    %p168 = por %p166, %p167
    %p170 = scmp.ne.s32.totalorder %s153, %s169
    %p171 = scmp.eq.s32.totalorder %s93, 0
    %p172 = por %p170, %p171
    %s173 = ssub.s32 %s87, %s94
    %p174 = scmp.eq.s32.totalorder %s173, 0
    %s176 = sadd.s32 %s175, 1
    %s177 = scalar_select %p174, %s175, %s176
    %p180 = pneg %p174
    %p181 = scmp.eq.s32.totalorder %s87, 1
    %p182 = por %p180, %p181
    %p183 = scmp.ne.s32.totalorder %s175, %s178
    %p184 = scmp.eq.s32.totalorder %s87, 0
    %p185 = por %p183, %p184
    %p186 = scmp.ne.s32.totalorder %s175, %s178
    %p187 = scmp.eq.s32.totalorder %s92, 1
    %p188 = por %p186, %p187
    %p189 = scmp.ne.s32.totalorder %s178, %s179
    %p190 = scmp.eq.s32.totalorder %s92, 0
    %p191 = por %p189, %p190
    %p192 = scmp.ne.s32.totalorder %s178, %s179
    %p193 = scmp.eq.s32.totalorder %s93, 1
    %p194 = por %p192, %p193
    %p196 = scmp.ne.s32.totalorder %s179, %s195
    %p197 = scmp.eq.s32.totalorder %s93, 0
    %p198 = por %p196, %p197
    %s200 = sadd.s32 %s199, 1
    %p203 = scmp.eq.s32.totalorder %s87, 1
    %p204 = scmp.ne.s32.totalorder %s199, %s201
    %p205 = scmp.eq.s32.totalorder %s87, 0
    %p206 = por %p204, %p205
    %p207 = scmp.ne.s32.totalorder %s199, %s201
    %p208 = scmp.eq.s32.totalorder %s92, 1
    %p209 = por %p207, %p208
    %p210 = scmp.ne.s32.totalorder %s201, %s202
    %p211 = scmp.eq.s32.totalorder %s92, 0
    %p212 = por %p210, %p211
    %p213 = scmp.ne.s32.totalorder %s201, %s202
    %p214 = scmp.eq.s32.totalorder %s93, 1
    %p215 = por %p213, %p214
    %p217 = scmp.ne.s32.totalorder %s202, %s216
    %p218 = scmp.eq.s32.totalorder %s93, 0
    %p219 = por %p217, %p218
    %s221 = sadd.s32 %s220, 1
    %p224 = scmp.eq.s32.totalorder %s87, 1
    %p225 = scmp.ne.s32.totalorder %s220, %s222
    %p226 = scmp.eq.s32.totalorder %s87, 0
    %p227 = por %p225, %p226
    %p228 = scmp.ne.s32.totalorder %s220, %s222
    %p229 = scmp.eq.s32.totalorder %s92, 1
    %p230 = por %p228, %p229
    %p231 = scmp.ne.s32.totalorder %s222, %s223
    %p232 = scmp.eq.s32.totalorder %s92, 0
    %p233 = por %p231, %p232
    %p234 = scmp.ne.s32.totalorder %s222, %s223
    %p235 = scmp.eq.s32.totalorder %s93, 1
    %p236 = por %p234, %p235
    %p238 = scmp.ne.s32.totalorder %s223, %s237
    %p239 = scmp.eq.s32.totalorder %s93, 0
    %p240 = por %p238, %p239
    %s242 = sadd.s32 %s241, 1
    %p245 = scmp.eq.s32.totalorder %s87, 1
    %p246 = scmp.ne.s32.totalorder %s241, %s243
    %p247 = scmp.eq.s32.totalorder %s87, 0
    %p248 = por %p246, %p247
    %p249 = scmp.ne.s32.totalorder %s241, %s243
    %p250 = scmp.eq.s32.totalorder %s92, 1
    %p251 = por %p249, %p250
    %p252 = scmp.ne.s32.totalorder %s243, %s244
    %p253 = scmp.eq.s32.totalorder %s92, 0
    %p254 = por %p252, %p253
    %p255 = scmp.ne.s32.totalorder %s243, %s244
    %p256 = scmp.eq.s32.totalorder %s93, 1
    %p257 = por %p255, %p256
    %p259 = scmp.ne.s32.totalorder %s244, %s258
    %p260 = scmp.eq.s32.totalorder %s93, 0
    %p261 = por %p259, %p260
    %s263 = sadd.s32 %s262, 1
    %p266 = scmp.eq.s32.totalorder %s87, 1
    %p267 = scmp.ne.s32.totalorder %s262, %s264
    %p268 = scmp.eq.s32.totalorder %s87, 0
    %p269 = por %p267, %p268
    %p270 = scmp.ne.s32.totalorder %s262, %s264
    %p271 = scmp.eq.s32.totalorder %s92, 1
    %p272 = por %p270, %p271
    %p273 = scmp.ne.s32.totalorder %s264, %s265
    %p274 = scmp.eq.s32.totalorder %s92, 0
    %p275 = por %p273, %p274
    %p276 = scmp.ne.s32.totalorder %s264, %s265
    %p277 = scmp.eq.s32.totalorder %s93, 1
    %p278 = por %p276, %p277
    %p280 = scmp.ne.s32.totalorder %s265, %s279
    %p281 = scmp.eq.s32.totalorder %s93, 0
    %p282 = por %p280, %p281
    %s284 = sadd.s32 %s283, 1
    %p287 = scmp.eq.s32.totalorder %s87, 1
    %p288 = scmp.ne.s32.totalorder %s283, %s285
    %p289 = scmp.eq.s32.totalorder %s87, 0
    %p290 = por %p288, %p289
    %p291 = scmp.ne.s32.totalorder %s283, %s285
    %p292 = scmp.eq.s32.totalorder %s92, 1
    %p293 = por %p291, %p292
    %p294 = scmp.ne.s32.totalorder %s285, %s286
    %p295 = scmp.eq.s32.totalorder %s92, 0
    %p296 = por %p294, %p295
    %p297 = scmp.ne.s32.totalorder %s285, %s286
    %p298 = scmp.eq.s32.totalorder %s93, 1
    %p299 = por %p297, %p298
    %p301 = scmp.ne.s32.totalorder %s286, %s300
    %p302 = scmp.eq.s32.totalorder %s93, 0
    %p303 = por %p301, %p302
    %s305 = sadd.s32 %s304, 1
    %p308 = scmp.eq.s32.totalorder %s87, 1
    %p309 = scmp.ne.s32.totalorder %s304, %s306
    %p310 = scmp.eq.s32.totalorder %s87, 0
    %p311 = por %p309, %p310
    %p312 = scmp.ne.s32.totalorder %s304, %s306
    %p313 = scmp.eq.s32.totalorder %s92, 1
    %p314 = por %p312, %p313
    %p315 = scmp.ne.s32.totalorder %s306, %s307
    %p316 = scmp.eq.s32.totalorder %s92, 0
    %p317 = por %p315, %p316
    %p318 = scmp.ne.s32.totalorder %s306, %s307
    %p319 = scmp.eq.s32.totalorder %s93, 1
    %p320 = por %p318, %p319
    %p322 = scmp.ne.s32.totalorder %s307, %s321
    %p323 = scmp.eq.s32.totalorder %s93, 0
    %p324 = por %p322, %p323
    %s326 = sadd.s32 %s325, 1
    %p329 = scmp.eq.s32.totalorder %s87, 1
    %p330 = scmp.ne.s32.totalorder %s325, %s327
    %p331 = scmp.eq.s32.totalorder %s87, 0
    %p332 = por %p330, %p331
    %p333 = scmp.ne.s32.totalorder %s325, %s327
    %p334 = scmp.eq.s32.totalorder %s92, 1
    %p335 = por %p333, %p334
    %p336 = scmp.ne.s32.totalorder %s327, %s328
    %p337 = scmp.eq.s32.totalorder %s92, 0
    %p338 = por %p336, %p337
    %p339 = scmp.ne.s32.totalorder %s327, %s328
    %p340 = scmp.eq.s32.totalorder %s93, 1
    %p341 = por %p339, %p340
    %p343 = scmp.ne.s32.totalorder %s328, %s342
    %p344 = scmp.eq.s32.totalorder %s93, 0
    %p345 = por %p343, %p344
    %s347 = sadd.s32 %s346, 1
    %p350 = scmp.eq.s32.totalorder %s87, 1
    %p351 = scmp.ne.s32.totalorder %s346, %s348
    %p352 = scmp.eq.s32.totalorder %s87, 0
    %p353 = por %p351, %p352
    %p354 = scmp.ne.s32.totalorder %s346, %s348
    %p355 = scmp.eq.s32.totalorder %s92, 1
    %p356 = por %p354, %p355
    %p357 = scmp.ne.s32.totalorder %s348, %s349
    %p358 = scmp.eq.s32.totalorder %s92, 0
    %p359 = por %p357, %p358
    %p360 = scmp.ne.s32.totalorder %s348, %s349
    %p361 = scmp.eq.s32.totalorder %s93, 1
    %p362 = por %p360, %p361
    %p364 = scmp.ne.s32.totalorder %s349, %s363
    %p365 = scmp.eq.s32.totalorder %s93, 0
    %p366 = por %p364, %p365
    %s368 = sadd.s32 %s367, 1
    %p371 = scmp.eq.s32.totalorder %s87, 1
    %p372 = scmp.ne.s32.totalorder %s367, %s369
    %p373 = scmp.eq.s32.totalorder %s87, 0
    %p374 = por %p372, %p373
    %p375 = scmp.ne.s32.totalorder %s367, %s369
    %p376 = scmp.eq.s32.totalorder %s92, 1
    %p377 = por %p375, %p376
    %p378 = scmp.ne.s32.totalorder %s369, %s370
    %p379 = scmp.eq.s32.totalorder %s92, 0
    %p380 = por %p378, %p379
    %p381 = scmp.ne.s32.totalorder %s369, %s370
    %p382 = scmp.eq.s32.totalorder %s93, 1
    %p383 = por %p381, %p382
    %p385 = scmp.ne.s32.totalorder %s370, %s384
    %p386 = scmp.eq.s32.totalorder %s93, 0
    %p387 = por %p385, %p386
    %s389 = sadd.s32 %s388, 1
    %p392 = scmp.eq.s32.totalorder %s87, 1
    %p393 = scmp.ne.s32.totalorder %s388, %s390
    %p394 = scmp.eq.s32.totalorder %s87, 0
    %p395 = por %p393, %p394
    %p396 = scmp.ne.s32.totalorder %s388, %s390
    %p397 = scmp.eq.s32.totalorder %s92, 1
    %p398 = por %p396, %p397
    %p399 = scmp.ne.s32.totalorder %s390, %s391
    %p400 = scmp.eq.s32.totalorder %s92, 0
    %p401 = por %p399, %p400
    %p402 = scmp.ne.s32.totalorder %s390, %s391
    %p403 = scmp.eq.s32.totalorder %s93, 1
    %p404 = por %p402, %p403
    %p406 = scmp.ne.s32.totalorder %s391, %s405
    %p407 = scmp.eq.s32.totalorder %s93, 0
    %p408 = por %p406, %p407
    %s410 = sadd.s32 %s409, 1
    %p413 = scmp.eq.s32.totalorder %s87, 1
    %p414 = scmp.ne.s32.totalorder %s409, %s411
    %p415 = scmp.eq.s32.totalorder %s87, 0
    %p416 = por %p414, %p415
    %p417 = scmp.ne.s32.totalorder %s409, %s411
    %p418 = scmp.eq.s32.totalorder %s92, 1
    %p419 = por %p417, %p418
    %p420 = scmp.ne.s32.totalorder %s411, %s412
    %p421 = scmp.eq.s32.totalorder %s92, 0
    %p422 = por %p420, %p421
    %p423 = scmp.ne.s32.totalorder %s411, %s412
    %p424 = scmp.eq.s32.totalorder %s93, 1
    %p425 = por %p423, %p424
    %p427 = scmp.ne.s32.totalorder %s412, %s426
    %p428 = scmp.eq.s32.totalorder %s93, 0
    %p429 = por %p427, %p428
    %s431 = sadd.s32 %s430, 1
    %p434 = scmp.eq.s32.totalorder %s87, 1
    %p435 = scmp.ne.s32.totalorder %s430, %s432
    %p436 = scmp.eq.s32.totalorder %s87, 0
    %p437 = por %p435, %p436
    %p438 = scmp.ne.s32.totalorder %s430, %s432
    %p439 = scmp.eq.s32.totalorder %s92, 1
    %p440 = por %p438, %p439
    %p441 = scmp.ne.s32.totalorder %s432, %s433
    %p442 = scmp.eq.s32.totalorder %s92, 0
    %p443 = por %p441, %p442
    %p444 = scmp.ne.s32.totalorder %s432, %s433
    %p445 = scmp.eq.s32.totalorder %s93, 1
    %p446 = por %p444, %p445
    %p448 = scmp.ne.s32.totalorder %s433, %s447
    %p449 = scmp.eq.s32.totalorder %s93, 0
    %p450 = por %p448, %p449
    %s452 = sadd.s32 %s451, 1
    %p455 = scmp.eq.s32.totalorder %s87, 1
    %p456 = scmp.ne.s32.totalorder %s451, %s453
    %p457 = scmp.eq.s32.totalorder %s87, 0
    %p458 = por %p456, %p457
    %p459 = scmp.ne.s32.totalorder %s451, %s453
    %p460 = scmp.eq.s32.totalorder %s92, 1
    %p461 = por %p459, %p460
    %p462 = scmp.ne.s32.totalorder %s453, %s454
    %p463 = scmp.eq.s32.totalorder %s92, 0
    %p464 = por %p462, %p463
    %p465 = scmp.ne.s32.totalorder %s453, %s454
    %p466 = scmp.eq.s32.totalorder %s93, 1
    %p467 = por %p465, %p466
    %p469 = scmp.ne.s32.totalorder %s454, %s468
    %p470 = scmp.eq.s32.totalorder %s93, 0
    %p471 = por %p469, %p470
    %s473 = sadd.s32 %s472, 1
    %p476 = scmp.eq.s32.totalorder %s87, 1
    %p477 = scmp.ne.s32.totalorder %s472, %s474
    %p478 = scmp.eq.s32.totalorder %s87, 0
    %p479 = por %p477, %p478
    %p480 = scmp.ne.s32.totalorder %s472, %s474
    %p481 = scmp.eq.s32.totalorder %s92, 1
    %p482 = por %p480, %p481
    %p483 = scmp.ne.s32.totalorder %s474, %s475
    %p484 = scmp.eq.s32.totalorder %s92, 0
    %p485 = por %p483, %p484
    %p486 = scmp.ne.s32.totalorder %s474, %s475
    %p487 = scmp.eq.s32.totalorder %s93, 1
    %p488 = por %p486, %p487
    %p490 = scmp.ne.s32.totalorder %s475, %s489
    %p491 = scmp.eq.s32.totalorder %s93, 0
    %p492 = por %p490, %p491
    %s494 = sadd.s32 %s493, 1
    %p497 = scmp.eq.s32.totalorder %s87, 1
    %p498 = scmp.ne.s32.totalorder %s493, %s495
    %p499 = scmp.eq.s32.totalorder %s87, 0
    %p500 = por %p498, %p499
    %p501 = scmp.ne.s32.totalorder %s493, %s495
    %p502 = scmp.eq.s32.totalorder %s92, 1
    %p503 = por %p501, %p502
    %p504 = scmp.ne.s32.totalorder %s495, %s496
    %p505 = scmp.eq.s32.totalorder %s92, 0
    %p506 = por %p504, %p505
    %p507 = scmp.ne.s32.totalorder %s495, %s496
    %p508 = scmp.eq.s32.totalorder %s93, 1
    %p509 = por %p507, %p508
    %p511 = scmp.ne.s32.totalorder %s496, %s510
    %p512 = scmp.eq.s32.totalorder %s93, 0
    %p513 = por %p511, %p512
    %s515 = sadd.s32 %s514, 1
    %p518 = scmp.eq.s32.totalorder %s87, 1
    %p519 = scmp.ne.s32.totalorder %s514, %s516
    %p520 = scmp.eq.s32.totalorder %s87, 0
    %p521 = por %p519, %p520
    %p522 = scmp.ne.s32.totalorder %s514, %s516
    %p523 = scmp.eq.s32.totalorder %s92, 1
    %p524 = por %p522, %p523
    %p525 = scmp.ne.s32.totalorder %s516, %s517
    %p526 = scmp.eq.s32.totalorder %s92, 0
    %p527 = por %p525, %p526
    %p528 = scmp.ne.s32.totalorder %s516, %s517
    %p529 = scmp.eq.s32.totalorder %s93, 1
    %p530 = por %p528, %p529
    %p532 = scmp.ne.s32.totalorder %s517, %s531
    %p533 = scmp.eq.s32.totalorder %s93, 0
    %p534 = por %p532, %p533
    %s536 = sadd.s32 %s535, 1
    %p539 = scmp.eq.s32.totalorder %s87, 1
    %p540 = scmp.ne.s32.totalorder %s535, %s537
    %p541 = scmp.eq.s32.totalorder %s87, 0
    %p542 = por %p540, %p541
    %p543 = scmp.ne.s32.totalorder %s535, %s537
    %p544 = scmp.eq.s32.totalorder %s92, 1
    %p545 = por %p543, %p544
    %p546 = scmp.ne.s32.totalorder %s537, %s538
    %p547 = scmp.eq.s32.totalorder %s92, 0
    %p548 = por %p546, %p547
    %p549 = scmp.ne.s32.totalorder %s537, %s538
    %p550 = scmp.eq.s32.totalorder %s93, 1
    %p551 = por %p549, %p550
    %p553 = scmp.ne.s32.totalorder %s538, %s552
    %p554 = scmp.eq.s32.totalorder %s93, 0
    %p555 = por %p553, %p554
    %s557 = sadd.s32 %s556, 1
    %p560 = scmp.eq.s32.totalorder %s87, 1
    %p561 = scmp.ne.s32.totalorder %s556, %s558
    %p562 = scmp.eq.s32.totalorder %s87, 0
    %p563 = por %p561, %p562
    %p564 = scmp.ne.s32.totalorder %s556, %s558
    %p565 = scmp.eq.s32.totalorder %s92, 1
    %p566 = por %p564, %p565
    %p567 = scmp.ne.s32.totalorder %s558, %s559
    %p568 = scmp.eq.s32.totalorder %s92, 0
    %p569 = por %p567, %p568
    %p570 = scmp.ne.s32.totalorder %s558, %s559
    %p571 = scmp.eq.s32.totalorder %s93, 1
    %p572 = por %p570, %p571
    %p574 = scmp.ne.s32.totalorder %s559, %s573
    %p575 = scmp.eq.s32.totalorder %s93, 0
    %p576 = por %p574, %p575
    %s578 = sadd.s32 %s577, 1
    %p581 = scmp.eq.s32.totalorder %s87, 1
    %p582 = scmp.ne.s32.totalorder %s577, %s579
    %p583 = scmp.eq.s32.totalorder %s87, 0
    %p584 = por %p582, %p583
    %p585 = scmp.ne.s32.totalorder %s577, %s579
    %p586 = scmp.eq.s32.totalorder %s92, 1
    %p587 = por %p585, %p586
    %p588 = scmp.ne.s32.totalorder %s579, %s580
    %p589 = scmp.eq.s32.totalorder %s92, 0
    %p590 = por %p588, %p589
    %p591 = scmp.ne.s32.totalorder %s579, %s580
    %p592 = scmp.eq.s32.totalorder %s93, 1
    %p593 = por %p591, %p592
    %p595 = scmp.ne.s32.totalorder %s580, %s594
    %p596 = scmp.eq.s32.totalorder %s93, 0
    %p597 = por %p595, %p596
    %s599 = sadd.s32 %s598, 1
    %p602 = scmp.eq.s32.totalorder %s87, 1
    %p603 = scmp.ne.s32.totalorder %s598, %s600
    %p604 = scmp.eq.s32.totalorder %s87, 0
    %p605 = por %p603, %p604
    %p606 = scmp.ne.s32.totalorder %s598, %s600
    %p607 = scmp.eq.s32.totalorder %s92, 1
    %p608 = por %p606, %p607
    %p609 = scmp.ne.s32.totalorder %s600, %s601
    %p610 = scmp.eq.s32.totalorder %s92, 0
    %p611 = por %p609, %p610
    %p612 = scmp.ne.s32.totalorder %s600, %s601
    %p613 = scmp.eq.s32.totalorder %s93, 1
    %p614 = por %p612, %p613
    %p616 = scmp.ne.s32.totalorder %s601, %s615
    %p617 = scmp.eq.s32.totalorder %s93, 0
    %p618 = por %p616, %p617
    %s620 = sadd.s32 %s619, 1
    %p623 = scmp.eq.s32.totalorder %s87, 1
    %p624 = scmp.ne.s32.totalorder %s619, %s621
    %p625 = scmp.eq.s32.totalorder %s87, 0
    %p626 = por %p624, %p625
    %p627 = scmp.ne.s32.totalorder %s619, %s621
    %p628 = scmp.eq.s32.totalorder %s92, 1
    %p629 = por %p627, %p628
    %p630 = scmp.ne.s32.totalorder %s621, %s622
    %p631 = scmp.eq.s32.totalorder %s92, 0
    %p632 = por %p630, %p631
    %p633 = scmp.ne.s32.totalorder %s621, %s622
    %p634 = scmp.eq.s32.totalorder %s93, 1
    %p635 = por %p633, %p634
    %p637 = scmp.ne.s32.totalorder %s622, %s636
    %p638 = scmp.eq.s32.totalorder %s93, 0
    %p639 = por %p637, %p638
    %s641 = sadd.s32 %s640, 1
    %p644 = scmp.eq.s32.totalorder %s87, 1
    %p645 = scmp.ne.s32.totalorder %s640, %s642
    %p646 = scmp.eq.s32.totalorder %s87, 0
    %p647 = por %p645, %p646
    %p648 = scmp.ne.s32.totalorder %s640, %s642
    %p649 = scmp.eq.s32.totalorder %s92, 1
    %p650 = por %p648, %p649
    %p651 = scmp.ne.s32.totalorder %s642, %s643
    %p652 = scmp.eq.s32.totalorder %s92, 0
    %p653 = por %p651, %p652
    %p654 = scmp.ne.s32.totalorder %s642, %s643
    %p655 = scmp.eq.s32.totalorder %s93, 1
    %p656 = por %p654, %p655
    %p658 = scmp.ne.s32.totalorder %s643, %s657
    %p659 = scmp.eq.s32.totalorder %s93, 0
    %p660 = por %p658, %p659
    %s662 = sadd.s32 %s661, 1
    %p665 = scmp.eq.s32.totalorder %s87, 1
    %p666 = scmp.ne.s32.totalorder %s661, %s663
    %p667 = scmp.eq.s32.totalorder %s87, 0
    %p668 = por %p666, %p667
    %p669 = scmp.ne.s32.totalorder %s661, %s663
    %p670 = scmp.eq.s32.totalorder %s92, 1
    %p671 = por %p669, %p670
    %p672 = scmp.ne.s32.totalorder %s663, %s664
    %p673 = scmp.eq.s32.totalorder %s92, 0
    %p674 = por %p672, %p673
    %p675 = scmp.ne.s32.totalorder %s663, %s664
    %p676 = scmp.eq.s32.totalorder %s93, 1
    %p677 = por %p675, %p676
    %p679 = scmp.ne.s32.totalorder %s664, %s678
    %p680 = scmp.eq.s32.totalorder %s93, 0
    %p681 = por %p679, %p680
    %s683 = sadd.s32 %s682, 1
    %p686 = scmp.eq.s32.totalorder %s87, 1
    %p687 = scmp.ne.s32.totalorder %s682, %s684
    %p688 = scmp.eq.s32.totalorder %s87, 0
    %p689 = por %p687, %p688
    %p690 = scmp.ne.s32.totalorder %s682, %s684
    %p691 = scmp.eq.s32.totalorder %s92, 1
    %p692 = por %p690, %p691
    %p693 = scmp.ne.s32.totalorder %s684, %s685
    %p694 = scmp.eq.s32.totalorder %s92, 0
    %p695 = por %p693, %p694
    %p696 = scmp.ne.s32.totalorder %s684, %s685
    %p697 = scmp.eq.s32.totalorder %s93, 1
    %p698 = por %p696, %p697
    %p700 = scmp.ne.s32.totalorder %s685, %s699
    %p701 = scmp.eq.s32.totalorder %s93, 0
    %p702 = por %p700, %p701
    %s704 = sadd.s32 %s703, 1
    %p707 = scmp.eq.s32.totalorder %s87, 1
    %p708 = scmp.ne.s32.totalorder %s703, %s705
    %p709 = scmp.eq.s32.totalorder %s87, 0
    %p710 = por %p708, %p709
    %p711 = scmp.ne.s32.totalorder %s703, %s705
    %p712 = scmp.eq.s32.totalorder %s92, 1
    %p713 = por %p711, %p712
    %p714 = scmp.ne.s32.totalorder %s705, %s706
    %p715 = scmp.eq.s32.totalorder %s92, 0
    %p716 = por %p714, %p715
    %p717 = scmp.ne.s32.totalorder %s705, %s706
    %p718 = scmp.eq.s32.totalorder %s93, 1
    %p719 = por %p717, %p718
    %p721 = scmp.ne.s32.totalorder %s706, %s720
    %p722 = scmp.eq.s32.totalorder %s93, 0
    %p723 = por %p721, %p722
    %s725 = sadd.s32 %s724, 1
    %p728 = scmp.eq.s32.totalorder %s87, 1
    %p729 = scmp.ne.s32.totalorder %s724, %s726
    %p730 = scmp.eq.s32.totalorder %s87, 0
    %p731 = por %p729, %p730
    %p732 = scmp.ne.s32.totalorder %s724, %s726
    %p733 = scmp.eq.s32.totalorder %s92, 1
    %p734 = por %p732, %p733
    %p735 = scmp.ne.s32.totalorder %s726, %s727
    %p736 = scmp.eq.s32.totalorder %s92, 0
    %p737 = por %p735, %p736
    %p738 = scmp.ne.s32.totalorder %s726, %s727
    %p739 = scmp.eq.s32.totalorder %s93, 1
    %p740 = por %p738, %p739
    %p742 = scmp.ne.s32.totalorder %s727, %s741
    %p743 = scmp.eq.s32.totalorder %s93, 0
    %p744 = por %p742, %p743
    %s746 = sadd.s32 %s745, 1
    %p749 = scmp.eq.s32.totalorder %s87, 1
    %p750 = scmp.ne.s32.totalorder %s745, %s747
    %p751 = scmp.eq.s32.totalorder %s87, 0
    %p752 = por %p750, %p751
    %p753 = scmp.ne.s32.totalorder %s745, %s747
    %p754 = scmp.eq.s32.totalorder %s92, 1
    %p755 = por %p753, %p754
    %p756 = scmp.ne.s32.totalorder %s747, %s748
    %p757 = scmp.eq.s32.totalorder %s92, 0
    %p758 = por %p756, %p757
    %p759 = scmp.ne.s32.totalorder %s747, %s748
    %p760 = scmp.eq.s32.totalorder %s93, 1
    %p761 = por %p759, %p760
    %p763 = scmp.ne.s32.totalorder %s748, %s762
    %p764 = scmp.eq.s32.totalorder %s93, 0
    %p765 = por %p763, %p764
    %s767 = sadd.s32 %s766, 1
    %p770 = scmp.eq.s32.totalorder %s87, 1
    %p771 = scmp.ne.s32.totalorder %s766, %s768
    %p772 = scmp.eq.s32.totalorder %s87, 0
    %p773 = por %p771, %p772
    %p774 = scmp.ne.s32.totalorder %s766, %s768
    %p775 = scmp.eq.s32.totalorder %s92, 1
    %p776 = por %p774, %p775
    %p777 = scmp.ne.s32.totalorder %s768, %s769
    %p778 = scmp.eq.s32.totalorder %s92, 0
    %p779 = por %p777, %p778
    %p780 = scmp.ne.s32.totalorder %s768, %s769
    %p781 = scmp.eq.s32.totalorder %s93, 1
    %p782 = por %p780, %p781
    %p784 = scmp.ne.s32.totalorder %s769, %s783
    %p785 = scmp.eq.s32.totalorder %s93, 0
    %p786 = por %p784, %p785
    %s788 = sadd.s32 %s787, 1
    %p791 = scmp.eq.s32.totalorder %s87, 1
    %p792 = scmp.ne.s32.totalorder %s787, %s789
    %p793 = scmp.eq.s32.totalorder %s87, 0
    %p794 = por %p792, %p793
    %p795 = scmp.ne.s32.totalorder %s787, %s789
    %p796 = scmp.eq.s32.totalorder %s92, 1
    %p797 = por %p795, %p796
    %p798 = scmp.ne.s32.totalorder %s789, %s790
    %p799 = scmp.eq.s32.totalorder %s92, 0
    %p800 = por %p798, %p799
    %p801 = scmp.ne.s32.totalorder %s789, %s790
    %p802 = scmp.eq.s32.totalorder %s93, 1
    %p803 = por %p801, %p802
    %p805 = scmp.ne.s32.totalorder %s790, %s804
    %p806 = scmp.eq.s32.totalorder %s93, 0
    %p807 = por %p805, %p806
    %s809 = sadd.s32 %s808, 1
    %p812 = scmp.eq.s32.totalorder %s87, 1
    %p813 = scmp.ne.s32.totalorder %s808, %s810
    %p814 = scmp.eq.s32.totalorder %s87, 0
    %p815 = por %p813, %p814
    %p816 = scmp.ne.s32.totalorder %s808, %s810
    %p817 = scmp.eq.s32.totalorder %s92, 1
    %p818 = por %p816, %p817
    %p819 = scmp.ne.s32.totalorder %s810, %s811
    %p820 = scmp.eq.s32.totalorder %s92, 0
    %p821 = por %p819, %p820
    %p822 = scmp.ne.s32.totalorder %s810, %s811
    %p823 = scmp.eq.s32.totalorder %s93, 1
    %p824 = por %p822, %p823
    %p826 = scmp.ne.s32.totalorder %s811, %s825
    %p827 = scmp.eq.s32.totalorder %s93, 0
    %p828 = por %p826, %p827
    %s830 = sadd.s32 %s829, 1
    %p833 = scmp.eq.s32.totalorder %s87, 1
    %p834 = scmp.ne.s32.totalorder %s829, %s831
    %p835 = scmp.eq.s32.totalorder %s87, 0
    %p836 = por %p834, %p835
    %p837 = scmp.ne.s32.totalorder %s829, %s831
    %p838 = scmp.eq.s32.totalorder %s92, 1
    %p839 = por %p837, %p838
    %p840 = scmp.ne.s32.totalorder %s831, %s832
    %p841 = scmp.eq.s32.totalorder %s92, 0
    %p842 = por %p840, %p841
    %p843 = scmp.ne.s32.totalorder %s831, %s832
    %p844 = scmp.eq.s32.totalorder %s93, 1
    %p845 = por %p843, %p844
    %p847 = scmp.ne.s32.totalorder %s832, %s846
    %p848 = scmp.eq.s32.totalorder %s93, 0
    %p849 = por %p847, %p848
    %s851 = sadd.s32 %s850, 1
    %p854 = scmp.eq.s32.totalorder %s87, 1
    %p855 = scmp.ne.s32.totalorder %s850, %s852
    %p856 = scmp.eq.s32.totalorder %s87, 0
    %p857 = por %p855, %p856
    %p858 = scmp.ne.s32.totalorder %s850, %s852
    %p859 = scmp.eq.s32.totalorder %s92, 1
    %p860 = por %p858, %p859
    %p861 = scmp.ne.s32.totalorder %s852, %s853
    %p862 = scmp.eq.s32.totalorder %s92, 0
    %p863 = por %p861, %p862
    %p864 = scmp.ne.s32.totalorder %s852, %s853
    %p865 = scmp.eq.s32.totalorder %s93, 1
    %p866 = por %p864, %p865
    %p868 = scmp.ne.s32.totalorder %s853, %s867
    %p869 = scmp.eq.s32.totalorder %s93, 0
    %p870 = por %p868, %p869
    %s872 = sadd.s32 %s871, 1
    %p875 = scmp.eq.s32.totalorder %s87, 1
    %p876 = scmp.ne.s32.totalorder %s871, %s873
    %p877 = scmp.eq.s32.totalorder %s87, 0
    %p878 = por %p876, %p877
    %p879 = scmp.ne.s32.totalorder %s871, %s873
    %p880 = scmp.eq.s32.totalorder %s92, 1
    %p881 = por %p879, %p880
    %p882 = scmp.ne.s32.totalorder %s873, %s874
    %p883 = scmp.eq.s32.totalorder %s92, 0
    %p884 = por %p882, %p883
    %p885 = scmp.ne.s32.totalorder %s873, %s874
    %p886 = scmp.eq.s32.totalorder %s93, 1
    %p887 = por %p885, %p886
    %p889 = scmp.ne.s32.totalorder %s874, %s888
    %p890 = scmp.eq.s32.totalorder %s93, 0
    %p891 = por %p889, %p890
    %s893 = sadd.s32 %s892, 1
    %p896 = scmp.eq.s32.totalorder %s87, 1
    %p897 = scmp.ne.s32.totalorder %s892, %s894
    %p898 = scmp.eq.s32.totalorder %s87, 0
    %p899 = por %p897, %p898
    %p900 = scmp.ne.s32.totalorder %s892, %s894
    %p901 = scmp.eq.s32.totalorder %s92, 1
    %p902 = por %p900, %p901
    %p903 = scmp.ne.s32.totalorder %s894, %s895
    %p904 = scmp.eq.s32.totalorder %s92, 0
    %p905 = por %p903, %p904
    %p906 = scmp.ne.s32.totalorder %s894, %s895
    %p907 = scmp.eq.s32.totalorder %s93, 1
    %p908 = por %p906, %p907
    %p910 = scmp.ne.s32.totalorder %s895, %s909
    %p911 = scmp.eq.s32.totalorder %s93, 0
    %p912 = por %p910, %p911
    %s914 = sadd.s32 %s913, 1
    %p917 = scmp.eq.s32.totalorder %s87, 1
    %p918 = scmp.ne.s32.totalorder %s913, %s915
    %p919 = scmp.eq.s32.totalorder %s87, 0
    %p920 = por %p918, %p919
    %p921 = scmp.ne.s32.totalorder %s913, %s915
    %p922 = scmp.eq.s32.totalorder %s92, 1
    %p923 = por %p921, %p922
    %p924 = scmp.ne.s32.totalorder %s915, %s916
    %p925 = scmp.eq.s32.totalorder %s92, 0
    %p926 = por %p924, %p925
    %p927 = scmp.ne.s32.totalorder %s915, %s916
    %p928 = scmp.eq.s32.totalorder %s93, 1
    %p929 = por %p927, %p928
    %p931 = scmp.ne.s32.totalorder %s916, %s930
    %p932 = scmp.eq.s32.totalorder %s93, 0
    %p933 = por %p931, %p932
    %s935 = sadd.s32 %s934, 1
    %p938 = scmp.eq.s32.totalorder %s87, 1
    %p939 = scmp.ne.s32.totalorder %s934, %s936
    %p940 = scmp.eq.s32.totalorder %s87, 0
    %p941 = por %p939, %p940
    %p942 = scmp.ne.s32.totalorder %s934, %s936
    %p943 = scmp.eq.s32.totalorder %s92, 1
    %p944 = por %p942, %p943
    %p945 = scmp.ne.s32.totalorder %s936, %s937
    %p946 = scmp.eq.s32.totalorder %s92, 0
    %p947 = por %p945, %p946
    %p948 = scmp.ne.s32.totalorder %s936, %s937
    %p949 = scmp.eq.s32.totalorder %s93, 1
    %p950 = por %p948, %p949
    %p952 = scmp.ne.s32.totalorder %s937, %s951
    %p953 = scmp.eq.s32.totalorder %s93, 0
    %p954 = por %p952, %p953
    %s955 = ssub.s32 %s87, %s94
    %p956 = scmp.eq.s32.totalorder %s955, 0
    %s958 = sadd.s32 %s957, 1
    %s959 = scalar_select %p956, %s957, %s958
    %p962 = pneg %p956
    %p963 = scmp.eq.s32.totalorder %s87, 1
    %p964 = por %p962, %p963
    %p965 = scmp.ne.s32.totalorder %s957, %s960
    %p966 = scmp.eq.s32.totalorder %s87, 0
    %p967 = por %p965, %p966
    %p968 = scmp.ne.s32.totalorder %s957, %s960
    %p969 = scmp.eq.s32.totalorder %s92, 1
    %p970 = por %p968, %p969
    %p971 = scmp.ne.s32.totalorder %s960, %s961
    %p972 = scmp.eq.s32.totalorder %s92, 0
    %p973 = por %p971, %p972
    %p974 = scmp.ne.s32.totalorder %s960, %s961
    %p975 = scmp.eq.s32.totalorder %s93, 1
    %p976 = por %p974, %p975
    %p978 = scmp.ne.s32.totalorder %s961, %s977
    %p979 = scmp.eq.s32.totalorder %s93, 0
    %p980 = por %p978, %p979
    %p981 = scmp.le.s32.totalorder 1, %s87
    %p982 = scmp.lt.s32.totalorder %s87, 3
    %p983 = pnand %p981, %p982
    %p984 = pneg %p983
    // Predicated region
    $region9: #{encoder_decoder_forward.1} parent=5 // pred_check
      _
    $region10: #{encoder_decoder_forward.1} parent=5 // pred_check_branch
      %986 = sbr.rel (%p983) target = $region12
    $region11: #{encoder_decoder_forward.1} parent=5 // pred_region
      %s987 = ssub.s32 %s87, 1
      // Predicated region
      $region13: #{encoder_decoder_forward.1} parent=11 // pred_check
        %p988 = pneg %p212
      $region14: #{encoder_decoder_forward.1} parent=11 // pred_check_branch
        %990 = sbr.rel (%p988) target = $region16
      $region15: #{encoder_decoder_forward.1} parent=11 // pred_region
        _
      $region16: #{encoder_decoder_forward.1} parent=11 // pred_fallthru
        _
      // Predicated region
      $region17: #{encoder_decoder_forward.1} parent=11 // pred_check
        %p991 = pneg %p233
      $region18: #{encoder_decoder_forward.1} parent=11 // pred_check_branch
        %993 = sbr.rel (%p991) target = $region20
      $region19: #{encoder_decoder_forward.1} parent=11 // pred_region
        _
      $region20: #{encoder_decoder_forward.1} parent=11 // pred_fallthru
        _
      // Predicated region
      $region21: #{encoder_decoder_forward.1} parent=11 // pred_check
        %p994 = pneg %p254
      $region22: #{encoder_decoder_forward.1} parent=11 // pred_check_branch
        %996 = sbr.rel (%p994) target = $region24
      $region23: #{encoder_decoder_forward.1} parent=11 // pred_region
        _
      $region24: #{encoder_decoder_forward.1} parent=11 // pred_fallthru
        _
      // Predicated region
      $region25: #{encoder_decoder_forward.1} parent=11 // pred_check
        %p997 = pneg %p275
      $region26: #{encoder_decoder_forward.1} parent=11 // pred_check_branch
        %999 = sbr.rel (%p997) target = $region28
      $region27: #{encoder_decoder_forward.1} parent=11 // pred_region
        _
      $region28: #{encoder_decoder_forward.1} parent=11 // pred_fallthru
        _
      // Predicated region
      $region29: #{encoder_decoder_forward.1} parent=11 // pred_check
        %p1000 = pneg %p296
      $region30: #{encoder_decoder_forward.1} parent=11 // pred_check_branch
        %1002 = sbr.rel (%p1000) target = $region32
      $region31: #{encoder_decoder_forward.1} parent=11 // pred_region
        _
      $region32: #{encoder_decoder_forward.1} parent=11 // pred_fallthru
        _
      // Predicated region
      $region33: #{encoder_decoder_forward.1} parent=11 // pred_check
        %p1003 = pneg %p317
      $region34: #{encoder_decoder_forward.1} parent=11 // pred_check_branch
        %1005 = sbr.rel (%p1003) target = $region36
      $region35: #{encoder_decoder_forward.1} parent=11 // pred_region
        _
      $region36: #{encoder_decoder_forward.1} parent=11 // pred_fallthru
        _
      // Predicated region
      $region37: #{encoder_decoder_forward.1} parent=11 // pred_check
        %p1006 = pneg %p338
      $region38: #{encoder_decoder_forward.1} parent=11 // pred_check_branch
        %1008 = sbr.rel (%p1006) target = $region40
      $region39: #{encoder_decoder_forward.1} parent=11 // pred_region
        _
      $region40: #{encoder_decoder_forward.1} parent=11 // pred_fallthru
        _
      // Predicated region
      $region41: #{encoder_decoder_forward.1} parent=11 // pred_check
        %p1009 = pneg %p359
      $region42: #{encoder_decoder_forward.1} parent=11 // pred_check_branch
        %1011 = sbr.rel (%p1009) target = $region44
      $region43: #{encoder_decoder_forward.1} parent=11 // pred_region
        _
      $region44: #{encoder_decoder_forward.1} parent=11 // pred_fallthru
        _
      // Predicated region
      $region45: #{encoder_decoder_forward.1} parent=11 // pred_check
        %p1012 = pneg %p380
      $region46: #{encoder_decoder_forward.1} parent=11 // pred_check_branch
        %1014 = sbr.rel (%p1012) target = $region48
      $region47: #{encoder_decoder_forward.1} parent=11 // pred_region
        _
      $region48: #{encoder_decoder_forward.1} parent=11 // pred_fallthru
        _
      // Predicated region
      $region49: #{encoder_decoder_forward.1} parent=11 // pred_check
        %p1015 = pneg %p401
      $region50: #{encoder_decoder_forward.1} parent=11 // pred_check_branch
        %1017 = sbr.rel (%p1015) target = $region52
      $region51: #{encoder_decoder_forward.1} parent=11 // pred_region
        _
      $region52: #{encoder_decoder_forward.1} parent=11 // pred_fallthru
        _
      // Predicated region
      $region53: #{encoder_decoder_forward.1} parent=11 // pred_check
        %p1018 = pneg %p422
      $region54: #{encoder_decoder_forward.1} parent=11 // pred_check_branch
        %1020 = sbr.rel (%p1018) target = $region56
      $region55: #{encoder_decoder_forward.1} parent=11 // pred_region
        _
      $region56: #{encoder_decoder_forward.1} parent=11 // pred_fallthru
        _
      // Predicated region
      $region57: #{encoder_decoder_forward.1} parent=11 // pred_check
        %p1021 = pneg %p443
      $region58: #{encoder_decoder_forward.1} parent=11 // pred_check_branch
        %1023 = sbr.rel (%p1021) target = $region60
      $region59: #{encoder_decoder_forward.1} parent=11 // pred_region
        _
      $region60: #{encoder_decoder_forward.1} parent=11 // pred_fallthru
        _
      // Predicated region
      $region61: #{encoder_decoder_forward.1} parent=11 // pred_check
        %p1024 = pneg %p464
      $region62: #{encoder_decoder_forward.1} parent=11 // pred_check_branch
        %1026 = sbr.rel (%p1024) target = $region64
      $region63: #{encoder_decoder_forward.1} parent=11 // pred_region
        _
      $region64: #{encoder_decoder_forward.1} parent=11 // pred_fallthru
        _
      // Predicated region
      $region65: #{encoder_decoder_forward.1} parent=11 // pred_check
        %p1027 = pneg %p485
      $region66: #{encoder_decoder_forward.1} parent=11 // pred_check_branch
        %1029 = sbr.rel (%p1027) target = $region68
      $region67: #{encoder_decoder_forward.1} parent=11 // pred_region
        _
      $region68: #{encoder_decoder_forward.1} parent=11 // pred_fallthru
        _
      // Predicated region
      $region69: #{encoder_decoder_forward.1} parent=11 // pred_check
        %p1030 = pneg %p506
      $region70: #{encoder_decoder_forward.1} parent=11 // pred_check_branch
        %1032 = sbr.rel (%p1030) target = $region72
      $region71: #{encoder_decoder_forward.1} parent=11 // pred_region
        _
      $region72: #{encoder_decoder_forward.1} parent=11 // pred_fallthru
        _
      // Predicated region
      $region73: #{encoder_decoder_forward.1} parent=11 // pred_check
        %p1033 = pneg %p527
      $region74: #{encoder_decoder_forward.1} parent=11 // pred_check_branch
        %1035 = sbr.rel (%p1033) target = $region76
      $region75: #{encoder_decoder_forward.1} parent=11 // pred_region
        _
      $region76: #{encoder_decoder_forward.1} parent=11 // pred_fallthru
        _
      // Predicated region
      $region77: #{encoder_decoder_forward.1} parent=11 // pred_check
        %p1036 = pneg %p548
      $region78: #{encoder_decoder_forward.1} parent=11 // pred_check_branch
        %1038 = sbr.rel (%p1036) target = $region80
      $region79: #{encoder_decoder_forward.1} parent=11 // pred_region
        _
      $region80: #{encoder_decoder_forward.1} parent=11 // pred_fallthru
        _
      // Predicated region
      $region81: #{encoder_decoder_forward.1} parent=11 // pred_check
        %p1039 = pneg %p569
      $region82: #{encoder_decoder_forward.1} parent=11 // pred_check_branch
        %1041 = sbr.rel (%p1039) target = $region84
      $region83: #{encoder_decoder_forward.1} parent=11 // pred_region
        _
      $region84: #{encoder_decoder_forward.1} parent=11 // pred_fallthru
        _
      // Predicated region
      $region85: #{encoder_decoder_forward.1} parent=11 // pred_check
        %p1042 = pneg %p590
      $region86: #{encoder_decoder_forward.1} parent=11 // pred_check_branch
        %1044 = sbr.rel (%p1042) target = $region88
      $region87: #{encoder_decoder_forward.1} parent=11 // pred_region
        _
      $region88: #{encoder_decoder_forward.1} parent=11 // pred_fallthru
        _
      // Predicated region
      $region89: #{encoder_decoder_forward.1} parent=11 // pred_check
        %p1045 = pneg %p611
      $region90: #{encoder_decoder_forward.1} parent=11 // pred_check_branch
        %1047 = sbr.rel (%p1045) target = $region92
      $region91: #{encoder_decoder_forward.1} parent=11 // pred_region
        _
      $region92: #{encoder_decoder_forward.1} parent=11 // pred_fallthru
        _
      // Predicated region
      $region93: #{encoder_decoder_forward.1} parent=11 // pred_check
        %p1048 = pneg %p632
      $region94: #{encoder_decoder_forward.1} parent=11 // pred_check_branch
        %1050 = sbr.rel (%p1048) target = $region96
      $region95: #{encoder_decoder_forward.1} parent=11 // pred_region
        _
      $region96: #{encoder_decoder_forward.1} parent=11 // pred_fallthru
        _
      // Predicated region
      $region97: #{encoder_decoder_forward.1} parent=11 // pred_check
        %p1051 = pneg %p653
      $region98: #{encoder_decoder_forward.1} parent=11 // pred_check_branch
        %1053 = sbr.rel (%p1051) target = $region100
      $region99: #{encoder_decoder_forward.1} parent=11 // pred_region
        _
      $region100: #{encoder_decoder_forward.1} parent=11 // pred_fallthru
        _
      // Predicated region
      $region101: #{encoder_decoder_forward.1} parent=11 // pred_check
        %p1054 = pneg %p674
      $region102: #{encoder_decoder_forward.1} parent=11 // pred_check_branch
        %1056 = sbr.rel (%p1054) target = $region104
      $region103: #{encoder_decoder_forward.1} parent=11 // pred_region
        _
      $region104: #{encoder_decoder_forward.1} parent=11 // pred_fallthru
        _
      // Predicated region
      $region105: #{encoder_decoder_forward.1} parent=11 // pred_check
        %p1057 = pneg %p695
      $region106: #{encoder_decoder_forward.1} parent=11 // pred_check_branch
        %1059 = sbr.rel (%p1057) target = $region108
      $region107: #{encoder_decoder_forward.1} parent=11 // pred_region
        _
      $region108: #{encoder_decoder_forward.1} parent=11 // pred_fallthru
        _
      // Predicated region
      $region109: #{encoder_decoder_forward.1} parent=11 // pred_check
        %p1060 = pneg %p716
      $region110: #{encoder_decoder_forward.1} parent=11 // pred_check_branch
        %1062 = sbr.rel (%p1060) target = $region112
      $region111: #{encoder_decoder_forward.1} parent=11 // pred_region
        _
      $region112: #{encoder_decoder_forward.1} parent=11 // pred_fallthru
        _
      // Predicated region
      $region113: #{encoder_decoder_forward.1} parent=11 // pred_check
        %p1063 = pneg %p737
      $region114: #{encoder_decoder_forward.1} parent=11 // pred_check_branch
        %1065 = sbr.rel (%p1063) target = $region116
      $region115: #{encoder_decoder_forward.1} parent=11 // pred_region
        _
      $region116: #{encoder_decoder_forward.1} parent=11 // pred_fallthru
        _
      // Predicated region
      $region117: #{encoder_decoder_forward.1} parent=11 // pred_check
        %p1066 = pneg %p758
      $region118: #{encoder_decoder_forward.1} parent=11 // pred_check_branch
        %1068 = sbr.rel (%p1066) target = $region120
      $region119: #{encoder_decoder_forward.1} parent=11 // pred_region
        _
      $region120: #{encoder_decoder_forward.1} parent=11 // pred_fallthru
        _
      // Predicated region
      $region121: #{encoder_decoder_forward.1} parent=11 // pred_check
        %p1069 = pneg %p779
      $region122: #{encoder_decoder_forward.1} parent=11 // pred_check_branch
        %1071 = sbr.rel (%p1069) target = $region124
      $region123: #{encoder_decoder_forward.1} parent=11 // pred_region
        _
      $region124: #{encoder_decoder_forward.1} parent=11 // pred_fallthru
        _
      // Predicated region
      $region125: #{encoder_decoder_forward.1} parent=11 // pred_check
        %p1072 = pneg %p800
      $region126: #{encoder_decoder_forward.1} parent=11 // pred_check_branch
        %1074 = sbr.rel (%p1072) target = $region128
      $region127: #{encoder_decoder_forward.1} parent=11 // pred_region
        _
      $region128: #{encoder_decoder_forward.1} parent=11 // pred_fallthru
        _
      // Predicated region
      $region129: #{encoder_decoder_forward.1} parent=11 // pred_check
        %p1075 = pneg %p821
      $region130: #{encoder_decoder_forward.1} parent=11 // pred_check_branch
        %1077 = sbr.rel (%p1075) target = $region132
      $region131: #{encoder_decoder_forward.1} parent=11 // pred_region
        _
      $region132: #{encoder_decoder_forward.1} parent=11 // pred_fallthru
        _
      // Predicated region
      $region133: #{encoder_decoder_forward.1} parent=11 // pred_check
        %p1078 = pneg %p842
      $region134: #{encoder_decoder_forward.1} parent=11 // pred_check_branch
        %1080 = sbr.rel (%p1078) target = $region136
      $region135: #{encoder_decoder_forward.1} parent=11 // pred_region
        _
      $region136: #{encoder_decoder_forward.1} parent=11 // pred_fallthru
        _
      // Predicated region
      $region137: #{encoder_decoder_forward.1} parent=11 // pred_check
        %p1081 = pneg %p863
      $region138: #{encoder_decoder_forward.1} parent=11 // pred_check_branch
        %1083 = sbr.rel (%p1081) target = $region140
      $region139: #{encoder_decoder_forward.1} parent=11 // pred_region
        _
      $region140: #{encoder_decoder_forward.1} parent=11 // pred_fallthru
        _
      // Predicated region
      $region141: #{encoder_decoder_forward.1} parent=11 // pred_check
        %p1084 = pneg %p884
      $region142: #{encoder_decoder_forward.1} parent=11 // pred_check_branch
        %1086 = sbr.rel (%p1084) target = $region144
      $region143: #{encoder_decoder_forward.1} parent=11 // pred_region
        _
      $region144: #{encoder_decoder_forward.1} parent=11 // pred_fallthru
        _
      // Predicated region
      $region145: #{encoder_decoder_forward.1} parent=11 // pred_check
        %p1087 = pneg %p905
      $region146: #{encoder_decoder_forward.1} parent=11 // pred_check_branch
        %1089 = sbr.rel (%p1087) target = $region148
      $region147: #{encoder_decoder_forward.1} parent=11 // pred_region
        _
      $region148: #{encoder_decoder_forward.1} parent=11 // pred_fallthru
        _
      // Predicated region
      $region149: #{encoder_decoder_forward.1} parent=11 // pred_check
        %p1090 = pneg %p926
      $region150: #{encoder_decoder_forward.1} parent=11 // pred_check_branch
        %1092 = sbr.rel (%p1090) target = $region152
      $region151: #{encoder_decoder_forward.1} parent=11 // pred_region
        _
      $region152: #{encoder_decoder_forward.1} parent=11 // pred_fallthru
        _
      // Predicated region
      $region153: #{encoder_decoder_forward.1} parent=11 // pred_check
        %p1093 = pneg %p947
      $region154: #{encoder_decoder_forward.1} parent=11 // pred_check_branch
        %1095 = sbr.rel (%p1093) target = $region156
      $region155: #{encoder_decoder_forward.1} parent=11 // pred_region
        _
      $region156: #{encoder_decoder_forward.1} parent=11 // pred_fallthru
        _
    $region12: #{encoder_decoder_forward.1} parent=5 // pred_fallthru
      _
    %p1096 = scmp.lt.s32.totalorder %s87, 2
    // Predicated region
    $region157: #{encoder_decoder_forward.1} parent=5 // pred_check
      %p1097 = pneg %p1096
    $region158: #{encoder_decoder_forward.1} parent=5 // pred_check_branch
      %1099 = sbr.rel (%p1097) target = $region160
    $region159: #{encoder_decoder_forward.1} parent=5 // pred_region
      // Predicated region
      $region161: #{encoder_decoder_forward.1} parent=159 // pred_check
        %p1100 = pneg %p107
      $region162: #{encoder_decoder_forward.1} parent=159 // pred_check_branch
        %1102 = sbr.rel (%p1100) target = $region164
      $region163: #{encoder_decoder_forward.1} parent=159 // pred_region
        %p1103 = scmp.lt.s32.totalorder %s87, 1
        %s1104 = scalar_select %p1103, %s87, 1
        %s1105 = smul.addr %s1104, 2
        %s1106 = smul.addr %s1105, 8
        %s1107 = scalar_lea.vmem %s1, %s1106
      $region164: #{encoder_decoder_forward.1} parent=159 // pred_fallthru
        _
      // Predicated region
      $region165: #{encoder_decoder_forward.1} parent=159 // pred_check
        %p1108 = pneg %p133
      $region166: #{encoder_decoder_forward.1} parent=159 // pred_check_branch
        %1110 = sbr.rel (%p1108) target = $region168
      $region167: #{encoder_decoder_forward.1} parent=159 // pred_region
        %p1111 = scmp.lt.s32.totalorder %s87, 1
        %s1112 = scalar_select %p1111, %s87, 1
        %s1113 = smul.addr %s1112, 2
        %s1114 = smul.addr %s1113, 8
        %s1115 = scalar_lea.vmem %s3, %s1114
      $region168: #{encoder_decoder_forward.1} parent=159 // pred_fallthru
        _
      // Predicated region
      $region169: #{encoder_decoder_forward.1} parent=159 // pred_check
        %p1116 = pneg %p159
      $region170: #{encoder_decoder_forward.1} parent=159 // pred_check_branch
        %1118 = sbr.rel (%p1116) target = $region172
      $region171: #{encoder_decoder_forward.1} parent=159 // pred_region
        %p1119 = scmp.lt.s32.totalorder %s87, 1
        %s1120 = scalar_select %p1119, %s87, 1
        %s1121 = scalar_lea.vmem %s5, %s1120
      $region172: #{encoder_decoder_forward.1} parent=159 // pred_fallthru
        _
      // Predicated region
      $region173: #{encoder_decoder_forward.1} parent=159 // pred_check
        %p1122 = pneg %p185
      $region174: #{encoder_decoder_forward.1} parent=159 // pred_check_branch
        %1124 = sbr.rel (%p1122) target = $region176
      $region175: #{encoder_decoder_forward.1} parent=159 // pred_region
        %p1125 = scmp.lt.s32.totalorder %s87, 1
        %s1126 = scalar_select %p1125, %s87, 1
        %s1127 = smul.addr %s1126, 2
        %s1128 = smul.addr %s1127, 8
        %s1129 = scalar_lea.vmem %s7, %s1128
      $region176: #{encoder_decoder_forward.1} parent=159 // pred_fallthru
        _
    $region160: #{encoder_decoder_forward.1} parent=5 // pred_fallthru
      _
    %p1130 = scmp.le.s32.totalorder 1, %s87
    %p1131 = scmp.lt.s32.totalorder %s87, 3
    %p1132 = pnand %p1130, %p1131
    %p1133 = pneg %p1132
    // Predicated region
    $region177: #{encoder_decoder_forward.1} parent=5 // pred_check
      _
    $region178: #{encoder_decoder_forward.1} parent=5 // pred_check_branch
      %1135 = sbr.rel (%p1132) target = $region180
    $region179: #{encoder_decoder_forward.1} parent=5 // pred_region
      %s1136 = ssub.s32 %s87, 1
      %p1137 = scmp.lt.s32.totalorder %s92, 1
      %s1138 = scalar_select %p1137, %s92, 1
      %s1139 = smul.addr %s1138, 2
      %s1140 = smul.addr %s1139, 8
      %s1141 = scalar_lea.vmem %s1, %s1140
      %p1142 = pneg %p113
      %p1143 = pneg %p110
      %p1144 = scmp.lt.s32.totalorder %s92, 1
      %s1145 = scalar_select %p1144, %s92, 1
      %s1146 = smul.addr %s1145, 2
      %s1147 = smul.addr %s1146, 8
      %s1148 = scalar_lea.vmem %s3, %s1147
      %p1149 = pneg %p139
      %p1150 = pneg %p136
      %p1151 = scmp.lt.s32.totalorder %s92, 1
      %s1152 = scalar_select %p1151, %s92, 1
      %s1153 = scalar_lea.vmem %s5, %s1152
      %p1154 = pneg %p165
      %p1155 = pneg %p162
      %p1156 = scmp.lt.s32.totalorder %s92, 1
      %s1157 = scalar_select %p1156, %s92, 1
      %s1158 = smul.addr %s1157, 2
      %s1159 = smul.addr %s1158, 8
      %s1160 = scalar_lea.vmem %s7, %s1159
      %p1161 = pneg %p191
      %p1162 = pneg %p188
      %p1163 = pneg %p212
      %p1164 = pneg %p209
      %p1165 = pneg %p233
      %p1166 = pneg %p230
      %p1167 = pneg %p254
      %p1168 = pneg %p251
      %p1169 = pneg %p275
      %p1170 = pneg %p272
      %p1171 = pneg %p296
      %p1172 = pneg %p293
      %p1173 = pneg %p317
      %p1174 = pneg %p314
      %p1175 = pneg %p338
      %p1176 = pneg %p335
      %p1177 = pneg %p359
      %p1178 = pneg %p356
      %p1179 = pneg %p380
      %p1180 = pneg %p377
      %p1181 = pneg %p401
      %p1182 = pneg %p398
      %p1183 = pneg %p422
      %p1184 = pneg %p419
      %p1185 = pneg %p443
      %p1186 = pneg %p440
      %p1187 = pneg %p464
      %p1188 = pneg %p461
      %p1189 = pneg %p485
      %p1190 = pneg %p482
      %p1191 = pneg %p506
      %p1192 = pneg %p503
      %p1193 = pneg %p527
      %p1194 = pneg %p524
      %p1195 = pneg %p548
      %p1196 = pneg %p545
      %p1197 = pneg %p569
      %p1198 = pneg %p566
      %p1199 = pneg %p590
      %p1200 = pneg %p587
      %p1201 = pneg %p611
      %p1202 = pneg %p608
      %p1203 = pneg %p632
      %p1204 = pneg %p629
      %p1205 = pneg %p653
      %p1206 = pneg %p650
      %p1207 = pneg %p674
      %p1208 = pneg %p671
      %p1209 = pneg %p695
      %p1210 = pneg %p692
      %p1211 = pneg %p716
      %p1212 = pneg %p713
      %p1213 = pneg %p737
      %p1214 = pneg %p734
      %p1215 = pneg %p758
      %p1216 = pneg %p755
      %p1217 = pneg %p779
      %p1218 = pneg %p776
      %p1219 = pneg %p800
      %p1220 = pneg %p797
      %p1221 = pneg %p821
      %p1222 = pneg %p818
      %p1223 = pneg %p842
      %p1224 = pneg %p839
      %p1225 = pneg %p863
      %p1226 = pneg %p860
      %p1227 = pneg %p884
      %p1228 = pneg %p881
      %p1229 = pneg %p905
      %p1230 = pneg %p902
      %p1231 = pneg %p926
      %p1232 = pneg %p923
      %p1233 = pneg %p947
      %p1234 = pneg %p944
      %p1235 = pneg %p973
      %p1236 = pneg %p970
      %p1237 = scmp.lt.s32.totalorder %s92, 1
      %s1238 = scalar_select %p1237, %s92, 1
      %s1239 = smul.addr %s1238, 2
      %s1240 = smul.addr %s1239, 8
      %s1241 = scalar_lea.vmem %s81, %s1240
      %p1242 = scmp.lt.s32.totalorder %s92, 1
      %s1243 = scalar_select %p1242, %s92, 1
      %s1244 = smul.addr %s1243, 2
      %s1245 = smul.addr %s1244, 8
      %s1246 = scalar_lea.vmem %s1, %s1245
      %p1247 = scmp.lt.s32.totalorder %s92, 1
      %s1248 = scalar_select %p1247, %s92, 1
      %s1249 = smul.addr %s1248, 2
      %s1250 = smul.addr %s1249, 8
      %s1251 = scalar_lea.vmem %s3, %s1250
      %p1252 = scmp.lt.s32.totalorder %s92, 1
      %s1253 = scalar_select %p1252, %s92, 1
      %s1254 = scalar_lea.vmem %s5, %s1253
      %p1255 = scmp.lt.s32.totalorder %s92, 1
      %s1256 = scalar_select %p1255, %s92, 1
      %s1257 = smul.addr %s1256, 2
      %s1258 = smul.addr %s1257, 8
      %s1259 = scalar_lea.vmem %s7, %s1258
      %p1260 = scmp.lt.s32.totalorder %s92, 1
      %s1261 = scalar_select %p1260, %s92, 1
      %s1262 = smul.addr %s1261, 2
      %s1263 = smul.addr %s1262, 8
      %s1264 = scalar_lea.vmem %s81, %s1263
      %v1265 = vld [vmem:[%s1246] sm:$0xff]
      %v1266 = vld [vmem:[%s1246 + $0x8] sm:$0xff]
      %v1267 = vld [vmem:[%s1254] sm:$0x1]
      %v1269 = vperm.slane %v1267, 0
      %v1271 = vld [vmem:[%s25] sm:$0x1]
      %v1272 = vld [vmem:[%s27] sm:$0x1]
      %vm1273 = vcmask 261120
      %v1274 = vsel %vm1273, %v1265, 0.0
      %1275 = vadd.xlane.f32.xlu0 %v1274
      %v1276 = vpop.xlane.xlu0 %1275
      %v1277 = vsel %vm1273, %v1266, 0.0
      %1278 = vadd.xlane.f32.xlu0 %v1277
      %v1279 = vpop.xlane.xlu0 %1278
      %v1280 = vrcp.pop 32.0
      %v1281 = vmul.f32 32.0, %v1280
      %v1282 = vsub.f32 1.0, %v1281
      %v1283 = vmul.f32 %v1280, %v1282
      %v1284 = vadd.f32 %v1280, %v1283
      %vm1285 = vweird.f32 %v1280
      %v1286 = vsel %vm1285, %v1280, %v1284
      %v1287 = vmul.f32 %v1276, %v1286
      %v1288 = vmul.f32 %v1279, %v1286
      %v1289 = vsub.f32 %v1265, %v1287
      %v1290 = vsub.f32 %v1266, %v1288
      %v1291 = vmul.f32 %v1289, %v1289
      %v1292 = vmul.f32 %v1290, %v1290
      %v1293 = vsel %vm1273, %v1291, 0.0
      %1294 = vadd.xlane.f32.xlu0 %v1293
      %v1295 = vpop.xlane.xlu0 %1294
      %v1296 = vsel %vm1273, %v1292, 0.0
      %1297 = vadd.xlane.f32.xlu0 %v1296
      %v1298 = vpop.xlane.xlu0 %1297
      %v1299 = vrcp.pop 31.0
      %v1300 = vmul.f32 31.0, %v1299
      %v1301 = vsub.f32 1.0, %v1300
      %v1302 = vmul.f32 %v1299, %v1301
      %v1303 = vadd.f32 %v1299, %v1302
      %vm1304 = vweird.f32 %v1299
      %v1305 = vsel %vm1304, %v1299, %v1303
      %v1306 = vmul.f32 %v1295, %v1305
      %v1307 = vmul.f32 %v1298, %v1305
      %v1308 = vrsqrt.pop %v1306
      %v1309 = vmul.f32 %v1308, %v1306
      %v1310 = vmul.f32 %v1309, %v1308
      %v1311 = vmul.f32 0.5, %v1310
      %v1312 = vsub.f32 1.5, %v1311
      %v1313 = vmul.f32 %v1308, %v1312
      %v1314 = vmul.f32 %v1306, %v1313
      %vm1315 = vcmp.eq.f32.partialorder %v1306, inf
      %v1316 = vsel %vm1315, %v1306, %v1314
      %vm1317 = vcmp.eq.f32.partialorder %v1306, 0.0
      %v1318 = vand.u32 %v1306, 2147483648
      %v1319 = vsel %vm1317, %v1318, %v1316
      %v1320 = vrsqrt.pop %v1307
      %v1321 = vmul.f32 %v1320, %v1307
      %v1322 = vmul.f32 %v1321, %v1320
      %v1323 = vmul.f32 0.5, %v1322
      %v1324 = vsub.f32 1.5, %v1323
      %v1325 = vmul.f32 %v1320, %v1324
      %v1326 = vmul.f32 %v1307, %v1325
      %vm1327 = vcmp.eq.f32.partialorder %v1307, inf
      %v1328 = vsel %vm1327, %v1307, %v1326
      %vm1329 = vcmp.eq.f32.partialorder %v1307, 0.0
      %v1330 = vand.u32 %v1307, 2147483648
      %v1331 = vsel %vm1329, %v1330, %v1328
      %v1332 = vadd.f32 %v1319, 1e-06
      %v1333 = vadd.f32 %v1331, 1e-06
      %v1334 = vrcp.pop %v1332
      %v1335 = vmul.f32 %v1332, %v1334
      %v1336 = vsub.f32 1.0, %v1335
      %v1337 = vmul.f32 %v1334, %v1336
      %v1338 = vadd.f32 %v1334, %v1337
      %vm1339 = vweird.f32 %v1332
      %vm1340 = vweird.f32 %v1334
      %vm1341 = vmor %vm1339, %vm1340
      %v1342 = vsel %vm1341, %v1334, %v1338
      %v1343 = vand.u32 2147483647, %v1332
      %vm1344 = vcmp.eq.f32.partialorder %v1343, 8.507059e+37
      %v1345 = vand.u32 %v1332, 2147483648
      %v1346 = vor.u32 1.1754944e-38, %v1345
      %v1347 = vsel %vm1344, %v1346, %v1342
      %v1348 = vmul.f32 1.0, %v1347
      %v1349 = vrcp.pop %v1333
      %v1350 = vmul.f32 %v1333, %v1349
      %v1351 = vsub.f32 1.0, %v1350
      %v1352 = vmul.f32 %v1349, %v1351
      %v1353 = vadd.f32 %v1349, %v1352
      %vm1354 = vweird.f32 %v1333
      %vm1355 = vweird.f32 %v1349
      %vm1356 = vmor %vm1354, %vm1355
      %v1357 = vsel %vm1356, %v1349, %v1353
      %v1358 = vand.u32 2147483647, %v1333
      %vm1359 = vcmp.eq.f32.partialorder %v1358, 8.507059e+37
      %v1360 = vand.u32 %v1333, 2147483648
      %v1361 = vor.u32 1.1754944e-38, %v1360
      %v1362 = vsel %vm1359, %v1361, %v1357
      %v1363 = vmul.f32 1.0, %v1362
      %v1365 = vperm.slane %v1271, 0
      %v1367 = vmul.f32 %v1365, %v1348
      %v1368 = vmul.f32 %v1365, %v1363
      %v1369 = vmul.f32 %v1289, %v1367
      %v1370 = vmul.f32 %v1290, %v1368
      %v1372 = vperm.slane %v1272, 0
      %v1374 = vadd.f32 %v1369, %v1372
      %v1375 = vadd.f32 %v1370, %v1372
      %v1376 = vld [vmem:[%s9] sm:$0xff]
      %v1377 = vld [vmem:[%s9 + $0x8] sm:$0xff]
      %v1378 = vld [vmem:[%s9 + $0x10] sm:$0xff]
      %v1379 = vld [vmem:[%s9 + $0x18] sm:$0xff]
      %v1380 = vld [vmem:[%s11] sm:$0x1]
      %v1381 = vld [vmem:[%s13] sm:$0xff]
      %v1382 = vld [vmem:[%s13 + $0x8] sm:$0xff]
      %v1383 = vld [vmem:[%s13 + $0x10] sm:$0xff]
      %v1384 = vld [vmem:[%s13 + $0x18] sm:$0xff]
      %v1385 = vld [vmem:[%s15] sm:$0x1]
      %v1387 = vperm.slane %v1380, 0
      %v1390 = vsel %vm1273, %v1374, 0
      %v1393 = vsel %vm1273, %v1375, 0
      %1395 = vmatpush.msra.mxu0 0.0
      %1396 = vmatpush.msra.mxu0 0.0
      %1397 = vmatpush.msra.mxu0 0.0
      %1398 = vmatpush.msra.mxu0 0.0
      %1399 = vmatpush.msra.mxu0 0.0
      %1400 = vmatpush.msra.mxu0 0.0
      %1401 = vmatpush.msra.mxu0 0.0
      %1402 = vmatpush.msra.mxu0 0.0
      %1403 = vmatpush.msra.mxu0 0.0
      %1404 = vmatpush.msra.mxu0 0.0
      %1405 = vmatpush.msra.mxu0 0.0
      %1406 = vmatpush.msra.mxu0 0.0
      %1407 = vmatpush.msra.mxu0 %v1379
      %1408 = vmatpush.msra.mxu0 %v1378
      %1409 = vmatpush.msra.mxu0 %v1377
      %1410 = vmatpush.msra.mxu0 %v1376
      %1411 = vmatmul.f32.gmra.mxu0 %v1390
      %v1412 = vpop.f32.mrf.mxu0
      %v1413 = vadd.f32 %v1387, %v1412
      %1414 = vmatmul.f32.gmra.mxu0 %v1393
      %v1415 = vpop.f32.mrf.mxu0
      %v1416 = vadd.f32 %v1387, %v1415
      %1417 = vdwg.mxu0
      %1420 = vrot.lane.b32.xlu0 %v1413, 96
      %v1421 = vpop.permute.xlu0 %1420
      %1422 = vrot.lane.b32.xlu0 %v1416, 96
      %v1423 = vpop.permute.xlu0 %1422
      %vm1424 = vcmask 64512
      %v1425 = vsel %vm1424, %v1413, 0
      %v1427 = vsel %vm1424, %v1416, 0
      %v1429 = vsel %vm1424, %v1421, 0
      %v1431 = vsel %vm1424, %v1423, 0
      %1433 = vmatpush.xpose.msra.mxu0 0.0
      %1434 = vmatpush.xpose.msra.mxu0 0.0
      %1435 = vmatpush.xpose.msra.mxu0 0.0
      %1436 = vmatpush.xpose.msra.mxu0 0.0
      %1437 = vmatpush.xpose.msra.mxu0 0.0
      %1438 = vmatpush.xpose.msra.mxu0 0.0
      %1439 = vmatpush.xpose.msra.mxu0 0.0
      %1440 = vmatpush.xpose.msra.mxu0 0.0
      %1441 = vmatpush.xpose.msra.mxu0 0.0
      %1442 = vmatpush.xpose.msra.mxu0 0.0
      %1443 = vmatpush.xpose.msra.mxu0 0.0
      %1444 = vmatpush.xpose.msra.mxu0 0.0
      %1445 = vmatpush.xpose.msra.mxu0 0.0
      %1446 = vmatpush.xpose.msra.mxu0 0.0
      %1447 = vmatpush.xpose.msra.mxu0 %v1431
      %1448 = vmatpush.xpose.msra.mxu0 %v1429
      %1449 = vmatmul.f32.gmra.mxu0 %v1425
      %v1450 = vpop.f32.mrf.mxu0
      %v1451 = vadd.f32 0.0, %v1450
      %1452 = vmatmul.f32.gmra.mxu0 %v1427
      %v1453 = vpop.f32.mrf.mxu0
      %v1454 = vadd.f32 0.0, %v1453
      %1455 = vdwg.mxu0
      %v1456 = vmul.f32 %v1451, 0.35355338
      %v1457 = vmul.f32 %v1454, 0.35355338
      %vm1458 = vcmp.eq.f32.partialorder %v1269, 0.0
      %v1459 = vsel %vm1458, -1e+09, %v1456
      %v1460 = vsel %vm1458, -1e+09, %v1457
      %vm1461 = vcmask 130048
      %v1462 = vsel %vm1461, %v1459, -inf
      %1463 = vmax.xlane.f32.xlu0 %v1462
      %v1464 = vpop.xlane.xlu0 %1463
      %v1465 = vsel %vm1461, %v1460, -inf
      %1466 = vmax.xlane.f32.xlu0 %v1465
      %v1467 = vpop.xlane.xlu0 %1466
      %v1468 = vsub.f32 %v1459, %v1464
      %v1469 = vsub.f32 %v1460, %v1467
      %v1470 = vmul.f32 %v1468, 1.442695
      %v1471 = vpow.pop %v1470
      %v1472 = vmul.f32 %v1469, 1.442695
      %v1473 = vpow.pop %v1472
      %v1474 = vsel %vm1461, %v1471, 0.0
      %1475 = vadd.xlane.f32.xlu0 %v1474
      %v1476 = vpop.xlane.xlu0 %1475
      %v1477 = vsel %vm1461, %v1473, 0.0
      %1478 = vadd.xlane.f32.xlu0 %v1477
      %v1479 = vpop.xlane.xlu0 %1478
      %v1480 = vrcp.pop %v1476
      %v1481 = vrcp.pop %v1479
      %v1482 = vmul.f32 %v1471, %v1480
      %v1483 = vmul.f32 %v1473, %v1481
      %1484 = vrot.lane.b32.xlu0 %v1413, 64
      %v1485 = vpop.permute.xlu0 %1484
      %1486 = vrot.lane.b32.xlu0 %v1416, 64
      %v1487 = vpop.permute.xlu0 %1486
      %v1491 = vsel %vm1461, %v1482, 0
      %v1494 = vsel %vm1461, %v1483, 0
      %1496 = vmatpush.msra.mxu0 0.0
      %1497 = vmatpush.msra.mxu0 0.0
      %1498 = vmatpush.msra.mxu0 0.0
      %1499 = vmatpush.msra.mxu0 0.0
      %1500 = vmatpush.msra.mxu0 0.0
      %1501 = vmatpush.msra.mxu0 0.0
      %1502 = vmatpush.msra.mxu0 0.0
      %1503 = vmatpush.msra.mxu0 0.0
      %1504 = vmatpush.msra.mxu0 0.0
      %1505 = vmatpush.msra.mxu0 0.0
      %1506 = vmatpush.msra.mxu0 0.0
      %1507 = vmatpush.msra.mxu0 0.0
      %1508 = vmatpush.msra.mxu0 0.0
      %1509 = vmatpush.msra.mxu0 0.0
      %1510 = vmatpush.msra.mxu0 %v1487
      %1511 = vmatpush.msra.mxu0 %v1485
      %1512 = vmatmul.f32.gmra.mxu0 %v1491
      %v1513 = vpop.f32.mrf.mxu0
      %v1514 = vadd.f32 0.0, %v1513
      %1515 = vmatmul.f32.gmra.mxu0 %v1494
      %v1516 = vpop.f32.mrf.mxu0
      %v1517 = vadd.f32 0.0, %v1516
      %1518 = vdwg.mxu0
      %1519 = vrot.lane.b32.xlu0 %v1413, 120
      %v1520 = vpop.permute.xlu0 %1519
      %1521 = vrot.lane.b32.xlu0 %v1416, 120
      %v1522 = vpop.permute.xlu0 %1521
      %1523 = vrot.lane.b32.xlu0 %v1413, 88
      %v1524 = vpop.permute.xlu0 %1523
      %1525 = vrot.lane.b32.xlu0 %v1416, 88
      %v1526 = vpop.permute.xlu0 %1525
      %v1527 = vsel %vm1424, %v1520, 0
      %v1529 = vsel %vm1424, %v1522, 0
      %v1531 = vsel %vm1424, %v1524, 0
      %v1533 = vsel %vm1424, %v1526, 0
      %1535 = vmatpush.xpose.msra.mxu0 0.0
      %1536 = vmatpush.xpose.msra.mxu0 0.0
      %1537 = vmatpush.xpose.msra.mxu0 0.0
      %1538 = vmatpush.xpose.msra.mxu0 0.0
      %1539 = vmatpush.xpose.msra.mxu0 0.0
      %1540 = vmatpush.xpose.msra.mxu0 0.0
      %1541 = vmatpush.xpose.msra.mxu0 0.0
      %1542 = vmatpush.xpose.msra.mxu0 0.0
      %1543 = vmatpush.xpose.msra.mxu0 0.0
      %1544 = vmatpush.xpose.msra.mxu0 0.0
      %1545 = vmatpush.xpose.msra.mxu0 0.0
      %1546 = vmatpush.xpose.msra.mxu0 0.0
      %1547 = vmatpush.xpose.msra.mxu0 0.0
      %1548 = vmatpush.xpose.msra.mxu0 0.0
      %1549 = vmatpush.xpose.msra.mxu0 %v1533
      %1550 = vmatpush.xpose.msra.mxu0 %v1531
      %1551 = vmatmul.f32.gmra.mxu0 %v1527
      %v1552 = vpop.f32.mrf.mxu0
      %v1553 = vadd.f32 0.0, %v1552
      %1554 = vmatmul.f32.gmra.mxu0 %v1529
      %v1555 = vpop.f32.mrf.mxu0
      %v1556 = vadd.f32 0.0, %v1555
      %1557 = vdwg.mxu0
      %v1558 = vmul.f32 %v1553, 0.35355338
      %v1559 = vmul.f32 %v1556, 0.35355338
      %v1560 = vsel %vm1458, -1e+09, %v1558
      %v1561 = vsel %vm1458, -1e+09, %v1559
      %v1562 = vsel %vm1461, %v1560, -inf
      %1563 = vmax.xlane.f32.xlu0 %v1562
      %v1564 = vpop.xlane.xlu0 %1563
      %v1565 = vsel %vm1461, %v1561, -inf
      %1566 = vmax.xlane.f32.xlu0 %v1565
      %v1567 = vpop.xlane.xlu0 %1566
      %v1568 = vsub.f32 %v1560, %v1564
      %v1569 = vsub.f32 %v1561, %v1567
      %v1570 = vmul.f32 %v1568, 1.442695
      %v1571 = vpow.pop %v1570
      %v1572 = vmul.f32 %v1569, 1.442695
      %v1573 = vpow.pop %v1572
      %v1574 = vsel %vm1461, %v1571, 0.0
      %1575 = vadd.xlane.f32.xlu0 %v1574
      %v1576 = vpop.xlane.xlu0 %1575
      %v1577 = vsel %vm1461, %v1573, 0.0
      %1578 = vadd.xlane.f32.xlu0 %v1577
      %v1579 = vpop.xlane.xlu0 %1578
      %v1580 = vrcp.pop %v1576
      %v1581 = vrcp.pop %v1579
      %v1582 = vmul.f32 %v1571, %v1580
      %v1583 = vmul.f32 %v1573, %v1581
      %1584 = vrot.lane.b32.xlu0 %v1413, 56
      %v1585 = vpop.permute.xlu0 %1584
      %1586 = vrot.lane.b32.xlu0 %v1416, 56
      %v1587 = vpop.permute.xlu0 %1586
      %v1591 = vsel %vm1461, %v1582, 0
      %v1594 = vsel %vm1461, %v1583, 0
      %1596 = vmatpush.msra.mxu0 0.0
      %1597 = vmatpush.msra.mxu0 0.0
      %1598 = vmatpush.msra.mxu0 0.0
      %1599 = vmatpush.msra.mxu0 0.0
      %1600 = vmatpush.msra.mxu0 0.0
      %1601 = vmatpush.msra.mxu0 0.0
      %1602 = vmatpush.msra.mxu0 0.0
      %1603 = vmatpush.msra.mxu0 0.0
      %1604 = vmatpush.msra.mxu0 0.0
      %1605 = vmatpush.msra.mxu0 0.0
      %1606 = vmatpush.msra.mxu0 0.0
      %1607 = vmatpush.msra.mxu0 0.0
      %1608 = vmatpush.msra.mxu0 0.0
      %1609 = vmatpush.msra.mxu0 0.0
      %1610 = vmatpush.msra.mxu0 %v1587
      %1611 = vmatpush.msra.mxu0 %v1585
      %1612 = vmatmul.f32.gmra.mxu0 %v1591
      %v1613 = vpop.f32.mrf.mxu0
      %v1614 = vadd.f32 0.0, %v1613
      %1615 = vmatmul.f32.gmra.mxu0 %v1594
      %v1616 = vpop.f32.mrf.mxu0
      %v1617 = vadd.f32 0.0, %v1616
      %1618 = vdwg.mxu0
      %1619 = vrot.lane.b32.xlu0 %v1413, 112
      %v1620 = vpop.permute.xlu0 %1619
      %1621 = vrot.lane.b32.xlu0 %v1416, 112
      %v1622 = vpop.permute.xlu0 %1621
      %1623 = vrot.lane.b32.xlu0 %v1413, 80
      %v1624 = vpop.permute.xlu0 %1623
      %1625 = vrot.lane.b32.xlu0 %v1416, 80
      %v1626 = vpop.permute.xlu0 %1625
      %v1627 = vsel %vm1424, %v1620, 0
      %v1629 = vsel %vm1424, %v1622, 0
      %v1631 = vsel %vm1424, %v1624, 0
      %v1633 = vsel %vm1424, %v1626, 0
      %1635 = vmatpush.xpose.msra.mxu0 0.0
      %1636 = vmatpush.xpose.msra.mxu0 0.0
      %1637 = vmatpush.xpose.msra.mxu0 0.0
      %1638 = vmatpush.xpose.msra.mxu0 0.0
      %1639 = vmatpush.xpose.msra.mxu0 0.0
      %1640 = vmatpush.xpose.msra.mxu0 0.0
      %1641 = vmatpush.xpose.msra.mxu0 0.0
      %1642 = vmatpush.xpose.msra.mxu0 0.0
      %1643 = vmatpush.xpose.msra.mxu0 0.0
      %1644 = vmatpush.xpose.msra.mxu0 0.0
      %1645 = vmatpush.xpose.msra.mxu0 0.0
      %1646 = vmatpush.xpose.msra.mxu0 0.0
      %1647 = vmatpush.xpose.msra.mxu0 0.0
      %1648 = vmatpush.xpose.msra.mxu0 0.0
      %1649 = vmatpush.xpose.msra.mxu0 %v1633
      %1650 = vmatpush.xpose.msra.mxu0 %v1631
      %1651 = vmatmul.f32.gmra.mxu0 %v1627
      %v1652 = vpop.f32.mrf.mxu0
      %v1653 = vadd.f32 0.0, %v1652
      %1654 = vmatmul.f32.gmra.mxu0 %v1629
      %v1655 = vpop.f32.mrf.mxu0
      %v1656 = vadd.f32 0.0, %v1655
      %1657 = vdwg.mxu0
      %v1658 = vmul.f32 %v1653, 0.35355338
      %v1659 = vmul.f32 %v1656, 0.35355338
      %v1660 = vsel %vm1458, -1e+09, %v1658
      %v1661 = vsel %vm1458, -1e+09, %v1659
      %v1662 = vsel %vm1461, %v1660, -inf
      %1663 = vmax.xlane.f32.xlu0 %v1662
      %v1664 = vpop.xlane.xlu0 %1663
      %v1665 = vsel %vm1461, %v1661, -inf
      %1666 = vmax.xlane.f32.xlu0 %v1665
      %v1667 = vpop.xlane.xlu0 %1666
      %v1668 = vsub.f32 %v1660, %v1664
      %v1669 = vsub.f32 %v1661, %v1667
      %v1670 = vmul.f32 %v1668, 1.442695
      %v1671 = vpow.pop %v1670
      %v1672 = vmul.f32 %v1669, 1.442695
      %v1673 = vpow.pop %v1672
      %v1674 = vsel %vm1461, %v1671, 0.0
      %1675 = vadd.xlane.f32.xlu0 %v1674
      %v1676 = vpop.xlane.xlu0 %1675
      %v1677 = vsel %vm1461, %v1673, 0.0
      %1678 = vadd.xlane.f32.xlu0 %v1677
      %v1679 = vpop.xlane.xlu0 %1678
      %v1680 = vrcp.pop %v1676
      %v1681 = vrcp.pop %v1679
      %v1682 = vmul.f32 %v1671, %v1680
      %v1683 = vmul.f32 %v1673, %v1681
      %1684 = vrot.lane.b32.xlu0 %v1413, 48
      %v1685 = vpop.permute.xlu0 %1684
      %1686 = vrot.lane.b32.xlu0 %v1416, 48
      %v1687 = vpop.permute.xlu0 %1686
      %v1691 = vsel %vm1461, %v1682, 0
      %v1694 = vsel %vm1461, %v1683, 0
      %1696 = vmatpush.msra.mxu0 0.0
      %1697 = vmatpush.msra.mxu0 0.0
      %1698 = vmatpush.msra.mxu0 0.0
      %1699 = vmatpush.msra.mxu0 0.0
      %1700 = vmatpush.msra.mxu0 0.0
      %1701 = vmatpush.msra.mxu0 0.0
      %1702 = vmatpush.msra.mxu0 0.0
      %1703 = vmatpush.msra.mxu0 0.0
      %1704 = vmatpush.msra.mxu0 0.0
      %1705 = vmatpush.msra.mxu0 0.0
      %1706 = vmatpush.msra.mxu0 0.0
      %1707 = vmatpush.msra.mxu0 0.0
      %1708 = vmatpush.msra.mxu0 0.0
      %1709 = vmatpush.msra.mxu0 0.0
      %1710 = vmatpush.msra.mxu0 %v1687
      %1711 = vmatpush.msra.mxu0 %v1685
      %1712 = vmatmul.f32.gmra.mxu0 %v1691
      %v1713 = vpop.f32.mrf.mxu0
      %v1714 = vadd.f32 0.0, %v1713
      %1715 = vmatmul.f32.gmra.mxu0 %v1694
      %v1716 = vpop.f32.mrf.mxu0
      %v1717 = vadd.f32 0.0, %v1716
      %1718 = vdwg.mxu0
      %1719 = vrot.lane.b32.xlu0 %v1413, 104
      %v1720 = vpop.permute.xlu0 %1719
      %1721 = vrot.lane.b32.xlu0 %v1416, 104
      %v1722 = vpop.permute.xlu0 %1721
      %1723 = vrot.lane.b32.xlu0 %v1413, 72
      %v1724 = vpop.permute.xlu0 %1723
      %1725 = vrot.lane.b32.xlu0 %v1416, 72
      %v1726 = vpop.permute.xlu0 %1725
      %v1727 = vsel %vm1424, %v1720, 0
      %v1729 = vsel %vm1424, %v1722, 0
      %v1731 = vsel %vm1424, %v1724, 0
      %v1733 = vsel %vm1424, %v1726, 0
      %1735 = vmatpush.xpose.msra.mxu0 0.0
      %1736 = vmatpush.xpose.msra.mxu0 0.0
      %1737 = vmatpush.xpose.msra.mxu0 0.0
      %1738 = vmatpush.xpose.msra.mxu0 0.0
      %1739 = vmatpush.xpose.msra.mxu0 0.0
      %1740 = vmatpush.xpose.msra.mxu0 0.0
      %1741 = vmatpush.xpose.msra.mxu0 0.0
      %1742 = vmatpush.xpose.msra.mxu0 0.0
      %1743 = vmatpush.xpose.msra.mxu0 0.0
      %1744 = vmatpush.xpose.msra.mxu0 0.0
      %1745 = vmatpush.xpose.msra.mxu0 0.0
      %1746 = vmatpush.xpose.msra.mxu0 0.0
      %1747 = vmatpush.xpose.msra.mxu0 0.0
      %1748 = vmatpush.xpose.msra.mxu0 0.0
      %1749 = vmatpush.xpose.msra.mxu0 %v1733
      %1750 = vmatpush.xpose.msra.mxu0 %v1731
      %1751 = vmatmul.f32.gmra.mxu0 %v1727
      %v1752 = vpop.f32.mrf.mxu0
      %v1753 = vadd.f32 0.0, %v1752
      %1754 = vmatmul.f32.gmra.mxu0 %v1729
      %v1755 = vpop.f32.mrf.mxu0
      %v1756 = vadd.f32 0.0, %v1755
      %1757 = vdwg.mxu0
      %v1758 = vmul.f32 %v1753, 0.35355338
      %v1759 = vmul.f32 %v1756, 0.35355338
      %v1760 = vsel %vm1458, -1e+09, %v1758
      %v1761 = vsel %vm1458, -1e+09, %v1759
      %v1762 = vsel %vm1461, %v1760, -inf
      %1763 = vmax.xlane.f32.xlu0 %v1762
      %v1764 = vpop.xlane.xlu0 %1763
      %v1765 = vsel %vm1461, %v1761, -inf
      %1766 = vmax.xlane.f32.xlu0 %v1765
      %v1767 = vpop.xlane.xlu0 %1766
      %v1768 = vsub.f32 %v1760, %v1764
      %v1769 = vsub.f32 %v1761, %v1767
      %v1770 = vmul.f32 %v1768, 1.442695
      %v1771 = vpow.pop %v1770
      %v1772 = vmul.f32 %v1769, 1.442695
      %v1773 = vpow.pop %v1772
      %v1774 = vsel %vm1461, %v1771, 0.0
      %1775 = vadd.xlane.f32.xlu0 %v1774
      %v1776 = vpop.xlane.xlu0 %1775
      %v1777 = vsel %vm1461, %v1773, 0.0
      %1778 = vadd.xlane.f32.xlu0 %v1777
      %v1779 = vpop.xlane.xlu0 %1778
      %v1780 = vrcp.pop %v1776
      %v1781 = vrcp.pop %v1779
      %v1782 = vmul.f32 %v1771, %v1780
      %v1783 = vmul.f32 %v1773, %v1781
      %1784 = vrot.lane.b32.xlu0 %v1413, 40
      %v1785 = vpop.permute.xlu0 %1784
      %1786 = vrot.lane.b32.xlu0 %v1416, 40
      %v1787 = vpop.permute.xlu0 %1786
      %v1791 = vsel %vm1461, %v1782, 0
      %v1794 = vsel %vm1461, %v1783, 0
      %1796 = vmatpush.msra.mxu0 0.0
      %1797 = vmatpush.msra.mxu0 0.0
      %1798 = vmatpush.msra.mxu0 0.0
      %1799 = vmatpush.msra.mxu0 0.0
      %1800 = vmatpush.msra.mxu0 0.0
      %1801 = vmatpush.msra.mxu0 0.0
      %1802 = vmatpush.msra.mxu0 0.0
      %1803 = vmatpush.msra.mxu0 0.0
      %1804 = vmatpush.msra.mxu0 0.0
      %1805 = vmatpush.msra.mxu0 0.0
      %1806 = vmatpush.msra.mxu0 0.0
      %1807 = vmatpush.msra.mxu0 0.0
      %1808 = vmatpush.msra.mxu0 0.0
      %1809 = vmatpush.msra.mxu0 0.0
      %1810 = vmatpush.msra.mxu0 %v1787
      %1811 = vmatpush.msra.mxu0 %v1785
      %1812 = vmatmul.f32.gmra.mxu0 %v1791
      %v1813 = vpop.f32.mrf.mxu0
      %v1814 = vadd.f32 0.0, %v1813
      %1815 = vmatmul.f32.gmra.mxu0 %v1794
      %v1816 = vpop.f32.mrf.mxu0
      %v1817 = vadd.f32 0.0, %v1816
      %1818 = vdwg.mxu0
      %1821 = vrot.lane.b32.xlu0 %v1614, 8
      %v1822 = vpop.permute.xlu0 %1821
      %1823 = vrot.lane.b32.xlu0 %v1617, 8
      %v1824 = vpop.permute.xlu0 %1823
      %1829 = vrot.lane.b32.xlu0 %v1714, 16
      %v1830 = vpop.permute.xlu0 %1829
      %1831 = vrot.lane.b32.xlu0 %v1717, 16
      %v1832 = vpop.permute.xlu0 %1831
      %1837 = vrot.lane.b32.xlu0 %v1814, 24
      %v1838 = vpop.permute.xlu0 %1837
      %1839 = vrot.lane.b32.xlu0 %v1817, 24
      %v1840 = vpop.permute.xlu0 %1839
      %v1843 = vsel %vm1424, %v1514, %v1822
      %v1844 = vsel %vm1424, %v1517, %v1824
      %v1845 = vsel %vm1461, %v1843, %v1830
      %v1846 = vsel %vm1461, %v1844, %v1832
      %vm1847 = vcmask 195584
      %v1848 = vsel %vm1847, %v1845, %v1838
      %v1849 = vsel %vm1847, %v1846, %v1840
      %v1851 = vperm.slane %v1385, 0
      %v1854 = vsel %vm1273, %v1848, 0
      %v1857 = vsel %vm1273, %v1849, 0
      %1859 = vmatpush.msra.mxu0 0.0
      %1860 = vmatpush.msra.mxu0 0.0
      %1861 = vmatpush.msra.mxu0 0.0
      %1862 = vmatpush.msra.mxu0 0.0
      %1863 = vmatpush.msra.mxu0 0.0
      %1864 = vmatpush.msra.mxu0 0.0
      %1865 = vmatpush.msra.mxu0 0.0
      %1866 = vmatpush.msra.mxu0 0.0
      %1867 = vmatpush.msra.mxu0 0.0
      %1868 = vmatpush.msra.mxu0 0.0
      %1869 = vmatpush.msra.mxu0 0.0
      %1870 = vmatpush.msra.mxu0 0.0
      %1871 = vmatpush.msra.mxu0 %v1384
      %1872 = vmatpush.msra.mxu0 %v1383
      %1873 = vmatpush.msra.mxu0 %v1382
      %1874 = vmatpush.msra.mxu0 %v1381
      %1875 = vmatmul.f32.gmra.mxu0 %v1854
      %v1876 = vpop.f32.mrf.mxu0
      %v1877 = vadd.f32 %v1851, %v1876
      %1878 = vmatmul.f32.gmra.mxu0 %v1857
      %v1879 = vpop.f32.mrf.mxu0
      %v1880 = vadd.f32 %v1851, %v1879
      %1881 = vdwg.mxu0
      %v1882 = vadd.f32 %v1265, %v1877
      %v1883 = vadd.f32 %v1266, %v1880
      %v1884 = vld [vmem:[%s29] sm:$0x1]
      %v1885 = vld [vmem:[%s31] sm:$0x1]
      %v1886 = vsel %vm1273, %v1882, 0.0
      %1887 = vadd.xlane.f32.xlu0 %v1886
      %v1888 = vpop.xlane.xlu0 %1887
      %v1889 = vsel %vm1273, %v1883, 0.0
      %1890 = vadd.xlane.f32.xlu0 %v1889
      %v1891 = vpop.xlane.xlu0 %1890
      %v1892 = vmul.f32 %v1888, %v1286
      %v1893 = vmul.f32 %v1891, %v1286
      %v1894 = vsub.f32 %v1882, %v1892
      %v1895 = vsub.f32 %v1883, %v1893
      %v1896 = vmul.f32 %v1894, %v1894
      %v1897 = vmul.f32 %v1895, %v1895
      %v1898 = vsel %vm1273, %v1896, 0.0
      %1899 = vadd.xlane.f32.xlu0 %v1898
      %v1900 = vpop.xlane.xlu0 %1899
      %v1901 = vsel %vm1273, %v1897, 0.0
      %1902 = vadd.xlane.f32.xlu0 %v1901
      %v1903 = vpop.xlane.xlu0 %1902
      %v1904 = vmul.f32 %v1900, %v1305
      %v1905 = vmul.f32 %v1903, %v1305
      %v1906 = vrsqrt.pop %v1904
      %v1907 = vmul.f32 %v1906, %v1904
      %v1908 = vmul.f32 %v1907, %v1906
      %v1909 = vmul.f32 0.5, %v1908
      %v1910 = vsub.f32 1.5, %v1909
      %v1911 = vmul.f32 %v1906, %v1910
      %v1912 = vmul.f32 %v1904, %v1911
      %vm1913 = vcmp.eq.f32.partialorder %v1904, inf
      %v1914 = vsel %vm1913, %v1904, %v1912
      %vm1915 = vcmp.eq.f32.partialorder %v1904, 0.0
      %v1916 = vand.u32 %v1904, 2147483648
      %v1917 = vsel %vm1915, %v1916, %v1914
      %v1918 = vrsqrt.pop %v1905
      %v1919 = vmul.f32 %v1918, %v1905
      %v1920 = vmul.f32 %v1919, %v1918
      %v1921 = vmul.f32 0.5, %v1920
      %v1922 = vsub.f32 1.5, %v1921
      %v1923 = vmul.f32 %v1918, %v1922
      %v1924 = vmul.f32 %v1905, %v1923
      %vm1925 = vcmp.eq.f32.partialorder %v1905, inf
      %v1926 = vsel %vm1925, %v1905, %v1924
      %vm1927 = vcmp.eq.f32.partialorder %v1905, 0.0
      %v1928 = vand.u32 %v1905, 2147483648
      %v1929 = vsel %vm1927, %v1928, %v1926
      %v1930 = vadd.f32 %v1917, 1e-06
      %v1931 = vadd.f32 %v1929, 1e-06
      %v1932 = vrcp.pop %v1930
      %v1933 = vmul.f32 %v1930, %v1932
      %v1934 = vsub.f32 1.0, %v1933
      %v1935 = vmul.f32 %v1932, %v1934
      %v1936 = vadd.f32 %v1932, %v1935
      %vm1937 = vweird.f32 %v1930
      %vm1938 = vweird.f32 %v1932
      %vm1939 = vmor %vm1937, %vm1938
      %v1940 = vsel %vm1939, %v1932, %v1936
      %v1941 = vand.u32 2147483647, %v1930
      %vm1942 = vcmp.eq.f32.partialorder %v1941, 8.507059e+37
      %v1943 = vand.u32 %v1930, 2147483648
      %v1944 = vor.u32 1.1754944e-38, %v1943
      %v1945 = vsel %vm1942, %v1944, %v1940
      %v1946 = vmul.f32 1.0, %v1945
      %v1947 = vrcp.pop %v1931
      %v1948 = vmul.f32 %v1931, %v1947
      %v1949 = vsub.f32 1.0, %v1948
      %v1950 = vmul.f32 %v1947, %v1949
      %v1951 = vadd.f32 %v1947, %v1950
      %vm1952 = vweird.f32 %v1931
      %vm1953 = vweird.f32 %v1947
      %vm1954 = vmor %vm1952, %vm1953
      %v1955 = vsel %vm1954, %v1947, %v1951
      %v1956 = vand.u32 2147483647, %v1931
      %vm1957 = vcmp.eq.f32.partialorder %v1956, 8.507059e+37
      %v1958 = vand.u32 %v1931, 2147483648
      %v1959 = vor.u32 1.1754944e-38, %v1958
      %v1960 = vsel %vm1957, %v1959, %v1955
      %v1961 = vmul.f32 1.0, %v1960
      %v1963 = vperm.slane %v1884, 0
      %v1965 = vmul.f32 %v1963, %v1946
      %v1966 = vmul.f32 %v1963, %v1961
      %v1967 = vmul.f32 %v1894, %v1965
      %v1968 = vmul.f32 %v1895, %v1966
      %v1970 = vperm.slane %v1885, 0
      %v1972 = vadd.f32 %v1967, %v1970
      %v1973 = vadd.f32 %v1968, %v1970
      %v1974 = vld [vmem:[%s17] sm:$0xff]
      %v1975 = vld [vmem:[%s17 + $0x8] sm:$0xff]
      %v1976 = vld [vmem:[%s17 + $0x10] sm:$0xff]
      %v1977 = vld [vmem:[%s17 + $0x18] sm:$0xff]
      %v1978 = vld [vmem:[%s19] sm:$0x1]
      %v1979 = vld [vmem:[%s21] sm:$0xff]
      %v1980 = vld [vmem:[%s21 + $0x8] sm:$0xff]
      %v1981 = vld [vmem:[%s21 + $0x10] sm:$0xff]
      %v1982 = vld [vmem:[%s21 + $0x18] sm:$0xff]
      %v1983 = vld [vmem:[%s21 + $0x20] sm:$0xff]
      %v1984 = vld [vmem:[%s21 + $0x28] sm:$0xff]
      %v1985 = vld [vmem:[%s21 + $0x30] sm:$0xff]
      %v1986 = vld [vmem:[%s21 + $0x38] sm:$0xff]
      %v1987 = vld [vmem:[%s23] sm:$0x1]
      %v1989 = vperm.slane %v1978, 0
      %v1992 = vsel %vm1273, %v1972, 0
      %v1995 = vsel %vm1273, %v1973, 0
      %1997 = vmatpush.msra.mxu0 0.0
      %1998 = vmatpush.msra.mxu0 0.0
      %1999 = vmatpush.msra.mxu0 0.0
      %2000 = vmatpush.msra.mxu0 0.0
      %2001 = vmatpush.msra.mxu0 0.0
      %2002 = vmatpush.msra.mxu0 0.0
      %2003 = vmatpush.msra.mxu0 0.0
      %2004 = vmatpush.msra.mxu0 0.0
      %2005 = vmatpush.msra.mxu0 0.0
      %2006 = vmatpush.msra.mxu0 0.0
      %2007 = vmatpush.msra.mxu0 0.0
      %2008 = vmatpush.msra.mxu0 0.0
      %2009 = vmatpush.msra.mxu0 %v1977
      %2010 = vmatpush.msra.mxu0 %v1976
      %2011 = vmatpush.msra.mxu0 %v1975
      %2012 = vmatpush.msra.mxu0 %v1974
      %2013 = vmatmul.f32.gmra.mxu0 %v1992
      %v2014 = vpop.f32.mrf.mxu0
      %v2015 = vadd.f32 %v1989, %v2014
      %2016 = vmatmul.f32.gmra.mxu0 %v1995
      %v2017 = vpop.f32.mrf.mxu0
      %v2018 = vadd.f32 %v1989, %v2017
      %2019 = vdwg.mxu0
      %v2020 = vmax.f32 %v2015, 0.0
      %v2021 = vmax.f32 %v2018, 0.0
      %v2023 = vperm.slane %v1987, 0
      %vm2025 = vcmask 523264
      %v2027 = vsel %vm2025, %v2020, 0
      %v2030 = vsel %vm2025, %v2021, 0
      %2032 = vmatpush.msra.mxu0 0.0
      %2033 = vmatpush.msra.mxu0 0.0
      %2034 = vmatpush.msra.mxu0 0.0
      %2035 = vmatpush.msra.mxu0 0.0
      %2036 = vmatpush.msra.mxu0 0.0
      %2037 = vmatpush.msra.mxu0 0.0
      %2038 = vmatpush.msra.mxu0 0.0
      %2039 = vmatpush.msra.mxu0 0.0
      %2040 = vmatpush.msra.mxu0 %v1986
      %2041 = vmatpush.msra.mxu0 %v1985
      %2042 = vmatpush.msra.mxu0 %v1984
      %2043 = vmatpush.msra.mxu0 %v1983
      %2044 = vmatpush.msra.mxu0 %v1982
      %2045 = vmatpush.msra.mxu0 %v1981
      %2046 = vmatpush.msra.mxu0 %v1980
      %2047 = vmatpush.msra.mxu0 %v1979
      %2048 = vmatmul.f32.gmra.mxu0 %v2027
      %v2049 = vpop.f32.mrf.mxu0
      %v2050 = vadd.f32 %v2023, %v2049
      %2051 = vmatmul.f32.gmra.mxu0 %v2030
      %v2052 = vpop.f32.mrf.mxu0
      %v2053 = vadd.f32 %v2023, %v2052
      %2054 = vdwg.mxu0
      %v2055 = vadd.f32 %v1882, %v2050
      %v2056 = vadd.f32 %v1883, %v2053
      %s2057 = scalar_lea.vmem %s25, 1
      %v2058 = vld [vmem:[%s2057] sm:$0x1]
      %s2059 = scalar_lea.vmem %s27, 1
      %v2060 = vld [vmem:[%s2059] sm:$0x1]
      %v2061 = vsel %vm1273, %v2055, 0.0
      %2062 = vadd.xlane.f32.xlu0 %v2061
      %v2063 = vpop.xlane.xlu0 %2062
      %v2064 = vsel %vm1273, %v2056, 0.0
      %2065 = vadd.xlane.f32.xlu0 %v2064
      %v2066 = vpop.xlane.xlu0 %2065
      %v2067 = vmul.f32 %v2063, %v1286
      %v2068 = vmul.f32 %v2066, %v1286
      %v2069 = vsub.f32 %v2055, %v2067
      %v2070 = vsub.f32 %v2056, %v2068
      %v2071 = vmul.f32 %v2069, %v2069
      %v2072 = vmul.f32 %v2070, %v2070
      %v2073 = vsel %vm1273, %v2071, 0.0
      %2074 = vadd.xlane.f32.xlu0 %v2073
      %v2075 = vpop.xlane.xlu0 %2074
      %v2076 = vsel %vm1273, %v2072, 0.0
      %2077 = vadd.xlane.f32.xlu0 %v2076
      %v2078 = vpop.xlane.xlu0 %2077
      %v2079 = vmul.f32 %v2075, %v1305
      %v2080 = vmul.f32 %v2078, %v1305
      %v2081 = vrsqrt.pop %v2079
      %v2082 = vmul.f32 %v2081, %v2079
      %v2083 = vmul.f32 %v2082, %v2081
      %v2084 = vmul.f32 0.5, %v2083
      %v2085 = vsub.f32 1.5, %v2084
      %v2086 = vmul.f32 %v2081, %v2085
      %v2087 = vmul.f32 %v2079, %v2086
      %vm2088 = vcmp.eq.f32.partialorder %v2079, inf
      %v2089 = vsel %vm2088, %v2079, %v2087
      %vm2090 = vcmp.eq.f32.partialorder %v2079, 0.0
      %v2091 = vand.u32 %v2079, 2147483648
      %v2092 = vsel %vm2090, %v2091, %v2089
      %v2093 = vrsqrt.pop %v2080
      %v2094 = vmul.f32 %v2093, %v2080
      %v2095 = vmul.f32 %v2094, %v2093
      %v2096 = vmul.f32 0.5, %v2095
      %v2097 = vsub.f32 1.5, %v2096
      %v2098 = vmul.f32 %v2093, %v2097
      %v2099 = vmul.f32 %v2080, %v2098
      %vm2100 = vcmp.eq.f32.partialorder %v2080, inf
      %v2101 = vsel %vm2100, %v2080, %v2099
      %vm2102 = vcmp.eq.f32.partialorder %v2080, 0.0
      %v2103 = vand.u32 %v2080, 2147483648
      %v2104 = vsel %vm2102, %v2103, %v2101
      %v2105 = vadd.f32 %v2092, 1e-06
      %v2106 = vadd.f32 %v2104, 1e-06
      %v2107 = vrcp.pop %v2105
      %v2108 = vmul.f32 %v2105, %v2107
      %v2109 = vsub.f32 1.0, %v2108
      %v2110 = vmul.f32 %v2107, %v2109
      %v2111 = vadd.f32 %v2107, %v2110
      %vm2112 = vweird.f32 %v2105
      %vm2113 = vweird.f32 %v2107
      %vm2114 = vmor %vm2112, %vm2113
      %v2115 = vsel %vm2114, %v2107, %v2111
      %v2116 = vand.u32 2147483647, %v2105
      %vm2117 = vcmp.eq.f32.partialorder %v2116, 8.507059e+37
      %v2118 = vand.u32 %v2105, 2147483648
      %v2119 = vor.u32 1.1754944e-38, %v2118
      %v2120 = vsel %vm2117, %v2119, %v2115
      %v2121 = vmul.f32 1.0, %v2120
      %v2122 = vrcp.pop %v2106
      %v2123 = vmul.f32 %v2106, %v2122
      %v2124 = vsub.f32 1.0, %v2123
      %v2125 = vmul.f32 %v2122, %v2124
      %v2126 = vadd.f32 %v2122, %v2125
      %vm2127 = vweird.f32 %v2106
      %vm2128 = vweird.f32 %v2122
      %vm2129 = vmor %vm2127, %vm2128
      %v2130 = vsel %vm2129, %v2122, %v2126
      %v2131 = vand.u32 2147483647, %v2106
      %vm2132 = vcmp.eq.f32.partialorder %v2131, 8.507059e+37
      %v2133 = vand.u32 %v2106, 2147483648
      %v2134 = vor.u32 1.1754944e-38, %v2133
      %v2135 = vsel %vm2132, %v2134, %v2130
      %v2136 = vmul.f32 1.0, %v2135
      %v2138 = vperm.slane %v2058, 0
      %v2140 = vmul.f32 %v2138, %v2121
      %v2141 = vmul.f32 %v2138, %v2136
      %v2142 = vmul.f32 %v2069, %v2140
      %v2143 = vmul.f32 %v2070, %v2141
      %v2145 = vperm.slane %v2060, 0
      %v2147 = vadd.f32 %v2142, %v2145
      %v2148 = vadd.f32 %v2143, %v2145
      %s2149 = scalar_lea.vmem %s9, 32
      %v2150 = vld [vmem:[%s2149] sm:$0xff]
      %v2151 = vld [vmem:[%s2149 + $0x8] sm:$0xff]
      %v2152 = vld [vmem:[%s2149 + $0x10] sm:$0xff]
      %v2153 = vld [vmem:[%s2149 + $0x18] sm:$0xff]
      %s2154 = scalar_lea.vmem %s11, 1
      %v2155 = vld [vmem:[%s2154] sm:$0x1]
      %s2156 = scalar_lea.vmem %s13, 32
      %v2157 = vld [vmem:[%s2156] sm:$0xff]
      %v2158 = vld [vmem:[%s2156 + $0x8] sm:$0xff]
      %v2159 = vld [vmem:[%s2156 + $0x10] sm:$0xff]
      %v2160 = vld [vmem:[%s2156 + $0x18] sm:$0xff]
      %s2161 = scalar_lea.vmem %s15, 1
      %v2162 = vld [vmem:[%s2161] sm:$0x1]
      %v2164 = vperm.slane %v2155, 0
      %v2167 = vsel %vm1273, %v2147, 0
      %v2170 = vsel %vm1273, %v2148, 0
      %2172 = vmatpush.msra.mxu0 0.0
      %2173 = vmatpush.msra.mxu0 0.0
      %2174 = vmatpush.msra.mxu0 0.0
      %2175 = vmatpush.msra.mxu0 0.0
      %2176 = vmatpush.msra.mxu0 0.0
      %2177 = vmatpush.msra.mxu0 0.0
      %2178 = vmatpush.msra.mxu0 0.0
      %2179 = vmatpush.msra.mxu0 0.0
      %2180 = vmatpush.msra.mxu0 0.0
      %2181 = vmatpush.msra.mxu0 0.0
      %2182 = vmatpush.msra.mxu0 0.0
      %2183 = vmatpush.msra.mxu0 0.0
      %2184 = vmatpush.msra.mxu0 %v2153
      %2185 = vmatpush.msra.mxu0 %v2152
      %2186 = vmatpush.msra.mxu0 %v2151
      %2187 = vmatpush.msra.mxu0 %v2150
      %2188 = vmatmul.f32.gmra.mxu0 %v2167
      %v2189 = vpop.f32.mrf.mxu0
      %v2190 = vadd.f32 %v2164, %v2189
      %2191 = vmatmul.f32.gmra.mxu0 %v2170
      %v2192 = vpop.f32.mrf.mxu0
      %v2193 = vadd.f32 %v2164, %v2192
      %2194 = vdwg.mxu0
      %2197 = vrot.lane.b32.xlu0 %v2190, 96
      %v2198 = vpop.permute.xlu0 %2197
      %2199 = vrot.lane.b32.xlu0 %v2193, 96
      %v2200 = vpop.permute.xlu0 %2199
      %v2201 = vsel %vm1424, %v2190, 0
      %v2203 = vsel %vm1424, %v2193, 0
      %v2205 = vsel %vm1424, %v2198, 0
      %v2207 = vsel %vm1424, %v2200, 0
      %2209 = vmatpush.xpose.msra.mxu0 0.0
      %2210 = vmatpush.xpose.msra.mxu0 0.0
      %2211 = vmatpush.xpose.msra.mxu0 0.0
      %2212 = vmatpush.xpose.msra.mxu0 0.0
      %2213 = vmatpush.xpose.msra.mxu0 0.0
      %2214 = vmatpush.xpose.msra.mxu0 0.0
      %2215 = vmatpush.xpose.msra.mxu0 0.0
      %2216 = vmatpush.xpose.msra.mxu0 0.0
      %2217 = vmatpush.xpose.msra.mxu0 0.0
      %2218 = vmatpush.xpose.msra.mxu0 0.0
      %2219 = vmatpush.xpose.msra.mxu0 0.0
      %2220 = vmatpush.xpose.msra.mxu0 0.0
      %2221 = vmatpush.xpose.msra.mxu0 0.0
      %2222 = vmatpush.xpose.msra.mxu0 0.0
      %2223 = vmatpush.xpose.msra.mxu0 %v2207
      %2224 = vmatpush.xpose.msra.mxu0 %v2205
      %2225 = vmatmul.f32.gmra.mxu0 %v2201
      %v2226 = vpop.f32.mrf.mxu0
      %v2227 = vadd.f32 0.0, %v2226
      %2228 = vmatmul.f32.gmra.mxu0 %v2203
      %v2229 = vpop.f32.mrf.mxu0
      %v2230 = vadd.f32 0.0, %v2229
      %2231 = vdwg.mxu0
      %v2232 = vmul.f32 %v2227, 0.35355338
      %v2233 = vmul.f32 %v2230, 0.35355338
      %v2234 = vsel %vm1458, -1e+09, %v2232
      %v2235 = vsel %vm1458, -1e+09, %v2233
      %v2236 = vsel %vm1461, %v2234, -inf
      %2237 = vmax.xlane.f32.xlu0 %v2236
      %v2238 = vpop.xlane.xlu0 %2237
      %v2239 = vsel %vm1461, %v2235, -inf
      %2240 = vmax.xlane.f32.xlu0 %v2239
      %v2241 = vpop.xlane.xlu0 %2240
      %v2242 = vsub.f32 %v2234, %v2238
      %v2243 = vsub.f32 %v2235, %v2241
      %v2244 = vmul.f32 %v2242, 1.442695
      %v2245 = vpow.pop %v2244
      %v2246 = vmul.f32 %v2243, 1.442695
      %v2247 = vpow.pop %v2246
      %v2248 = vsel %vm1461, %v2245, 0.0
      %2249 = vadd.xlane.f32.xlu0 %v2248
      %v2250 = vpop.xlane.xlu0 %2249
      %v2251 = vsel %vm1461, %v2247, 0.0
      %2252 = vadd.xlane.f32.xlu0 %v2251
      %v2253 = vpop.xlane.xlu0 %2252
      %v2254 = vrcp.pop %v2250
      %v2255 = vrcp.pop %v2253
      %v2256 = vmul.f32 %v2245, %v2254
      %v2257 = vmul.f32 %v2247, %v2255
      %2258 = vrot.lane.b32.xlu0 %v2190, 64
      %v2259 = vpop.permute.xlu0 %2258
      %2260 = vrot.lane.b32.xlu0 %v2193, 64
      %v2261 = vpop.permute.xlu0 %2260
      %v2265 = vsel %vm1461, %v2256, 0
      %v2268 = vsel %vm1461, %v2257, 0
      %2270 = vmatpush.msra.mxu0 0.0
      %2271 = vmatpush.msra.mxu0 0.0
      %2272 = vmatpush.msra.mxu0 0.0
      %2273 = vmatpush.msra.mxu0 0.0
      %2274 = vmatpush.msra.mxu0 0.0
      %2275 = vmatpush.msra.mxu0 0.0
      %2276 = vmatpush.msra.mxu0 0.0
      %2277 = vmatpush.msra.mxu0 0.0
      %2278 = vmatpush.msra.mxu0 0.0
      %2279 = vmatpush.msra.mxu0 0.0
      %2280 = vmatpush.msra.mxu0 0.0
      %2281 = vmatpush.msra.mxu0 0.0
      %2282 = vmatpush.msra.mxu0 0.0
      %2283 = vmatpush.msra.mxu0 0.0
      %2284 = vmatpush.msra.mxu0 %v2261
      %2285 = vmatpush.msra.mxu0 %v2259
      %2286 = vmatmul.f32.gmra.mxu0 %v2265
      %v2287 = vpop.f32.mrf.mxu0
      %v2288 = vadd.f32 0.0, %v2287
      %2289 = vmatmul.f32.gmra.mxu0 %v2268
      %v2290 = vpop.f32.mrf.mxu0
      %v2291 = vadd.f32 0.0, %v2290
      %2292 = vdwg.mxu0
      %2293 = vrot.lane.b32.xlu0 %v2190, 120
      %v2294 = vpop.permute.xlu0 %2293
      %2295 = vrot.lane.b32.xlu0 %v2193, 120
      %v2296 = vpop.permute.xlu0 %2295
      %2297 = vrot.lane.b32.xlu0 %v2190, 88
      %v2298 = vpop.permute.xlu0 %2297
      %2299 = vrot.lane.b32.xlu0 %v2193, 88
      %v2300 = vpop.permute.xlu0 %2299
      %v2301 = vsel %vm1424, %v2294, 0
      %v2303 = vsel %vm1424, %v2296, 0
      %v2305 = vsel %vm1424, %v2298, 0
      %v2307 = vsel %vm1424, %v2300, 0
      %2309 = vmatpush.xpose.msra.mxu0 0.0
      %2310 = vmatpush.xpose.msra.mxu0 0.0
      %2311 = vmatpush.xpose.msra.mxu0 0.0
      %2312 = vmatpush.xpose.msra.mxu0 0.0
      %2313 = vmatpush.xpose.msra.mxu0 0.0
      %2314 = vmatpush.xpose.msra.mxu0 0.0
      %2315 = vmatpush.xpose.msra.mxu0 0.0
      %2316 = vmatpush.xpose.msra.mxu0 0.0
      %2317 = vmatpush.xpose.msra.mxu0 0.0
      %2318 = vmatpush.xpose.msra.mxu0 0.0
      %2319 = vmatpush.xpose.msra.mxu0 0.0
      %2320 = vmatpush.xpose.msra.mxu0 0.0
      %2321 = vmatpush.xpose.msra.mxu0 0.0
      %2322 = vmatpush.xpose.msra.mxu0 0.0
      %2323 = vmatpush.xpose.msra.mxu0 %v2307
      %2324 = vmatpush.xpose.msra.mxu0 %v2305
      %2325 = vmatmul.f32.gmra.mxu0 %v2301
      %v2326 = vpop.f32.mrf.mxu0
      %v2327 = vadd.f32 0.0, %v2326
      %2328 = vmatmul.f32.gmra.mxu0 %v2303
      %v2329 = vpop.f32.mrf.mxu0
      %v2330 = vadd.f32 0.0, %v2329
      %2331 = vdwg.mxu0
      %v2332 = vmul.f32 %v2327, 0.35355338
      %v2333 = vmul.f32 %v2330, 0.35355338
      %v2334 = vsel %vm1458, -1e+09, %v2332
      %v2335 = vsel %vm1458, -1e+09, %v2333
      %v2336 = vsel %vm1461, %v2334, -inf
      %2337 = vmax.xlane.f32.xlu0 %v2336
      %v2338 = vpop.xlane.xlu0 %2337
      %v2339 = vsel %vm1461, %v2335, -inf
      %2340 = vmax.xlane.f32.xlu0 %v2339
      %v2341 = vpop.xlane.xlu0 %2340
      %v2342 = vsub.f32 %v2334, %v2338
      %v2343 = vsub.f32 %v2335, %v2341
      %v2344 = vmul.f32 %v2342, 1.442695
      %v2345 = vpow.pop %v2344
      %v2346 = vmul.f32 %v2343, 1.442695
      %v2347 = vpow.pop %v2346
      %v2348 = vsel %vm1461, %v2345, 0.0
      %2349 = vadd.xlane.f32.xlu0 %v2348
      %v2350 = vpop.xlane.xlu0 %2349
      %v2351 = vsel %vm1461, %v2347, 0.0
      %2352 = vadd.xlane.f32.xlu0 %v2351
      %v2353 = vpop.xlane.xlu0 %2352
      %v2354 = vrcp.pop %v2350
      %v2355 = vrcp.pop %v2353
      %v2356 = vmul.f32 %v2345, %v2354
      %v2357 = vmul.f32 %v2347, %v2355
      %2358 = vrot.lane.b32.xlu0 %v2190, 56
      %v2359 = vpop.permute.xlu0 %2358
      %2360 = vrot.lane.b32.xlu0 %v2193, 56
      %v2361 = vpop.permute.xlu0 %2360
      %v2365 = vsel %vm1461, %v2356, 0
      %v2368 = vsel %vm1461, %v2357, 0
      %2370 = vmatpush.msra.mxu0 0.0
      %2371 = vmatpush.msra.mxu0 0.0
      %2372 = vmatpush.msra.mxu0 0.0
      %2373 = vmatpush.msra.mxu0 0.0
      %2374 = vmatpush.msra.mxu0 0.0
      %2375 = vmatpush.msra.mxu0 0.0
      %2376 = vmatpush.msra.mxu0 0.0
      %2377 = vmatpush.msra.mxu0 0.0
      %2378 = vmatpush.msra.mxu0 0.0
      %2379 = vmatpush.msra.mxu0 0.0
      %2380 = vmatpush.msra.mxu0 0.0
      %2381 = vmatpush.msra.mxu0 0.0
      %2382 = vmatpush.msra.mxu0 0.0
      %2383 = vmatpush.msra.mxu0 0.0
      %2384 = vmatpush.msra.mxu0 %v2361
      %2385 = vmatpush.msra.mxu0 %v2359
      %2386 = vmatmul.f32.gmra.mxu0 %v2365
      %v2387 = vpop.f32.mrf.mxu0
      %v2388 = vadd.f32 0.0, %v2387
      %2389 = vmatmul.f32.gmra.mxu0 %v2368
      %v2390 = vpop.f32.mrf.mxu0
      %v2391 = vadd.f32 0.0, %v2390
      %2392 = vdwg.mxu0
      %2393 = vrot.lane.b32.xlu0 %v2190, 112
      %v2394 = vpop.permute.xlu0 %2393
      %2395 = vrot.lane.b32.xlu0 %v2193, 112
      %v2396 = vpop.permute.xlu0 %2395
      %2397 = vrot.lane.b32.xlu0 %v2190, 80
      %v2398 = vpop.permute.xlu0 %2397
      %2399 = vrot.lane.b32.xlu0 %v2193, 80
      %v2400 = vpop.permute.xlu0 %2399
      %v2401 = vsel %vm1424, %v2394, 0
      %v2403 = vsel %vm1424, %v2396, 0
      %v2405 = vsel %vm1424, %v2398, 0
      %v2407 = vsel %vm1424, %v2400, 0
      %2409 = vmatpush.xpose.msra.mxu0 0.0
      %2410 = vmatpush.xpose.msra.mxu0 0.0
      %2411 = vmatpush.xpose.msra.mxu0 0.0
      %2412 = vmatpush.xpose.msra.mxu0 0.0
      %2413 = vmatpush.xpose.msra.mxu0 0.0
      %2414 = vmatpush.xpose.msra.mxu0 0.0
      %2415 = vmatpush.xpose.msra.mxu0 0.0
      %2416 = vmatpush.xpose.msra.mxu0 0.0
      %2417 = vmatpush.xpose.msra.mxu0 0.0
      %2418 = vmatpush.xpose.msra.mxu0 0.0
      %2419 = vmatpush.xpose.msra.mxu0 0.0
      %2420 = vmatpush.xpose.msra.mxu0 0.0
      %2421 = vmatpush.xpose.msra.mxu0 0.0
      %2422 = vmatpush.xpose.msra.mxu0 0.0
      %2423 = vmatpush.xpose.msra.mxu0 %v2407
      %2424 = vmatpush.xpose.msra.mxu0 %v2405
      %2425 = vmatmul.f32.gmra.mxu0 %v2401
      %v2426 = vpop.f32.mrf.mxu0
      %v2427 = vadd.f32 0.0, %v2426
      %2428 = vmatmul.f32.gmra.mxu0 %v2403
      %v2429 = vpop.f32.mrf.mxu0
      %v2430 = vadd.f32 0.0, %v2429
      %2431 = vdwg.mxu0
      %v2432 = vmul.f32 %v2427, 0.35355338
      %v2433 = vmul.f32 %v2430, 0.35355338
      %v2434 = vsel %vm1458, -1e+09, %v2432
      %v2435 = vsel %vm1458, -1e+09, %v2433
      %v2436 = vsel %vm1461, %v2434, -inf
      %2437 = vmax.xlane.f32.xlu0 %v2436
      %v2438 = vpop.xlane.xlu0 %2437
      %v2439 = vsel %vm1461, %v2435, -inf
      %2440 = vmax.xlane.f32.xlu0 %v2439
      %v2441 = vpop.xlane.xlu0 %2440
      %v2442 = vsub.f32 %v2434, %v2438
      %v2443 = vsub.f32 %v2435, %v2441
      %v2444 = vmul.f32 %v2442, 1.442695
      %v2445 = vpow.pop %v2444
      %v2446 = vmul.f32 %v2443, 1.442695
      %v2447 = vpow.pop %v2446
      %v2448 = vsel %vm1461, %v2445, 0.0
      %2449 = vadd.xlane.f32.xlu0 %v2448
      %v2450 = vpop.xlane.xlu0 %2449
      %v2451 = vsel %vm1461, %v2447, 0.0
      %2452 = vadd.xlane.f32.xlu0 %v2451
      %v2453 = vpop.xlane.xlu0 %2452
      %v2454 = vrcp.pop %v2450
      %v2455 = vrcp.pop %v2453
      %v2456 = vmul.f32 %v2445, %v2454
      %v2457 = vmul.f32 %v2447, %v2455
      %2458 = vrot.lane.b32.xlu0 %v2190, 48
      %v2459 = vpop.permute.xlu0 %2458
      %2460 = vrot.lane.b32.xlu0 %v2193, 48
      %v2461 = vpop.permute.xlu0 %2460
      %v2465 = vsel %vm1461, %v2456, 0
      %v2468 = vsel %vm1461, %v2457, 0
      %2470 = vmatpush.msra.mxu0 0.0
      %2471 = vmatpush.msra.mxu0 0.0
      %2472 = vmatpush.msra.mxu0 0.0
      %2473 = vmatpush.msra.mxu0 0.0
      %2474 = vmatpush.msra.mxu0 0.0
      %2475 = vmatpush.msra.mxu0 0.0
      %2476 = vmatpush.msra.mxu0 0.0
      %2477 = vmatpush.msra.mxu0 0.0
      %2478 = vmatpush.msra.mxu0 0.0
      %2479 = vmatpush.msra.mxu0 0.0
      %2480 = vmatpush.msra.mxu0 0.0
      %2481 = vmatpush.msra.mxu0 0.0
      %2482 = vmatpush.msra.mxu0 0.0
      %2483 = vmatpush.msra.mxu0 0.0
      %2484 = vmatpush.msra.mxu0 %v2461
      %2485 = vmatpush.msra.mxu0 %v2459
      %2486 = vmatmul.f32.gmra.mxu0 %v2465
      %v2487 = vpop.f32.mrf.mxu0
      %v2488 = vadd.f32 0.0, %v2487
      %2489 = vmatmul.f32.gmra.mxu0 %v2468
      %v2490 = vpop.f32.mrf.mxu0
      %v2491 = vadd.f32 0.0, %v2490
      %2492 = vdwg.mxu0
      %2493 = vrot.lane.b32.xlu0 %v2190, 104
      %v2494 = vpop.permute.xlu0 %2493
      %2495 = vrot.lane.b32.xlu0 %v2193, 104
      %v2496 = vpop.permute.xlu0 %2495
      %2497 = vrot.lane.b32.xlu0 %v2190, 72
      %v2498 = vpop.permute.xlu0 %2497
      %2499 = vrot.lane.b32.xlu0 %v2193, 72
      %v2500 = vpop.permute.xlu0 %2499
      %v2501 = vsel %vm1424, %v2494, 0
      %v2503 = vsel %vm1424, %v2496, 0
      %v2505 = vsel %vm1424, %v2498, 0
      %v2507 = vsel %vm1424, %v2500, 0
      %2509 = vmatpush.xpose.msra.mxu0 0.0
      %2510 = vmatpush.xpose.msra.mxu0 0.0
      %2511 = vmatpush.xpose.msra.mxu0 0.0
      %2512 = vmatpush.xpose.msra.mxu0 0.0
      %2513 = vmatpush.xpose.msra.mxu0 0.0
      %2514 = vmatpush.xpose.msra.mxu0 0.0
      %2515 = vmatpush.xpose.msra.mxu0 0.0
      %2516 = vmatpush.xpose.msra.mxu0 0.0
      %2517 = vmatpush.xpose.msra.mxu0 0.0
      %2518 = vmatpush.xpose.msra.mxu0 0.0
      %2519 = vmatpush.xpose.msra.mxu0 0.0
      %2520 = vmatpush.xpose.msra.mxu0 0.0
      %2521 = vmatpush.xpose.msra.mxu0 0.0
      %2522 = vmatpush.xpose.msra.mxu0 0.0
      %2523 = vmatpush.xpose.msra.mxu0 %v2507
      %2524 = vmatpush.xpose.msra.mxu0 %v2505
      %2525 = vmatmul.f32.gmra.mxu0 %v2501
      %v2526 = vpop.f32.mrf.mxu0
      %v2527 = vadd.f32 0.0, %v2526
      %2528 = vmatmul.f32.gmra.mxu0 %v2503
      %v2529 = vpop.f32.mrf.mxu0
      %v2530 = vadd.f32 0.0, %v2529
      %2531 = vdwg.mxu0
      %v2532 = vmul.f32 %v2527, 0.35355338
      %v2533 = vmul.f32 %v2530, 0.35355338
      %v2534 = vsel %vm1458, -1e+09, %v2532
      %v2535 = vsel %vm1458, -1e+09, %v2533
      %v2536 = vsel %vm1461, %v2534, -inf
      %2537 = vmax.xlane.f32.xlu0 %v2536
      %v2538 = vpop.xlane.xlu0 %2537
      %v2539 = vsel %vm1461, %v2535, -inf
      %2540 = vmax.xlane.f32.xlu0 %v2539
      %v2541 = vpop.xlane.xlu0 %2540
      %v2542 = vsub.f32 %v2534, %v2538
      %v2543 = vsub.f32 %v2535, %v2541
      %v2544 = vmul.f32 %v2542, 1.442695
      %v2545 = vpow.pop %v2544
      %v2546 = vmul.f32 %v2543, 1.442695
      %v2547 = vpow.pop %v2546
      %v2548 = vsel %vm1461, %v2545, 0.0
      %2549 = vadd.xlane.f32.xlu0 %v2548
      %v2550 = vpop.xlane.xlu0 %2549
      %v2551 = vsel %vm1461, %v2547, 0.0
      %2552 = vadd.xlane.f32.xlu0 %v2551
      %v2553 = vpop.xlane.xlu0 %2552
      %v2554 = vrcp.pop %v2550
      %v2555 = vrcp.pop %v2553
      %v2556 = vmul.f32 %v2545, %v2554
      %v2557 = vmul.f32 %v2547, %v2555
      %2558 = vrot.lane.b32.xlu0 %v2190, 40
      %v2559 = vpop.permute.xlu0 %2558
      %2560 = vrot.lane.b32.xlu0 %v2193, 40
      %v2561 = vpop.permute.xlu0 %2560
      %v2565 = vsel %vm1461, %v2556, 0
      %v2568 = vsel %vm1461, %v2557, 0
      %2570 = vmatpush.msra.mxu0 0.0
      %2571 = vmatpush.msra.mxu0 0.0
      %2572 = vmatpush.msra.mxu0 0.0
      %2573 = vmatpush.msra.mxu0 0.0
      %2574 = vmatpush.msra.mxu0 0.0
      %2575 = vmatpush.msra.mxu0 0.0
      %2576 = vmatpush.msra.mxu0 0.0
      %2577 = vmatpush.msra.mxu0 0.0
      %2578 = vmatpush.msra.mxu0 0.0
      %2579 = vmatpush.msra.mxu0 0.0
      %2580 = vmatpush.msra.mxu0 0.0
      %2581 = vmatpush.msra.mxu0 0.0
      %2582 = vmatpush.msra.mxu0 0.0
      %2583 = vmatpush.msra.mxu0 0.0
      %2584 = vmatpush.msra.mxu0 %v2561
      %2585 = vmatpush.msra.mxu0 %v2559
      %2586 = vmatmul.f32.gmra.mxu0 %v2565
      %v2587 = vpop.f32.mrf.mxu0
      %v2588 = vadd.f32 0.0, %v2587
      %2589 = vmatmul.f32.gmra.mxu0 %v2568
      %v2590 = vpop.f32.mrf.mxu0
      %v2591 = vadd.f32 0.0, %v2590
      %2592 = vdwg.mxu0
      %2595 = vrot.lane.b32.xlu0 %v2388, 8
      %v2596 = vpop.permute.xlu0 %2595
      %2597 = vrot.lane.b32.xlu0 %v2391, 8
      %v2598 = vpop.permute.xlu0 %2597
      %2603 = vrot.lane.b32.xlu0 %v2488, 16
      %v2604 = vpop.permute.xlu0 %2603
      %2605 = vrot.lane.b32.xlu0 %v2491, 16
      %v2606 = vpop.permute.xlu0 %2605
      %2611 = vrot.lane.b32.xlu0 %v2588, 24
      %v2612 = vpop.permute.xlu0 %2611
      %2613 = vrot.lane.b32.xlu0 %v2591, 24
      %v2614 = vpop.permute.xlu0 %2613
      %v2617 = vsel %vm1424, %v2288, %v2596
      %v2618 = vsel %vm1424, %v2291, %v2598
      %v2619 = vsel %vm1461, %v2617, %v2604
      %v2620 = vsel %vm1461, %v2618, %v2606
      %v2621 = vsel %vm1847, %v2619, %v2612
      %v2622 = vsel %vm1847, %v2620, %v2614
      %v2624 = vperm.slane %v2162, 0
      %v2627 = vsel %vm1273, %v2621, 0
      %v2630 = vsel %vm1273, %v2622, 0
      %2632 = vmatpush.msra.mxu0 0.0
      %2633 = vmatpush.msra.mxu0 0.0
      %2634 = vmatpush.msra.mxu0 0.0
      %2635 = vmatpush.msra.mxu0 0.0
      %2636 = vmatpush.msra.mxu0 0.0
      %2637 = vmatpush.msra.mxu0 0.0
      %2638 = vmatpush.msra.mxu0 0.0
      %2639 = vmatpush.msra.mxu0 0.0
      %2640 = vmatpush.msra.mxu0 0.0
      %2641 = vmatpush.msra.mxu0 0.0
      %2642 = vmatpush.msra.mxu0 0.0
      %2643 = vmatpush.msra.mxu0 0.0
      %2644 = vmatpush.msra.mxu0 %v2160
      %2645 = vmatpush.msra.mxu0 %v2159
      %2646 = vmatpush.msra.mxu0 %v2158
      %2647 = vmatpush.msra.mxu0 %v2157
      %2648 = vmatmul.f32.gmra.mxu0 %v2627
      %v2649 = vpop.f32.mrf.mxu0
      %v2650 = vadd.f32 %v2624, %v2649
      %2651 = vmatmul.f32.gmra.mxu0 %v2630
      %v2652 = vpop.f32.mrf.mxu0
      %v2653 = vadd.f32 %v2624, %v2652
      %2654 = vdwg.mxu0
      %v2655 = vadd.f32 %v2055, %v2650
      %v2656 = vadd.f32 %v2056, %v2653
      %s2657 = scalar_lea.vmem %s29, 1
      %v2658 = vld [vmem:[%s2657] sm:$0x1]
      %s2659 = scalar_lea.vmem %s31, 1
      %v2660 = vld [vmem:[%s2659] sm:$0x1]
      %v2661 = vsel %vm1273, %v2655, 0.0
      %2662 = vadd.xlane.f32.xlu0 %v2661
      %v2663 = vpop.xlane.xlu0 %2662
      %v2664 = vsel %vm1273, %v2656, 0.0
      %2665 = vadd.xlane.f32.xlu0 %v2664
      %v2666 = vpop.xlane.xlu0 %2665
      %v2667 = vmul.f32 %v2663, %v1286
      %v2668 = vmul.f32 %v2666, %v1286
      %v2669 = vsub.f32 %v2655, %v2667
      %v2670 = vsub.f32 %v2656, %v2668
      %v2671 = vmul.f32 %v2669, %v2669
      %v2672 = vmul.f32 %v2670, %v2670
      %v2673 = vsel %vm1273, %v2671, 0.0
      %2674 = vadd.xlane.f32.xlu0 %v2673
      %v2675 = vpop.xlane.xlu0 %2674
      %v2676 = vsel %vm1273, %v2672, 0.0
      %2677 = vadd.xlane.f32.xlu0 %v2676
      %v2678 = vpop.xlane.xlu0 %2677
      %v2679 = vmul.f32 %v2675, %v1305
      %v2680 = vmul.f32 %v2678, %v1305
      %v2681 = vrsqrt.pop %v2679
      %v2682 = vmul.f32 %v2681, %v2679
      %v2683 = vmul.f32 %v2682, %v2681
      %v2684 = vmul.f32 0.5, %v2683
      %v2685 = vsub.f32 1.5, %v2684
      %v2686 = vmul.f32 %v2681, %v2685
      %v2687 = vmul.f32 %v2679, %v2686
      %vm2688 = vcmp.eq.f32.partialorder %v2679, inf
      %v2689 = vsel %vm2688, %v2679, %v2687
      %vm2690 = vcmp.eq.f32.partialorder %v2679, 0.0
      %v2691 = vand.u32 %v2679, 2147483648
      %v2692 = vsel %vm2690, %v2691, %v2689
      %v2693 = vrsqrt.pop %v2680
      %v2694 = vmul.f32 %v2693, %v2680
      %v2695 = vmul.f32 %v2694, %v2693
      %v2696 = vmul.f32 0.5, %v2695
      %v2697 = vsub.f32 1.5, %v2696
      %v2698 = vmul.f32 %v2693, %v2697
      %v2699 = vmul.f32 %v2680, %v2698
      %vm2700 = vcmp.eq.f32.partialorder %v2680, inf
      %v2701 = vsel %vm2700, %v2680, %v2699
      %vm2702 = vcmp.eq.f32.partialorder %v2680, 0.0
      %v2703 = vand.u32 %v2680, 2147483648
      %v2704 = vsel %vm2702, %v2703, %v2701
      %v2705 = vadd.f32 %v2692, 1e-06
      %v2706 = vadd.f32 %v2704, 1e-06
      %v2707 = vrcp.pop %v2705
      %v2708 = vmul.f32 %v2705, %v2707
      %v2709 = vsub.f32 1.0, %v2708
      %v2710 = vmul.f32 %v2707, %v2709
      %v2711 = vadd.f32 %v2707, %v2710
      %vm2712 = vweird.f32 %v2705
      %vm2713 = vweird.f32 %v2707
      %vm2714 = vmor %vm2712, %vm2713
      %v2715 = vsel %vm2714, %v2707, %v2711
      %v2716 = vand.u32 2147483647, %v2705
      %vm2717 = vcmp.eq.f32.partialorder %v2716, 8.507059e+37
      %v2718 = vand.u32 %v2705, 2147483648
      %v2719 = vor.u32 1.1754944e-38, %v2718
      %v2720 = vsel %vm2717, %v2719, %v2715
      %v2721 = vmul.f32 1.0, %v2720
      %v2722 = vrcp.pop %v2706
      %v2723 = vmul.f32 %v2706, %v2722
      %v2724 = vsub.f32 1.0, %v2723
      %v2725 = vmul.f32 %v2722, %v2724
      %v2726 = vadd.f32 %v2722, %v2725
      %vm2727 = vweird.f32 %v2706
      %vm2728 = vweird.f32 %v2722
      %vm2729 = vmor %vm2727, %vm2728
      %v2730 = vsel %vm2729, %v2722, %v2726
      %v2731 = vand.u32 2147483647, %v2706
      %vm2732 = vcmp.eq.f32.partialorder %v2731, 8.507059e+37
      %v2733 = vand.u32 %v2706, 2147483648
      %v2734 = vor.u32 1.1754944e-38, %v2733
      %v2735 = vsel %vm2732, %v2734, %v2730
      %v2736 = vmul.f32 1.0, %v2735
      %v2738 = vperm.slane %v2658, 0
      %v2740 = vmul.f32 %v2738, %v2721
      %v2741 = vmul.f32 %v2738, %v2736
      %v2742 = vmul.f32 %v2669, %v2740
      %v2743 = vmul.f32 %v2670, %v2741
      %v2745 = vperm.slane %v2660, 0
      %v2747 = vadd.f32 %v2742, %v2745
      %v2748 = vadd.f32 %v2743, %v2745
      %s2749 = scalar_lea.vmem %s17, 32
      %v2750 = vld [vmem:[%s2749] sm:$0xff]
      %v2751 = vld [vmem:[%s2749 + $0x8] sm:$0xff]
      %v2752 = vld [vmem:[%s2749 + $0x10] sm:$0xff]
      %v2753 = vld [vmem:[%s2749 + $0x18] sm:$0xff]
      %s2754 = scalar_lea.vmem %s19, 1
      %v2755 = vld [vmem:[%s2754] sm:$0x1]
      %s2756 = scalar_lea.vmem %s21, 64
      %v2757 = vld [vmem:[%s2756] sm:$0xff]
      %v2758 = vld [vmem:[%s2756 + $0x8] sm:$0xff]
      %v2759 = vld [vmem:[%s2756 + $0x10] sm:$0xff]
      %v2760 = vld [vmem:[%s2756 + $0x18] sm:$0xff]
      %v2761 = vld [vmem:[%s2756 + $0x20] sm:$0xff]
      %v2762 = vld [vmem:[%s2756 + $0x28] sm:$0xff]
      %v2763 = vld [vmem:[%s2756 + $0x30] sm:$0xff]
      %v2764 = vld [vmem:[%s2756 + $0x38] sm:$0xff]
      %s2765 = scalar_lea.vmem %s23, 1
      %v2766 = vld [vmem:[%s2765] sm:$0x1]
      %v2768 = vperm.slane %v2755, 0
      %v2771 = vsel %vm1273, %v2747, 0
      %v2774 = vsel %vm1273, %v2748, 0
      %2776 = vmatpush.msra.mxu0 0.0
      %2777 = vmatpush.msra.mxu0 0.0
      %2778 = vmatpush.msra.mxu0 0.0
      %2779 = vmatpush.msra.mxu0 0.0
      %2780 = vmatpush.msra.mxu0 0.0
      %2781 = vmatpush.msra.mxu0 0.0
      %2782 = vmatpush.msra.mxu0 0.0
      %2783 = vmatpush.msra.mxu0 0.0
      %2784 = vmatpush.msra.mxu0 0.0
      %2785 = vmatpush.msra.mxu0 0.0
      %2786 = vmatpush.msra.mxu0 0.0
      %2787 = vmatpush.msra.mxu0 0.0
      %2788 = vmatpush.msra.mxu0 %v2753
      %2789 = vmatpush.msra.mxu0 %v2752
      %2790 = vmatpush.msra.mxu0 %v2751
      %2791 = vmatpush.msra.mxu0 %v2750
      %2792 = vmatmul.f32.gmra.mxu0 %v2771
      %v2793 = vpop.f32.mrf.mxu0
      %v2794 = vadd.f32 %v2768, %v2793
      %2795 = vmatmul.f32.gmra.mxu0 %v2774
      %v2796 = vpop.f32.mrf.mxu0
      %v2797 = vadd.f32 %v2768, %v2796
      %2798 = vdwg.mxu0
      %v2799 = vmax.f32 %v2794, 0.0
      %v2800 = vmax.f32 %v2797, 0.0
      %v2802 = vperm.slane %v2766, 0
      %v2805 = vsel %vm2025, %v2799, 0
      %v2808 = vsel %vm2025, %v2800, 0
      %2810 = vmatpush.msra.mxu0 0.0
      %2811 = vmatpush.msra.mxu0 0.0
      %2812 = vmatpush.msra.mxu0 0.0
      %2813 = vmatpush.msra.mxu0 0.0
      %2814 = vmatpush.msra.mxu0 0.0
      %2815 = vmatpush.msra.mxu0 0.0
      %2816 = vmatpush.msra.mxu0 0.0
      %2817 = vmatpush.msra.mxu0 0.0
      %2818 = vmatpush.msra.mxu0 %v2764
      %2819 = vmatpush.msra.mxu0 %v2763
      %2820 = vmatpush.msra.mxu0 %v2762
      %2821 = vmatpush.msra.mxu0 %v2761
      %2822 = vmatpush.msra.mxu0 %v2760
      %2823 = vmatpush.msra.mxu0 %v2759
      %2824 = vmatpush.msra.mxu0 %v2758
      %2825 = vmatpush.msra.mxu0 %v2757
      %2826 = vmatmul.f32.gmra.mxu0 %v2805
      %v2827 = vpop.f32.mrf.mxu0
      %v2828 = vadd.f32 %v2802, %v2827
      %2829 = vmatmul.f32.gmra.mxu0 %v2808
      %v2830 = vpop.f32.mrf.mxu0
      %v2831 = vadd.f32 %v2802, %v2830
      %2832 = vdwg.mxu0
      %v2833 = vadd.f32 %v2655, %v2828
      %v2834 = vadd.f32 %v2656, %v2831
      %v2835 = vld [vmem:[%s33] sm:$0x1]
      %v2836 = vld [vmem:[%s35] sm:$0x1]
      %v2837 = vsel %vm1273, %v2833, 0.0
      %2838 = vadd.xlane.f32.xlu0 %v2837
      %v2839 = vpop.xlane.xlu0 %2838
      %v2840 = vsel %vm1273, %v2834, 0.0
      %2841 = vadd.xlane.f32.xlu0 %v2840
      %v2842 = vpop.xlane.xlu0 %2841
      %v2843 = vmul.f32 %v2839, %v1286
      %v2844 = vmul.f32 %v2842, %v1286
      %v2845 = vsub.f32 %v2833, %v2843
      %v2846 = vsub.f32 %v2834, %v2844
      %v2847 = vmul.f32 %v2845, %v2845
      %v2848 = vmul.f32 %v2846, %v2846
      %v2849 = vsel %vm1273, %v2847, 0.0
      %2850 = vadd.xlane.f32.xlu0 %v2849
      %v2851 = vpop.xlane.xlu0 %2850
      %v2852 = vsel %vm1273, %v2848, 0.0
      %2853 = vadd.xlane.f32.xlu0 %v2852
      %v2854 = vpop.xlane.xlu0 %2853
      %v2855 = vmul.f32 %v2851, %v1305
      %v2856 = vmul.f32 %v2854, %v1305
      %v2857 = vrsqrt.pop %v2855
      %v2858 = vmul.f32 %v2857, %v2855
      %v2859 = vmul.f32 %v2858, %v2857
      %v2860 = vmul.f32 0.5, %v2859
      %v2861 = vsub.f32 1.5, %v2860
      %v2862 = vmul.f32 %v2857, %v2861
      %v2863 = vmul.f32 %v2855, %v2862
      %vm2864 = vcmp.eq.f32.partialorder %v2855, inf
      %v2865 = vsel %vm2864, %v2855, %v2863
      %vm2866 = vcmp.eq.f32.partialorder %v2855, 0.0
      %v2867 = vand.u32 %v2855, 2147483648
      %v2868 = vsel %vm2866, %v2867, %v2865
      %v2869 = vrsqrt.pop %v2856
      %v2870 = vmul.f32 %v2869, %v2856
      %v2871 = vmul.f32 %v2870, %v2869
      %v2872 = vmul.f32 0.5, %v2871
      %v2873 = vsub.f32 1.5, %v2872
      %v2874 = vmul.f32 %v2869, %v2873
      %v2875 = vmul.f32 %v2856, %v2874
      %vm2876 = vcmp.eq.f32.partialorder %v2856, inf
      %v2877 = vsel %vm2876, %v2856, %v2875
      %vm2878 = vcmp.eq.f32.partialorder %v2856, 0.0
      %v2879 = vand.u32 %v2856, 2147483648
      %v2880 = vsel %vm2878, %v2879, %v2877
      %v2881 = vadd.f32 %v2868, 1e-06
      %v2882 = vadd.f32 %v2880, 1e-06
      %v2883 = vrcp.pop %v2881
      %v2884 = vmul.f32 %v2881, %v2883
      %v2885 = vsub.f32 1.0, %v2884
      %v2886 = vmul.f32 %v2883, %v2885
      %v2887 = vadd.f32 %v2883, %v2886
      %vm2888 = vweird.f32 %v2881
      %vm2889 = vweird.f32 %v2883
      %vm2890 = vmor %vm2888, %vm2889
      %v2891 = vsel %vm2890, %v2883, %v2887
      %v2892 = vand.u32 2147483647, %v2881
      %vm2893 = vcmp.eq.f32.partialorder %v2892, 8.507059e+37
      %v2894 = vand.u32 %v2881, 2147483648
      %v2895 = vor.u32 1.1754944e-38, %v2894
      %v2896 = vsel %vm2893, %v2895, %v2891
      %v2897 = vmul.f32 1.0, %v2896
      %v2898 = vrcp.pop %v2882
      %v2899 = vmul.f32 %v2882, %v2898
      %v2900 = vsub.f32 1.0, %v2899
      %v2901 = vmul.f32 %v2898, %v2900
      %v2902 = vadd.f32 %v2898, %v2901
      %vm2903 = vweird.f32 %v2882
      %vm2904 = vweird.f32 %v2898
      %vm2905 = vmor %vm2903, %vm2904
      %v2906 = vsel %vm2905, %v2898, %v2902
      %v2907 = vand.u32 2147483647, %v2882
      %vm2908 = vcmp.eq.f32.partialorder %v2907, 8.507059e+37
      %v2909 = vand.u32 %v2882, 2147483648
      %v2910 = vor.u32 1.1754944e-38, %v2909
      %v2911 = vsel %vm2908, %v2910, %v2906
      %v2912 = vmul.f32 1.0, %v2911
      %v2914 = vperm.slane %v2835, 0
      %v2916 = vmul.f32 %v2914, %v2897
      %v2917 = vmul.f32 %v2914, %v2912
      %v2918 = vmul.f32 %v2845, %v2916
      %v2919 = vmul.f32 %v2846, %v2917
      %v2921 = vperm.slane %v2836, 0
      %v2923 = vadd.f32 %v2918, %v2921
      %v2924 = vadd.f32 %v2919, %v2921
      %v2925 = vld [vmem:[%s1251] sm:$0xff]
      %v2926 = vld [vmem:[%s1251 + $0x8] sm:$0xff]
      %v2927 = vld [vmem:[%s1259] sm:$0xff]
      %v2928 = vld [vmem:[%s1259 + $0x8] sm:$0xff]
      %v2929 = vld [vmem:[%s65] sm:$0x1]
      %v2930 = vld [vmem:[%s67] sm:$0x1]
      %v2931 = vsel %vm1273, %v2925, 0.0
      %2932 = vadd.xlane.f32.xlu0 %v2931
      %v2933 = vpop.xlane.xlu0 %2932
      %v2934 = vsel %vm1273, %v2926, 0.0
      %2935 = vadd.xlane.f32.xlu0 %v2934
      %v2936 = vpop.xlane.xlu0 %2935
      %v2937 = vmul.f32 %v2933, %v1286
      %v2938 = vmul.f32 %v2936, %v1286
      %v2939 = vsub.f32 %v2925, %v2937
      %v2940 = vsub.f32 %v2926, %v2938
      %v2941 = vmul.f32 %v2939, %v2939
      %v2942 = vmul.f32 %v2940, %v2940
      %v2943 = vsel %vm1273, %v2941, 0.0
      %2944 = vadd.xlane.f32.xlu0 %v2943
      %v2945 = vpop.xlane.xlu0 %2944
      %v2946 = vsel %vm1273, %v2942, 0.0
      %2947 = vadd.xlane.f32.xlu0 %v2946
      %v2948 = vpop.xlane.xlu0 %2947
      %v2949 = vmul.f32 %v2945, %v1305
      %v2950 = vmul.f32 %v2948, %v1305
      %v2951 = vrsqrt.pop %v2949
      %v2952 = vmul.f32 %v2951, %v2949
      %v2953 = vmul.f32 %v2952, %v2951
      %v2954 = vmul.f32 0.5, %v2953
      %v2955 = vsub.f32 1.5, %v2954
      %v2956 = vmul.f32 %v2951, %v2955
      %v2957 = vmul.f32 %v2949, %v2956
      %vm2958 = vcmp.eq.f32.partialorder %v2949, inf
      %v2959 = vsel %vm2958, %v2949, %v2957
      %vm2960 = vcmp.eq.f32.partialorder %v2949, 0.0
      %v2961 = vand.u32 %v2949, 2147483648
      %v2962 = vsel %vm2960, %v2961, %v2959
      %v2963 = vrsqrt.pop %v2950
      %v2964 = vmul.f32 %v2963, %v2950
      %v2965 = vmul.f32 %v2964, %v2963
      %v2966 = vmul.f32 0.5, %v2965
      %v2967 = vsub.f32 1.5, %v2966
      %v2968 = vmul.f32 %v2963, %v2967
      %v2969 = vmul.f32 %v2950, %v2968
      %vm2970 = vcmp.eq.f32.partialorder %v2950, inf
      %v2971 = vsel %vm2970, %v2950, %v2969
      %vm2972 = vcmp.eq.f32.partialorder %v2950, 0.0
      %v2973 = vand.u32 %v2950, 2147483648
      %v2974 = vsel %vm2972, %v2973, %v2971
      %v2975 = vadd.f32 %v2962, 1e-06
      %v2976 = vadd.f32 %v2974, 1e-06
      %v2977 = vrcp.pop %v2975
      %v2978 = vmul.f32 %v2975, %v2977
      %v2979 = vsub.f32 1.0, %v2978
      %v2980 = vmul.f32 %v2977, %v2979
      %v2981 = vadd.f32 %v2977, %v2980
      %vm2982 = vweird.f32 %v2975
      %vm2983 = vweird.f32 %v2977
      %vm2984 = vmor %vm2982, %vm2983
      %v2985 = vsel %vm2984, %v2977, %v2981
      %v2986 = vand.u32 2147483647, %v2975
      %vm2987 = vcmp.eq.f32.partialorder %v2986, 8.507059e+37
      %v2988 = vand.u32 %v2975, 2147483648
      %v2989 = vor.u32 1.1754944e-38, %v2988
      %v2990 = vsel %vm2987, %v2989, %v2985
      %v2991 = vmul.f32 1.0, %v2990
      %v2992 = vrcp.pop %v2976
      %v2993 = vmul.f32 %v2976, %v2992
      %v2994 = vsub.f32 1.0, %v2993
      %v2995 = vmul.f32 %v2992, %v2994
      %v2996 = vadd.f32 %v2992, %v2995
      %vm2997 = vweird.f32 %v2976
      %vm2998 = vweird.f32 %v2992
      %vm2999 = vmor %vm2997, %vm2998
      %v3000 = vsel %vm2999, %v2992, %v2996
      %v3001 = vand.u32 2147483647, %v2976
      %vm3002 = vcmp.eq.f32.partialorder %v3001, 8.507059e+37
      %v3003 = vand.u32 %v2976, 2147483648
      %v3004 = vor.u32 1.1754944e-38, %v3003
      %v3005 = vsel %vm3002, %v3004, %v3000
      %v3006 = vmul.f32 1.0, %v3005
      %v3008 = vperm.slane %v2929, 0
      %v3010 = vmul.f32 %v3008, %v2991
      %v3011 = vmul.f32 %v3008, %v3006
      %v3012 = vmul.f32 %v2939, %v3010
      %v3013 = vmul.f32 %v2940, %v3011
      %v3015 = vperm.slane %v2930, 0
      %v3017 = vadd.f32 %v3012, %v3015
      %v3018 = vadd.f32 %v3013, %v3015
      %v3019 = vld [vmem:[%s37] sm:$0xff]
      %v3020 = vld [vmem:[%s37 + $0x8] sm:$0xff]
      %v3021 = vld [vmem:[%s37 + $0x10] sm:$0xff]
      %v3022 = vld [vmem:[%s37 + $0x18] sm:$0xff]
      %v3023 = vld [vmem:[%s39] sm:$0x1]
      %v3024 = vld [vmem:[%s41] sm:$0xff]
      %v3025 = vld [vmem:[%s41 + $0x8] sm:$0xff]
      %v3026 = vld [vmem:[%s41 + $0x10] sm:$0xff]
      %v3027 = vld [vmem:[%s41 + $0x18] sm:$0xff]
      %v3028 = vld [vmem:[%s43] sm:$0x1]
      %v3030 = vperm.slane %v3023, 0
      %v3033 = vsel %vm1273, %v3017, 0
      %v3036 = vsel %vm1273, %v3018, 0
      %3038 = vmatpush.msra.mxu0 0.0
      %3039 = vmatpush.msra.mxu0 0.0
      %3040 = vmatpush.msra.mxu0 0.0
      %3041 = vmatpush.msra.mxu0 0.0
      %3042 = vmatpush.msra.mxu0 0.0
      %3043 = vmatpush.msra.mxu0 0.0
      %3044 = vmatpush.msra.mxu0 0.0
      %3045 = vmatpush.msra.mxu0 0.0
      %3046 = vmatpush.msra.mxu0 0.0
      %3047 = vmatpush.msra.mxu0 0.0
      %3048 = vmatpush.msra.mxu0 0.0
      %3049 = vmatpush.msra.mxu0 0.0
      %3050 = vmatpush.msra.mxu0 %v3022
      %3051 = vmatpush.msra.mxu0 %v3021
      %3052 = vmatpush.msra.mxu0 %v3020
      %3053 = vmatpush.msra.mxu0 %v3019
      %3054 = vmatmul.f32.gmra.mxu0 %v3033
      %v3055 = vpop.f32.mrf.mxu0
      %v3056 = vadd.f32 %v3030, %v3055
      %3057 = vmatmul.f32.gmra.mxu0 %v3036
      %v3058 = vpop.f32.mrf.mxu0
      %v3059 = vadd.f32 %v3030, %v3058
      %3060 = vdwg.mxu0
      %3063 = vrot.lane.b32.xlu0 %v3056, 96
      %v3064 = vpop.permute.xlu0 %3063
      %3065 = vrot.lane.b32.xlu0 %v3059, 96
      %v3066 = vpop.permute.xlu0 %3065
      %v3067 = vsel %vm1424, %v3056, 0
      %v3069 = vsel %vm1424, %v3059, 0
      %v3071 = vsel %vm1424, %v3064, 0
      %v3073 = vsel %vm1424, %v3066, 0
      %3075 = vmatpush.xpose.msra.mxu0 0.0
      %3076 = vmatpush.xpose.msra.mxu0 0.0
      %3077 = vmatpush.xpose.msra.mxu0 0.0
      %3078 = vmatpush.xpose.msra.mxu0 0.0
      %3079 = vmatpush.xpose.msra.mxu0 0.0
      %3080 = vmatpush.xpose.msra.mxu0 0.0
      %3081 = vmatpush.xpose.msra.mxu0 0.0
      %3082 = vmatpush.xpose.msra.mxu0 0.0
      %3083 = vmatpush.xpose.msra.mxu0 0.0
      %3084 = vmatpush.xpose.msra.mxu0 0.0
      %3085 = vmatpush.xpose.msra.mxu0 0.0
      %3086 = vmatpush.xpose.msra.mxu0 0.0
      %3087 = vmatpush.xpose.msra.mxu0 0.0
      %3088 = vmatpush.xpose.msra.mxu0 0.0
      %3089 = vmatpush.xpose.msra.mxu0 %v3073
      %3090 = vmatpush.xpose.msra.mxu0 %v3071
      %3091 = vmatmul.f32.gmra.mxu0 %v3067
      %v3092 = vpop.f32.mrf.mxu0
      %v3093 = vadd.f32 0.0, %v3092
      %3094 = vmatmul.f32.gmra.mxu0 %v3069
      %v3095 = vpop.f32.mrf.mxu0
      %v3096 = vadd.f32 0.0, %v3095
      %3097 = vdwg.mxu0
      %v3098 = vmul.f32 %v3093, 0.35355338
      %v3099 = vmul.f32 %v3096, 0.35355338
      %vm3100 = vcmp.eq.f32.partialorder %v2927, 0.0
      %vm3101 = vcmp.eq.f32.partialorder %v2928, 0.0
      %v3102 = vsel %vm3100, -1e+09, %v3098
      %v3103 = vsel %vm3101, -1e+09, %v3099
      %v3104 = vsel %vm1461, %v3102, -inf
      %3105 = vmax.xlane.f32.xlu0 %v3104
      %v3106 = vpop.xlane.xlu0 %3105
      %v3107 = vsel %vm1461, %v3103, -inf
      %3108 = vmax.xlane.f32.xlu0 %v3107
      %v3109 = vpop.xlane.xlu0 %3108
      %v3110 = vsub.f32 %v3102, %v3106
      %v3111 = vsub.f32 %v3103, %v3109
      %v3112 = vmul.f32 %v3110, 1.442695
      %v3113 = vpow.pop %v3112
      %v3114 = vmul.f32 %v3111, 1.442695
      %v3115 = vpow.pop %v3114
      %v3116 = vsel %vm1461, %v3113, 0.0
      %3117 = vadd.xlane.f32.xlu0 %v3116
      %v3118 = vpop.xlane.xlu0 %3117
      %v3119 = vsel %vm1461, %v3115, 0.0
      %3120 = vadd.xlane.f32.xlu0 %v3119
      %v3121 = vpop.xlane.xlu0 %3120
      %v3122 = vrcp.pop %v3118
      %v3123 = vrcp.pop %v3121
      %v3124 = vmul.f32 %v3113, %v3122
      %v3125 = vmul.f32 %v3115, %v3123
      %3126 = vrot.lane.b32.xlu0 %v3056, 64
      %v3127 = vpop.permute.xlu0 %3126
      %3128 = vrot.lane.b32.xlu0 %v3059, 64
      %v3129 = vpop.permute.xlu0 %3128
      %v3133 = vsel %vm1461, %v3124, 0
      %v3136 = vsel %vm1461, %v3125, 0
      %3138 = vmatpush.msra.mxu0 0.0
      %3139 = vmatpush.msra.mxu0 0.0
      %3140 = vmatpush.msra.mxu0 0.0
      %3141 = vmatpush.msra.mxu0 0.0
      %3142 = vmatpush.msra.mxu0 0.0
      %3143 = vmatpush.msra.mxu0 0.0
      %3144 = vmatpush.msra.mxu0 0.0
      %3145 = vmatpush.msra.mxu0 0.0
      %3146 = vmatpush.msra.mxu0 0.0
      %3147 = vmatpush.msra.mxu0 0.0
      %3148 = vmatpush.msra.mxu0 0.0
      %3149 = vmatpush.msra.mxu0 0.0
      %3150 = vmatpush.msra.mxu0 0.0
      %3151 = vmatpush.msra.mxu0 0.0
      %3152 = vmatpush.msra.mxu0 %v3129
      %3153 = vmatpush.msra.mxu0 %v3127
      %3154 = vmatmul.f32.gmra.mxu0 %v3133
      %v3155 = vpop.f32.mrf.mxu0
      %v3156 = vadd.f32 0.0, %v3155
      %3157 = vmatmul.f32.gmra.mxu0 %v3136
      %v3158 = vpop.f32.mrf.mxu0
      %v3159 = vadd.f32 0.0, %v3158
      %3160 = vdwg.mxu0
      %3161 = vrot.lane.b32.xlu0 %v3056, 120
      %v3162 = vpop.permute.xlu0 %3161
      %3163 = vrot.lane.b32.xlu0 %v3059, 120
      %v3164 = vpop.permute.xlu0 %3163
      %3165 = vrot.lane.b32.xlu0 %v3056, 88
      %v3166 = vpop.permute.xlu0 %3165
      %3167 = vrot.lane.b32.xlu0 %v3059, 88
      %v3168 = vpop.permute.xlu0 %3167
      %v3169 = vsel %vm1424, %v3162, 0
      %v3171 = vsel %vm1424, %v3164, 0
      %v3173 = vsel %vm1424, %v3166, 0
      %v3175 = vsel %vm1424, %v3168, 0
      %3177 = vmatpush.xpose.msra.mxu0 0.0
      %3178 = vmatpush.xpose.msra.mxu0 0.0
      %3179 = vmatpush.xpose.msra.mxu0 0.0
      %3180 = vmatpush.xpose.msra.mxu0 0.0
      %3181 = vmatpush.xpose.msra.mxu0 0.0
      %3182 = vmatpush.xpose.msra.mxu0 0.0
      %3183 = vmatpush.xpose.msra.mxu0 0.0
      %3184 = vmatpush.xpose.msra.mxu0 0.0
      %3185 = vmatpush.xpose.msra.mxu0 0.0
      %3186 = vmatpush.xpose.msra.mxu0 0.0
      %3187 = vmatpush.xpose.msra.mxu0 0.0
      %3188 = vmatpush.xpose.msra.mxu0 0.0
      %3189 = vmatpush.xpose.msra.mxu0 0.0
      %3190 = vmatpush.xpose.msra.mxu0 0.0
      %3191 = vmatpush.xpose.msra.mxu0 %v3175
      %3192 = vmatpush.xpose.msra.mxu0 %v3173
      %3193 = vmatmul.f32.gmra.mxu0 %v3169
      %v3194 = vpop.f32.mrf.mxu0
      %v3195 = vadd.f32 0.0, %v3194
      %3196 = vmatmul.f32.gmra.mxu0 %v3171
      %v3197 = vpop.f32.mrf.mxu0
      %v3198 = vadd.f32 0.0, %v3197
      %3199 = vdwg.mxu0
      %v3200 = vmul.f32 %v3195, 0.35355338
      %v3201 = vmul.f32 %v3198, 0.35355338
      %v3202 = vsel %vm3100, -1e+09, %v3200
      %v3203 = vsel %vm3101, -1e+09, %v3201
      %v3204 = vsel %vm1461, %v3202, -inf
      %3205 = vmax.xlane.f32.xlu0 %v3204
      %v3206 = vpop.xlane.xlu0 %3205
      %v3207 = vsel %vm1461, %v3203, -inf
      %3208 = vmax.xlane.f32.xlu0 %v3207
      %v3209 = vpop.xlane.xlu0 %3208
      %v3210 = vsub.f32 %v3202, %v3206
      %v3211 = vsub.f32 %v3203, %v3209
      %v3212 = vmul.f32 %v3210, 1.442695
      %v3213 = vpow.pop %v3212
      %v3214 = vmul.f32 %v3211, 1.442695
      %v3215 = vpow.pop %v3214
      %v3216 = vsel %vm1461, %v3213, 0.0
      %3217 = vadd.xlane.f32.xlu0 %v3216
      %v3218 = vpop.xlane.xlu0 %3217
      %v3219 = vsel %vm1461, %v3215, 0.0
      %3220 = vadd.xlane.f32.xlu0 %v3219
      %v3221 = vpop.xlane.xlu0 %3220
      %v3222 = vrcp.pop %v3218
      %v3223 = vrcp.pop %v3221
      %v3224 = vmul.f32 %v3213, %v3222
      %v3225 = vmul.f32 %v3215, %v3223
      %3226 = vrot.lane.b32.xlu0 %v3056, 56
      %v3227 = vpop.permute.xlu0 %3226
      %3228 = vrot.lane.b32.xlu0 %v3059, 56
      %v3229 = vpop.permute.xlu0 %3228
      %v3233 = vsel %vm1461, %v3224, 0
      %v3236 = vsel %vm1461, %v3225, 0
      %3238 = vmatpush.msra.mxu0 0.0
      %3239 = vmatpush.msra.mxu0 0.0
      %3240 = vmatpush.msra.mxu0 0.0
      %3241 = vmatpush.msra.mxu0 0.0
      %3242 = vmatpush.msra.mxu0 0.0
      %3243 = vmatpush.msra.mxu0 0.0
      %3244 = vmatpush.msra.mxu0 0.0
      %3245 = vmatpush.msra.mxu0 0.0
      %3246 = vmatpush.msra.mxu0 0.0
      %3247 = vmatpush.msra.mxu0 0.0
      %3248 = vmatpush.msra.mxu0 0.0
      %3249 = vmatpush.msra.mxu0 0.0
      %3250 = vmatpush.msra.mxu0 0.0
      %3251 = vmatpush.msra.mxu0 0.0
      %3252 = vmatpush.msra.mxu0 %v3229
      %3253 = vmatpush.msra.mxu0 %v3227
      %3254 = vmatmul.f32.gmra.mxu0 %v3233
      %v3255 = vpop.f32.mrf.mxu0
      %v3256 = vadd.f32 0.0, %v3255
      %3257 = vmatmul.f32.gmra.mxu0 %v3236
      %v3258 = vpop.f32.mrf.mxu0
      %v3259 = vadd.f32 0.0, %v3258
      %3260 = vdwg.mxu0
      %3261 = vrot.lane.b32.xlu0 %v3056, 112
      %v3262 = vpop.permute.xlu0 %3261
      %3263 = vrot.lane.b32.xlu0 %v3059, 112
      %v3264 = vpop.permute.xlu0 %3263
      %3265 = vrot.lane.b32.xlu0 %v3056, 80
      %v3266 = vpop.permute.xlu0 %3265
      %3267 = vrot.lane.b32.xlu0 %v3059, 80
      %v3268 = vpop.permute.xlu0 %3267
      %v3269 = vsel %vm1424, %v3262, 0
      %v3271 = vsel %vm1424, %v3264, 0
      %v3273 = vsel %vm1424, %v3266, 0
      %v3275 = vsel %vm1424, %v3268, 0
      %3277 = vmatpush.xpose.msra.mxu0 0.0
      %3278 = vmatpush.xpose.msra.mxu0 0.0
      %3279 = vmatpush.xpose.msra.mxu0 0.0
      %3280 = vmatpush.xpose.msra.mxu0 0.0
      %3281 = vmatpush.xpose.msra.mxu0 0.0
      %3282 = vmatpush.xpose.msra.mxu0 0.0
      %3283 = vmatpush.xpose.msra.mxu0 0.0
      %3284 = vmatpush.xpose.msra.mxu0 0.0
      %3285 = vmatpush.xpose.msra.mxu0 0.0
      %3286 = vmatpush.xpose.msra.mxu0 0.0
      %3287 = vmatpush.xpose.msra.mxu0 0.0
      %3288 = vmatpush.xpose.msra.mxu0 0.0
      %3289 = vmatpush.xpose.msra.mxu0 0.0
      %3290 = vmatpush.xpose.msra.mxu0 0.0
      %3291 = vmatpush.xpose.msra.mxu0 %v3275
      %3292 = vmatpush.xpose.msra.mxu0 %v3273
      %3293 = vmatmul.f32.gmra.mxu0 %v3269
      %v3294 = vpop.f32.mrf.mxu0
      %v3295 = vadd.f32 0.0, %v3294
      %3296 = vmatmul.f32.gmra.mxu0 %v3271
      %v3297 = vpop.f32.mrf.mxu0
      %v3298 = vadd.f32 0.0, %v3297
      %3299 = vdwg.mxu0
      %v3300 = vmul.f32 %v3295, 0.35355338
      %v3301 = vmul.f32 %v3298, 0.35355338
      %v3302 = vsel %vm3100, -1e+09, %v3300
      %v3303 = vsel %vm3101, -1e+09, %v3301
      %v3304 = vsel %vm1461, %v3302, -inf
      %3305 = vmax.xlane.f32.xlu0 %v3304
      %v3306 = vpop.xlane.xlu0 %3305
      %v3307 = vsel %vm1461, %v3303, -inf
      %3308 = vmax.xlane.f32.xlu0 %v3307
      %v3309 = vpop.xlane.xlu0 %3308
      %v3310 = vsub.f32 %v3302, %v3306
      %v3311 = vsub.f32 %v3303, %v3309
      %v3312 = vmul.f32 %v3310, 1.442695
      %v3313 = vpow.pop %v3312
      %v3314 = vmul.f32 %v3311, 1.442695
      %v3315 = vpow.pop %v3314
      %v3316 = vsel %vm1461, %v3313, 0.0
      %3317 = vadd.xlane.f32.xlu0 %v3316
      %v3318 = vpop.xlane.xlu0 %3317
      %v3319 = vsel %vm1461, %v3315, 0.0
      %3320 = vadd.xlane.f32.xlu0 %v3319
      %v3321 = vpop.xlane.xlu0 %3320
      %v3322 = vrcp.pop %v3318
      %v3323 = vrcp.pop %v3321
      %v3324 = vmul.f32 %v3313, %v3322
      %v3325 = vmul.f32 %v3315, %v3323
      %3326 = vrot.lane.b32.xlu0 %v3056, 48
      %v3327 = vpop.permute.xlu0 %3326
      %3328 = vrot.lane.b32.xlu0 %v3059, 48
      %v3329 = vpop.permute.xlu0 %3328
      %v3333 = vsel %vm1461, %v3324, 0
      %v3336 = vsel %vm1461, %v3325, 0
      %3338 = vmatpush.msra.mxu0 0.0
      %3339 = vmatpush.msra.mxu0 0.0
      %3340 = vmatpush.msra.mxu0 0.0
      %3341 = vmatpush.msra.mxu0 0.0
      %3342 = vmatpush.msra.mxu0 0.0
      %3343 = vmatpush.msra.mxu0 0.0
      %3344 = vmatpush.msra.mxu0 0.0
      %3345 = vmatpush.msra.mxu0 0.0
      %3346 = vmatpush.msra.mxu0 0.0
      %3347 = vmatpush.msra.mxu0 0.0
      %3348 = vmatpush.msra.mxu0 0.0
      %3349 = vmatpush.msra.mxu0 0.0
      %3350 = vmatpush.msra.mxu0 0.0
      %3351 = vmatpush.msra.mxu0 0.0
      %3352 = vmatpush.msra.mxu0 %v3329
      %3353 = vmatpush.msra.mxu0 %v3327
      %3354 = vmatmul.f32.gmra.mxu0 %v3333
      %v3355 = vpop.f32.mrf.mxu0
      %v3356 = vadd.f32 0.0, %v3355
      %3357 = vmatmul.f32.gmra.mxu0 %v3336
      %v3358 = vpop.f32.mrf.mxu0
      %v3359 = vadd.f32 0.0, %v3358
      %3360 = vdwg.mxu0
      %3361 = vrot.lane.b32.xlu0 %v3056, 104
      %v3362 = vpop.permute.xlu0 %3361
      %3363 = vrot.lane.b32.xlu0 %v3059, 104
      %v3364 = vpop.permute.xlu0 %3363
      %3365 = vrot.lane.b32.xlu0 %v3056, 72
      %v3366 = vpop.permute.xlu0 %3365
      %3367 = vrot.lane.b32.xlu0 %v3059, 72
      %v3368 = vpop.permute.xlu0 %3367
      %v3369 = vsel %vm1424, %v3362, 0
      %v3371 = vsel %vm1424, %v3364, 0
      %v3373 = vsel %vm1424, %v3366, 0
      %v3375 = vsel %vm1424, %v3368, 0
      %3377 = vmatpush.xpose.msra.mxu0 0.0
      %3378 = vmatpush.xpose.msra.mxu0 0.0
      %3379 = vmatpush.xpose.msra.mxu0 0.0
      %3380 = vmatpush.xpose.msra.mxu0 0.0
      %3381 = vmatpush.xpose.msra.mxu0 0.0
      %3382 = vmatpush.xpose.msra.mxu0 0.0
      %3383 = vmatpush.xpose.msra.mxu0 0.0
      %3384 = vmatpush.xpose.msra.mxu0 0.0
      %3385 = vmatpush.xpose.msra.mxu0 0.0
      %3386 = vmatpush.xpose.msra.mxu0 0.0
      %3387 = vmatpush.xpose.msra.mxu0 0.0
      %3388 = vmatpush.xpose.msra.mxu0 0.0
      %3389 = vmatpush.xpose.msra.mxu0 0.0
      %3390 = vmatpush.xpose.msra.mxu0 0.0
      %3391 = vmatpush.xpose.msra.mxu0 %v3375
      %3392 = vmatpush.xpose.msra.mxu0 %v3373
      %3393 = vmatmul.f32.gmra.mxu0 %v3369
      %v3394 = vpop.f32.mrf.mxu0
      %v3395 = vadd.f32 0.0, %v3394
      %3396 = vmatmul.f32.gmra.mxu0 %v3371
      %v3397 = vpop.f32.mrf.mxu0
      %v3398 = vadd.f32 0.0, %v3397
      %3399 = vdwg.mxu0
      %v3400 = vmul.f32 %v3395, 0.35355338
      %v3401 = vmul.f32 %v3398, 0.35355338
      %v3402 = vsel %vm3100, -1e+09, %v3400
      %v3403 = vsel %vm3101, -1e+09, %v3401
      %v3404 = vsel %vm1461, %v3402, -inf
      %3405 = vmax.xlane.f32.xlu0 %v3404
      %v3406 = vpop.xlane.xlu0 %3405
      %v3407 = vsel %vm1461, %v3403, -inf
      %3408 = vmax.xlane.f32.xlu0 %v3407
      %v3409 = vpop.xlane.xlu0 %3408
      %v3410 = vsub.f32 %v3402, %v3406
      %v3411 = vsub.f32 %v3403, %v3409
      %v3412 = vmul.f32 %v3410, 1.442695
      %v3413 = vpow.pop %v3412
      %v3414 = vmul.f32 %v3411, 1.442695
      %v3415 = vpow.pop %v3414
      %v3416 = vsel %vm1461, %v3413, 0.0
      %3417 = vadd.xlane.f32.xlu0 %v3416
      %v3418 = vpop.xlane.xlu0 %3417
      %v3419 = vsel %vm1461, %v3415, 0.0
      %3420 = vadd.xlane.f32.xlu0 %v3419
      %v3421 = vpop.xlane.xlu0 %3420
      %v3422 = vrcp.pop %v3418
      %v3423 = vrcp.pop %v3421
      %v3424 = vmul.f32 %v3413, %v3422
      %v3425 = vmul.f32 %v3415, %v3423
      %3426 = vrot.lane.b32.xlu0 %v3056, 40
      %v3427 = vpop.permute.xlu0 %3426
      %3428 = vrot.lane.b32.xlu0 %v3059, 40
      %v3429 = vpop.permute.xlu0 %3428
      %v3433 = vsel %vm1461, %v3424, 0
      %v3436 = vsel %vm1461, %v3425, 0
      %3438 = vmatpush.msra.mxu0 0.0
      %3439 = vmatpush.msra.mxu0 0.0
      %3440 = vmatpush.msra.mxu0 0.0
      %3441 = vmatpush.msra.mxu0 0.0
      %3442 = vmatpush.msra.mxu0 0.0
      %3443 = vmatpush.msra.mxu0 0.0
      %3444 = vmatpush.msra.mxu0 0.0
      %3445 = vmatpush.msra.mxu0 0.0
      %3446 = vmatpush.msra.mxu0 0.0
      %3447 = vmatpush.msra.mxu0 0.0
      %3448 = vmatpush.msra.mxu0 0.0
      %3449 = vmatpush.msra.mxu0 0.0
      %3450 = vmatpush.msra.mxu0 0.0
      %3451 = vmatpush.msra.mxu0 0.0
      %3452 = vmatpush.msra.mxu0 %v3429
      %3453 = vmatpush.msra.mxu0 %v3427
      %3454 = vmatmul.f32.gmra.mxu0 %v3433
      %v3455 = vpop.f32.mrf.mxu0
      %v3456 = vadd.f32 0.0, %v3455
      %3457 = vmatmul.f32.gmra.mxu0 %v3436
      %v3458 = vpop.f32.mrf.mxu0
      %v3459 = vadd.f32 0.0, %v3458
      %3460 = vdwg.mxu0
      %3463 = vrot.lane.b32.xlu0 %v3256, 8
      %v3464 = vpop.permute.xlu0 %3463
      %3465 = vrot.lane.b32.xlu0 %v3259, 8
      %v3466 = vpop.permute.xlu0 %3465
      %3471 = vrot.lane.b32.xlu0 %v3356, 16
      %v3472 = vpop.permute.xlu0 %3471
      %3473 = vrot.lane.b32.xlu0 %v3359, 16
      %v3474 = vpop.permute.xlu0 %3473
      %3479 = vrot.lane.b32.xlu0 %v3456, 24
      %v3480 = vpop.permute.xlu0 %3479
      %3481 = vrot.lane.b32.xlu0 %v3459, 24
      %v3482 = vpop.permute.xlu0 %3481
      %v3485 = vsel %vm1424, %v3156, %v3464
      %v3486 = vsel %vm1424, %v3159, %v3466
      %v3487 = vsel %vm1461, %v3485, %v3472
      %v3488 = vsel %vm1461, %v3486, %v3474
      %v3489 = vsel %vm1847, %v3487, %v3480
      %v3490 = vsel %vm1847, %v3488, %v3482
      %v3492 = vperm.slane %v3028, 0
      %v3495 = vsel %vm1273, %v3489, 0
      %v3498 = vsel %vm1273, %v3490, 0
      %3500 = vmatpush.msra.mxu0 0.0
      %3501 = vmatpush.msra.mxu0 0.0
      %3502 = vmatpush.msra.mxu0 0.0
      %3503 = vmatpush.msra.mxu0 0.0
      %3504 = vmatpush.msra.mxu0 0.0
      %3505 = vmatpush.msra.mxu0 0.0
      %3506 = vmatpush.msra.mxu0 0.0
      %3507 = vmatpush.msra.mxu0 0.0
      %3508 = vmatpush.msra.mxu0 0.0
      %3509 = vmatpush.msra.mxu0 0.0
      %3510 = vmatpush.msra.mxu0 0.0
      %3511 = vmatpush.msra.mxu0 0.0
      %3512 = vmatpush.msra.mxu0 %v3027
      %3513 = vmatpush.msra.mxu0 %v3026
      %3514 = vmatpush.msra.mxu0 %v3025
      %3515 = vmatpush.msra.mxu0 %v3024
      %3516 = vmatmul.f32.gmra.mxu0 %v3495
      %v3517 = vpop.f32.mrf.mxu0
      %v3518 = vadd.f32 %v3492, %v3517
      %3519 = vmatmul.f32.gmra.mxu0 %v3498
      %v3520 = vpop.f32.mrf.mxu0
      %v3521 = vadd.f32 %v3492, %v3520
      %3522 = vdwg.mxu0
      %v3523 = vadd.f32 %v2925, %v3518
      %v3524 = vadd.f32 %v2926, %v3521
      %v3525 = vld [vmem:[%s69] sm:$0x1]
      %v3526 = vld [vmem:[%s71] sm:$0x1]
      %v3527 = vsel %vm1273, %v3523, 0.0
      %3528 = vadd.xlane.f32.xlu0 %v3527
      %v3529 = vpop.xlane.xlu0 %3528
      %v3530 = vsel %vm1273, %v3524, 0.0
      %3531 = vadd.xlane.f32.xlu0 %v3530
      %v3532 = vpop.xlane.xlu0 %3531
      %v3533 = vmul.f32 %v3529, %v1286
      %v3534 = vmul.f32 %v3532, %v1286
      %v3535 = vsub.f32 %v3523, %v3533
      %v3536 = vsub.f32 %v3524, %v3534
      %v3537 = vmul.f32 %v3535, %v3535
      %v3538 = vmul.f32 %v3536, %v3536
      %v3539 = vsel %vm1273, %v3537, 0.0
      %3540 = vadd.xlane.f32.xlu0 %v3539
      %v3541 = vpop.xlane.xlu0 %3540
      %v3542 = vsel %vm1273, %v3538, 0.0
      %3543 = vadd.xlane.f32.xlu0 %v3542
      %v3544 = vpop.xlane.xlu0 %3543
      %v3545 = vmul.f32 %v3541, %v1305
      %v3546 = vmul.f32 %v3544, %v1305
      %v3547 = vrsqrt.pop %v3545
      %v3548 = vmul.f32 %v3547, %v3545
      %v3549 = vmul.f32 %v3548, %v3547
      %v3550 = vmul.f32 0.5, %v3549
      %v3551 = vsub.f32 1.5, %v3550
      %v3552 = vmul.f32 %v3547, %v3551
      %v3553 = vmul.f32 %v3545, %v3552
      %vm3554 = vcmp.eq.f32.partialorder %v3545, inf
      %v3555 = vsel %vm3554, %v3545, %v3553
      %vm3556 = vcmp.eq.f32.partialorder %v3545, 0.0
      %v3557 = vand.u32 %v3545, 2147483648
      %v3558 = vsel %vm3556, %v3557, %v3555
      %v3559 = vrsqrt.pop %v3546
      %v3560 = vmul.f32 %v3559, %v3546
      %v3561 = vmul.f32 %v3560, %v3559
      %v3562 = vmul.f32 0.5, %v3561
      %v3563 = vsub.f32 1.5, %v3562
      %v3564 = vmul.f32 %v3559, %v3563
      %v3565 = vmul.f32 %v3546, %v3564
      %vm3566 = vcmp.eq.f32.partialorder %v3546, inf
      %v3567 = vsel %vm3566, %v3546, %v3565
      %vm3568 = vcmp.eq.f32.partialorder %v3546, 0.0
      %v3569 = vand.u32 %v3546, 2147483648
      %v3570 = vsel %vm3568, %v3569, %v3567
      %v3571 = vadd.f32 %v3558, 1e-06
      %v3572 = vadd.f32 %v3570, 1e-06
      %v3573 = vrcp.pop %v3571
      %v3574 = vmul.f32 %v3571, %v3573
      %v3575 = vsub.f32 1.0, %v3574
      %v3576 = vmul.f32 %v3573, %v3575
      %v3577 = vadd.f32 %v3573, %v3576
      %vm3578 = vweird.f32 %v3571
      %vm3579 = vweird.f32 %v3573
      %vm3580 = vmor %vm3578, %vm3579
      %v3581 = vsel %vm3580, %v3573, %v3577
      %v3582 = vand.u32 2147483647, %v3571
      %vm3583 = vcmp.eq.f32.partialorder %v3582, 8.507059e+37
      %v3584 = vand.u32 %v3571, 2147483648
      %v3585 = vor.u32 1.1754944e-38, %v3584
      %v3586 = vsel %vm3583, %v3585, %v3581
      %v3587 = vmul.f32 1.0, %v3586
      %v3588 = vrcp.pop %v3572
      %v3589 = vmul.f32 %v3572, %v3588
      %v3590 = vsub.f32 1.0, %v3589
      %v3591 = vmul.f32 %v3588, %v3590
      %v3592 = vadd.f32 %v3588, %v3591
      %vm3593 = vweird.f32 %v3572
      %vm3594 = vweird.f32 %v3588
      %vm3595 = vmor %vm3593, %vm3594
      %v3596 = vsel %vm3595, %v3588, %v3592
      %v3597 = vand.u32 2147483647, %v3572
      %vm3598 = vcmp.eq.f32.partialorder %v3597, 8.507059e+37
      %v3599 = vand.u32 %v3572, 2147483648
      %v3600 = vor.u32 1.1754944e-38, %v3599
      %v3601 = vsel %vm3598, %v3600, %v3596
      %v3602 = vmul.f32 1.0, %v3601
      %v3604 = vperm.slane %v3525, 0
      %v3606 = vmul.f32 %v3604, %v3587
      %v3607 = vmul.f32 %v3604, %v3602
      %v3608 = vmul.f32 %v3535, %v3606
      %v3609 = vmul.f32 %v3536, %v3607
      %v3611 = vperm.slane %v3526, 0
      %v3613 = vadd.f32 %v3608, %v3611
      %v3614 = vadd.f32 %v3609, %v3611
      %v3615 = vld [vmem:[%s45] sm:$0xff]
      %v3616 = vld [vmem:[%s45 + $0x8] sm:$0xff]
      %v3617 = vld [vmem:[%s45 + $0x10] sm:$0xff]
      %v3618 = vld [vmem:[%s45 + $0x18] sm:$0xff]
      %v3619 = vld [vmem:[%s47] sm:$0x1]
      %v3620 = vld [vmem:[%s49] sm:$0xff]
      %v3621 = vld [vmem:[%s49 + $0x8] sm:$0xff]
      %v3622 = vld [vmem:[%s49 + $0x10] sm:$0xff]
      %v3623 = vld [vmem:[%s49 + $0x18] sm:$0xff]
      %v3624 = vld [vmem:[%s51] sm:$0x1]
      %v3625 = vld [vmem:[%s53] sm:$0xff]
      %v3626 = vld [vmem:[%s53 + $0x8] sm:$0xff]
      %v3627 = vld [vmem:[%s53 + $0x10] sm:$0xff]
      %v3628 = vld [vmem:[%s53 + $0x18] sm:$0xff]
      %v3629 = vld [vmem:[%s55] sm:$0x1]
      %v3631 = vperm.slane %v3619, 0
      %v3634 = vsel %vm1273, %v3613, 0
      %v3637 = vsel %vm1273, %v3614, 0
      %3639 = vmatpush.msra.mxu0 0.0
      %3640 = vmatpush.msra.mxu0 0.0
      %3641 = vmatpush.msra.mxu0 0.0
      %3642 = vmatpush.msra.mxu0 0.0
      %3643 = vmatpush.msra.mxu0 0.0
      %3644 = vmatpush.msra.mxu0 0.0
      %3645 = vmatpush.msra.mxu0 0.0
      %3646 = vmatpush.msra.mxu0 0.0
      %3647 = vmatpush.msra.mxu0 0.0
      %3648 = vmatpush.msra.mxu0 0.0
      %3649 = vmatpush.msra.mxu0 0.0
      %3650 = vmatpush.msra.mxu0 0.0
      %3651 = vmatpush.msra.mxu0 %v3618
      %3652 = vmatpush.msra.mxu0 %v3617
      %3653 = vmatpush.msra.mxu0 %v3616
      %3654 = vmatpush.msra.mxu0 %v3615
      %3655 = vmatmul.f32.gmra.mxu0 %v3634
      %v3656 = vpop.f32.mrf.mxu0
      %v3657 = vadd.f32 %v3631, %v3656
      %3658 = vmatmul.f32.gmra.mxu0 %v3637
      %v3659 = vpop.f32.mrf.mxu0
      %v3660 = vadd.f32 %v3631, %v3659
      %3661 = vdwg.mxu0
      %v3663 = vperm.slane %v3624, 0
      %v3666 = vsel %vm1273, %v2923, 0
      %v3669 = vsel %vm1273, %v2924, 0
      %3671 = vmatpush.msra.mxu0 0.0
      %3672 = vmatpush.msra.mxu0 0.0
      %3673 = vmatpush.msra.mxu0 0.0
      %3674 = vmatpush.msra.mxu0 0.0
      %3675 = vmatpush.msra.mxu0 0.0
      %3676 = vmatpush.msra.mxu0 0.0
      %3677 = vmatpush.msra.mxu0 0.0
      %3678 = vmatpush.msra.mxu0 0.0
      %3679 = vmatpush.msra.mxu0 0.0
      %3680 = vmatpush.msra.mxu0 0.0
      %3681 = vmatpush.msra.mxu0 0.0
      %3682 = vmatpush.msra.mxu0 0.0
      %3683 = vmatpush.msra.mxu0 %v3623
      %3684 = vmatpush.msra.mxu0 %v3622
      %3685 = vmatpush.msra.mxu0 %v3621
      %3686 = vmatpush.msra.mxu0 %v3620
      %3687 = vmatmul.f32.gmra.mxu0 %v3666
      %v3688 = vpop.f32.mrf.mxu0
      %v3689 = vadd.f32 %v3663, %v3688
      %3690 = vmatmul.f32.gmra.mxu0 %v3669
      %v3691 = vpop.f32.mrf.mxu0
      %v3692 = vadd.f32 %v3663, %v3691
      %3693 = vdwg.mxu0
      %v3695 = vsel %vm1424, %v3657, 0
      %v3698 = vsel %vm1424, %v3660, 0
      %v3701 = vsel %vm1424, %v3689, 0
      %v3704 = vsel %vm1424, %v3692, 0
      %3706 = vmatpush.xpose.msra.mxu0 0.0
      %3707 = vmatpush.xpose.msra.mxu0 0.0
      %3708 = vmatpush.xpose.msra.mxu0 0.0
      %3709 = vmatpush.xpose.msra.mxu0 0.0
      %3710 = vmatpush.xpose.msra.mxu0 0.0
      %3711 = vmatpush.xpose.msra.mxu0 0.0
      %3712 = vmatpush.xpose.msra.mxu0 0.0
      %3713 = vmatpush.xpose.msra.mxu0 0.0
      %3714 = vmatpush.xpose.msra.mxu0 0.0
      %3715 = vmatpush.xpose.msra.mxu0 0.0
      %3716 = vmatpush.xpose.msra.mxu0 0.0
      %3717 = vmatpush.xpose.msra.mxu0 0.0
      %3718 = vmatpush.xpose.msra.mxu0 0.0
      %3719 = vmatpush.xpose.msra.mxu0 0.0
      %3720 = vmatpush.xpose.msra.mxu0 %v3704
      %3721 = vmatpush.xpose.msra.mxu0 %v3701
      %3722 = vmatmul.f32.gmra.mxu0 %v3695
      %v3723 = vpop.f32.mrf.mxu0
      %v3724 = vadd.f32 0.0, %v3723
      %3725 = vmatmul.f32.gmra.mxu0 %v3698
      %v3726 = vpop.f32.mrf.mxu0
      %v3727 = vadd.f32 0.0, %v3726
      %3728 = vdwg.mxu0
      %v3729 = vmul.f32 %v3724, 0.35355338
      %v3730 = vmul.f32 %v3727, 0.35355338
      %v3731 = vsel %vm1458, -1e+09, %v3729
      %v3732 = vsel %vm1458, -1e+09, %v3730
      %v3733 = vsel %vm1461, %v3731, -inf
      %3734 = vmax.xlane.f32.xlu0 %v3733
      %v3735 = vpop.xlane.xlu0 %3734
      %v3736 = vsel %vm1461, %v3732, -inf
      %3737 = vmax.xlane.f32.xlu0 %v3736
      %v3738 = vpop.xlane.xlu0 %3737
      %v3739 = vsub.f32 %v3731, %v3735
      %v3740 = vsub.f32 %v3732, %v3738
      %v3741 = vmul.f32 %v3739, 1.442695
      %v3742 = vpow.pop %v3741
      %v3743 = vmul.f32 %v3740, 1.442695
      %v3744 = vpow.pop %v3743
      %v3745 = vsel %vm1461, %v3742, 0.0
      %3746 = vadd.xlane.f32.xlu0 %v3745
      %v3747 = vpop.xlane.xlu0 %3746
      %v3748 = vsel %vm1461, %v3744, 0.0
      %3749 = vadd.xlane.f32.xlu0 %v3748
      %v3750 = vpop.xlane.xlu0 %3749
      %v3751 = vrcp.pop %v3747
      %v3752 = vrcp.pop %v3750
      %v3753 = vmul.f32 %v3742, %v3751
      %v3754 = vmul.f32 %v3744, %v3752
      %3755 = vrot.lane.b32.xlu0 %v3689, 96
      %v3756 = vpop.permute.xlu0 %3755
      %3757 = vrot.lane.b32.xlu0 %v3692, 96
      %v3758 = vpop.permute.xlu0 %3757
      %v3762 = vsel %vm1461, %v3753, 0
      %v3765 = vsel %vm1461, %v3754, 0
      %3767 = vmatpush.msra.mxu0 0.0
      %3768 = vmatpush.msra.mxu0 0.0
      %3769 = vmatpush.msra.mxu0 0.0
      %3770 = vmatpush.msra.mxu0 0.0
      %3771 = vmatpush.msra.mxu0 0.0
      %3772 = vmatpush.msra.mxu0 0.0
      %3773 = vmatpush.msra.mxu0 0.0
      %3774 = vmatpush.msra.mxu0 0.0
      %3775 = vmatpush.msra.mxu0 0.0
      %3776 = vmatpush.msra.mxu0 0.0
      %3777 = vmatpush.msra.mxu0 0.0
      %3778 = vmatpush.msra.mxu0 0.0
      %3779 = vmatpush.msra.mxu0 0.0
      %3780 = vmatpush.msra.mxu0 0.0
      %3781 = vmatpush.msra.mxu0 %v3758
      %3782 = vmatpush.msra.mxu0 %v3756
      %3783 = vmatmul.f32.gmra.mxu0 %v3762
      %v3784 = vpop.f32.mrf.mxu0
      %v3785 = vadd.f32 0.0, %v3784
      %3786 = vmatmul.f32.gmra.mxu0 %v3765
      %v3787 = vpop.f32.mrf.mxu0
      %v3788 = vadd.f32 0.0, %v3787
      %3789 = vdwg.mxu0
      %3790 = vrot.lane.b32.xlu0 %v3657, 120
      %v3791 = vpop.permute.xlu0 %3790
      %3792 = vrot.lane.b32.xlu0 %v3660, 120
      %v3793 = vpop.permute.xlu0 %3792
      %3794 = vrot.lane.b32.xlu0 %v3689, 120
      %v3795 = vpop.permute.xlu0 %3794
      %3796 = vrot.lane.b32.xlu0 %v3692, 120
      %v3797 = vpop.permute.xlu0 %3796
      %v3798 = vsel %vm1424, %v3791, 0
      %v3800 = vsel %vm1424, %v3793, 0
      %v3802 = vsel %vm1424, %v3795, 0
      %v3804 = vsel %vm1424, %v3797, 0
      %3806 = vmatpush.xpose.msra.mxu0 0.0
      %3807 = vmatpush.xpose.msra.mxu0 0.0
      %3808 = vmatpush.xpose.msra.mxu0 0.0
      %3809 = vmatpush.xpose.msra.mxu0 0.0
      %3810 = vmatpush.xpose.msra.mxu0 0.0
      %3811 = vmatpush.xpose.msra.mxu0 0.0
      %3812 = vmatpush.xpose.msra.mxu0 0.0
      %3813 = vmatpush.xpose.msra.mxu0 0.0
      %3814 = vmatpush.xpose.msra.mxu0 0.0
      %3815 = vmatpush.xpose.msra.mxu0 0.0
      %3816 = vmatpush.xpose.msra.mxu0 0.0
      %3817 = vmatpush.xpose.msra.mxu0 0.0
      %3818 = vmatpush.xpose.msra.mxu0 0.0
      %3819 = vmatpush.xpose.msra.mxu0 0.0
      %3820 = vmatpush.xpose.msra.mxu0 %v3804
      %3821 = vmatpush.xpose.msra.mxu0 %v3802
      %3822 = vmatmul.f32.gmra.mxu0 %v3798
      %v3823 = vpop.f32.mrf.mxu0
      %v3824 = vadd.f32 0.0, %v3823
      %3825 = vmatmul.f32.gmra.mxu0 %v3800
      %v3826 = vpop.f32.mrf.mxu0
      %v3827 = vadd.f32 0.0, %v3826
      %3828 = vdwg.mxu0
      %v3829 = vmul.f32 %v3824, 0.35355338
      %v3830 = vmul.f32 %v3827, 0.35355338
      %v3831 = vsel %vm1458, -1e+09, %v3829
      %v3832 = vsel %vm1458, -1e+09, %v3830
      %v3833 = vsel %vm1461, %v3831, -inf
      %3834 = vmax.xlane.f32.xlu0 %v3833
      %v3835 = vpop.xlane.xlu0 %3834
      %v3836 = vsel %vm1461, %v3832, -inf
      %3837 = vmax.xlane.f32.xlu0 %v3836
      %v3838 = vpop.xlane.xlu0 %3837
      %v3839 = vsub.f32 %v3831, %v3835
      %v3840 = vsub.f32 %v3832, %v3838
      %v3841 = vmul.f32 %v3839, 1.442695
      %v3842 = vpow.pop %v3841
      %v3843 = vmul.f32 %v3840, 1.442695
      %v3844 = vpow.pop %v3843
      %v3845 = vsel %vm1461, %v3842, 0.0
      %3846 = vadd.xlane.f32.xlu0 %v3845
      %v3847 = vpop.xlane.xlu0 %3846
      %v3848 = vsel %vm1461, %v3844, 0.0
      %3849 = vadd.xlane.f32.xlu0 %v3848
      %v3850 = vpop.xlane.xlu0 %3849
      %v3851 = vrcp.pop %v3847
      %v3852 = vrcp.pop %v3850
      %v3853 = vmul.f32 %v3842, %v3851
      %v3854 = vmul.f32 %v3844, %v3852
      %3855 = vrot.lane.b32.xlu0 %v3689, 88
      %v3856 = vpop.permute.xlu0 %3855
      %3857 = vrot.lane.b32.xlu0 %v3692, 88
      %v3858 = vpop.permute.xlu0 %3857
      %v3862 = vsel %vm1461, %v3853, 0
      %v3865 = vsel %vm1461, %v3854, 0
      %3867 = vmatpush.msra.mxu0 0.0
      %3868 = vmatpush.msra.mxu0 0.0
      %3869 = vmatpush.msra.mxu0 0.0
      %3870 = vmatpush.msra.mxu0 0.0
      %3871 = vmatpush.msra.mxu0 0.0
      %3872 = vmatpush.msra.mxu0 0.0
      %3873 = vmatpush.msra.mxu0 0.0
      %3874 = vmatpush.msra.mxu0 0.0
      %3875 = vmatpush.msra.mxu0 0.0
      %3876 = vmatpush.msra.mxu0 0.0
      %3877 = vmatpush.msra.mxu0 0.0
      %3878 = vmatpush.msra.mxu0 0.0
      %3879 = vmatpush.msra.mxu0 0.0
      %3880 = vmatpush.msra.mxu0 0.0
      %3881 = vmatpush.msra.mxu0 %v3858
      %3882 = vmatpush.msra.mxu0 %v3856
      %3883 = vmatmul.f32.gmra.mxu0 %v3862
      %v3884 = vpop.f32.mrf.mxu0
      %v3885 = vadd.f32 0.0, %v3884
      %3886 = vmatmul.f32.gmra.mxu0 %v3865
      %v3887 = vpop.f32.mrf.mxu0
      %v3888 = vadd.f32 0.0, %v3887
      %3889 = vdwg.mxu0
      %3890 = vrot.lane.b32.xlu0 %v3657, 112
      %v3891 = vpop.permute.xlu0 %3890
      %3892 = vrot.lane.b32.xlu0 %v3660, 112
      %v3893 = vpop.permute.xlu0 %3892
      %3894 = vrot.lane.b32.xlu0 %v3689, 112
      %v3895 = vpop.permute.xlu0 %3894
      %3896 = vrot.lane.b32.xlu0 %v3692, 112
      %v3897 = vpop.permute.xlu0 %3896
      %v3898 = vsel %vm1424, %v3891, 0
      %v3900 = vsel %vm1424, %v3893, 0
      %v3902 = vsel %vm1424, %v3895, 0
      %v3904 = vsel %vm1424, %v3897, 0
      %3906 = vmatpush.xpose.msra.mxu0 0.0
      %3907 = vmatpush.xpose.msra.mxu0 0.0
      %3908 = vmatpush.xpose.msra.mxu0 0.0
      %3909 = vmatpush.xpose.msra.mxu0 0.0
      %3910 = vmatpush.xpose.msra.mxu0 0.0
      %3911 = vmatpush.xpose.msra.mxu0 0.0
      %3912 = vmatpush.xpose.msra.mxu0 0.0
      %3913 = vmatpush.xpose.msra.mxu0 0.0
      %3914 = vmatpush.xpose.msra.mxu0 0.0
      %3915 = vmatpush.xpose.msra.mxu0 0.0
      %3916 = vmatpush.xpose.msra.mxu0 0.0
      %3917 = vmatpush.xpose.msra.mxu0 0.0
      %3918 = vmatpush.xpose.msra.mxu0 0.0
      %3919 = vmatpush.xpose.msra.mxu0 0.0
      %3920 = vmatpush.xpose.msra.mxu0 %v3904
      %3921 = vmatpush.xpose.msra.mxu0 %v3902
      %3922 = vmatmul.f32.gmra.mxu0 %v3898
      %v3923 = vpop.f32.mrf.mxu0
      %v3924 = vadd.f32 0.0, %v3923
      %3925 = vmatmul.f32.gmra.mxu0 %v3900
      %v3926 = vpop.f32.mrf.mxu0
      %v3927 = vadd.f32 0.0, %v3926
      %3928 = vdwg.mxu0
      %v3929 = vmul.f32 %v3924, 0.35355338
      %v3930 = vmul.f32 %v3927, 0.35355338
      %v3931 = vsel %vm1458, -1e+09, %v3929
      %v3932 = vsel %vm1458, -1e+09, %v3930
      %v3933 = vsel %vm1461, %v3931, -inf
      %3934 = vmax.xlane.f32.xlu0 %v3933
      %v3935 = vpop.xlane.xlu0 %3934
      %v3936 = vsel %vm1461, %v3932, -inf
      %3937 = vmax.xlane.f32.xlu0 %v3936
      %v3938 = vpop.xlane.xlu0 %3937
      %v3939 = vsub.f32 %v3931, %v3935
      %v3940 = vsub.f32 %v3932, %v3938
      %v3941 = vmul.f32 %v3939, 1.442695
      %v3942 = vpow.pop %v3941
      %v3943 = vmul.f32 %v3940, 1.442695
      %v3944 = vpow.pop %v3943
      %v3945 = vsel %vm1461, %v3942, 0.0
      %3946 = vadd.xlane.f32.xlu0 %v3945
      %v3947 = vpop.xlane.xlu0 %3946
      %v3948 = vsel %vm1461, %v3944, 0.0
      %3949 = vadd.xlane.f32.xlu0 %v3948
      %v3950 = vpop.xlane.xlu0 %3949
      %v3951 = vrcp.pop %v3947
      %v3952 = vrcp.pop %v3950
      %v3953 = vmul.f32 %v3942, %v3951
      %v3954 = vmul.f32 %v3944, %v3952
      %3955 = vrot.lane.b32.xlu0 %v3689, 80
      %v3956 = vpop.permute.xlu0 %3955
      %3957 = vrot.lane.b32.xlu0 %v3692, 80
      %v3958 = vpop.permute.xlu0 %3957
      %v3962 = vsel %vm1461, %v3953, 0
      %v3965 = vsel %vm1461, %v3954, 0
      %3967 = vmatpush.msra.mxu0 0.0
      %3968 = vmatpush.msra.mxu0 0.0
      %3969 = vmatpush.msra.mxu0 0.0
      %3970 = vmatpush.msra.mxu0 0.0
      %3971 = vmatpush.msra.mxu0 0.0
      %3972 = vmatpush.msra.mxu0 0.0
      %3973 = vmatpush.msra.mxu0 0.0
      %3974 = vmatpush.msra.mxu0 0.0
      %3975 = vmatpush.msra.mxu0 0.0
      %3976 = vmatpush.msra.mxu0 0.0
      %3977 = vmatpush.msra.mxu0 0.0
      %3978 = vmatpush.msra.mxu0 0.0
      %3979 = vmatpush.msra.mxu0 0.0
      %3980 = vmatpush.msra.mxu0 0.0
      %3981 = vmatpush.msra.mxu0 %v3958
      %3982 = vmatpush.msra.mxu0 %v3956
      %3983 = vmatmul.f32.gmra.mxu0 %v3962
      %v3984 = vpop.f32.mrf.mxu0
      %v3985 = vadd.f32 0.0, %v3984
      %3986 = vmatmul.f32.gmra.mxu0 %v3965
      %v3987 = vpop.f32.mrf.mxu0
      %v3988 = vadd.f32 0.0, %v3987
      %3989 = vdwg.mxu0
      %3990 = vrot.lane.b32.xlu0 %v3657, 104
      %v3991 = vpop.permute.xlu0 %3990
      %3992 = vrot.lane.b32.xlu0 %v3660, 104
      %v3993 = vpop.permute.xlu0 %3992
      %3994 = vrot.lane.b32.xlu0 %v3689, 104
      %v3995 = vpop.permute.xlu0 %3994
      %3996 = vrot.lane.b32.xlu0 %v3692, 104
      %v3997 = vpop.permute.xlu0 %3996
      %v3998 = vsel %vm1424, %v3991, 0
      %v4000 = vsel %vm1424, %v3993, 0
      %v4002 = vsel %vm1424, %v3995, 0
      %v4004 = vsel %vm1424, %v3997, 0
      %4006 = vmatpush.xpose.msra.mxu0 0.0
      %4007 = vmatpush.xpose.msra.mxu0 0.0
      %4008 = vmatpush.xpose.msra.mxu0 0.0
      %4009 = vmatpush.xpose.msra.mxu0 0.0
      %4010 = vmatpush.xpose.msra.mxu0 0.0
      %4011 = vmatpush.xpose.msra.mxu0 0.0
      %4012 = vmatpush.xpose.msra.mxu0 0.0
      %4013 = vmatpush.xpose.msra.mxu0 0.0
      %4014 = vmatpush.xpose.msra.mxu0 0.0
      %4015 = vmatpush.xpose.msra.mxu0 0.0
      %4016 = vmatpush.xpose.msra.mxu0 0.0
      %4017 = vmatpush.xpose.msra.mxu0 0.0
      %4018 = vmatpush.xpose.msra.mxu0 0.0
      %4019 = vmatpush.xpose.msra.mxu0 0.0
      %4020 = vmatpush.xpose.msra.mxu0 %v4004
      %4021 = vmatpush.xpose.msra.mxu0 %v4002
      %4022 = vmatmul.f32.gmra.mxu0 %v3998
      %v4023 = vpop.f32.mrf.mxu0
      %v4024 = vadd.f32 0.0, %v4023
      %4025 = vmatmul.f32.gmra.mxu0 %v4000
      %v4026 = vpop.f32.mrf.mxu0
      %v4027 = vadd.f32 0.0, %v4026
      %4028 = vdwg.mxu0
      %v4029 = vmul.f32 %v4024, 0.35355338
      %v4030 = vmul.f32 %v4027, 0.35355338
      %v4031 = vsel %vm1458, -1e+09, %v4029
      %v4032 = vsel %vm1458, -1e+09, %v4030
      %v4033 = vsel %vm1461, %v4031, -inf
      %4034 = vmax.xlane.f32.xlu0 %v4033
      %v4035 = vpop.xlane.xlu0 %4034
      %v4036 = vsel %vm1461, %v4032, -inf
      %4037 = vmax.xlane.f32.xlu0 %v4036
      %v4038 = vpop.xlane.xlu0 %4037
      %v4039 = vsub.f32 %v4031, %v4035
      %v4040 = vsub.f32 %v4032, %v4038
      %v4041 = vmul.f32 %v4039, 1.442695
      %v4042 = vpow.pop %v4041
      %v4043 = vmul.f32 %v4040, 1.442695
      %v4044 = vpow.pop %v4043
      %v4045 = vsel %vm1461, %v4042, 0.0
      %4046 = vadd.xlane.f32.xlu0 %v4045
      %v4047 = vpop.xlane.xlu0 %4046
      %v4048 = vsel %vm1461, %v4044, 0.0
      %4049 = vadd.xlane.f32.xlu0 %v4048
      %v4050 = vpop.xlane.xlu0 %4049
      %v4051 = vrcp.pop %v4047
      %v4052 = vrcp.pop %v4050
      %v4053 = vmul.f32 %v4042, %v4051
      %v4054 = vmul.f32 %v4044, %v4052
      %4055 = vrot.lane.b32.xlu0 %v3689, 72
      %v4056 = vpop.permute.xlu0 %4055
      %4057 = vrot.lane.b32.xlu0 %v3692, 72
      %v4058 = vpop.permute.xlu0 %4057
      %v4062 = vsel %vm1461, %v4053, 0
      %v4065 = vsel %vm1461, %v4054, 0
      %4067 = vmatpush.msra.mxu0 0.0
      %4068 = vmatpush.msra.mxu0 0.0
      %4069 = vmatpush.msra.mxu0 0.0
      %4070 = vmatpush.msra.mxu0 0.0
      %4071 = vmatpush.msra.mxu0 0.0
      %4072 = vmatpush.msra.mxu0 0.0
      %4073 = vmatpush.msra.mxu0 0.0
      %4074 = vmatpush.msra.mxu0 0.0
      %4075 = vmatpush.msra.mxu0 0.0
      %4076 = vmatpush.msra.mxu0 0.0
      %4077 = vmatpush.msra.mxu0 0.0
      %4078 = vmatpush.msra.mxu0 0.0
      %4079 = vmatpush.msra.mxu0 0.0
      %4080 = vmatpush.msra.mxu0 0.0
      %4081 = vmatpush.msra.mxu0 %v4058
      %4082 = vmatpush.msra.mxu0 %v4056
      %4083 = vmatmul.f32.gmra.mxu0 %v4062
      %v4084 = vpop.f32.mrf.mxu0
      %v4085 = vadd.f32 0.0, %v4084
      %4086 = vmatmul.f32.gmra.mxu0 %v4065
      %v4087 = vpop.f32.mrf.mxu0
      %v4088 = vadd.f32 0.0, %v4087
      %4089 = vdwg.mxu0
      %4092 = vrot.lane.b32.xlu0 %v3885, 8
      %v4093 = vpop.permute.xlu0 %4092
      %4094 = vrot.lane.b32.xlu0 %v3888, 8
      %v4095 = vpop.permute.xlu0 %4094
      %4100 = vrot.lane.b32.xlu0 %v3985, 16
      %v4101 = vpop.permute.xlu0 %4100
      %4102 = vrot.lane.b32.xlu0 %v3988, 16
      %v4103 = vpop.permute.xlu0 %4102
      %4108 = vrot.lane.b32.xlu0 %v4085, 24
      %v4109 = vpop.permute.xlu0 %4108
      %4110 = vrot.lane.b32.xlu0 %v4088, 24
      %v4111 = vpop.permute.xlu0 %4110
      %v4114 = vsel %vm1424, %v3785, %v4093
      %v4115 = vsel %vm1424, %v3788, %v4095
      %v4116 = vsel %vm1461, %v4114, %v4101
      %v4117 = vsel %vm1461, %v4115, %v4103
      %v4118 = vsel %vm1847, %v4116, %v4109
      %v4119 = vsel %vm1847, %v4117, %v4111
      %v4121 = vperm.slane %v3629, 0
      %v4124 = vsel %vm1273, %v4118, 0
      %v4127 = vsel %vm1273, %v4119, 0
      %4129 = vmatpush.msra.mxu0 0.0
      %4130 = vmatpush.msra.mxu0 0.0
      %4131 = vmatpush.msra.mxu0 0.0
      %4132 = vmatpush.msra.mxu0 0.0
      %4133 = vmatpush.msra.mxu0 0.0
      %4134 = vmatpush.msra.mxu0 0.0
      %4135 = vmatpush.msra.mxu0 0.0
      %4136 = vmatpush.msra.mxu0 0.0
      %4137 = vmatpush.msra.mxu0 0.0
      %4138 = vmatpush.msra.mxu0 0.0
      %4139 = vmatpush.msra.mxu0 0.0
      %4140 = vmatpush.msra.mxu0 0.0
      %4141 = vmatpush.msra.mxu0 %v3628
      %4142 = vmatpush.msra.mxu0 %v3627
      %4143 = vmatpush.msra.mxu0 %v3626
      %4144 = vmatpush.msra.mxu0 %v3625
      %4145 = vmatmul.f32.gmra.mxu0 %v4124
      %v4146 = vpop.f32.mrf.mxu0
      %v4147 = vadd.f32 %v4121, %v4146
      %4148 = vmatmul.f32.gmra.mxu0 %v4127
      %v4149 = vpop.f32.mrf.mxu0
      %v4150 = vadd.f32 %v4121, %v4149
      %4151 = vdwg.mxu0
      %v4152 = vadd.f32 %v3523, %v4147
      %v4153 = vadd.f32 %v3524, %v4150
      %v4154 = vld [vmem:[%s73] sm:$0x1]
      %v4155 = vld [vmem:[%s75] sm:$0x1]
      %v4156 = vsel %vm1273, %v4152, 0.0
      %4157 = vadd.xlane.f32.xlu0 %v4156
      %v4158 = vpop.xlane.xlu0 %4157
      %v4159 = vsel %vm1273, %v4153, 0.0
      %4160 = vadd.xlane.f32.xlu0 %v4159
      %v4161 = vpop.xlane.xlu0 %4160
      %v4162 = vmul.f32 %v4158, %v1286
      %v4163 = vmul.f32 %v4161, %v1286
      %v4164 = vsub.f32 %v4152, %v4162
      %v4165 = vsub.f32 %v4153, %v4163
      %v4166 = vmul.f32 %v4164, %v4164
      %v4167 = vmul.f32 %v4165, %v4165
      %v4168 = vsel %vm1273, %v4166, 0.0
      %4169 = vadd.xlane.f32.xlu0 %v4168
      %v4170 = vpop.xlane.xlu0 %4169
      %v4171 = vsel %vm1273, %v4167, 0.0
      %4172 = vadd.xlane.f32.xlu0 %v4171
      %v4173 = vpop.xlane.xlu0 %4172
      %v4174 = vmul.f32 %v4170, %v1305
      %v4175 = vmul.f32 %v4173, %v1305
      %v4176 = vrsqrt.pop %v4174
      %v4177 = vmul.f32 %v4176, %v4174
      %v4178 = vmul.f32 %v4177, %v4176
      %v4179 = vmul.f32 0.5, %v4178
      %v4180 = vsub.f32 1.5, %v4179
      %v4181 = vmul.f32 %v4176, %v4180
      %v4182 = vmul.f32 %v4174, %v4181
      %vm4183 = vcmp.eq.f32.partialorder %v4174, inf
      %v4184 = vsel %vm4183, %v4174, %v4182
      %vm4185 = vcmp.eq.f32.partialorder %v4174, 0.0
      %v4186 = vand.u32 %v4174, 2147483648
      %v4187 = vsel %vm4185, %v4186, %v4184
      %v4188 = vrsqrt.pop %v4175
      %v4189 = vmul.f32 %v4188, %v4175
      %v4190 = vmul.f32 %v4189, %v4188
      %v4191 = vmul.f32 0.5, %v4190
      %v4192 = vsub.f32 1.5, %v4191
      %v4193 = vmul.f32 %v4188, %v4192
      %v4194 = vmul.f32 %v4175, %v4193
      %vm4195 = vcmp.eq.f32.partialorder %v4175, inf
      %v4196 = vsel %vm4195, %v4175, %v4194
      %vm4197 = vcmp.eq.f32.partialorder %v4175, 0.0
      %v4198 = vand.u32 %v4175, 2147483648
      %v4199 = vsel %vm4197, %v4198, %v4196
      %v4200 = vadd.f32 %v4187, 1e-06
      %v4201 = vadd.f32 %v4199, 1e-06
      %v4202 = vrcp.pop %v4200
      %v4203 = vmul.f32 %v4200, %v4202
      %v4204 = vsub.f32 1.0, %v4203
      %v4205 = vmul.f32 %v4202, %v4204
      %v4206 = vadd.f32 %v4202, %v4205
      %vm4207 = vweird.f32 %v4200
      %vm4208 = vweird.f32 %v4202
      %vm4209 = vmor %vm4207, %vm4208
      %v4210 = vsel %vm4209, %v4202, %v4206
      %v4211 = vand.u32 2147483647, %v4200
      %vm4212 = vcmp.eq.f32.partialorder %v4211, 8.507059e+37
      %v4213 = vand.u32 %v4200, 2147483648
      %v4214 = vor.u32 1.1754944e-38, %v4213
      %v4215 = vsel %vm4212, %v4214, %v4210
      %v4216 = vmul.f32 1.0, %v4215
      %v4217 = vrcp.pop %v4201
      %v4218 = vmul.f32 %v4201, %v4217
      %v4219 = vsub.f32 1.0, %v4218
      %v4220 = vmul.f32 %v4217, %v4219
      %v4221 = vadd.f32 %v4217, %v4220
      %vm4222 = vweird.f32 %v4201
      %vm4223 = vweird.f32 %v4217
      %vm4224 = vmor %vm4222, %vm4223
      %v4225 = vsel %vm4224, %v4217, %v4221
      %v4226 = vand.u32 2147483647, %v4201
      %vm4227 = vcmp.eq.f32.partialorder %v4226, 8.507059e+37
      %v4228 = vand.u32 %v4201, 2147483648
      %v4229 = vor.u32 1.1754944e-38, %v4228
      %v4230 = vsel %vm4227, %v4229, %v4225
      %v4231 = vmul.f32 1.0, %v4230
      %v4233 = vperm.slane %v4154, 0
      %v4235 = vmul.f32 %v4233, %v4216
      %v4236 = vmul.f32 %v4233, %v4231
      %v4237 = vmul.f32 %v4164, %v4235
      %v4238 = vmul.f32 %v4165, %v4236
      %v4240 = vperm.slane %v4155, 0
      %v4242 = vadd.f32 %v4237, %v4240
      %v4243 = vadd.f32 %v4238, %v4240
      %v4244 = vld [vmem:[%s57] sm:$0xff]
      %v4245 = vld [vmem:[%s57 + $0x8] sm:$0xff]
      %v4246 = vld [vmem:[%s57 + $0x10] sm:$0xff]
      %v4247 = vld [vmem:[%s57 + $0x18] sm:$0xff]
      %v4248 = vld [vmem:[%s59] sm:$0x1]
      %v4249 = vld [vmem:[%s61] sm:$0xff]
      %v4250 = vld [vmem:[%s61 + $0x8] sm:$0xff]
      %v4251 = vld [vmem:[%s61 + $0x10] sm:$0xff]
      %v4252 = vld [vmem:[%s61 + $0x18] sm:$0xff]
      %v4253 = vld [vmem:[%s61 + $0x20] sm:$0xff]
      %v4254 = vld [vmem:[%s61 + $0x28] sm:$0xff]
      %v4255 = vld [vmem:[%s61 + $0x30] sm:$0xff]
      %v4256 = vld [vmem:[%s61 + $0x38] sm:$0xff]
      %v4257 = vld [vmem:[%s63] sm:$0x1]
      %v4259 = vperm.slane %v4248, 0
      %v4262 = vsel %vm1273, %v4242, 0
      %v4265 = vsel %vm1273, %v4243, 0
      %4267 = vmatpush.msra.mxu0 0.0
      %4268 = vmatpush.msra.mxu0 0.0
      %4269 = vmatpush.msra.mxu0 0.0
      %4270 = vmatpush.msra.mxu0 0.0
      %4271 = vmatpush.msra.mxu0 0.0
      %4272 = vmatpush.msra.mxu0 0.0
      %4273 = vmatpush.msra.mxu0 0.0
      %4274 = vmatpush.msra.mxu0 0.0
      %4275 = vmatpush.msra.mxu0 0.0
      %4276 = vmatpush.msra.mxu0 0.0
      %4277 = vmatpush.msra.mxu0 0.0
      %4278 = vmatpush.msra.mxu0 0.0
      %4279 = vmatpush.msra.mxu0 %v4247
      %4280 = vmatpush.msra.mxu0 %v4246
      %4281 = vmatpush.msra.mxu0 %v4245
      %4282 = vmatpush.msra.mxu0 %v4244
      %4283 = vmatmul.f32.gmra.mxu0 %v4262
      %v4284 = vpop.f32.mrf.mxu0
      %v4285 = vadd.f32 %v4259, %v4284
      %4286 = vmatmul.f32.gmra.mxu0 %v4265
      %v4287 = vpop.f32.mrf.mxu0
      %v4288 = vadd.f32 %v4259, %v4287
      %4289 = vdwg.mxu0
      %v4290 = vmax.f32 %v4285, 0.0
      %v4291 = vmax.f32 %v4288, 0.0
      %v4293 = vperm.slane %v4257, 0
      %v4296 = vsel %vm2025, %v4290, 0
      %v4299 = vsel %vm2025, %v4291, 0
      %4301 = vmatpush.msra.mxu0 0.0
      %4302 = vmatpush.msra.mxu0 0.0
      %4303 = vmatpush.msra.mxu0 0.0
      %4304 = vmatpush.msra.mxu0 0.0
      %4305 = vmatpush.msra.mxu0 0.0
      %4306 = vmatpush.msra.mxu0 0.0
      %4307 = vmatpush.msra.mxu0 0.0
      %4308 = vmatpush.msra.mxu0 0.0
      %4309 = vmatpush.msra.mxu0 %v4256
      %4310 = vmatpush.msra.mxu0 %v4255
      %4311 = vmatpush.msra.mxu0 %v4254
      %4312 = vmatpush.msra.mxu0 %v4253
      %4313 = vmatpush.msra.mxu0 %v4252
      %4314 = vmatpush.msra.mxu0 %v4251
      %4315 = vmatpush.msra.mxu0 %v4250
      %4316 = vmatpush.msra.mxu0 %v4249
      %4317 = vmatmul.f32.gmra.mxu0 %v4296
      %v4318 = vpop.f32.mrf.mxu0
      %v4319 = vadd.f32 %v4293, %v4318
      %4320 = vmatmul.f32.gmra.mxu0 %v4299
      %v4321 = vpop.f32.mrf.mxu0
      %v4322 = vadd.f32 %v4293, %v4321
      %4323 = vdwg.mxu0
      %v4324 = vadd.f32 %v4152, %v4319
      %v4325 = vadd.f32 %v4153, %v4322
      %s4326 = scalar_lea.vmem %s65, 1
      %v4327 = vld [vmem:[%s4326] sm:$0x1]
      %s4328 = scalar_lea.vmem %s67, 1
      %v4329 = vld [vmem:[%s4328] sm:$0x1]
      %v4330 = vsel %vm1273, %v4324, 0.0
      %4331 = vadd.xlane.f32.xlu0 %v4330
      %v4332 = vpop.xlane.xlu0 %4331
      %v4333 = vsel %vm1273, %v4325, 0.0
      %4334 = vadd.xlane.f32.xlu0 %v4333
      %v4335 = vpop.xlane.xlu0 %4334
      %v4336 = vmul.f32 %v4332, %v1286
      %v4337 = vmul.f32 %v4335, %v1286
      %v4338 = vsub.f32 %v4324, %v4336
      %v4339 = vsub.f32 %v4325, %v4337
      %v4340 = vmul.f32 %v4338, %v4338
      %v4341 = vmul.f32 %v4339, %v4339
      %v4342 = vsel %vm1273, %v4340, 0.0
      %4343 = vadd.xlane.f32.xlu0 %v4342
      %v4344 = vpop.xlane.xlu0 %4343
      %v4345 = vsel %vm1273, %v4341, 0.0
      %4346 = vadd.xlane.f32.xlu0 %v4345
      %v4347 = vpop.xlane.xlu0 %4346
      %v4348 = vmul.f32 %v4344, %v1305
      %v4349 = vmul.f32 %v4347, %v1305
      %v4350 = vrsqrt.pop %v4348
      %v4351 = vmul.f32 %v4350, %v4348
      %v4352 = vmul.f32 %v4351, %v4350
      %v4353 = vmul.f32 0.5, %v4352
      %v4354 = vsub.f32 1.5, %v4353
      %v4355 = vmul.f32 %v4350, %v4354
      %v4356 = vmul.f32 %v4348, %v4355
      %vm4357 = vcmp.eq.f32.partialorder %v4348, inf
      %v4358 = vsel %vm4357, %v4348, %v4356
      %vm4359 = vcmp.eq.f32.partialorder %v4348, 0.0
      %v4360 = vand.u32 %v4348, 2147483648
      %v4361 = vsel %vm4359, %v4360, %v4358
      %v4362 = vrsqrt.pop %v4349
      %v4363 = vmul.f32 %v4362, %v4349
      %v4364 = vmul.f32 %v4363, %v4362
      %v4365 = vmul.f32 0.5, %v4364
      %v4366 = vsub.f32 1.5, %v4365
      %v4367 = vmul.f32 %v4362, %v4366
      %v4368 = vmul.f32 %v4349, %v4367
      %vm4369 = vcmp.eq.f32.partialorder %v4349, inf
      %v4370 = vsel %vm4369, %v4349, %v4368
      %vm4371 = vcmp.eq.f32.partialorder %v4349, 0.0
      %v4372 = vand.u32 %v4349, 2147483648
      %v4373 = vsel %vm4371, %v4372, %v4370
      %v4374 = vadd.f32 %v4361, 1e-06
      %v4375 = vadd.f32 %v4373, 1e-06
      %v4376 = vrcp.pop %v4374
      %v4377 = vmul.f32 %v4374, %v4376
      %v4378 = vsub.f32 1.0, %v4377
      %v4379 = vmul.f32 %v4376, %v4378
      %v4380 = vadd.f32 %v4376, %v4379
      %vm4381 = vweird.f32 %v4374
      %vm4382 = vweird.f32 %v4376
      %vm4383 = vmor %vm4381, %vm4382
      %v4384 = vsel %vm4383, %v4376, %v4380
      %v4385 = vand.u32 2147483647, %v4374
      %vm4386 = vcmp.eq.f32.partialorder %v4385, 8.507059e+37
      %v4387 = vand.u32 %v4374, 2147483648
      %v4388 = vor.u32 1.1754944e-38, %v4387
      %v4389 = vsel %vm4386, %v4388, %v4384
      %v4390 = vmul.f32 1.0, %v4389
      %v4391 = vrcp.pop %v4375
      %v4392 = vmul.f32 %v4375, %v4391
      %v4393 = vsub.f32 1.0, %v4392
      %v4394 = vmul.f32 %v4391, %v4393
      %v4395 = vadd.f32 %v4391, %v4394
      %vm4396 = vweird.f32 %v4375
      %vm4397 = vweird.f32 %v4391
      %vm4398 = vmor %vm4396, %vm4397
      %v4399 = vsel %vm4398, %v4391, %v4395
      %v4400 = vand.u32 2147483647, %v4375
      %vm4401 = vcmp.eq.f32.partialorder %v4400, 8.507059e+37
      %v4402 = vand.u32 %v4375, 2147483648
      %v4403 = vor.u32 1.1754944e-38, %v4402
      %v4404 = vsel %vm4401, %v4403, %v4399
      %v4405 = vmul.f32 1.0, %v4404
      %v4407 = vperm.slane %v4327, 0
      %v4409 = vmul.f32 %v4407, %v4390
      %v4410 = vmul.f32 %v4407, %v4405
      %v4411 = vmul.f32 %v4338, %v4409
      %v4412 = vmul.f32 %v4339, %v4410
      %v4414 = vperm.slane %v4329, 0
      %v4416 = vadd.f32 %v4411, %v4414
      %v4417 = vadd.f32 %v4412, %v4414
      %s4418 = scalar_lea.vmem %s37, 32
      %v4419 = vld [vmem:[%s4418] sm:$0xff]
      %v4420 = vld [vmem:[%s4418 + $0x8] sm:$0xff]
      %v4421 = vld [vmem:[%s4418 + $0x10] sm:$0xff]
      %v4422 = vld [vmem:[%s4418 + $0x18] sm:$0xff]
      %s4423 = scalar_lea.vmem %s39, 1
      %v4424 = vld [vmem:[%s4423] sm:$0x1]
      %s4425 = scalar_lea.vmem %s41, 32
      %v4426 = vld [vmem:[%s4425] sm:$0xff]
      %v4427 = vld [vmem:[%s4425 + $0x8] sm:$0xff]
      %v4428 = vld [vmem:[%s4425 + $0x10] sm:$0xff]
      %v4429 = vld [vmem:[%s4425 + $0x18] sm:$0xff]
      %s4430 = scalar_lea.vmem %s43, 1
      %v4431 = vld [vmem:[%s4430] sm:$0x1]
      %v4433 = vperm.slane %v4424, 0
      %v4436 = vsel %vm1273, %v4416, 0
      %v4439 = vsel %vm1273, %v4417, 0
      %4441 = vmatpush.msra.mxu0 0.0
      %4442 = vmatpush.msra.mxu0 0.0
      %4443 = vmatpush.msra.mxu0 0.0
      %4444 = vmatpush.msra.mxu0 0.0
      %4445 = vmatpush.msra.mxu0 0.0
      %4446 = vmatpush.msra.mxu0 0.0
      %4447 = vmatpush.msra.mxu0 0.0
      %4448 = vmatpush.msra.mxu0 0.0
      %4449 = vmatpush.msra.mxu0 0.0
      %4450 = vmatpush.msra.mxu0 0.0
      %4451 = vmatpush.msra.mxu0 0.0
      %4452 = vmatpush.msra.mxu0 0.0
      %4453 = vmatpush.msra.mxu0 %v4422
      %4454 = vmatpush.msra.mxu0 %v4421
      %4455 = vmatpush.msra.mxu0 %v4420
      %4456 = vmatpush.msra.mxu0 %v4419
      %4457 = vmatmul.f32.gmra.mxu0 %v4436
      %v4458 = vpop.f32.mrf.mxu0
      %v4459 = vadd.f32 %v4433, %v4458
      %4460 = vmatmul.f32.gmra.mxu0 %v4439
      %v4461 = vpop.f32.mrf.mxu0
      %v4462 = vadd.f32 %v4433, %v4461
      %4463 = vdwg.mxu0
      %4466 = vrot.lane.b32.xlu0 %v4459, 96
      %v4467 = vpop.permute.xlu0 %4466
      %4468 = vrot.lane.b32.xlu0 %v4462, 96
      %v4469 = vpop.permute.xlu0 %4468
      %v4470 = vsel %vm1424, %v4459, 0
      %v4472 = vsel %vm1424, %v4462, 0
      %v4474 = vsel %vm1424, %v4467, 0
      %v4476 = vsel %vm1424, %v4469, 0
      %4478 = vmatpush.xpose.msra.mxu0 0.0
      %4479 = vmatpush.xpose.msra.mxu0 0.0
      %4480 = vmatpush.xpose.msra.mxu0 0.0
      %4481 = vmatpush.xpose.msra.mxu0 0.0
      %4482 = vmatpush.xpose.msra.mxu0 0.0
      %4483 = vmatpush.xpose.msra.mxu0 0.0
      %4484 = vmatpush.xpose.msra.mxu0 0.0
      %4485 = vmatpush.xpose.msra.mxu0 0.0
      %4486 = vmatpush.xpose.msra.mxu0 0.0
      %4487 = vmatpush.xpose.msra.mxu0 0.0
      %4488 = vmatpush.xpose.msra.mxu0 0.0
      %4489 = vmatpush.xpose.msra.mxu0 0.0
      %4490 = vmatpush.xpose.msra.mxu0 0.0
      %4491 = vmatpush.xpose.msra.mxu0 0.0
      %4492 = vmatpush.xpose.msra.mxu0 %v4476
      %4493 = vmatpush.xpose.msra.mxu0 %v4474
      %4494 = vmatmul.f32.gmra.mxu0 %v4470
      %v4495 = vpop.f32.mrf.mxu0
      %v4496 = vadd.f32 0.0, %v4495
      %4497 = vmatmul.f32.gmra.mxu0 %v4472
      %v4498 = vpop.f32.mrf.mxu0
      %v4499 = vadd.f32 0.0, %v4498
      %4500 = vdwg.mxu0
      %v4501 = vmul.f32 %v4496, 0.35355338
      %v4502 = vmul.f32 %v4499, 0.35355338
      %v4503 = vsel %vm3100, -1e+09, %v4501
      %v4504 = vsel %vm3101, -1e+09, %v4502
      %v4505 = vsel %vm1461, %v4503, -inf
      %4506 = vmax.xlane.f32.xlu0 %v4505
      %v4507 = vpop.xlane.xlu0 %4506
      %v4508 = vsel %vm1461, %v4504, -inf
      %4509 = vmax.xlane.f32.xlu0 %v4508
      %v4510 = vpop.xlane.xlu0 %4509
      %v4511 = vsub.f32 %v4503, %v4507
      %v4512 = vsub.f32 %v4504, %v4510
      %v4513 = vmul.f32 %v4511, 1.442695
      %v4514 = vpow.pop %v4513
      %v4515 = vmul.f32 %v4512, 1.442695
      %v4516 = vpow.pop %v4515
      %v4517 = vsel %vm1461, %v4514, 0.0
      %4518 = vadd.xlane.f32.xlu0 %v4517
      %v4519 = vpop.xlane.xlu0 %4518
      %v4520 = vsel %vm1461, %v4516, 0.0
      %4521 = vadd.xlane.f32.xlu0 %v4520
      %v4522 = vpop.xlane.xlu0 %4521
      %v4523 = vrcp.pop %v4519
      %v4524 = vrcp.pop %v4522
      %v4525 = vmul.f32 %v4514, %v4523
      %v4526 = vmul.f32 %v4516, %v4524
      %4527 = vrot.lane.b32.xlu0 %v4459, 64
      %v4528 = vpop.permute.xlu0 %4527
      %4529 = vrot.lane.b32.xlu0 %v4462, 64
      %v4530 = vpop.permute.xlu0 %4529
      %v4534 = vsel %vm1461, %v4525, 0
      %v4537 = vsel %vm1461, %v4526, 0
      %4539 = vmatpush.msra.mxu0 0.0
      %4540 = vmatpush.msra.mxu0 0.0
      %4541 = vmatpush.msra.mxu0 0.0
      %4542 = vmatpush.msra.mxu0 0.0
      %4543 = vmatpush.msra.mxu0 0.0
      %4544 = vmatpush.msra.mxu0 0.0
      %4545 = vmatpush.msra.mxu0 0.0
      %4546 = vmatpush.msra.mxu0 0.0
      %4547 = vmatpush.msra.mxu0 0.0
      %4548 = vmatpush.msra.mxu0 0.0
      %4549 = vmatpush.msra.mxu0 0.0
      %4550 = vmatpush.msra.mxu0 0.0
      %4551 = vmatpush.msra.mxu0 0.0
      %4552 = vmatpush.msra.mxu0 0.0
      %4553 = vmatpush.msra.mxu0 %v4530
      %4554 = vmatpush.msra.mxu0 %v4528
      %4555 = vmatmul.f32.gmra.mxu0 %v4534
      %v4556 = vpop.f32.mrf.mxu0
      %v4557 = vadd.f32 0.0, %v4556
      %4558 = vmatmul.f32.gmra.mxu0 %v4537
      %v4559 = vpop.f32.mrf.mxu0
      %v4560 = vadd.f32 0.0, %v4559
      %4561 = vdwg.mxu0
      %4562 = vrot.lane.b32.xlu0 %v4459, 120
      %v4563 = vpop.permute.xlu0 %4562
      %4564 = vrot.lane.b32.xlu0 %v4462, 120
      %v4565 = vpop.permute.xlu0 %4564
      %4566 = vrot.lane.b32.xlu0 %v4459, 88
      %v4567 = vpop.permute.xlu0 %4566
      %4568 = vrot.lane.b32.xlu0 %v4462, 88
      %v4569 = vpop.permute.xlu0 %4568
      %v4570 = vsel %vm1424, %v4563, 0
      %v4572 = vsel %vm1424, %v4565, 0
      %v4574 = vsel %vm1424, %v4567, 0
      %v4576 = vsel %vm1424, %v4569, 0
      %4578 = vmatpush.xpose.msra.mxu0 0.0
      %4579 = vmatpush.xpose.msra.mxu0 0.0
      %4580 = vmatpush.xpose.msra.mxu0 0.0
      %4581 = vmatpush.xpose.msra.mxu0 0.0
      %4582 = vmatpush.xpose.msra.mxu0 0.0
      %4583 = vmatpush.xpose.msra.mxu0 0.0
      %4584 = vmatpush.xpose.msra.mxu0 0.0
      %4585 = vmatpush.xpose.msra.mxu0 0.0
      %4586 = vmatpush.xpose.msra.mxu0 0.0
      %4587 = vmatpush.xpose.msra.mxu0 0.0
      %4588 = vmatpush.xpose.msra.mxu0 0.0
      %4589 = vmatpush.xpose.msra.mxu0 0.0
      %4590 = vmatpush.xpose.msra.mxu0 0.0
      %4591 = vmatpush.xpose.msra.mxu0 0.0
      %4592 = vmatpush.xpose.msra.mxu0 %v4576
      %4593 = vmatpush.xpose.msra.mxu0 %v4574
      %4594 = vmatmul.f32.gmra.mxu0 %v4570
      %v4595 = vpop.f32.mrf.mxu0
      %v4596 = vadd.f32 0.0, %v4595
      %4597 = vmatmul.f32.gmra.mxu0 %v4572
      %v4598 = vpop.f32.mrf.mxu0
      %v4599 = vadd.f32 0.0, %v4598
      %4600 = vdwg.mxu0
      %v4601 = vmul.f32 %v4596, 0.35355338
      %v4602 = vmul.f32 %v4599, 0.35355338
      %v4603 = vsel %vm3100, -1e+09, %v4601
      %v4604 = vsel %vm3101, -1e+09, %v4602
      %v4605 = vsel %vm1461, %v4603, -inf
      %4606 = vmax.xlane.f32.xlu0 %v4605
      %v4607 = vpop.xlane.xlu0 %4606
      %v4608 = vsel %vm1461, %v4604, -inf
      %4609 = vmax.xlane.f32.xlu0 %v4608
      %v4610 = vpop.xlane.xlu0 %4609
      %v4611 = vsub.f32 %v4603, %v4607
      %v4612 = vsub.f32 %v4604, %v4610
      %v4613 = vmul.f32 %v4611, 1.442695
      %v4614 = vpow.pop %v4613
      %v4615 = vmul.f32 %v4612, 1.442695
      %v4616 = vpow.pop %v4615
      %v4617 = vsel %vm1461, %v4614, 0.0
      %4618 = vadd.xlane.f32.xlu0 %v4617
      %v4619 = vpop.xlane.xlu0 %4618
      %v4620 = vsel %vm1461, %v4616, 0.0
      %4621 = vadd.xlane.f32.xlu0 %v4620
      %v4622 = vpop.xlane.xlu0 %4621
      %v4623 = vrcp.pop %v4619
      %v4624 = vrcp.pop %v4622
      %v4625 = vmul.f32 %v4614, %v4623
      %v4626 = vmul.f32 %v4616, %v4624
      %4627 = vrot.lane.b32.xlu0 %v4459, 56
      %v4628 = vpop.permute.xlu0 %4627
      %4629 = vrot.lane.b32.xlu0 %v4462, 56
      %v4630 = vpop.permute.xlu0 %4629
      %v4634 = vsel %vm1461, %v4625, 0
      %v4637 = vsel %vm1461, %v4626, 0
      %4639 = vmatpush.msra.mxu0 0.0
      %4640 = vmatpush.msra.mxu0 0.0
      %4641 = vmatpush.msra.mxu0 0.0
      %4642 = vmatpush.msra.mxu0 0.0
      %4643 = vmatpush.msra.mxu0 0.0
      %4644 = vmatpush.msra.mxu0 0.0
      %4645 = vmatpush.msra.mxu0 0.0
      %4646 = vmatpush.msra.mxu0 0.0
      %4647 = vmatpush.msra.mxu0 0.0
      %4648 = vmatpush.msra.mxu0 0.0
      %4649 = vmatpush.msra.mxu0 0.0
      %4650 = vmatpush.msra.mxu0 0.0
      %4651 = vmatpush.msra.mxu0 0.0
      %4652 = vmatpush.msra.mxu0 0.0
      %4653 = vmatpush.msra.mxu0 %v4630
      %4654 = vmatpush.msra.mxu0 %v4628
      %4655 = vmatmul.f32.gmra.mxu0 %v4634
      %v4656 = vpop.f32.mrf.mxu0
      %v4657 = vadd.f32 0.0, %v4656
      %4658 = vmatmul.f32.gmra.mxu0 %v4637
      %v4659 = vpop.f32.mrf.mxu0
      %v4660 = vadd.f32 0.0, %v4659
      %4661 = vdwg.mxu0
      %4662 = vrot.lane.b32.xlu0 %v4459, 112
      %v4663 = vpop.permute.xlu0 %4662
      %4664 = vrot.lane.b32.xlu0 %v4462, 112
      %v4665 = vpop.permute.xlu0 %4664
      %4666 = vrot.lane.b32.xlu0 %v4459, 80
      %v4667 = vpop.permute.xlu0 %4666
      %4668 = vrot.lane.b32.xlu0 %v4462, 80
      %v4669 = vpop.permute.xlu0 %4668
      %v4670 = vsel %vm1424, %v4663, 0
      %v4672 = vsel %vm1424, %v4665, 0
      %v4674 = vsel %vm1424, %v4667, 0
      %v4676 = vsel %vm1424, %v4669, 0
      %4678 = vmatpush.xpose.msra.mxu0 0.0
      %4679 = vmatpush.xpose.msra.mxu0 0.0
      %4680 = vmatpush.xpose.msra.mxu0 0.0
      %4681 = vmatpush.xpose.msra.mxu0 0.0
      %4682 = vmatpush.xpose.msra.mxu0 0.0
      %4683 = vmatpush.xpose.msra.mxu0 0.0
      %4684 = vmatpush.xpose.msra.mxu0 0.0
      %4685 = vmatpush.xpose.msra.mxu0 0.0
      %4686 = vmatpush.xpose.msra.mxu0 0.0
      %4687 = vmatpush.xpose.msra.mxu0 0.0
      %4688 = vmatpush.xpose.msra.mxu0 0.0
      %4689 = vmatpush.xpose.msra.mxu0 0.0
      %4690 = vmatpush.xpose.msra.mxu0 0.0
      %4691 = vmatpush.xpose.msra.mxu0 0.0
      %4692 = vmatpush.xpose.msra.mxu0 %v4676
      %4693 = vmatpush.xpose.msra.mxu0 %v4674
      %4694 = vmatmul.f32.gmra.mxu0 %v4670
      %v4695 = vpop.f32.mrf.mxu0
      %v4696 = vadd.f32 0.0, %v4695
      %4697 = vmatmul.f32.gmra.mxu0 %v4672
      %v4698 = vpop.f32.mrf.mxu0
      %v4699 = vadd.f32 0.0, %v4698
      %4700 = vdwg.mxu0
      %v4701 = vmul.f32 %v4696, 0.35355338
      %v4702 = vmul.f32 %v4699, 0.35355338
      %v4703 = vsel %vm3100, -1e+09, %v4701
      %v4704 = vsel %vm3101, -1e+09, %v4702
      %v4705 = vsel %vm1461, %v4703, -inf
      %4706 = vmax.xlane.f32.xlu0 %v4705
      %v4707 = vpop.xlane.xlu0 %4706
      %v4708 = vsel %vm1461, %v4704, -inf
      %4709 = vmax.xlane.f32.xlu0 %v4708
      %v4710 = vpop.xlane.xlu0 %4709
      %v4711 = vsub.f32 %v4703, %v4707
      %v4712 = vsub.f32 %v4704, %v4710
      %v4713 = vmul.f32 %v4711, 1.442695
      %v4714 = vpow.pop %v4713
      %v4715 = vmul.f32 %v4712, 1.442695
      %v4716 = vpow.pop %v4715
      %v4717 = vsel %vm1461, %v4714, 0.0
      %4718 = vadd.xlane.f32.xlu0 %v4717
      %v4719 = vpop.xlane.xlu0 %4718
      %v4720 = vsel %vm1461, %v4716, 0.0
      %4721 = vadd.xlane.f32.xlu0 %v4720
      %v4722 = vpop.xlane.xlu0 %4721
      %v4723 = vrcp.pop %v4719
      %v4724 = vrcp.pop %v4722
      %v4725 = vmul.f32 %v4714, %v4723
      %v4726 = vmul.f32 %v4716, %v4724
      %4727 = vrot.lane.b32.xlu0 %v4459, 48
      %v4728 = vpop.permute.xlu0 %4727
      %4729 = vrot.lane.b32.xlu0 %v4462, 48
      %v4730 = vpop.permute.xlu0 %4729
      %v4734 = vsel %vm1461, %v4725, 0
      %v4737 = vsel %vm1461, %v4726, 0
      %4739 = vmatpush.msra.mxu0 0.0
      %4740 = vmatpush.msra.mxu0 0.0
      %4741 = vmatpush.msra.mxu0 0.0
      %4742 = vmatpush.msra.mxu0 0.0
      %4743 = vmatpush.msra.mxu0 0.0
      %4744 = vmatpush.msra.mxu0 0.0
      %4745 = vmatpush.msra.mxu0 0.0
      %4746 = vmatpush.msra.mxu0 0.0
      %4747 = vmatpush.msra.mxu0 0.0
      %4748 = vmatpush.msra.mxu0 0.0
      %4749 = vmatpush.msra.mxu0 0.0
      %4750 = vmatpush.msra.mxu0 0.0
      %4751 = vmatpush.msra.mxu0 0.0
      %4752 = vmatpush.msra.mxu0 0.0
      %4753 = vmatpush.msra.mxu0 %v4730
      %4754 = vmatpush.msra.mxu0 %v4728
      %4755 = vmatmul.f32.gmra.mxu0 %v4734
      %v4756 = vpop.f32.mrf.mxu0
      %v4757 = vadd.f32 0.0, %v4756
      %4758 = vmatmul.f32.gmra.mxu0 %v4737
      %v4759 = vpop.f32.mrf.mxu0
      %v4760 = vadd.f32 0.0, %v4759
      %4761 = vdwg.mxu0
      %4762 = vrot.lane.b32.xlu0 %v4459, 104
      %v4763 = vpop.permute.xlu0 %4762
      %4764 = vrot.lane.b32.xlu0 %v4462, 104
      %v4765 = vpop.permute.xlu0 %4764
      %4766 = vrot.lane.b32.xlu0 %v4459, 72
      %v4767 = vpop.permute.xlu0 %4766
      %4768 = vrot.lane.b32.xlu0 %v4462, 72
      %v4769 = vpop.permute.xlu0 %4768
      %v4770 = vsel %vm1424, %v4763, 0
      %v4772 = vsel %vm1424, %v4765, 0
      %v4774 = vsel %vm1424, %v4767, 0
      %v4776 = vsel %vm1424, %v4769, 0
      %4778 = vmatpush.xpose.msra.mxu0 0.0
      %4779 = vmatpush.xpose.msra.mxu0 0.0
      %4780 = vmatpush.xpose.msra.mxu0 0.0
      %4781 = vmatpush.xpose.msra.mxu0 0.0
      %4782 = vmatpush.xpose.msra.mxu0 0.0
      %4783 = vmatpush.xpose.msra.mxu0 0.0
      %4784 = vmatpush.xpose.msra.mxu0 0.0
      %4785 = vmatpush.xpose.msra.mxu0 0.0
      %4786 = vmatpush.xpose.msra.mxu0 0.0
      %4787 = vmatpush.xpose.msra.mxu0 0.0
      %4788 = vmatpush.xpose.msra.mxu0 0.0
      %4789 = vmatpush.xpose.msra.mxu0 0.0
      %4790 = vmatpush.xpose.msra.mxu0 0.0
      %4791 = vmatpush.xpose.msra.mxu0 0.0
      %4792 = vmatpush.xpose.msra.mxu0 %v4776
      %4793 = vmatpush.xpose.msra.mxu0 %v4774
      %4794 = vmatmul.f32.gmra.mxu0 %v4770
      %v4795 = vpop.f32.mrf.mxu0
      %v4796 = vadd.f32 0.0, %v4795
      %4797 = vmatmul.f32.gmra.mxu0 %v4772
      %v4798 = vpop.f32.mrf.mxu0
      %v4799 = vadd.f32 0.0, %v4798
      %4800 = vdwg.mxu0
      %v4801 = vmul.f32 %v4796, 0.35355338
      %v4802 = vmul.f32 %v4799, 0.35355338
      %v4803 = vsel %vm3100, -1e+09, %v4801
      %v4804 = vsel %vm3101, -1e+09, %v4802
      %v4805 = vsel %vm1461, %v4803, -inf
      %4806 = vmax.xlane.f32.xlu0 %v4805
      %v4807 = vpop.xlane.xlu0 %4806
      %v4808 = vsel %vm1461, %v4804, -inf
      %4809 = vmax.xlane.f32.xlu0 %v4808
      %v4810 = vpop.xlane.xlu0 %4809
      %v4811 = vsub.f32 %v4803, %v4807
      %v4812 = vsub.f32 %v4804, %v4810
      %v4813 = vmul.f32 %v4811, 1.442695
      %v4814 = vpow.pop %v4813
      %v4815 = vmul.f32 %v4812, 1.442695
      %v4816 = vpow.pop %v4815
      %v4817 = vsel %vm1461, %v4814, 0.0
      %4818 = vadd.xlane.f32.xlu0 %v4817
      %v4819 = vpop.xlane.xlu0 %4818
      %v4820 = vsel %vm1461, %v4816, 0.0
      %4821 = vadd.xlane.f32.xlu0 %v4820
      %v4822 = vpop.xlane.xlu0 %4821
      %v4823 = vrcp.pop %v4819
      %v4824 = vrcp.pop %v4822
      %v4825 = vmul.f32 %v4814, %v4823
      %v4826 = vmul.f32 %v4816, %v4824
      %4827 = vrot.lane.b32.xlu0 %v4459, 40
      %v4828 = vpop.permute.xlu0 %4827
      %4829 = vrot.lane.b32.xlu0 %v4462, 40
      %v4830 = vpop.permute.xlu0 %4829
      %v4834 = vsel %vm1461, %v4825, 0
      %v4837 = vsel %vm1461, %v4826, 0
      %4839 = vmatpush.msra.mxu0 0.0
      %4840 = vmatpush.msra.mxu0 0.0
      %4841 = vmatpush.msra.mxu0 0.0
      %4842 = vmatpush.msra.mxu0 0.0
      %4843 = vmatpush.msra.mxu0 0.0
      %4844 = vmatpush.msra.mxu0 0.0
      %4845 = vmatpush.msra.mxu0 0.0
      %4846 = vmatpush.msra.mxu0 0.0
      %4847 = vmatpush.msra.mxu0 0.0
      %4848 = vmatpush.msra.mxu0 0.0
      %4849 = vmatpush.msra.mxu0 0.0
      %4850 = vmatpush.msra.mxu0 0.0
      %4851 = vmatpush.msra.mxu0 0.0
      %4852 = vmatpush.msra.mxu0 0.0
      %4853 = vmatpush.msra.mxu0 %v4830
      %4854 = vmatpush.msra.mxu0 %v4828
      %4855 = vmatmul.f32.gmra.mxu0 %v4834
      %v4856 = vpop.f32.mrf.mxu0
      %v4857 = vadd.f32 0.0, %v4856
      %4858 = vmatmul.f32.gmra.mxu0 %v4837
      %v4859 = vpop.f32.mrf.mxu0
      %v4860 = vadd.f32 0.0, %v4859
      %4861 = vdwg.mxu0
      %4864 = vrot.lane.b32.xlu0 %v4657, 8
      %v4865 = vpop.permute.xlu0 %4864
      %4866 = vrot.lane.b32.xlu0 %v4660, 8
      %v4867 = vpop.permute.xlu0 %4866
      %4872 = vrot.lane.b32.xlu0 %v4757, 16
      %v4873 = vpop.permute.xlu0 %4872
      %4874 = vrot.lane.b32.xlu0 %v4760, 16
      %v4875 = vpop.permute.xlu0 %4874
      %4880 = vrot.lane.b32.xlu0 %v4857, 24
      %v4881 = vpop.permute.xlu0 %4880
      %4882 = vrot.lane.b32.xlu0 %v4860, 24
      %v4883 = vpop.permute.xlu0 %4882
      %v4886 = vsel %vm1424, %v4557, %v4865
      %v4887 = vsel %vm1424, %v4560, %v4867
      %v4888 = vsel %vm1461, %v4886, %v4873
      %v4889 = vsel %vm1461, %v4887, %v4875
      %v4890 = vsel %vm1847, %v4888, %v4881
      %v4891 = vsel %vm1847, %v4889, %v4883
      %v4893 = vperm.slane %v4431, 0
      %v4896 = vsel %vm1273, %v4890, 0
      %v4899 = vsel %vm1273, %v4891, 0
      %4901 = vmatpush.msra.mxu0 0.0
      %4902 = vmatpush.msra.mxu0 0.0
      %4903 = vmatpush.msra.mxu0 0.0
      %4904 = vmatpush.msra.mxu0 0.0
      %4905 = vmatpush.msra.mxu0 0.0
      %4906 = vmatpush.msra.mxu0 0.0
      %4907 = vmatpush.msra.mxu0 0.0
      %4908 = vmatpush.msra.mxu0 0.0
      %4909 = vmatpush.msra.mxu0 0.0
      %4910 = vmatpush.msra.mxu0 0.0
      %4911 = vmatpush.msra.mxu0 0.0
      %4912 = vmatpush.msra.mxu0 0.0
      %4913 = vmatpush.msra.mxu0 %v4429
      %4914 = vmatpush.msra.mxu0 %v4428
      %4915 = vmatpush.msra.mxu0 %v4427
      %4916 = vmatpush.msra.mxu0 %v4426
      %4917 = vmatmul.f32.gmra.mxu0 %v4896
      %v4918 = vpop.f32.mrf.mxu0
      %v4919 = vadd.f32 %v4893, %v4918
      %4920 = vmatmul.f32.gmra.mxu0 %v4899
      %v4921 = vpop.f32.mrf.mxu0
      %v4922 = vadd.f32 %v4893, %v4921
      %4923 = vdwg.mxu0
      %v4924 = vadd.f32 %v4324, %v4919
      %v4925 = vadd.f32 %v4325, %v4922
      %s4926 = scalar_lea.vmem %s69, 1
      %v4927 = vld [vmem:[%s4926] sm:$0x1]
      %s4928 = scalar_lea.vmem %s71, 1
      %v4929 = vld [vmem:[%s4928] sm:$0x1]
      %v4930 = vsel %vm1273, %v4924, 0.0
      %4931 = vadd.xlane.f32.xlu0 %v4930
      %v4932 = vpop.xlane.xlu0 %4931
      %v4933 = vsel %vm1273, %v4925, 0.0
      %4934 = vadd.xlane.f32.xlu0 %v4933
      %v4935 = vpop.xlane.xlu0 %4934
      %v4936 = vmul.f32 %v4932, %v1286
      %v4937 = vmul.f32 %v4935, %v1286
      %v4938 = vsub.f32 %v4924, %v4936
      %v4939 = vsub.f32 %v4925, %v4937
      %v4940 = vmul.f32 %v4938, %v4938
      %v4941 = vmul.f32 %v4939, %v4939
      %v4942 = vsel %vm1273, %v4940, 0.0
      %4943 = vadd.xlane.f32.xlu0 %v4942
      %v4944 = vpop.xlane.xlu0 %4943
      %v4945 = vsel %vm1273, %v4941, 0.0
      %4946 = vadd.xlane.f32.xlu0 %v4945
      %v4947 = vpop.xlane.xlu0 %4946
      %v4948 = vmul.f32 %v4944, %v1305
      %v4949 = vmul.f32 %v4947, %v1305
      %v4950 = vrsqrt.pop %v4948
      %v4951 = vmul.f32 %v4950, %v4948
      %v4952 = vmul.f32 %v4951, %v4950
      %v4953 = vmul.f32 0.5, %v4952
      %v4954 = vsub.f32 1.5, %v4953
      %v4955 = vmul.f32 %v4950, %v4954
      %v4956 = vmul.f32 %v4948, %v4955
      %vm4957 = vcmp.eq.f32.partialorder %v4948, inf
      %v4958 = vsel %vm4957, %v4948, %v4956
      %vm4959 = vcmp.eq.f32.partialorder %v4948, 0.0
      %v4960 = vand.u32 %v4948, 2147483648
      %v4961 = vsel %vm4959, %v4960, %v4958
      %v4962 = vrsqrt.pop %v4949
      %v4963 = vmul.f32 %v4962, %v4949
      %v4964 = vmul.f32 %v4963, %v4962
      %v4965 = vmul.f32 0.5, %v4964
      %v4966 = vsub.f32 1.5, %v4965
      %v4967 = vmul.f32 %v4962, %v4966
      %v4968 = vmul.f32 %v4949, %v4967
      %vm4969 = vcmp.eq.f32.partialorder %v4949, inf
      %v4970 = vsel %vm4969, %v4949, %v4968
      %vm4971 = vcmp.eq.f32.partialorder %v4949, 0.0
      %v4972 = vand.u32 %v4949, 2147483648
      %v4973 = vsel %vm4971, %v4972, %v4970
      %v4974 = vadd.f32 %v4961, 1e-06
      %v4975 = vadd.f32 %v4973, 1e-06
      %v4976 = vrcp.pop %v4974
      %v4977 = vmul.f32 %v4974, %v4976
      %v4978 = vsub.f32 1.0, %v4977
      %v4979 = vmul.f32 %v4976, %v4978
      %v4980 = vadd.f32 %v4976, %v4979
      %vm4981 = vweird.f32 %v4974
      %vm4982 = vweird.f32 %v4976
      %vm4983 = vmor %vm4981, %vm4982
      %v4984 = vsel %vm4983, %v4976, %v4980
      %v4985 = vand.u32 2147483647, %v4974
      %vm4986 = vcmp.eq.f32.partialorder %v4985, 8.507059e+37
      %v4987 = vand.u32 %v4974, 2147483648
      %v4988 = vor.u32 1.1754944e-38, %v4987
      %v4989 = vsel %vm4986, %v4988, %v4984
      %v4990 = vmul.f32 1.0, %v4989
      %v4991 = vrcp.pop %v4975
      %v4992 = vmul.f32 %v4975, %v4991
      %v4993 = vsub.f32 1.0, %v4992
      %v4994 = vmul.f32 %v4991, %v4993
      %v4995 = vadd.f32 %v4991, %v4994
      %vm4996 = vweird.f32 %v4975
      %vm4997 = vweird.f32 %v4991
      %vm4998 = vmor %vm4996, %vm4997
      %v4999 = vsel %vm4998, %v4991, %v4995
      %v5000 = vand.u32 2147483647, %v4975
      %vm5001 = vcmp.eq.f32.partialorder %v5000, 8.507059e+37
      %v5002 = vand.u32 %v4975, 2147483648
      %v5003 = vor.u32 1.1754944e-38, %v5002
      %v5004 = vsel %vm5001, %v5003, %v4999
      %v5005 = vmul.f32 1.0, %v5004
      %v5007 = vperm.slane %v4927, 0
      %v5009 = vmul.f32 %v5007, %v4990
      %v5010 = vmul.f32 %v5007, %v5005
      %v5011 = vmul.f32 %v4938, %v5009
      %v5012 = vmul.f32 %v4939, %v5010
      %v5014 = vperm.slane %v4929, 0
      %v5016 = vadd.f32 %v5011, %v5014
      %v5017 = vadd.f32 %v5012, %v5014
      %s5018 = scalar_lea.vmem %s45, 32
      %v5019 = vld [vmem:[%s5018] sm:$0xff]
      %v5020 = vld [vmem:[%s5018 + $0x8] sm:$0xff]
      %v5021 = vld [vmem:[%s5018 + $0x10] sm:$0xff]
      %v5022 = vld [vmem:[%s5018 + $0x18] sm:$0xff]
      %s5023 = scalar_lea.vmem %s47, 1
      %v5024 = vld [vmem:[%s5023] sm:$0x1]
      %s5025 = scalar_lea.vmem %s49, 32
      %v5026 = vld [vmem:[%s5025] sm:$0xff]
      %v5027 = vld [vmem:[%s5025 + $0x8] sm:$0xff]
      %v5028 = vld [vmem:[%s5025 + $0x10] sm:$0xff]
      %v5029 = vld [vmem:[%s5025 + $0x18] sm:$0xff]
      %s5030 = scalar_lea.vmem %s51, 1
      %v5031 = vld [vmem:[%s5030] sm:$0x1]
      %s5032 = scalar_lea.vmem %s53, 32
      %v5033 = vld [vmem:[%s5032] sm:$0xff]
      %v5034 = vld [vmem:[%s5032 + $0x8] sm:$0xff]
      %v5035 = vld [vmem:[%s5032 + $0x10] sm:$0xff]
      %v5036 = vld [vmem:[%s5032 + $0x18] sm:$0xff]
      %s5037 = scalar_lea.vmem %s55, 1
      %v5038 = vld [vmem:[%s5037] sm:$0x1]
      %v5040 = vperm.slane %v5024, 0
      %v5043 = vsel %vm1273, %v5016, 0
      %v5046 = vsel %vm1273, %v5017, 0
      %5048 = vmatpush.msra.mxu0 0.0
      %5049 = vmatpush.msra.mxu0 0.0
      %5050 = vmatpush.msra.mxu0 0.0
      %5051 = vmatpush.msra.mxu0 0.0
      %5052 = vmatpush.msra.mxu0 0.0
      %5053 = vmatpush.msra.mxu0 0.0
      %5054 = vmatpush.msra.mxu0 0.0
      %5055 = vmatpush.msra.mxu0 0.0
      %5056 = vmatpush.msra.mxu0 0.0
      %5057 = vmatpush.msra.mxu0 0.0
      %5058 = vmatpush.msra.mxu0 0.0
      %5059 = vmatpush.msra.mxu0 0.0
      %5060 = vmatpush.msra.mxu0 %v5022
      %5061 = vmatpush.msra.mxu0 %v5021
      %5062 = vmatpush.msra.mxu0 %v5020
      %5063 = vmatpush.msra.mxu0 %v5019
      %5064 = vmatmul.f32.gmra.mxu0 %v5043
      %v5065 = vpop.f32.mrf.mxu0
      %v5066 = vadd.f32 %v5040, %v5065
      %5067 = vmatmul.f32.gmra.mxu0 %v5046
      %v5068 = vpop.f32.mrf.mxu0
      %v5069 = vadd.f32 %v5040, %v5068
      %5070 = vdwg.mxu0
      %v5072 = vperm.slane %v5031, 0
      %5074 = vmatpush.msra.mxu0 0.0
      %5075 = vmatpush.msra.mxu0 0.0
      %5076 = vmatpush.msra.mxu0 0.0
      %5077 = vmatpush.msra.mxu0 0.0
      %5078 = vmatpush.msra.mxu0 0.0
      %5079 = vmatpush.msra.mxu0 0.0
      %5080 = vmatpush.msra.mxu0 0.0
      %5081 = vmatpush.msra.mxu0 0.0
      %5082 = vmatpush.msra.mxu0 0.0
      %5083 = vmatpush.msra.mxu0 0.0
      %5084 = vmatpush.msra.mxu0 0.0
      %5085 = vmatpush.msra.mxu0 0.0
      %5086 = vmatpush.msra.mxu0 %v5029
      %5087 = vmatpush.msra.mxu0 %v5028
      %5088 = vmatpush.msra.mxu0 %v5027
      %5089 = vmatpush.msra.mxu0 %v5026
      %5090 = vmatmul.f32.gmra.mxu0 %v3666
      %v5091 = vpop.f32.mrf.mxu0
      %v5092 = vadd.f32 %v5072, %v5091
      %5093 = vmatmul.f32.gmra.mxu0 %v3669
      %v5094 = vpop.f32.mrf.mxu0
      %v5095 = vadd.f32 %v5072, %v5094
      %5096 = vdwg.mxu0
      %v5098 = vsel %vm1424, %v5066, 0
      %v5101 = vsel %vm1424, %v5069, 0
      %v5104 = vsel %vm1424, %v5092, 0
      %v5107 = vsel %vm1424, %v5095, 0
      %5109 = vmatpush.xpose.msra.mxu0 0.0
      %5110 = vmatpush.xpose.msra.mxu0 0.0
      %5111 = vmatpush.xpose.msra.mxu0 0.0
      %5112 = vmatpush.xpose.msra.mxu0 0.0
      %5113 = vmatpush.xpose.msra.mxu0 0.0
      %5114 = vmatpush.xpose.msra.mxu0 0.0
      %5115 = vmatpush.xpose.msra.mxu0 0.0
      %5116 = vmatpush.xpose.msra.mxu0 0.0
      %5117 = vmatpush.xpose.msra.mxu0 0.0
      %5118 = vmatpush.xpose.msra.mxu0 0.0
      %5119 = vmatpush.xpose.msra.mxu0 0.0
      %5120 = vmatpush.xpose.msra.mxu0 0.0
      %5121 = vmatpush.xpose.msra.mxu0 0.0
      %5122 = vmatpush.xpose.msra.mxu0 0.0
      %5123 = vmatpush.xpose.msra.mxu0 %v5107
      %5124 = vmatpush.xpose.msra.mxu0 %v5104
      %5125 = vmatmul.f32.gmra.mxu0 %v5098
      %v5126 = vpop.f32.mrf.mxu0
      %v5127 = vadd.f32 0.0, %v5126
      %5128 = vmatmul.f32.gmra.mxu0 %v5101
      %v5129 = vpop.f32.mrf.mxu0
      %v5130 = vadd.f32 0.0, %v5129
      %5131 = vdwg.mxu0
      %v5132 = vmul.f32 %v5127, 0.35355338
      %v5133 = vmul.f32 %v5130, 0.35355338
      %v5134 = vsel %vm1458, -1e+09, %v5132
      %v5135 = vsel %vm1458, -1e+09, %v5133
      %v5136 = vsel %vm1461, %v5134, -inf
      %5137 = vmax.xlane.f32.xlu0 %v5136
      %v5138 = vpop.xlane.xlu0 %5137
      %v5139 = vsel %vm1461, %v5135, -inf
      %5140 = vmax.xlane.f32.xlu0 %v5139
      %v5141 = vpop.xlane.xlu0 %5140
      %v5142 = vsub.f32 %v5134, %v5138
      %v5143 = vsub.f32 %v5135, %v5141
      %v5144 = vmul.f32 %v5142, 1.442695
      %v5145 = vpow.pop %v5144
      %v5146 = vmul.f32 %v5143, 1.442695
      %v5147 = vpow.pop %v5146
      %v5148 = vsel %vm1461, %v5145, 0.0
      %5149 = vadd.xlane.f32.xlu0 %v5148
      %v5150 = vpop.xlane.xlu0 %5149
      %v5151 = vsel %vm1461, %v5147, 0.0
      %5152 = vadd.xlane.f32.xlu0 %v5151
      %v5153 = vpop.xlane.xlu0 %5152
      %v5154 = vrcp.pop %v5150
      %v5155 = vrcp.pop %v5153
      %v5156 = vmul.f32 %v5145, %v5154
      %v5157 = vmul.f32 %v5147, %v5155
      %5158 = vrot.lane.b32.xlu0 %v5092, 96
      %v5159 = vpop.permute.xlu0 %5158
      %5160 = vrot.lane.b32.xlu0 %v5095, 96
      %v5161 = vpop.permute.xlu0 %5160
      %v5165 = vsel %vm1461, %v5156, 0
      %v5168 = vsel %vm1461, %v5157, 0
      %5170 = vmatpush.msra.mxu0 0.0
      %5171 = vmatpush.msra.mxu0 0.0
      %5172 = vmatpush.msra.mxu0 0.0
      %5173 = vmatpush.msra.mxu0 0.0
      %5174 = vmatpush.msra.mxu0 0.0
      %5175 = vmatpush.msra.mxu0 0.0
      %5176 = vmatpush.msra.mxu0 0.0
      %5177 = vmatpush.msra.mxu0 0.0
      %5178 = vmatpush.msra.mxu0 0.0
      %5179 = vmatpush.msra.mxu0 0.0
      %5180 = vmatpush.msra.mxu0 0.0
      %5181 = vmatpush.msra.mxu0 0.0
      %5182 = vmatpush.msra.mxu0 0.0
      %5183 = vmatpush.msra.mxu0 0.0
      %5184 = vmatpush.msra.mxu0 %v5161
      %5185 = vmatpush.msra.mxu0 %v5159
      %5186 = vmatmul.f32.gmra.mxu0 %v5165
      %v5187 = vpop.f32.mrf.mxu0
      %v5188 = vadd.f32 0.0, %v5187
      %5189 = vmatmul.f32.gmra.mxu0 %v5168
      %v5190 = vpop.f32.mrf.mxu0
      %v5191 = vadd.f32 0.0, %v5190
      %5192 = vdwg.mxu0
      %5193 = vrot.lane.b32.xlu0 %v5066, 120
      %v5194 = vpop.permute.xlu0 %5193
      %5195 = vrot.lane.b32.xlu0 %v5069, 120
      %v5196 = vpop.permute.xlu0 %5195
      %5197 = vrot.lane.b32.xlu0 %v5092, 120
      %v5198 = vpop.permute.xlu0 %5197
      %5199 = vrot.lane.b32.xlu0 %v5095, 120
      %v5200 = vpop.permute.xlu0 %5199
      %v5201 = vsel %vm1424, %v5194, 0
      %v5203 = vsel %vm1424, %v5196, 0
      %v5205 = vsel %vm1424, %v5198, 0
      %v5207 = vsel %vm1424, %v5200, 0
      %5209 = vmatpush.xpose.msra.mxu0 0.0
      %5210 = vmatpush.xpose.msra.mxu0 0.0
      %5211 = vmatpush.xpose.msra.mxu0 0.0
      %5212 = vmatpush.xpose.msra.mxu0 0.0
      %5213 = vmatpush.xpose.msra.mxu0 0.0
      %5214 = vmatpush.xpose.msra.mxu0 0.0
      %5215 = vmatpush.xpose.msra.mxu0 0.0
      %5216 = vmatpush.xpose.msra.mxu0 0.0
      %5217 = vmatpush.xpose.msra.mxu0 0.0
      %5218 = vmatpush.xpose.msra.mxu0 0.0
      %5219 = vmatpush.xpose.msra.mxu0 0.0
      %5220 = vmatpush.xpose.msra.mxu0 0.0
      %5221 = vmatpush.xpose.msra.mxu0 0.0
      %5222 = vmatpush.xpose.msra.mxu0 0.0
      %5223 = vmatpush.xpose.msra.mxu0 %v5207
      %5224 = vmatpush.xpose.msra.mxu0 %v5205
      %5225 = vmatmul.f32.gmra.mxu0 %v5201
      %v5226 = vpop.f32.mrf.mxu0
      %v5227 = vadd.f32 0.0, %v5226
      %5228 = vmatmul.f32.gmra.mxu0 %v5203
      %v5229 = vpop.f32.mrf.mxu0
      %v5230 = vadd.f32 0.0, %v5229
      %5231 = vdwg.mxu0
      %v5232 = vmul.f32 %v5227, 0.35355338
      %v5233 = vmul.f32 %v5230, 0.35355338
      %v5234 = vsel %vm1458, -1e+09, %v5232
      %v5235 = vsel %vm1458, -1e+09, %v5233
      %v5236 = vsel %vm1461, %v5234, -inf
      %5237 = vmax.xlane.f32.xlu0 %v5236
      %v5238 = vpop.xlane.xlu0 %5237
      %v5239 = vsel %vm1461, %v5235, -inf
      %5240 = vmax.xlane.f32.xlu0 %v5239
      %v5241 = vpop.xlane.xlu0 %5240
      %v5242 = vsub.f32 %v5234, %v5238
      %v5243 = vsub.f32 %v5235, %v5241
      %v5244 = vmul.f32 %v5242, 1.442695
      %v5245 = vpow.pop %v5244
      %v5246 = vmul.f32 %v5243, 1.442695
      %v5247 = vpow.pop %v5246
      %v5248 = vsel %vm1461, %v5245, 0.0
      %5249 = vadd.xlane.f32.xlu0 %v5248
      %v5250 = vpop.xlane.xlu0 %5249
      %v5251 = vsel %vm1461, %v5247, 0.0
      %5252 = vadd.xlane.f32.xlu0 %v5251
      %v5253 = vpop.xlane.xlu0 %5252
      %v5254 = vrcp.pop %v5250
      %v5255 = vrcp.pop %v5253
      %v5256 = vmul.f32 %v5245, %v5254
      %v5257 = vmul.f32 %v5247, %v5255
      %5258 = vrot.lane.b32.xlu0 %v5092, 88
      %v5259 = vpop.permute.xlu0 %5258
      %5260 = vrot.lane.b32.xlu0 %v5095, 88
      %v5261 = vpop.permute.xlu0 %5260
      %v5265 = vsel %vm1461, %v5256, 0
      %v5268 = vsel %vm1461, %v5257, 0
      %5270 = vmatpush.msra.mxu0 0.0
      %5271 = vmatpush.msra.mxu0 0.0
      %5272 = vmatpush.msra.mxu0 0.0
      %5273 = vmatpush.msra.mxu0 0.0
      %5274 = vmatpush.msra.mxu0 0.0
      %5275 = vmatpush.msra.mxu0 0.0
      %5276 = vmatpush.msra.mxu0 0.0
      %5277 = vmatpush.msra.mxu0 0.0
      %5278 = vmatpush.msra.mxu0 0.0
      %5279 = vmatpush.msra.mxu0 0.0
      %5280 = vmatpush.msra.mxu0 0.0
      %5281 = vmatpush.msra.mxu0 0.0
      %5282 = vmatpush.msra.mxu0 0.0
      %5283 = vmatpush.msra.mxu0 0.0
      %5284 = vmatpush.msra.mxu0 %v5261
      %5285 = vmatpush.msra.mxu0 %v5259
      %5286 = vmatmul.f32.gmra.mxu0 %v5265
      %v5287 = vpop.f32.mrf.mxu0
      %v5288 = vadd.f32 0.0, %v5287
      %5289 = vmatmul.f32.gmra.mxu0 %v5268
      %v5290 = vpop.f32.mrf.mxu0
      %v5291 = vadd.f32 0.0, %v5290
      %5292 = vdwg.mxu0
      %5293 = vrot.lane.b32.xlu0 %v5066, 112
      %v5294 = vpop.permute.xlu0 %5293
      %5295 = vrot.lane.b32.xlu0 %v5069, 112
      %v5296 = vpop.permute.xlu0 %5295
      %5297 = vrot.lane.b32.xlu0 %v5092, 112
      %v5298 = vpop.permute.xlu0 %5297
      %5299 = vrot.lane.b32.xlu0 %v5095, 112
      %v5300 = vpop.permute.xlu0 %5299
      %v5301 = vsel %vm1424, %v5294, 0
      %v5303 = vsel %vm1424, %v5296, 0
      %v5305 = vsel %vm1424, %v5298, 0
      %v5307 = vsel %vm1424, %v5300, 0
      %5309 = vmatpush.xpose.msra.mxu0 0.0
      %5310 = vmatpush.xpose.msra.mxu0 0.0
      %5311 = vmatpush.xpose.msra.mxu0 0.0
      %5312 = vmatpush.xpose.msra.mxu0 0.0
      %5313 = vmatpush.xpose.msra.mxu0 0.0
      %5314 = vmatpush.xpose.msra.mxu0 0.0
      %5315 = vmatpush.xpose.msra.mxu0 0.0
      %5316 = vmatpush.xpose.msra.mxu0 0.0
      %5317 = vmatpush.xpose.msra.mxu0 0.0
      %5318 = vmatpush.xpose.msra.mxu0 0.0
      %5319 = vmatpush.xpose.msra.mxu0 0.0
      %5320 = vmatpush.xpose.msra.mxu0 0.0
      %5321 = vmatpush.xpose.msra.mxu0 0.0
      %5322 = vmatpush.xpose.msra.mxu0 0.0
      %5323 = vmatpush.xpose.msra.mxu0 %v5307
      %5324 = vmatpush.xpose.msra.mxu0 %v5305
      %5325 = vmatmul.f32.gmra.mxu0 %v5301
      %v5326 = vpop.f32.mrf.mxu0
      %v5327 = vadd.f32 0.0, %v5326
      %5328 = vmatmul.f32.gmra.mxu0 %v5303
      %v5329 = vpop.f32.mrf.mxu0
      %v5330 = vadd.f32 0.0, %v5329
      %5331 = vdwg.mxu0
      %v5332 = vmul.f32 %v5327, 0.35355338
      %v5333 = vmul.f32 %v5330, 0.35355338
      %v5334 = vsel %vm1458, -1e+09, %v5332
      %v5335 = vsel %vm1458, -1e+09, %v5333
      %v5336 = vsel %vm1461, %v5334, -inf
      %5337 = vmax.xlane.f32.xlu0 %v5336
      %v5338 = vpop.xlane.xlu0 %5337
      %v5339 = vsel %vm1461, %v5335, -inf
      %5340 = vmax.xlane.f32.xlu0 %v5339
      %v5341 = vpop.xlane.xlu0 %5340
      %v5342 = vsub.f32 %v5334, %v5338
      %v5343 = vsub.f32 %v5335, %v5341
      %v5344 = vmul.f32 %v5342, 1.442695
      %v5345 = vpow.pop %v5344
      %v5346 = vmul.f32 %v5343, 1.442695
      %v5347 = vpow.pop %v5346
      %v5348 = vsel %vm1461, %v5345, 0.0
      %5349 = vadd.xlane.f32.xlu0 %v5348
      %v5350 = vpop.xlane.xlu0 %5349
      %v5351 = vsel %vm1461, %v5347, 0.0
      %5352 = vadd.xlane.f32.xlu0 %v5351
      %v5353 = vpop.xlane.xlu0 %5352
      %v5354 = vrcp.pop %v5350
      %v5355 = vrcp.pop %v5353
      %v5356 = vmul.f32 %v5345, %v5354
      %v5357 = vmul.f32 %v5347, %v5355
      %5358 = vrot.lane.b32.xlu0 %v5092, 80
      %v5359 = vpop.permute.xlu0 %5358
      %5360 = vrot.lane.b32.xlu0 %v5095, 80
      %v5361 = vpop.permute.xlu0 %5360
      %v5365 = vsel %vm1461, %v5356, 0
      %v5368 = vsel %vm1461, %v5357, 0
      %5370 = vmatpush.msra.mxu0 0.0
      %5371 = vmatpush.msra.mxu0 0.0
      %5372 = vmatpush.msra.mxu0 0.0
      %5373 = vmatpush.msra.mxu0 0.0
      %5374 = vmatpush.msra.mxu0 0.0
      %5375 = vmatpush.msra.mxu0 0.0
      %5376 = vmatpush.msra.mxu0 0.0
      %5377 = vmatpush.msra.mxu0 0.0
      %5378 = vmatpush.msra.mxu0 0.0
      %5379 = vmatpush.msra.mxu0 0.0
      %5380 = vmatpush.msra.mxu0 0.0
      %5381 = vmatpush.msra.mxu0 0.0
      %5382 = vmatpush.msra.mxu0 0.0
      %5383 = vmatpush.msra.mxu0 0.0
      %5384 = vmatpush.msra.mxu0 %v5361
      %5385 = vmatpush.msra.mxu0 %v5359
      %5386 = vmatmul.f32.gmra.mxu0 %v5365
      %v5387 = vpop.f32.mrf.mxu0
      %v5388 = vadd.f32 0.0, %v5387
      %5389 = vmatmul.f32.gmra.mxu0 %v5368
      %v5390 = vpop.f32.mrf.mxu0
      %v5391 = vadd.f32 0.0, %v5390
      %5392 = vdwg.mxu0
      %5393 = vrot.lane.b32.xlu0 %v5066, 104
      %v5394 = vpop.permute.xlu0 %5393
      %5395 = vrot.lane.b32.xlu0 %v5069, 104
      %v5396 = vpop.permute.xlu0 %5395
      %5397 = vrot.lane.b32.xlu0 %v5092, 104
      %v5398 = vpop.permute.xlu0 %5397
      %5399 = vrot.lane.b32.xlu0 %v5095, 104
      %v5400 = vpop.permute.xlu0 %5399
      %v5401 = vsel %vm1424, %v5394, 0
      %v5403 = vsel %vm1424, %v5396, 0
      %v5405 = vsel %vm1424, %v5398, 0
      %v5407 = vsel %vm1424, %v5400, 0
      %5409 = vmatpush.xpose.msra.mxu0 0.0
      %5410 = vmatpush.xpose.msra.mxu0 0.0
      %5411 = vmatpush.xpose.msra.mxu0 0.0
      %5412 = vmatpush.xpose.msra.mxu0 0.0
      %5413 = vmatpush.xpose.msra.mxu0 0.0
      %5414 = vmatpush.xpose.msra.mxu0 0.0
      %5415 = vmatpush.xpose.msra.mxu0 0.0
      %5416 = vmatpush.xpose.msra.mxu0 0.0
      %5417 = vmatpush.xpose.msra.mxu0 0.0
      %5418 = vmatpush.xpose.msra.mxu0 0.0
      %5419 = vmatpush.xpose.msra.mxu0 0.0
      %5420 = vmatpush.xpose.msra.mxu0 0.0
      %5421 = vmatpush.xpose.msra.mxu0 0.0
      %5422 = vmatpush.xpose.msra.mxu0 0.0
      %5423 = vmatpush.xpose.msra.mxu0 %v5407
      %5424 = vmatpush.xpose.msra.mxu0 %v5405
      %5425 = vmatmul.f32.gmra.mxu0 %v5401
      %v5426 = vpop.f32.mrf.mxu0
      %v5427 = vadd.f32 0.0, %v5426
      %5428 = vmatmul.f32.gmra.mxu0 %v5403
      %v5429 = vpop.f32.mrf.mxu0
      %v5430 = vadd.f32 0.0, %v5429
      %5431 = vdwg.mxu0
      %v5432 = vmul.f32 %v5427, 0.35355338
      %v5433 = vmul.f32 %v5430, 0.35355338
      %v5434 = vsel %vm1458, -1e+09, %v5432
      %v5435 = vsel %vm1458, -1e+09, %v5433
      %v5436 = vsel %vm1461, %v5434, -inf
      %5437 = vmax.xlane.f32.xlu0 %v5436
      %v5438 = vpop.xlane.xlu0 %5437
      %v5439 = vsel %vm1461, %v5435, -inf
      %5440 = vmax.xlane.f32.xlu0 %v5439
      %v5441 = vpop.xlane.xlu0 %5440
      %v5442 = vsub.f32 %v5434, %v5438
      %v5443 = vsub.f32 %v5435, %v5441
      %v5444 = vmul.f32 %v5442, 1.442695
      %v5445 = vpow.pop %v5444
      %v5446 = vmul.f32 %v5443, 1.442695
      %v5447 = vpow.pop %v5446
      %v5448 = vsel %vm1461, %v5445, 0.0
      %5449 = vadd.xlane.f32.xlu0 %v5448
      %v5450 = vpop.xlane.xlu0 %5449
      %v5451 = vsel %vm1461, %v5447, 0.0
      %5452 = vadd.xlane.f32.xlu0 %v5451
      %v5453 = vpop.xlane.xlu0 %5452
      %v5454 = vrcp.pop %v5450
      %v5455 = vrcp.pop %v5453
      %v5456 = vmul.f32 %v5445, %v5454
      %v5457 = vmul.f32 %v5447, %v5455
      %5458 = vrot.lane.b32.xlu0 %v5092, 72
      %v5459 = vpop.permute.xlu0 %5458
      %5460 = vrot.lane.b32.xlu0 %v5095, 72
      %v5461 = vpop.permute.xlu0 %5460
      %v5465 = vsel %vm1461, %v5456, 0
      %v5468 = vsel %vm1461, %v5457, 0
      %5470 = vmatpush.msra.mxu0 0.0
      %5471 = vmatpush.msra.mxu0 0.0
      %5472 = vmatpush.msra.mxu0 0.0
      %5473 = vmatpush.msra.mxu0 0.0
      %5474 = vmatpush.msra.mxu0 0.0
      %5475 = vmatpush.msra.mxu0 0.0
      %5476 = vmatpush.msra.mxu0 0.0
      %5477 = vmatpush.msra.mxu0 0.0
      %5478 = vmatpush.msra.mxu0 0.0
      %5479 = vmatpush.msra.mxu0 0.0
      %5480 = vmatpush.msra.mxu0 0.0
      %5481 = vmatpush.msra.mxu0 0.0
      %5482 = vmatpush.msra.mxu0 0.0
      %5483 = vmatpush.msra.mxu0 0.0
      %5484 = vmatpush.msra.mxu0 %v5461
      %5485 = vmatpush.msra.mxu0 %v5459
      %5486 = vmatmul.f32.gmra.mxu0 %v5465
      %v5487 = vpop.f32.mrf.mxu0
      %v5488 = vadd.f32 0.0, %v5487
      %5489 = vmatmul.f32.gmra.mxu0 %v5468
      %v5490 = vpop.f32.mrf.mxu0
      %v5491 = vadd.f32 0.0, %v5490
      %5492 = vdwg.mxu0
      %5495 = vrot.lane.b32.xlu0 %v5288, 8
      %v5496 = vpop.permute.xlu0 %5495
      %5497 = vrot.lane.b32.xlu0 %v5291, 8
      %v5498 = vpop.permute.xlu0 %5497
      %5503 = vrot.lane.b32.xlu0 %v5388, 16
      %v5504 = vpop.permute.xlu0 %5503
      %5505 = vrot.lane.b32.xlu0 %v5391, 16
      %v5506 = vpop.permute.xlu0 %5505
      %5511 = vrot.lane.b32.xlu0 %v5488, 24
      %v5512 = vpop.permute.xlu0 %5511
      %5513 = vrot.lane.b32.xlu0 %v5491, 24
      %v5514 = vpop.permute.xlu0 %5513
      %v5517 = vsel %vm1424, %v5188, %v5496
      %v5518 = vsel %vm1424, %v5191, %v5498
      %v5519 = vsel %vm1461, %v5517, %v5504
      %v5520 = vsel %vm1461, %v5518, %v5506
      %v5521 = vsel %vm1847, %v5519, %v5512
      %v5522 = vsel %vm1847, %v5520, %v5514
      %v5524 = vperm.slane %v5038, 0
      %v5527 = vsel %vm1273, %v5521, 0
      %v5530 = vsel %vm1273, %v5522, 0
      %5532 = vmatpush.msra.mxu0 0.0
      %5533 = vmatpush.msra.mxu0 0.0
      %5534 = vmatpush.msra.mxu0 0.0
      %5535 = vmatpush.msra.mxu0 0.0
      %5536 = vmatpush.msra.mxu0 0.0
      %5537 = vmatpush.msra.mxu0 0.0
      %5538 = vmatpush.msra.mxu0 0.0
      %5539 = vmatpush.msra.mxu0 0.0
      %5540 = vmatpush.msra.mxu0 0.0
      %5541 = vmatpush.msra.mxu0 0.0
      %5542 = vmatpush.msra.mxu0 0.0
      %5543 = vmatpush.msra.mxu0 0.0
      %5544 = vmatpush.msra.mxu0 %v5036
      %5545 = vmatpush.msra.mxu0 %v5035
      %5546 = vmatpush.msra.mxu0 %v5034
      %5547 = vmatpush.msra.mxu0 %v5033
      %5548 = vmatmul.f32.gmra.mxu0 %v5527
      %v5549 = vpop.f32.mrf.mxu0
      %v5550 = vadd.f32 %v5524, %v5549
      %5551 = vmatmul.f32.gmra.mxu0 %v5530
      %v5552 = vpop.f32.mrf.mxu0
      %v5553 = vadd.f32 %v5524, %v5552
      %5554 = vdwg.mxu0
      %v5555 = vadd.f32 %v4924, %v5550
      %v5556 = vadd.f32 %v4925, %v5553
      %s5557 = scalar_lea.vmem %s73, 1
      %v5558 = vld [vmem:[%s5557] sm:$0x1]
      %s5559 = scalar_lea.vmem %s75, 1
      %v5560 = vld [vmem:[%s5559] sm:$0x1]
      %v5561 = vsel %vm1273, %v5555, 0.0
      %5562 = vadd.xlane.f32.xlu0 %v5561
      %v5563 = vpop.xlane.xlu0 %5562
      %v5564 = vsel %vm1273, %v5556, 0.0
      %5565 = vadd.xlane.f32.xlu0 %v5564
      %v5566 = vpop.xlane.xlu0 %5565
      %v5567 = vmul.f32 %v5563, %v1286
      %v5568 = vmul.f32 %v5566, %v1286
      %v5569 = vsub.f32 %v5555, %v5567
      %v5570 = vsub.f32 %v5556, %v5568
      %v5571 = vmul.f32 %v5569, %v5569
      %v5572 = vmul.f32 %v5570, %v5570
      %v5573 = vsel %vm1273, %v5571, 0.0
      %5574 = vadd.xlane.f32.xlu0 %v5573
      %v5575 = vpop.xlane.xlu0 %5574
      %v5576 = vsel %vm1273, %v5572, 0.0
      %5577 = vadd.xlane.f32.xlu0 %v5576
      %v5578 = vpop.xlane.xlu0 %5577
      %v5579 = vmul.f32 %v5575, %v1305
      %v5580 = vmul.f32 %v5578, %v1305
      %v5581 = vrsqrt.pop %v5579
      %v5582 = vmul.f32 %v5581, %v5579
      %v5583 = vmul.f32 %v5582, %v5581
      %v5584 = vmul.f32 0.5, %v5583
      %v5585 = vsub.f32 1.5, %v5584
      %v5586 = vmul.f32 %v5581, %v5585
      %v5587 = vmul.f32 %v5579, %v5586
      %vm5588 = vcmp.eq.f32.partialorder %v5579, inf
      %v5589 = vsel %vm5588, %v5579, %v5587
      %vm5590 = vcmp.eq.f32.partialorder %v5579, 0.0
      %v5591 = vand.u32 %v5579, 2147483648
      %v5592 = vsel %vm5590, %v5591, %v5589
      %v5593 = vrsqrt.pop %v5580
      %v5594 = vmul.f32 %v5593, %v5580
      %v5595 = vmul.f32 %v5594, %v5593
      %v5596 = vmul.f32 0.5, %v5595
      %v5597 = vsub.f32 1.5, %v5596
      %v5598 = vmul.f32 %v5593, %v5597
      %v5599 = vmul.f32 %v5580, %v5598
      %vm5600 = vcmp.eq.f32.partialorder %v5580, inf
      %v5601 = vsel %vm5600, %v5580, %v5599
      %vm5602 = vcmp.eq.f32.partialorder %v5580, 0.0
      %v5603 = vand.u32 %v5580, 2147483648
      %v5604 = vsel %vm5602, %v5603, %v5601
      %v5605 = vadd.f32 %v5592, 1e-06
      %v5606 = vadd.f32 %v5604, 1e-06
      %v5607 = vrcp.pop %v5605
      %v5608 = vmul.f32 %v5605, %v5607
      %v5609 = vsub.f32 1.0, %v5608
      %v5610 = vmul.f32 %v5607, %v5609
      %v5611 = vadd.f32 %v5607, %v5610
      %vm5612 = vweird.f32 %v5605
      %vm5613 = vweird.f32 %v5607
      %vm5614 = vmor %vm5612, %vm5613
      %v5615 = vsel %vm5614, %v5607, %v5611
      %v5616 = vand.u32 2147483647, %v5605
      %vm5617 = vcmp.eq.f32.partialorder %v5616, 8.507059e+37
      %v5618 = vand.u32 %v5605, 2147483648
      %v5619 = vor.u32 1.1754944e-38, %v5618
      %v5620 = vsel %vm5617, %v5619, %v5615
      %v5621 = vmul.f32 1.0, %v5620
      %v5622 = vrcp.pop %v5606
      %v5623 = vmul.f32 %v5606, %v5622
      %v5624 = vsub.f32 1.0, %v5623
      %v5625 = vmul.f32 %v5622, %v5624
      %v5626 = vadd.f32 %v5622, %v5625
      %vm5627 = vweird.f32 %v5606
      %vm5628 = vweird.f32 %v5622
      %vm5629 = vmor %vm5627, %vm5628
      %v5630 = vsel %vm5629, %v5622, %v5626
      %v5631 = vand.u32 2147483647, %v5606
      %vm5632 = vcmp.eq.f32.partialorder %v5631, 8.507059e+37
      %v5633 = vand.u32 %v5606, 2147483648
      %v5634 = vor.u32 1.1754944e-38, %v5633
      %v5635 = vsel %vm5632, %v5634, %v5630
      %v5636 = vmul.f32 1.0, %v5635
      %v5638 = vperm.slane %v5558, 0
      %v5640 = vmul.f32 %v5638, %v5621
      %v5641 = vmul.f32 %v5638, %v5636
      %v5642 = vmul.f32 %v5569, %v5640
      %v5643 = vmul.f32 %v5570, %v5641
      %v5645 = vperm.slane %v5560, 0
      %v5647 = vadd.f32 %v5642, %v5645
      %v5648 = vadd.f32 %v5643, %v5645
      %s5649 = scalar_lea.vmem %s57, 32
      %v5650 = vld [vmem:[%s5649] sm:$0xff]
      %v5651 = vld [vmem:[%s5649 + $0x8] sm:$0xff]
      %v5652 = vld [vmem:[%s5649 + $0x10] sm:$0xff]
      %v5653 = vld [vmem:[%s5649 + $0x18] sm:$0xff]
      %s5654 = scalar_lea.vmem %s59, 1
      %v5655 = vld [vmem:[%s5654] sm:$0x1]
      %s5656 = scalar_lea.vmem %s61, 64
      %v5657 = vld [vmem:[%s5656] sm:$0xff]
      %v5658 = vld [vmem:[%s5656 + $0x8] sm:$0xff]
      %v5659 = vld [vmem:[%s5656 + $0x10] sm:$0xff]
      %v5660 = vld [vmem:[%s5656 + $0x18] sm:$0xff]
      %v5661 = vld [vmem:[%s5656 + $0x20] sm:$0xff]
      %v5662 = vld [vmem:[%s5656 + $0x28] sm:$0xff]
      %v5663 = vld [vmem:[%s5656 + $0x30] sm:$0xff]
      %v5664 = vld [vmem:[%s5656 + $0x38] sm:$0xff]
      %s5665 = scalar_lea.vmem %s63, 1
      %v5666 = vld [vmem:[%s5665] sm:$0x1]
      %v5668 = vperm.slane %v5655, 0
      %v5671 = vsel %vm1273, %v5647, 0
      %v5674 = vsel %vm1273, %v5648, 0
      %5676 = vmatpush.msra.mxu0 0.0
      %5677 = vmatpush.msra.mxu0 0.0
      %5678 = vmatpush.msra.mxu0 0.0
      %5679 = vmatpush.msra.mxu0 0.0
      %5680 = vmatpush.msra.mxu0 0.0
      %5681 = vmatpush.msra.mxu0 0.0
      %5682 = vmatpush.msra.mxu0 0.0
      %5683 = vmatpush.msra.mxu0 0.0
      %5684 = vmatpush.msra.mxu0 0.0
      %5685 = vmatpush.msra.mxu0 0.0
      %5686 = vmatpush.msra.mxu0 0.0
      %5687 = vmatpush.msra.mxu0 0.0
      %5688 = vmatpush.msra.mxu0 %v5653
      %5689 = vmatpush.msra.mxu0 %v5652
      %5690 = vmatpush.msra.mxu0 %v5651
      %5691 = vmatpush.msra.mxu0 %v5650
      %5692 = vmatmul.f32.gmra.mxu0 %v5671
      %v5693 = vpop.f32.mrf.mxu0
      %v5694 = vadd.f32 %v5668, %v5693
      %5695 = vmatmul.f32.gmra.mxu0 %v5674
      %v5696 = vpop.f32.mrf.mxu0
      %v5697 = vadd.f32 %v5668, %v5696
      %5698 = vdwg.mxu0
      %v5699 = vmax.f32 %v5694, 0.0
      %v5700 = vmax.f32 %v5697, 0.0
      %v5702 = vperm.slane %v5666, 0
      %v5705 = vsel %vm2025, %v5699, 0
      %v5708 = vsel %vm2025, %v5700, 0
      %5710 = vmatpush.msra.mxu0 0.0
      %5711 = vmatpush.msra.mxu0 0.0
      %5712 = vmatpush.msra.mxu0 0.0
      %5713 = vmatpush.msra.mxu0 0.0
      %5714 = vmatpush.msra.mxu0 0.0
      %5715 = vmatpush.msra.mxu0 0.0
      %5716 = vmatpush.msra.mxu0 0.0
      %5717 = vmatpush.msra.mxu0 0.0
      %5718 = vmatpush.msra.mxu0 %v5664
      %5719 = vmatpush.msra.mxu0 %v5663
      %5720 = vmatpush.msra.mxu0 %v5662
      %5721 = vmatpush.msra.mxu0 %v5661
      %5722 = vmatpush.msra.mxu0 %v5660
      %5723 = vmatpush.msra.mxu0 %v5659
      %5724 = vmatpush.msra.mxu0 %v5658
      %5725 = vmatpush.msra.mxu0 %v5657
      %5726 = vmatmul.f32.gmra.mxu0 %v5705
      %v5727 = vpop.f32.mrf.mxu0
      %v5728 = vadd.f32 %v5702, %v5727
      %5729 = vmatmul.f32.gmra.mxu0 %v5708
      %v5730 = vpop.f32.mrf.mxu0
      %v5731 = vadd.f32 %v5702, %v5730
      %5732 = vdwg.mxu0
      %v5733 = vadd.f32 %v5555, %v5728
      %v5734 = vadd.f32 %v5556, %v5731
      %v5735 = vld [vmem:[%s77] sm:$0x1]
      %v5736 = vld [vmem:[%s79] sm:$0x1]
      %v5737 = vsel %vm1273, %v5733, 0.0
      %5738 = vadd.xlane.f32.xlu0 %v5737
      %v5739 = vpop.xlane.xlu0 %5738
      %v5740 = vsel %vm1273, %v5734, 0.0
      %5741 = vadd.xlane.f32.xlu0 %v5740
      %v5742 = vpop.xlane.xlu0 %5741
      %v5743 = vmul.f32 %v5739, %v1286
      %v5744 = vmul.f32 %v5742, %v1286
      %v5745 = vsub.f32 %v5733, %v5743
      %v5746 = vsub.f32 %v5734, %v5744
      %v5747 = vmul.f32 %v5745, %v5745
      %v5748 = vmul.f32 %v5746, %v5746
      %v5749 = vsel %vm1273, %v5747, 0.0
      %5750 = vadd.xlane.f32.xlu0 %v5749
      %v5751 = vpop.xlane.xlu0 %5750
      %v5752 = vsel %vm1273, %v5748, 0.0
      %5753 = vadd.xlane.f32.xlu0 %v5752
      %v5754 = vpop.xlane.xlu0 %5753
      %v5755 = vmul.f32 %v5751, %v1305
      %v5756 = vmul.f32 %v5754, %v1305
      %v5757 = vrsqrt.pop %v5755
      %v5758 = vmul.f32 %v5757, %v5755
      %v5759 = vmul.f32 %v5758, %v5757
      %v5760 = vmul.f32 0.5, %v5759
      %v5761 = vsub.f32 1.5, %v5760
      %v5762 = vmul.f32 %v5757, %v5761
      %v5763 = vmul.f32 %v5755, %v5762
      %vm5764 = vcmp.eq.f32.partialorder %v5755, inf
      %v5765 = vsel %vm5764, %v5755, %v5763
      %vm5766 = vcmp.eq.f32.partialorder %v5755, 0.0
      %v5767 = vand.u32 %v5755, 2147483648
      %v5768 = vsel %vm5766, %v5767, %v5765
      %v5769 = vrsqrt.pop %v5756
      %v5770 = vmul.f32 %v5769, %v5756
      %v5771 = vmul.f32 %v5770, %v5769
      %v5772 = vmul.f32 0.5, %v5771
      %v5773 = vsub.f32 1.5, %v5772
      %v5774 = vmul.f32 %v5769, %v5773
      %v5775 = vmul.f32 %v5756, %v5774
      %vm5776 = vcmp.eq.f32.partialorder %v5756, inf
      %v5777 = vsel %vm5776, %v5756, %v5775
      %vm5778 = vcmp.eq.f32.partialorder %v5756, 0.0
      %v5779 = vand.u32 %v5756, 2147483648
      %v5780 = vsel %vm5778, %v5779, %v5777
      %v5781 = vadd.f32 %v5768, 1e-06
      %v5782 = vadd.f32 %v5780, 1e-06
      %v5783 = vrcp.pop %v5781
      %v5784 = vmul.f32 %v5781, %v5783
      %v5785 = vsub.f32 1.0, %v5784
      %v5786 = vmul.f32 %v5783, %v5785
      %v5787 = vadd.f32 %v5783, %v5786
      %vm5788 = vweird.f32 %v5781
      %vm5789 = vweird.f32 %v5783
      %vm5790 = vmor %vm5788, %vm5789
      %v5791 = vsel %vm5790, %v5783, %v5787
      %v5792 = vand.u32 2147483647, %v5781
      %vm5793 = vcmp.eq.f32.partialorder %v5792, 8.507059e+37
      %v5794 = vand.u32 %v5781, 2147483648
      %v5795 = vor.u32 1.1754944e-38, %v5794
      %v5796 = vsel %vm5793, %v5795, %v5791
      %v5797 = vmul.f32 1.0, %v5796
      %v5798 = vrcp.pop %v5782
      %v5799 = vmul.f32 %v5782, %v5798
      %v5800 = vsub.f32 1.0, %v5799
      %v5801 = vmul.f32 %v5798, %v5800
      %v5802 = vadd.f32 %v5798, %v5801
      %vm5803 = vweird.f32 %v5782
      %vm5804 = vweird.f32 %v5798
      %vm5805 = vmor %vm5803, %vm5804
      %v5806 = vsel %vm5805, %v5798, %v5802
      %v5807 = vand.u32 2147483647, %v5782
      %vm5808 = vcmp.eq.f32.partialorder %v5807, 8.507059e+37
      %v5809 = vand.u32 %v5782, 2147483648
      %v5810 = vor.u32 1.1754944e-38, %v5809
      %v5811 = vsel %vm5808, %v5810, %v5806
      %v5812 = vmul.f32 1.0, %v5811
      %v5814 = vperm.slane %v5735, 0
      %v5816 = vmul.f32 %v5814, %v5797
      %v5817 = vmul.f32 %v5814, %v5812
      %v5818 = vmul.f32 %v5745, %v5816
      %v5819 = vmul.f32 %v5746, %v5817
      %v5821 = vperm.slane %v5736, 0
      %v5823 = vadd.f32 %v5818, %v5821
      %v5824 = vadd.f32 %v5819, %v5821
      %5825 = vst.msk [vmem:[%s1264] sm:$0xff] %vm1273, %v5823
      %vm5826 = vcmask 253952
      %5827 = vst.msk [vmem:[%s1264 + $0x8] sm:$0x1] %vm5826, %v5824
      %p5828 = scmp.lt.s32.totalorder %s92, 1
      %s5829 = scalar_select %p5828, %s92, 1
      %s5830 = smul.addr %s5829, 2
      %s5831 = smul.addr %s5830, 8
      %s5832 = scalar_lea.vmem %s81, %s5831
      // Predicated region
      $region181: #{encoder_decoder_forward.1} parent=179 // pred_check
        %p5833 = pneg %p970
      $region182: #{encoder_decoder_forward.1} parent=179 // pred_check_branch
        %5835 = sbr.rel (%p5833) target = $region184
      $region183: #{encoder_decoder_forward.1} parent=179 // pred_region
        _
      $region184: #{encoder_decoder_forward.1} parent=179 // pred_fallthru
        _
    $region180: #{encoder_decoder_forward.1} parent=5 // pred_fallthru
      _
    %p5836 = scmp.le.s32.totalorder 2, %s87
    // Predicated region
    $region185: #{encoder_decoder_forward.1} parent=5 // pred_check
      %p5837 = pneg %p5836
    $region186: #{encoder_decoder_forward.1} parent=5 // pred_check_branch
      %5839 = sbr.rel (%p5837) target = $region188
    $region187: #{encoder_decoder_forward.1} parent=5 // pred_region
      %s5840 = ssub.s32 %s87, 2
      // Predicated region
      $region189: #{encoder_decoder_forward.1} parent=187 // pred_check
        %p5841 = pneg %p976
      $region190: #{encoder_decoder_forward.1} parent=187 // pred_check_branch
        %5843 = sbr.rel (%p5841) target = $region192
      $region191: #{encoder_decoder_forward.1} parent=187 // pred_region
        %p5844 = scmp.lt.s32.totalorder %s93, 1
        %s5845 = scalar_select %p5844, %s93, 1
        %s5846 = smul.addr %s5845, 2
        %s5847 = smul.addr %s5846, 8
        %s5848 = scalar_lea.vmem %s81, %s5847
      $region192: #{encoder_decoder_forward.1} parent=187 // pred_fallthru
        _
    $region188: #{encoder_decoder_forward.1} parent=5 // pred_fallthru
      _
  $region6: #{encoder_decoder_forward.1} parent=0 // loop_footer
    %s91 = sadd.s32 1, %s87
  $region7: #{encoder_decoder_forward.1} parent=0 // loop_footer_branch
    %86 = sbr.rel target = $region3
  $region8: #{encoder_decoder_forward.1} parent=0 // loop_exit
    _

</llo_original>
